<compile_context>
chip_gen: v5e
topology: v5e:2x2
jax: 0.10.0
libtpu: 0.0.40
codegen_flags: <defaults>
</compile_context>

<pallas_src>
import functools

import jax
import jax.numpy as jnp
from jax.experimental import pallas as pl
from jax.experimental.pallas import tpu as pltpu

NEG_SLOPE = 0.01   # LeakyReLU slope used everywhere in the module
LN_EPS = 1e-5      # torch LayerNorm default
BN_EPS = 1e-5      # torch BatchNorm1d default

# Matmul inputs are cast to this dtype right before the MXU (accumulation is
# always f32).  bf16 is MXU-native on v5e/v6e/v7x and halves weight DMA bytes.
# Set to jnp.float32 for bit-exact f32 matmuls.
MXU_DTYPE = jnp.bfloat16


# ----------------------------------------------------------------------------
# In-kernel helpers (operate on values; refs are loaded at the call sites)
# ----------------------------------------------------------------------------
def _apply_act(y, act):
    if act == "none":
        return y
    if act == "relu":
        return jnp.maximum(y, 0.0)
    if act == "lrelu":
        return jnp.where(y >= 0, y, NEG_SLOPE * y)
    if act == "lrelu_sigmoid":
        y = jnp.where(y >= 0, y, NEG_SLOPE * y)
        return jax.nn.sigmoid(y)
    raise ValueError(act)


def _dense(x, w, b, act="none"):
    """x @ W + b with fused activation; bf16 MXU inputs, f32 accumulation."""
    y = jnp.dot(x.astype(w.dtype), w, preferred_element_type=jnp.float32)
    y = y + b
    return _apply_act(y, act)


def _layernorm(x, g, b, eps=LN_EPS):
    mu = jnp.mean(x, axis=-1, keepdims=True)
    var = jnp.mean(jnp.square(x - mu), axis=-1, keepdims=True)
    return (x - mu) * jax.lax.rsqrt(var + eps) * g + b


def _mha(x_q, x_kv, a, nhead):
    """Multi-head attention with head-stacked weights (nhead on the leading dim).

    The concatenated multi-head output is never materialized: each head's
    context vector is immediately contracted with its (dh, d) slice of W_o
    (stored as wo[h]) and accumulated -- everything stays VMEM/vreg resident.
    """
    dh = a["wq"].shape[-1]
    scale = 1.0 / (dh ** 0.5)
    acc = None
    for h in range(nhead):
        q = _dense(x_q, a["wq"][h], a["bq"][h])            # (T, dh) f32
        k = _dense(x_kv, a["wk"][h], a["bk"][h])           # (T, dh) f32
        v = _dense(x_kv, a["wv"][h], a["bv"][h])           # (T, dh) f32
        s = jax.lax.dot_general(q.astype(MXU_DTYPE), k.astype(MXU_DTYPE),
                                (((1,), (1,)), ((), ())),
                                preferred_element_type=jnp.float32) * scale
        s = s - jnp.max(s, axis=-1, keepdims=True)          # f32 softmax stats
        e = jnp.exp(s)
        p = e * pl.reciprocal(jnp.sum(e, axis=-1, keepdims=True), approx=True)
        o = jnp.dot(p.astype(MXU_DTYPE), v.astype(MXU_DTYPE),
                    preferred_element_type=jnp.float32)     # (T, dh)
        c = jnp.dot(o.astype(MXU_DTYPE), a["wo"][h],
                    preferred_element_type=jnp.float32)     # (T, d)
        acc = c if acc is None else acc + c
    return acc + a["bo"][...]


# ----------------------------------------------------------------------------
# The single fused kernel: the whole Decoder.forward for one batch element
# ----------------------------------------------------------------------------
def _decoder_fused_kernel(*refs, treedef, n_data, d_model, nhead, n_layers):
    num_w = treedef.num_leaves
    x1_ref, x2_ref, pitch_ref, pe_ref = refs[:n_data]
    w_refs = refs[n_data:n_data + num_w]
    x_out_ref, z_ref, m_ref = refs[n_data + num_w:]
    p = jax.tree_util.tree_unflatten(treedef, list(w_refs))

    x1 = x1_ref[0]        # (T, n_timbre)
    x2 = x2_ref[0]        # (T, n_feat)
    pitch = pitch_ref[0]  # (T, n_pitch)

    # x = lrelu((emb_timbre(x1) + emb_feat(x2)) * sqrt(d_model))  (fused epilogue)
    xt = _dense(x1, p["emb_timbre_w"][...], p["emb_timbre_b"][...])
    xf = _dense(x2, p["emb_feat_w"][...], p["emb_feat_b"][...])
    x = _apply_act((xt + xf) * (d_model ** 0.5), "lrelu")            # (T, d)

    # exp_layer: 1x1 Conv1d stack, eval-mode BatchNorm folded into the weights;
    # the channels-last layout absorbs both PyTorch transposes.
    e = p["exp"]
    y = _dense(x, e["c1_w"][...], e["c1_b"][...])                    # conv1 + bn1
    y = _dense(y, e["c2_w"][...], e["c2_b"][...], act="lrelu")       # conv2 + lrelu
    y = _dense(y, e["c3_w"][...], e["c3_b"][...], act="lrelu")       # conv3 + bn2 + lrelu
    y = _dense(y, e["c4_w"][...], e["c4_b"][...], act="lrelu")       # conv4 + bn3 + lrelu

    # memory = emb_pitch(pitch)
    mem = _dense(pitch, p["emb_pitch_w"][...], p["emb_pitch_b"][...])  # (T, d)

    # x += positional_encoding * pr + pr   (table pre-scaled on the host)
    x = x + pe_ref[...]

    # DecoderBlock: n_layers x (self-attn -> cross-attn -> FF+LayerNorm);
    # like the PyTorch module there are no residual connections here.
    dec = p["dec"]
    for i in range(n_layers):
        x = _mha(x, x, dec["attn1"][i], nhead)
        x = _mha(x, mem, dec["attn2"][i], nhead)
        f = dec["ff"][i]
        h = _dense(x, f["w1"][...], f["b1"][...], act="relu")
        x = _layernorm(_dense(h, f["w2"][...], f["b2"][...]),
                       f["ln_g"][...], f["ln_b"][...])

    # dec.fc: Linear -> LeakyReLU -> Linear
    h = _dense(x, dec["fc1_w"][...], dec["fc1_b"][...], act="lrelu")
    xo = _dense(h, dec["fc2_w"][...], dec["fc2_b"][...])             # (T, n_out)

    # z = y * x ; mask head: Linear+lrelu, Linear+lrelu, Sigmoid  (all fused)
    z = y * xo
    m = _dense(z, p["mask1_w"][...], p["mask1_b"][...], act="lrelu")
    m = _dense(m, p["mask2_w"][...], p["mask2_b"][...], act="lrelu_sigmoid")

    x_out_ref[0] = xo.astype(x_out_ref.dtype)
    z_ref[0] = z.astype(z_ref.dtype)
    m_ref[0] = m.astype(m_ref.dtype)


# ----------------------------------------------------------------------------
# Host-side wrapper
# ----------------------------------------------------------------------------
def positional_encoding_jax(n_time, n_feature):
    # matches torch positional_encoding(zero_pad=False, scale=False): raw
    # feature index i in 10000 ** (2*i/d), sin on even cols, cos on odd cols.
    pos = jnp.arange(n_time, dtype=jnp.float32).reshape(-1, 1)
    denom = jnp.power(10000.0,
                      2.0 * jnp.arange(n_feature, dtype=jnp.float32) / n_feature)
    pe = pos / denom
    pe = pe.at[:, 0::2].set(jnp.sin(pe[:, 0::2]))
    pe = pe.at[:, 1::2].set(jnp.cos(pe[:, 1::2]))
    return pe                                                        # (T, d)


def decoder_forward(params, x1, x2, pitch, *, d_model, nhead, n_layers, pr):
    B, T, _ = x1.shape
    n_out = params["dec"]["fc2_w"].shape[1]

    # Constant (T, d) positional table; scale (* pr + pr) once on the host and
    # add it inside the fused kernel (no standalone elementwise kernel).
    pe = (positional_encoding_jax(T, d_model) * pr + pr).astype(jnp.float32)

    leaves, treedef = jax.tree_util.tree_flatten(params)
    data = [x1, x2, pitch, pe]

    def batched(arr):
        return pl.BlockSpec((1, T, arr.shape[-1]), lambda b: (b, 0, 0))

    data_specs = [batched(x1), batched(x2), batched(pitch),
                  pl.BlockSpec((T, d_model), lambda b: (0, 0))]
    # Full-block, grid-constant weight specs -> DMA'd once, VMEM-resident.
    w_specs = [pl.BlockSpec(w.shape, lambda b, nd=w.ndim: (0,) * nd)
               for w in leaves]

    out_shape = (jax.ShapeDtypeStruct((B, T, n_out), jnp.float32),   # x (dec out)
                 jax.ShapeDtypeStruct((B, T, n_out), jnp.float32),   # z
                 jax.ShapeDtypeStruct((B, T, n_out), jnp.float32))   # m (pre-transpose)
    out_specs = tuple(pl.BlockSpec((1, T, n_out), lambda b: (b, 0, 0))
                      for _ in range(3))

    kernel = functools.partial(_decoder_fused_kernel, treedef=treedef,
                               n_data=len(data), d_model=d_model,
                               nhead=nhead, n_layers=n_layers)

    x_out, z, m = pl.pallas_call(
        kernel,
        out_shape=out_shape,
        grid=(B,),
        in_specs=data_specs + w_specs,
        out_specs=out_specs,
        compiler_params=pltpu.CompilerParams(
            dimension_semantics=("parallel",),        # v7x: shard batch over 2 TCs
            vmem_limit_bytes=32 * 1024 * 1024),       # explicit VMEM budget (v7x-safe)
    )(*data, *leaves)

    m = jnp.swapaxes(m, -2, -1)                       # (B, n_out, T), as in PyTorch
    return m, z, x_out


# ----------------------------------------------------------------------------
# Deterministic synthetic parameters (eval-mode BN folded; biases kept f32,
# matmul weights stored in MXU_DTYPE to halve weight DMA bytes).
# ----------------------------------------------------------------------------
def init_params(key, *, n_feat, n_timbre, n_pitch, d_model, n_out, n_layers,
                n_hidden, nhead):
    keys = iter(jax.random.split(key, 256))
    dh = d_model // nhead

    def w(cin, cout, s=0.05):
        return (jax.random.normal(next(keys), (cin, cout), jnp.float32) * s
                ).astype(MXU_DTYPE)

    def b(n):
        return jax.random.normal(next(keys), (1, n), jnp.float32) * 0.01

    def conv_bn(cin, cout, with_bn):
        cw = jax.random.normal(next(keys), (cin, cout), jnp.float32) * 0.05
        cb = jax.random.normal(next(keys), (1, cout), jnp.float32) * 0.01
        if with_bn:  # eval-mode BN (running_mean=0, running_var=1, gamma=1, beta=0)
            gamma = jnp.ones((cout,), jnp.float32)
            beta = jnp.zeros((cout,), jnp.float32)
            mean = jnp.zeros((cout,), jnp.float32)
            var = jnp.ones((cout,), jnp.float32)
            sc = gamma * jax.lax.rsqrt(var + BN_EPS)
            cw = cw * sc[None, :]
            cb = cb * sc[None, :] + (beta - mean * sc)[None, :]
        return cw.astype(MXU_DTYPE), cb

    def attn_params():
        def stack_w(din, dout):
            return (jax.random.normal(next(keys), (nhead, din, dout), jnp.float32)
                    * 0.05).astype(MXU_DTYPE)

        def stack_b():
            return jax.random.normal(next(keys), (nhead, 1, dh), jnp.float32) * 0.01

        return {
            "wq": stack_w(d_model, dh), "bq": stack_b(),
            "wk": stack_w(d_model, dh), "bk": stack_b(),
            "wv": stack_w(d_model, dh), "bv": stack_b(),
            "wo": stack_w(dh, d_model),
            "bo": b(d_model),
        }

    p = {
        "emb_timbre_w": w(n_timbre, d_model), "emb_timbre_b": b(d_model),
        "emb_feat_w": w(n_feat, d_model), "emb_feat_b": b(d_model),
        "emb_pitch_w": w(n_pitch, d_model), "emb_pitch_b": b(d_model),
    }

    exp = {}
    exp["c1_w"], exp["c1_b"] = conv_bn(d_model, d_model, True)
    exp["c2_w"], exp["c2_b"] = conv_bn(d_model, d_model, False)
    exp["c3_w"], exp["c3_b"] = conv_bn(d_model, d_model, True)
    exp["c4_w"], exp["c4_b"] = conv_bn(d_model, n_out, True)
    p["exp"] = exp

    dec = {"attn1": [], "attn2": [], "ff": []}
    for _ in range(n_layers):
        dec["attn1"].append(attn_params())
        dec["attn2"].append(attn_params())
        dec["ff"].append({
            "w1": w(d_model, n_hidden), "b1": b(n_hidden),
            "w2": w(n_hidden, d_model), "b2": b(d_model),
            "ln_g": jnp.ones((1, d_model), jnp.float32),
            "ln_b": jnp.zeros((1, d_model), jnp.float32),
        })
    dec["fc1_w"] = w(d_model, d_model); dec["fc1_b"] = b(d_model)
    dec["fc2_w"] = w(d_model, n_out); dec["fc2_b"] = b(n_out)
    p["dec"] = dec

    p["mask1_w"] = w(n_out, n_out); p["mask1_b"] = b(n_out)
    p["mask2_w"] = w(n_out, n_out); p["mask2_b"] = b(n_out)
    return p


# ----------------------------------------------------------------------------
if __name__ == "__main__":
    # Small shapes consistent with the module's forward.
    B, T = 2, 16
    n_feat, n_timbre, n_pitch = 16, 8, 12
    d_model, nhead, n_layers = 32, 4, 2
    nfft = 62
    n_out = nfft // 2 + 1          # 32
    n_hidden = 64                  # FeedForward hidden width (scaled-down)
    pr = 0.01

    key = jax.random.PRNGKey(0)
    kp, k1, k2, k3 = jax.random.split(key, 4)
    params = init_params(kp, n_feat=n_feat, n_timbre=n_timbre, n_pitch=n_pitch,
                         d_model=d_model, n_out=n_out, n_layers=n_layers,
                         n_hidden=n_hidden, nhead=nhead)

    x1 = jax.random.normal(k1, (B, T, n_timbre), jnp.float32)   # timbre features
    x2 = jax.random.normal(k2, (B, T, n_feat), jnp.float32)     # spectral features
    pitch = jax.random.normal(k3, (B, T, n_pitch), jnp.float32)

    fwd = jax.jit(functools.partial(decoder_forward, d_model=d_model, nhead=nhead,
                                    n_layers=n_layers, pr=pr))
    m, z, x = fwd(params, x1, x2, pitch)
    jax.block_until_ready((m, z, x))

    assert m.shape == (B, n_out, T)
    assert z.shape == (B, T, n_out)
    assert x.shape == (B, T, n_out)
    assert bool(jnp.all(jnp.isfinite(m)))
    assert bool(jnp.all(jnp.isfinite(z)))
    assert bool(jnp.all(jnp.isfinite(x)))
    # TODO(synk): Dropout / BatchNorm implemented with eval-mode semantics
    # (training-mode stochasticity / batch statistics have no deterministic
    # kernel equivalent here).
    print("KERNEL_OK")
</pallas_src>

<mosaic_0001>
module attributes {stable_mosaic.version = 11 : i64} {
  func.func @_decoder_fused_kernel(%arg0: i32, %arg1: memref<1x16x8xf32, #tpu.memory_space<vmem>>, %arg2: memref<1x16x16xf32, #tpu.memory_space<vmem>>, %arg3: memref<1x16x12xf32, #tpu.memory_space<vmem>>, %arg4: memref<16x32xf32, #tpu.memory_space<vmem>>, %arg5: memref<4x1x8xf32, #tpu.memory_space<vmem>>, %arg6: memref<1x32xf32, #tpu.memory_space<vmem>>, %arg7: memref<4x1x8xf32, #tpu.memory_space<vmem>>, %arg8: memref<4x1x8xf32, #tpu.memory_space<vmem>>, %arg9: memref<4x32x8xbf16, #tpu.memory_space<vmem>>, %arg10: memref<4x8x32xbf16, #tpu.memory_space<vmem>>, %arg11: memref<4x32x8xbf16, #tpu.memory_space<vmem>>, %arg12: memref<4x32x8xbf16, #tpu.memory_space<vmem>>, %arg13: memref<4x1x8xf32, #tpu.memory_space<vmem>>, %arg14: memref<1x32xf32, #tpu.memory_space<vmem>>, %arg15: memref<4x1x8xf32, #tpu.memory_space<vmem>>, %arg16: memref<4x1x8xf32, #tpu.memory_space<vmem>>, %arg17: memref<4x32x8xbf16, #tpu.memory_space<vmem>>, %arg18: memref<4x8x32xbf16, #tpu.memory_space<vmem>>, %arg19: memref<4x32x8xbf16, #tpu.memory_space<vmem>>, %arg20: memref<4x32x8xbf16, #tpu.memory_space<vmem>>, %arg21: memref<4x1x8xf32, #tpu.memory_space<vmem>>, %arg22: memref<1x32xf32, #tpu.memory_space<vmem>>, %arg23: memref<4x1x8xf32, #tpu.memory_space<vmem>>, %arg24: memref<4x1x8xf32, #tpu.memory_space<vmem>>, %arg25: memref<4x32x8xbf16, #tpu.memory_space<vmem>>, %arg26: memref<4x8x32xbf16, #tpu.memory_space<vmem>>, %arg27: memref<4x32x8xbf16, #tpu.memory_space<vmem>>, %arg28: memref<4x32x8xbf16, #tpu.memory_space<vmem>>, %arg29: memref<4x1x8xf32, #tpu.memory_space<vmem>>, %arg30: memref<1x32xf32, #tpu.memory_space<vmem>>, %arg31: memref<4x1x8xf32, #tpu.memory_space<vmem>>, %arg32: memref<4x1x8xf32, #tpu.memory_space<vmem>>, %arg33: memref<4x32x8xbf16, #tpu.memory_space<vmem>>, %arg34: memref<4x8x32xbf16, #tpu.memory_space<vmem>>, %arg35: memref<4x32x8xbf16, #tpu.memory_space<vmem>>, %arg36: memref<4x32x8xbf16, #tpu.memory_space<vmem>>, %arg37: memref<1x32xf32, #tpu.memory_space<vmem>>, %arg38: memref<32x32xbf16, #tpu.memory_space<vmem>>, %arg39: memref<1x32xf32, #tpu.memory_space<vmem>>, %arg40: memref<32x32xbf16, #tpu.memory_space<vmem>>, %arg41: memref<1x64xf32, #tpu.memory_space<vmem>>, %arg42: memref<1x32xf32, #tpu.memory_space<vmem>>, %arg43: memref<1x32xf32, #tpu.memory_space<vmem>>, %arg44: memref<1x32xf32, #tpu.memory_space<vmem>>, %arg45: memref<32x64xbf16, #tpu.memory_space<vmem>>, %arg46: memref<64x32xbf16, #tpu.memory_space<vmem>>, %arg47: memref<1x64xf32, #tpu.memory_space<vmem>>, %arg48: memref<1x32xf32, #tpu.memory_space<vmem>>, %arg49: memref<1x32xf32, #tpu.memory_space<vmem>>, %arg50: memref<1x32xf32, #tpu.memory_space<vmem>>, %arg51: memref<32x64xbf16, #tpu.memory_space<vmem>>, %arg52: memref<64x32xbf16, #tpu.memory_space<vmem>>, %arg53: memref<1x32xf32, #tpu.memory_space<vmem>>, %arg54: memref<16x32xbf16, #tpu.memory_space<vmem>>, %arg55: memref<1x32xf32, #tpu.memory_space<vmem>>, %arg56: memref<12x32xbf16, #tpu.memory_space<vmem>>, %arg57: memref<1x32xf32, #tpu.memory_space<vmem>>, %arg58: memref<8x32xbf16, #tpu.memory_space<vmem>>, %arg59: memref<1x32xf32, #tpu.memory_space<vmem>>, %arg60: memref<32x32xbf16, #tpu.memory_space<vmem>>, %arg61: memref<1x32xf32, #tpu.memory_space<vmem>>, %arg62: memref<32x32xbf16, #tpu.memory_space<vmem>>, %arg63: memref<1x32xf32, #tpu.memory_space<vmem>>, %arg64: memref<32x32xbf16, #tpu.memory_space<vmem>>, %arg65: memref<1x32xf32, #tpu.memory_space<vmem>>, %arg66: memref<32x32xbf16, #tpu.memory_space<vmem>>, %arg67: memref<1x32xf32, #tpu.memory_space<vmem>>, %arg68: memref<32x32xbf16, #tpu.memory_space<vmem>>, %arg69: memref<1x32xf32, #tpu.memory_space<vmem>>, %arg70: memref<32x32xbf16, #tpu.memory_space<vmem>>, %arg71: memref<1x16x32xf32, #tpu.memory_space<vmem>>, %arg72: memref<1x16x32xf32, #tpu.memory_space<vmem>>, %arg73: memref<1x16x32xf32, #tpu.memory_space<vmem>>) attributes {dimension_semantics = [#tpu.dimension_semantics<parallel>], iteration_bounds = array<i64: 2>, scalar_prefetch = 0 : i64, scratch_operands = 0 : i64, tpu.core_type = #tpu.core_type<tc>, window_params = [{transform_indices = @transform_0, window_bounds = array<i64: 1, 16, 8>}, {transform_indices = @transform_1, window_bounds = array<i64: 1, 16, 16>}, {transform_indices = @transform_2, window_bounds = array<i64: 1, 16, 12>}, {pipeline_mode = #tpu.pipeline_mode<synchronous>, transform_indices = @transform_3, window_bounds = array<i64: 16, 32>}, {pipeline_mode = #tpu.pipeline_mode<synchronous>, transform_indices = @transform_4, window_bounds = array<i64: 4, 1, 8>}, {pipeline_mode = #tpu.pipeline_mode<synchronous>, transform_indices = @transform_5, window_bounds = array<i64: 1, 32>}, {pipeline_mode = #tpu.pipeline_mode<synchronous>, transform_indices = @transform_6, window_bounds = array<i64: 4, 1, 8>}, {pipeline_mode = #tpu.pipeline_mode<synchronous>, transform_indices = @transform_7, window_bounds = array<i64: 4, 1, 8>}, {pipeline_mode = #tpu.pipeline_mode<synchronous>, transform_indices = @transform_8, window_bounds = array<i64: 4, 32, 8>}, {pipeline_mode = #tpu.pipeline_mode<synchronous>, transform_indices = @transform_9, window_bounds = array<i64: 4, 8, 32>}, {pipeline_mode = #tpu.pipeline_mode<synchronous>, transform_indices = @transform_10, window_bounds = array<i64: 4, 32, 8>}, {pipeline_mode = #tpu.pipeline_mode<synchronous>, transform_indices = @transform_11, window_bounds = array<i64: 4, 32, 8>}, {pipeline_mode = #tpu.pipeline_mode<synchronous>, transform_indices = @transform_12, window_bounds = array<i64: 4, 1, 8>}, {pipeline_mode = #tpu.pipeline_mode<synchronous>, transform_indices = @transform_13, window_bounds = array<i64: 1, 32>}, {pipeline_mode = #tpu.pipeline_mode<synchronous>, transform_indices = @transform_14, window_bounds = array<i64: 4, 1, 8>}, {pipeline_mode = #tpu.pipeline_mode<synchronous>, transform_indices = @transform_15, window_bounds = array<i64: 4, 1, 8>}, {pipeline_mode = #tpu.pipeline_mode<synchronous>, transform_indices = @transform_16, window_bounds = array<i64: 4, 32, 8>}, {pipeline_mode = #tpu.pipeline_mode<synchronous>, transform_indices = @transform_17, window_bounds = array<i64: 4, 8, 32>}, {pipeline_mode = #tpu.pipeline_mode<synchronous>, transform_indices = @transform_18, window_bounds = array<i64: 4, 32, 8>}, {pipeline_mode = #tpu.pipeline_mode<synchronous>, transform_indices = @transform_19, window_bounds = array<i64: 4, 32, 8>}, {pipeline_mode = #tpu.pipeline_mode<synchronous>, transform_indices = @transform_20, window_bounds = array<i64: 4, 1, 8>}, {pipeline_mode = #tpu.pipeline_mode<synchronous>, transform_indices = @transform_21, window_bounds = array<i64: 1, 32>}, {pipeline_mode = #tpu.pipeline_mode<synchronous>, transform_indices = @transform_22, window_bounds = array<i64: 4, 1, 8>}, {pipeline_mode = #tpu.pipeline_mode<synchronous>, transform_indices = @transform_23, window_bounds = array<i64: 4, 1, 8>}, {pipeline_mode = #tpu.pipeline_mode<synchronous>, transform_indices = @transform_24, window_bounds = array<i64: 4, 32, 8>}, {pipeline_mode = #tpu.pipeline_mode<synchronous>, transform_indices = @transform_25, window_bounds = array<i64: 4, 8, 32>}, {pipeline_mode = #tpu.pipeline_mode<synchronous>, transform_indices = @transform_26, window_bounds = array<i64: 4, 32, 8>}, {pipeline_mode = #tpu.pipeline_mode<synchronous>, transform_indices = @transform_27, window_bounds = array<i64: 4, 32, 8>}, {pipeline_mode = #tpu.pipeline_mode<synchronous>, transform_indices = @transform_28, window_bounds = array<i64: 4, 1, 8>}, {pipeline_mode = #tpu.pipeline_mode<synchronous>, transform_indices = @transform_29, window_bounds = array<i64: 1, 32>}, {pipeline_mode = #tpu.pipeline_mode<synchronous>, transform_indices = @transform_30, window_bounds = array<i64: 4, 1, 8>}, {pipeline_mode = #tpu.pipeline_mode<synchronous>, transform_indices = @transform_31, window_bounds = array<i64: 4, 1, 8>}, {pipeline_mode = #tpu.pipeline_mode<synchronous>, transform_indices = @transform_32, window_bounds = array<i64: 4, 32, 8>}, {pipeline_mode = #tpu.pipeline_mode<synchronous>, transform_indices = @transform_33, window_bounds = array<i64: 4, 8, 32>}, {pipeline_mode = #tpu.pipeline_mode<synchronous>, transform_indices = @transform_34, window_bounds = array<i64: 4, 32, 8>}, {pipeline_mode = #tpu.pipeline_mode<synchronous>, transform_indices = @transform_35, window_bounds = array<i64: 4, 32, 8>}, {pipeline_mode = #tpu.pipeline_mode<synchronous>, transform_indices = @transform_36, window_bounds = array<i64: 1, 32>}, {pipeline_mode = #tpu.pipeline_mode<synchronous>, transform_indices = @transform_37, window_bounds = array<i64: 32, 32>}, {pipeline_mode = #tpu.pipeline_mode<synchronous>, transform_indices = @transform_38, window_bounds = array<i64: 1, 32>}, {pipeline_mode = #tpu.pipeline_mode<synchronous>, transform_indices = @transform_39, window_bounds = array<i64: 32, 32>}, {pipeline_mode = #tpu.pipeline_mode<synchronous>, transform_indices = @transform_40, window_bounds = array<i64: 1, 64>}, {pipeline_mode = #tpu.pipeline_mode<synchronous>, transform_indices = @transform_41, window_bounds = array<i64: 1, 32>}, {pipeline_mode = #tpu.pipeline_mode<synchronous>, transform_indices = @transform_42, window_bounds = array<i64: 1, 32>}, {pipeline_mode = #tpu.pipeline_mode<synchronous>, transform_indices = @transform_43, window_bounds = array<i64: 1, 32>}, {pipeline_mode = #tpu.pipeline_mode<synchronous>, transform_indices = @transform_44, window_bounds = array<i64: 32, 64>}, {pipeline_mode = #tpu.pipeline_mode<synchronous>, transform_indices = @transform_45, window_bounds = array<i64: 64, 32>}, {pipeline_mode = #tpu.pipeline_mode<synchronous>, transform_indices = @transform_46, window_bounds = array<i64: 1, 64>}, {pipeline_mode = #tpu.pipeline_mode<synchronous>, transform_indices = @transform_47, window_bounds = array<i64: 1, 32>}, {pipeline_mode = #tpu.pipeline_mode<synchronous>, transform_indices = @transform_48, window_bounds = array<i64: 1, 32>}, {pipeline_mode = #tpu.pipeline_mode<synchronous>, transform_indices = @transform_49, window_bounds = array<i64: 1, 32>}, {pipeline_mode = #tpu.pipeline_mode<synchronous>, transform_indices = @transform_50, window_bounds = array<i64: 32, 64>}, {pipeline_mode = #tpu.pipeline_mode<synchronous>, transform_indices = @transform_51, window_bounds = array<i64: 64, 32>}, {pipeline_mode = #tpu.pipeline_mode<synchronous>, transform_indices = @transform_52, window_bounds = array<i64: 1, 32>}, {pipeline_mode = #tpu.pipeline_mode<synchronous>, transform_indices = @transform_53, window_bounds = array<i64: 16, 32>}, {pipeline_mode = #tpu.pipeline_mode<synchronous>, transform_indices = @transform_54, window_bounds = array<i64: 1, 32>}, {pipeline_mode = #tpu.pipeline_mode<synchronous>, transform_indices = @transform_55, window_bounds = array<i64: 12, 32>}, {pipeline_mode = #tpu.pipeline_mode<synchronous>, transform_indices = @transform_56, window_bounds = array<i64: 1, 32>}, {pipeline_mode = #tpu.pipeline_mode<synchronous>, transform_indices = @transform_57, window_bounds = array<i64: 8, 32>}, {pipeline_mode = #tpu.pipeline_mode<synchronous>, transform_indices = @transform_58, window_bounds = array<i64: 1, 32>}, {pipeline_mode = #tpu.pipeline_mode<synchronous>, transform_indices = @transform_59, window_bounds = array<i64: 32, 32>}, {pipeline_mode = #tpu.pipeline_mode<synchronous>, transform_indices = @transform_60, window_bounds = array<i64: 1, 32>}, {pipeline_mode = #tpu.pipeline_mode<synchronous>, transform_indices = @transform_61, window_bounds = array<i64: 32, 32>}, {pipeline_mode = #tpu.pipeline_mode<synchronous>, transform_indices = @transform_62, window_bounds = array<i64: 1, 32>}, {pipeline_mode = #tpu.pipeline_mode<synchronous>, transform_indices = @transform_63, window_bounds = array<i64: 32, 32>}, {pipeline_mode = #tpu.pipeline_mode<synchronous>, transform_indices = @transform_64, window_bounds = array<i64: 1, 32>}, {pipeline_mode = #tpu.pipeline_mode<synchronous>, transform_indices = @transform_65, window_bounds = array<i64: 32, 32>}, {pipeline_mode = #tpu.pipeline_mode<synchronous>, transform_indices = @transform_66, window_bounds = array<i64: 1, 32>}, {pipeline_mode = #tpu.pipeline_mode<synchronous>, transform_indices = @transform_67, window_bounds = array<i64: 32, 32>}, {pipeline_mode = #tpu.pipeline_mode<synchronous>, transform_indices = @transform_68, window_bounds = array<i64: 1, 32>}, {pipeline_mode = #tpu.pipeline_mode<synchronous>, transform_indices = @transform_69, window_bounds = array<i64: 32, 32>}, {transform_indices = @transform_70, window_bounds = array<i64: 1, 16, 32>}, {transform_indices = @transform_71, window_bounds = array<i64: 1, 16, 32>}, {transform_indices = @transform_72, window_bounds = array<i64: 1, 16, 32>}]} {
    %c0 = arith.constant 0 : index
    %c0_0 = arith.constant 0 : index
    %c0_1 = arith.constant 0 : index
    %0 = vector.load %arg1[%c0, %c0_0, %c0_1] : memref<1x16x8xf32, #tpu.memory_space<vmem>>, vector<1x16x8xf32>
    %1 = vector.shape_cast %0 : vector<1x16x8xf32> to vector<16x8xf32>
    %c0_2 = arith.constant 0 : index
    %c0_3 = arith.constant 0 : index
    %c0_4 = arith.constant 0 : index
    %2 = vector.load %arg2[%c0_2, %c0_3, %c0_4] : memref<1x16x16xf32, #tpu.memory_space<vmem>>, vector<1x16x16xf32>
    %3 = vector.shape_cast %2 : vector<1x16x16xf32> to vector<16x16xf32>
    %c0_5 = arith.constant 0 : index
    %c0_6 = arith.constant 0 : index
    %c0_7 = arith.constant 0 : index
    %4 = vector.load %arg3[%c0_5, %c0_6, %c0_7] : memref<1x16x12xf32, #tpu.memory_space<vmem>>, vector<1x16x12xf32>
    %5 = vector.shape_cast %4 : vector<1x16x12xf32> to vector<16x12xf32>
    %c0_8 = arith.constant 0 : index
    %c0_9 = arith.constant 0 : index
    %6 = vector.load %arg58[%c0_8, %c0_9] : memref<8x32xbf16, #tpu.memory_space<vmem>>, vector<8x32xbf16>
    %c0_10 = arith.constant 0 : index
    %c0_11 = arith.constant 0 : index
    %7 = vector.load %arg57[%c0_10, %c0_11] : memref<1x32xf32, #tpu.memory_space<vmem>>, vector<1x32xf32>
    %8 = arith.truncf %1 : vector<16x8xf32> to vector<16x8xbf16>
    %cst = arith.constant dense<0.000000e+00> : vector<16x32xf32>
    %9 = tpu.matmul %8, %6, %cst {dimension_numbers = #tpu.dot_dimension_numbers<[1], [0], [0], [1], [0, 0, 1, 1], [], []>} : vector<16x8xbf16>, vector<8x32xbf16>, vector<16x32xf32> -> vector<16x32xf32>
    %10 = vector.broadcast %7 : vector<1x32xf32> to vector<16x32xf32>
    %11 = arith.addf %9, %10 : vector<16x32xf32>
    %c0_12 = arith.constant 0 : index
    %c0_13 = arith.constant 0 : index
    %12 = vector.load %arg54[%c0_12, %c0_13] : memref<16x32xbf16, #tpu.memory_space<vmem>>, vector<16x32xbf16>
    %c0_14 = arith.constant 0 : index
    %c0_15 = arith.constant 0 : index
    %13 = vector.load %arg53[%c0_14, %c0_15] : memref<1x32xf32, #tpu.memory_space<vmem>>, vector<1x32xf32>
    %14 = arith.truncf %3 : vector<16x16xf32> to vector<16x16xbf16>
    %cst_16 = arith.constant dense<0.000000e+00> : vector<16x32xf32>
    %15 = tpu.matmul %14, %12, %cst_16 {dimension_numbers = #tpu.dot_dimension_numbers<[1], [0], [0], [1], [0, 0, 1, 1], [], []>} : vector<16x16xbf16>, vector<16x32xbf16>, vector<16x32xf32> -> vector<16x32xf32>
    %16 = vector.broadcast %13 : vector<1x32xf32> to vector<16x32xf32>
    %17 = arith.addf %15, %16 : vector<16x32xf32>
    %18 = arith.addf %11, %17 : vector<16x32xf32>
    %cst_17 = arith.constant 5.65685415 : f32
    %19 = vector.broadcast %cst_17 : f32 to vector<16x32xf32>
    %20 = arith.mulf %18, %19 : vector<16x32xf32>
    %cst_18 = arith.constant 0.000000e+00 : f32
    %21 = vector.broadcast %cst_18 : f32 to vector<16x32xf32>
    %22 = arith.cmpf oge, %20, %21 : vector<16x32xf32>
    %cst_19 = arith.constant 0.00999999977 : f32
    %23 = vector.broadcast %cst_19 : f32 to vector<16x32xf32>
    %24 = arith.mulf %23, %20 : vector<16x32xf32>
    %25 = arith.select %22, %20, %24 : vector<16x32xi1>, vector<16x32xf32>
    %c0_20 = arith.constant 0 : index
    %c0_21 = arith.constant 0 : index
    %26 = vector.load %arg60[%c0_20, %c0_21] : memref<32x32xbf16, #tpu.memory_space<vmem>>, vector<32x32xbf16>
    %c0_22 = arith.constant 0 : index
    %c0_23 = arith.constant 0 : index
    %27 = vector.load %arg59[%c0_22, %c0_23] : memref<1x32xf32, #tpu.memory_space<vmem>>, vector<1x32xf32>
    %28 = arith.truncf %25 : vector<16x32xf32> to vector<16x32xbf16>
    %cst_24 = arith.constant dense<0.000000e+00> : vector<16x32xf32>
    %29 = tpu.matmul %28, %26, %cst_24 {dimension_numbers = #tpu.dot_dimension_numbers<[1], [0], [0], [1], [0, 0, 1, 1], [], []>} : vector<16x32xbf16>, vector<32x32xbf16>, vector<16x32xf32> -> vector<16x32xf32>
    %30 = vector.broadcast %27 : vector<1x32xf32> to vector<16x32xf32>
    %31 = arith.addf %29, %30 : vector<16x32xf32>
    %c0_25 = arith.constant 0 : index
    %c0_26 = arith.constant 0 : index
    %32 = vector.load %arg62[%c0_25, %c0_26] : memref<32x32xbf16, #tpu.memory_space<vmem>>, vector<32x32xbf16>
    %c0_27 = arith.constant 0 : index
    %c0_28 = arith.constant 0 : index
    %33 = vector.load %arg61[%c0_27, %c0_28] : memref<1x32xf32, #tpu.memory_space<vmem>>, vector<1x32xf32>
    %34 = arith.truncf %31 : vector<16x32xf32> to vector<16x32xbf16>
    %cst_29 = arith.constant dense<0.000000e+00> : vector<16x32xf32>
    %35 = tpu.matmul %34, %32, %cst_29 {dimension_numbers = #tpu.dot_dimension_numbers<[1], [0], [0], [1], [0, 0, 1, 1], [], []>} : vector<16x32xbf16>, vector<32x32xbf16>, vector<16x32xf32> -> vector<16x32xf32>
    %36 = vector.broadcast %33 : vector<1x32xf32> to vector<16x32xf32>
    %37 = arith.addf %35, %36 : vector<16x32xf32>
    %cst_30 = arith.constant 0.000000e+00 : f32
    %38 = vector.broadcast %cst_30 : f32 to vector<16x32xf32>
    %39 = arith.cmpf oge, %37, %38 : vector<16x32xf32>
    %cst_31 = arith.constant 0.00999999977 : f32
    %40 = vector.broadcast %cst_31 : f32 to vector<16x32xf32>
    %41 = arith.mulf %40, %37 : vector<16x32xf32>
    %42 = arith.select %39, %37, %41 : vector<16x32xi1>, vector<16x32xf32>
    %c0_32 = arith.constant 0 : index
    %c0_33 = arith.constant 0 : index
    %43 = vector.load %arg64[%c0_32, %c0_33] : memref<32x32xbf16, #tpu.memory_space<vmem>>, vector<32x32xbf16>
    %c0_34 = arith.constant 0 : index
    %c0_35 = arith.constant 0 : index
    %44 = vector.load %arg63[%c0_34, %c0_35] : memref<1x32xf32, #tpu.memory_space<vmem>>, vector<1x32xf32>
    %45 = arith.truncf %42 : vector<16x32xf32> to vector<16x32xbf16>
    %cst_36 = arith.constant dense<0.000000e+00> : vector<16x32xf32>
    %46 = tpu.matmul %45, %43, %cst_36 {dimension_numbers = #tpu.dot_dimension_numbers<[1], [0], [0], [1], [0, 0, 1, 1], [], []>} : vector<16x32xbf16>, vector<32x32xbf16>, vector<16x32xf32> -> vector<16x32xf32>
    %47 = vector.broadcast %44 : vector<1x32xf32> to vector<16x32xf32>
    %48 = arith.addf %46, %47 : vector<16x32xf32>
    %cst_37 = arith.constant 0.000000e+00 : f32
    %49 = vector.broadcast %cst_37 : f32 to vector<16x32xf32>
    %50 = arith.cmpf oge, %48, %49 : vector<16x32xf32>
    %cst_38 = arith.constant 0.00999999977 : f32
    %51 = vector.broadcast %cst_38 : f32 to vector<16x32xf32>
    %52 = arith.mulf %51, %48 : vector<16x32xf32>
    %53 = arith.select %50, %48, %52 : vector<16x32xi1>, vector<16x32xf32>
    %c0_39 = arith.constant 0 : index
    %c0_40 = arith.constant 0 : index
    %54 = vector.load %arg66[%c0_39, %c0_40] : memref<32x32xbf16, #tpu.memory_space<vmem>>, vector<32x32xbf16>
    %c0_41 = arith.constant 0 : index
    %c0_42 = arith.constant 0 : index
    %55 = vector.load %arg65[%c0_41, %c0_42] : memref<1x32xf32, #tpu.memory_space<vmem>>, vector<1x32xf32>
    %56 = arith.truncf %53 : vector<16x32xf32> to vector<16x32xbf16>
    %cst_43 = arith.constant dense<0.000000e+00> : vector<16x32xf32>
    %57 = tpu.matmul %56, %54, %cst_43 {dimension_numbers = #tpu.dot_dimension_numbers<[1], [0], [0], [1], [0, 0, 1, 1], [], []>} : vector<16x32xbf16>, vector<32x32xbf16>, vector<16x32xf32> -> vector<16x32xf32>
    %58 = vector.broadcast %55 : vector<1x32xf32> to vector<16x32xf32>
    %59 = arith.addf %57, %58 : vector<16x32xf32>
    %cst_44 = arith.constant 0.000000e+00 : f32
    %60 = vector.broadcast %cst_44 : f32 to vector<16x32xf32>
    %61 = arith.cmpf oge, %59, %60 : vector<16x32xf32>
    %cst_45 = arith.constant 0.00999999977 : f32
    %62 = vector.broadcast %cst_45 : f32 to vector<16x32xf32>
    %63 = arith.mulf %62, %59 : vector<16x32xf32>
    %64 = arith.select %61, %59, %63 : vector<16x32xi1>, vector<16x32xf32>
    %c0_46 = arith.constant 0 : index
    %c0_47 = arith.constant 0 : index
    %65 = vector.load %arg56[%c0_46, %c0_47] : memref<12x32xbf16, #tpu.memory_space<vmem>>, vector<12x32xbf16>
    %c0_48 = arith.constant 0 : index
    %c0_49 = arith.constant 0 : index
    %66 = vector.load %arg55[%c0_48, %c0_49] : memref<1x32xf32, #tpu.memory_space<vmem>>, vector<1x32xf32>
    %67 = arith.truncf %5 : vector<16x12xf32> to vector<16x12xbf16>
    %cst_50 = arith.constant dense<0.000000e+00> : vector<16x32xf32>
    %68 = tpu.matmul %67, %65, %cst_50 {dimension_numbers = #tpu.dot_dimension_numbers<[1], [0], [0], [1], [0, 0, 1, 1], [], []>} : vector<16x12xbf16>, vector<12x32xbf16>, vector<16x32xf32> -> vector<16x32xf32>
    %69 = vector.broadcast %66 : vector<1x32xf32> to vector<16x32xf32>
    %70 = arith.addf %68, %69 : vector<16x32xf32>
    %c0_51 = arith.constant 0 : index
    %c0_52 = arith.constant 0 : index
    %71 = vector.load %arg4[%c0_51, %c0_52] : memref<16x32xf32, #tpu.memory_space<vmem>>, vector<16x32xf32>
    %72 = arith.addf %25, %71 : vector<16x32xf32>
    %c0_53 = arith.constant 0 : index
    %c0_54 = arith.constant 0 : index
    %c0_55 = arith.constant 0 : index
    %73 = vector.load %arg11[%c0_53, %c0_54, %c0_55] : memref<4x32x8xbf16, #tpu.memory_space<vmem>>, vector<1x32x8xbf16>
    %74 = vector.shape_cast %73 : vector<1x32x8xbf16> to vector<32x8xbf16>
    %c0_56 = arith.constant 0 : index
    %c0_57 = arith.constant 0 : index
    %c0_58 = arith.constant 0 : index
    %75 = vector.load %arg7[%c0_56, %c0_57, %c0_58] : memref<4x1x8xf32, #tpu.memory_space<vmem>>, vector<1x1x8xf32>
    %76 = vector.shape_cast %75 : vector<1x1x8xf32> to vector<1x8xf32>
    %77 = arith.truncf %72 : vector<16x32xf32> to vector<16x32xbf16>
    %cst_59 = arith.constant dense<0.000000e+00> : vector<16x8xf32>
    %78 = tpu.matmul %77, %74, %cst_59 {dimension_numbers = #tpu.dot_dimension_numbers<[1], [0], [0], [1], [0, 0, 1, 1], [], []>} : vector<16x32xbf16>, vector<32x8xbf16>, vector<16x8xf32> -> vector<16x8xf32>
    %79 = vector.broadcast %76 : vector<1x8xf32> to vector<16x8xf32>
    %80 = arith.addf %78, %79 : vector<16x8xf32>
    %c0_60 = arith.constant 0 : index
    %c0_61 = arith.constant 0 : index
    %c0_62 = arith.constant 0 : index
    %81 = vector.load %arg9[%c0_60, %c0_61, %c0_62] : memref<4x32x8xbf16, #tpu.memory_space<vmem>>, vector<1x32x8xbf16>
    %82 = vector.shape_cast %81 : vector<1x32x8xbf16> to vector<32x8xbf16>
    %c0_63 = arith.constant 0 : index
    %c0_64 = arith.constant 0 : index
    %c0_65 = arith.constant 0 : index
    %83 = vector.load %arg5[%c0_63, %c0_64, %c0_65] : memref<4x1x8xf32, #tpu.memory_space<vmem>>, vector<1x1x8xf32>
    %84 = vector.shape_cast %83 : vector<1x1x8xf32> to vector<1x8xf32>
    %85 = arith.truncf %72 : vector<16x32xf32> to vector<16x32xbf16>
    %cst_66 = arith.constant dense<0.000000e+00> : vector<16x8xf32>
    %86 = tpu.matmul %85, %82, %cst_66 {dimension_numbers = #tpu.dot_dimension_numbers<[1], [0], [0], [1], [0, 0, 1, 1], [], []>} : vector<16x32xbf16>, vector<32x8xbf16>, vector<16x8xf32> -> vector<16x8xf32>
    %87 = vector.broadcast %84 : vector<1x8xf32> to vector<16x8xf32>
    %88 = arith.addf %86, %87 : vector<16x8xf32>
    %c0_67 = arith.constant 0 : index
    %c0_68 = arith.constant 0 : index
    %c0_69 = arith.constant 0 : index
    %89 = vector.load %arg12[%c0_67, %c0_68, %c0_69] : memref<4x32x8xbf16, #tpu.memory_space<vmem>>, vector<1x32x8xbf16>
    %90 = vector.shape_cast %89 : vector<1x32x8xbf16> to vector<32x8xbf16>
    %c0_70 = arith.constant 0 : index
    %c0_71 = arith.constant 0 : index
    %c0_72 = arith.constant 0 : index
    %91 = vector.load %arg8[%c0_70, %c0_71, %c0_72] : memref<4x1x8xf32, #tpu.memory_space<vmem>>, vector<1x1x8xf32>
    %92 = vector.shape_cast %91 : vector<1x1x8xf32> to vector<1x8xf32>
    %93 = arith.truncf %72 : vector<16x32xf32> to vector<16x32xbf16>
    %cst_73 = arith.constant dense<0.000000e+00> : vector<16x8xf32>
    %94 = tpu.matmul %93, %90, %cst_73 {dimension_numbers = #tpu.dot_dimension_numbers<[1], [0], [0], [1], [0, 0, 1, 1], [], []>} : vector<16x32xbf16>, vector<32x8xbf16>, vector<16x8xf32> -> vector<16x8xf32>
    %95 = vector.broadcast %92 : vector<1x8xf32> to vector<16x8xf32>
    %96 = arith.addf %94, %95 : vector<16x8xf32>
    %97 = arith.truncf %80 : vector<16x8xf32> to vector<16x8xbf16>
    %98 = arith.truncf %88 : vector<16x8xf32> to vector<16x8xbf16>
    %cst_74 = arith.constant dense<0.000000e+00> : vector<16x16xf32>
    %99 = tpu.matmul %97, %98, %cst_74 {dimension_numbers = #tpu.dot_dimension_numbers<[1], [1], [0], [0], [0, 0, 1, 0], [], []>} : vector<16x8xbf16>, vector<16x8xbf16>, vector<16x16xf32> -> vector<16x16xf32>
    %cst_75 = arith.constant 0.353553385 : f32
    %100 = vector.broadcast %cst_75 : f32 to vector<16x16xf32>
    %101 = arith.mulf %99, %100 : vector<16x16xf32>
    %cst_76 = arith.constant dense<0xFF800000> : vector<16xf32>
    %102 = vector.multi_reduction <maximumf>, %101, %cst_76 [1] : vector<16x16xf32> to vector<16xf32>
    %103 = vector.shape_cast %102 : vector<16xf32> to vector<16x1xf32>
    %104 = vector.broadcast %103 : vector<16x1xf32> to vector<16x16xf32>
    %105 = arith.subf %101, %104 : vector<16x16xf32>
    %106 = math.exp %105 : vector<16x16xf32>
    %cst_77 = arith.constant dense<0.000000e+00> : vector<16xf32>
    %107 = vector.multi_reduction <add>, %106, %cst_77 [1] : vector<16x16xf32> to vector<16xf32>
    %108 = vector.shape_cast %107 : vector<16xf32> to vector<16x1xf32>
    %109 = tpu.reciprocal %108 {approx = true} : vector<16x1xf32> -> vector<16x1xf32>
    %110 = vector.broadcast %109 : vector<16x1xf32> to vector<16x16xf32>
    %111 = arith.mulf %106, %110 : vector<16x16xf32>
    %112 = arith.truncf %111 : vector<16x16xf32> to vector<16x16xbf16>
    %113 = arith.truncf %96 : vector<16x8xf32> to vector<16x8xbf16>
    %cst_78 = arith.constant dense<0.000000e+00> : vector<16x8xf32>
    %114 = tpu.matmul %112, %113, %cst_78 {dimension_numbers = #tpu.dot_dimension_numbers<[1], [0], [0], [1], [0, 0, 1, 1], [], []>} : vector<16x16xbf16>, vector<16x8xbf16>, vector<16x8xf32> -> vector<16x8xf32>
    %115 = arith.truncf %114 : vector<16x8xf32> to vector<16x8xbf16>
    %c0_79 = arith.constant 0 : index
    %c0_80 = arith.constant 0 : index
    %c0_81 = arith.constant 0 : index
    %116 = vector.load %arg10[%c0_79, %c0_80, %c0_81] : memref<4x8x32xbf16, #tpu.memory_space<vmem>>, vector<1x8x32xbf16>
    %117 = vector.shape_cast %116 : vector<1x8x32xbf16> to vector<8x32xbf16>
    %cst_82 = arith.constant dense<0.000000e+00> : vector<16x32xf32>
    %118 = tpu.matmul %115, %117, %cst_82 {dimension_numbers = #tpu.dot_dimension_numbers<[1], [0], [0], [1], [0, 0, 1, 1], [], []>} : vector<16x8xbf16>, vector<8x32xbf16>, vector<16x32xf32> -> vector<16x32xf32>
    %c1 = arith.constant 1 : index
    %c0_83 = arith.constant 0 : index
    %c0_84 = arith.constant 0 : index
    %119 = vector.load %arg11[%c1, %c0_83, %c0_84] : memref<4x32x8xbf16, #tpu.memory_space<vmem>>, vector<1x32x8xbf16>
    %120 = vector.shape_cast %119 : vector<1x32x8xbf16> to vector<32x8xbf16>
    %c1_85 = arith.constant 1 : index
    %c0_86 = arith.constant 0 : index
    %c0_87 = arith.constant 0 : index
    %121 = vector.load %arg7[%c1_85, %c0_86, %c0_87] : memref<4x1x8xf32, #tpu.memory_space<vmem>>, vector<1x1x8xf32>
    %122 = vector.shape_cast %121 : vector<1x1x8xf32> to vector<1x8xf32>
    %123 = arith.truncf %72 : vector<16x32xf32> to vector<16x32xbf16>
    %cst_88 = arith.constant dense<0.000000e+00> : vector<16x8xf32>
    %124 = tpu.matmul %123, %120, %cst_88 {dimension_numbers = #tpu.dot_dimension_numbers<[1], [0], [0], [1], [0, 0, 1, 1], [], []>} : vector<16x32xbf16>, vector<32x8xbf16>, vector<16x8xf32> -> vector<16x8xf32>
    %125 = vector.broadcast %122 : vector<1x8xf32> to vector<16x8xf32>
    %126 = arith.addf %124, %125 : vector<16x8xf32>
    %c1_89 = arith.constant 1 : index
    %c0_90 = arith.constant 0 : index
    %c0_91 = arith.constant 0 : index
    %127 = vector.load %arg9[%c1_89, %c0_90, %c0_91] : memref<4x32x8xbf16, #tpu.memory_space<vmem>>, vector<1x32x8xbf16>
    %128 = vector.shape_cast %127 : vector<1x32x8xbf16> to vector<32x8xbf16>
    %c1_92 = arith.constant 1 : index
    %c0_93 = arith.constant 0 : index
    %c0_94 = arith.constant 0 : index
    %129 = vector.load %arg5[%c1_92, %c0_93, %c0_94] : memref<4x1x8xf32, #tpu.memory_space<vmem>>, vector<1x1x8xf32>
    %130 = vector.shape_cast %129 : vector<1x1x8xf32> to vector<1x8xf32>
    %131 = arith.truncf %72 : vector<16x32xf32> to vector<16x32xbf16>
    %cst_95 = arith.constant dense<0.000000e+00> : vector<16x8xf32>
    %132 = tpu.matmul %131, %128, %cst_95 {dimension_numbers = #tpu.dot_dimension_numbers<[1], [0], [0], [1], [0, 0, 1, 1], [], []>} : vector<16x32xbf16>, vector<32x8xbf16>, vector<16x8xf32> -> vector<16x8xf32>
    %133 = vector.broadcast %130 : vector<1x8xf32> to vector<16x8xf32>
    %134 = arith.addf %132, %133 : vector<16x8xf32>
    %c1_96 = arith.constant 1 : index
    %c0_97 = arith.constant 0 : index
    %c0_98 = arith.constant 0 : index
    %135 = vector.load %arg12[%c1_96, %c0_97, %c0_98] : memref<4x32x8xbf16, #tpu.memory_space<vmem>>, vector<1x32x8xbf16>
    %136 = vector.shape_cast %135 : vector<1x32x8xbf16> to vector<32x8xbf16>
    %c1_99 = arith.constant 1 : index
    %c0_100 = arith.constant 0 : index
    %c0_101 = arith.constant 0 : index
    %137 = vector.load %arg8[%c1_99, %c0_100, %c0_101] : memref<4x1x8xf32, #tpu.memory_space<vmem>>, vector<1x1x8xf32>
    %138 = vector.shape_cast %137 : vector<1x1x8xf32> to vector<1x8xf32>
    %139 = arith.truncf %72 : vector<16x32xf32> to vector<16x32xbf16>
    %cst_102 = arith.constant dense<0.000000e+00> : vector<16x8xf32>
    %140 = tpu.matmul %139, %136, %cst_102 {dimension_numbers = #tpu.dot_dimension_numbers<[1], [0], [0], [1], [0, 0, 1, 1], [], []>} : vector<16x32xbf16>, vector<32x8xbf16>, vector<16x8xf32> -> vector<16x8xf32>
    %141 = vector.broadcast %138 : vector<1x8xf32> to vector<16x8xf32>
    %142 = arith.addf %140, %141 : vector<16x8xf32>
    %143 = arith.truncf %126 : vector<16x8xf32> to vector<16x8xbf16>
    %144 = arith.truncf %134 : vector<16x8xf32> to vector<16x8xbf16>
    %cst_103 = arith.constant dense<0.000000e+00> : vector<16x16xf32>
    %145 = tpu.matmul %143, %144, %cst_103 {dimension_numbers = #tpu.dot_dimension_numbers<[1], [1], [0], [0], [0, 0, 1, 0], [], []>} : vector<16x8xbf16>, vector<16x8xbf16>, vector<16x16xf32> -> vector<16x16xf32>
    %cst_104 = arith.constant 0.353553385 : f32
    %146 = vector.broadcast %cst_104 : f32 to vector<16x16xf32>
    %147 = arith.mulf %145, %146 : vector<16x16xf32>
    %cst_105 = arith.constant dense<0xFF800000> : vector<16xf32>
    %148 = vector.multi_reduction <maximumf>, %147, %cst_105 [1] : vector<16x16xf32> to vector<16xf32>
    %149 = vector.shape_cast %148 : vector<16xf32> to vector<16x1xf32>
    %150 = vector.broadcast %149 : vector<16x1xf32> to vector<16x16xf32>
    %151 = arith.subf %147, %150 : vector<16x16xf32>
    %152 = math.exp %151 : vector<16x16xf32>
    %cst_106 = arith.constant dense<0.000000e+00> : vector<16xf32>
    %153 = vector.multi_reduction <add>, %152, %cst_106 [1] : vector<16x16xf32> to vector<16xf32>
    %154 = vector.shape_cast %153 : vector<16xf32> to vector<16x1xf32>
    %155 = tpu.reciprocal %154 {approx = true} : vector<16x1xf32> -> vector<16x1xf32>
    %156 = vector.broadcast %155 : vector<16x1xf32> to vector<16x16xf32>
    %157 = arith.mulf %152, %156 : vector<16x16xf32>
    %158 = arith.truncf %157 : vector<16x16xf32> to vector<16x16xbf16>
    %159 = arith.truncf %142 : vector<16x8xf32> to vector<16x8xbf16>
    %cst_107 = arith.constant dense<0.000000e+00> : vector<16x8xf32>
    %160 = tpu.matmul %158, %159, %cst_107 {dimension_numbers = #tpu.dot_dimension_numbers<[1], [0], [0], [1], [0, 0, 1, 1], [], []>} : vector<16x16xbf16>, vector<16x8xbf16>, vector<16x8xf32> -> vector<16x8xf32>
    %161 = arith.truncf %160 : vector<16x8xf32> to vector<16x8xbf16>
    %c1_108 = arith.constant 1 : index
    %c0_109 = arith.constant 0 : index
    %c0_110 = arith.constant 0 : index
    %162 = vector.load %arg10[%c1_108, %c0_109, %c0_110] : memref<4x8x32xbf16, #tpu.memory_space<vmem>>, vector<1x8x32xbf16>
    %163 = vector.shape_cast %162 : vector<1x8x32xbf16> to vector<8x32xbf16>
    %cst_111 = arith.constant dense<0.000000e+00> : vector<16x32xf32>
    %164 = tpu.matmul %161, %163, %cst_111 {dimension_numbers = #tpu.dot_dimension_numbers<[1], [0], [0], [1], [0, 0, 1, 1], [], []>} : vector<16x8xbf16>, vector<8x32xbf16>, vector<16x32xf32> -> vector<16x32xf32>
    %165 = arith.addf %118, %164 : vector<16x32xf32>
    %c2 = arith.constant 2 : index
    %c0_112 = arith.constant 0 : index
    %c0_113 = arith.constant 0 : index
    %166 = vector.load %arg11[%c2, %c0_112, %c0_113] : memref<4x32x8xbf16, #tpu.memory_space<vmem>>, vector<1x32x8xbf16>
    %167 = vector.shape_cast %166 : vector<1x32x8xbf16> to vector<32x8xbf16>
    %c2_114 = arith.constant 2 : index
    %c0_115 = arith.constant 0 : index
    %c0_116 = arith.constant 0 : index
    %168 = vector.load %arg7[%c2_114, %c0_115, %c0_116] : memref<4x1x8xf32, #tpu.memory_space<vmem>>, vector<1x1x8xf32>
    %169 = vector.shape_cast %168 : vector<1x1x8xf32> to vector<1x8xf32>
    %170 = arith.truncf %72 : vector<16x32xf32> to vector<16x32xbf16>
    %cst_117 = arith.constant dense<0.000000e+00> : vector<16x8xf32>
    %171 = tpu.matmul %170, %167, %cst_117 {dimension_numbers = #tpu.dot_dimension_numbers<[1], [0], [0], [1], [0, 0, 1, 1], [], []>} : vector<16x32xbf16>, vector<32x8xbf16>, vector<16x8xf32> -> vector<16x8xf32>
    %172 = vector.broadcast %169 : vector<1x8xf32> to vector<16x8xf32>
    %173 = arith.addf %171, %172 : vector<16x8xf32>
    %c2_118 = arith.constant 2 : index
    %c0_119 = arith.constant 0 : index
    %c0_120 = arith.constant 0 : index
    %174 = vector.load %arg9[%c2_118, %c0_119, %c0_120] : memref<4x32x8xbf16, #tpu.memory_space<vmem>>, vector<1x32x8xbf16>
    %175 = vector.shape_cast %174 : vector<1x32x8xbf16> to vector<32x8xbf16>
    %c2_121 = arith.constant 2 : index
    %c0_122 = arith.constant 0 : index
    %c0_123 = arith.constant 0 : index
    %176 = vector.load %arg5[%c2_121, %c0_122, %c0_123] : memref<4x1x8xf32, #tpu.memory_space<vmem>>, vector<1x1x8xf32>
    %177 = vector.shape_cast %176 : vector<1x1x8xf32> to vector<1x8xf32>
    %178 = arith.truncf %72 : vector<16x32xf32> to vector<16x32xbf16>
    %cst_124 = arith.constant dense<0.000000e+00> : vector<16x8xf32>
    %179 = tpu.matmul %178, %175, %cst_124 {dimension_numbers = #tpu.dot_dimension_numbers<[1], [0], [0], [1], [0, 0, 1, 1], [], []>} : vector<16x32xbf16>, vector<32x8xbf16>, vector<16x8xf32> -> vector<16x8xf32>
    %180 = vector.broadcast %177 : vector<1x8xf32> to vector<16x8xf32>
    %181 = arith.addf %179, %180 : vector<16x8xf32>
    %c2_125 = arith.constant 2 : index
    %c0_126 = arith.constant 0 : index
    %c0_127 = arith.constant 0 : index
    %182 = vector.load %arg12[%c2_125, %c0_126, %c0_127] : memref<4x32x8xbf16, #tpu.memory_space<vmem>>, vector<1x32x8xbf16>
    %183 = vector.shape_cast %182 : vector<1x32x8xbf16> to vector<32x8xbf16>
    %c2_128 = arith.constant 2 : index
    %c0_129 = arith.constant 0 : index
    %c0_130 = arith.constant 0 : index
    %184 = vector.load %arg8[%c2_128, %c0_129, %c0_130] : memref<4x1x8xf32, #tpu.memory_space<vmem>>, vector<1x1x8xf32>
    %185 = vector.shape_cast %184 : vector<1x1x8xf32> to vector<1x8xf32>
    %186 = arith.truncf %72 : vector<16x32xf32> to vector<16x32xbf16>
    %cst_131 = arith.constant dense<0.000000e+00> : vector<16x8xf32>
    %187 = tpu.matmul %186, %183, %cst_131 {dimension_numbers = #tpu.dot_dimension_numbers<[1], [0], [0], [1], [0, 0, 1, 1], [], []>} : vector<16x32xbf16>, vector<32x8xbf16>, vector<16x8xf32> -> vector<16x8xf32>
    %188 = vector.broadcast %185 : vector<1x8xf32> to vector<16x8xf32>
    %189 = arith.addf %187, %188 : vector<16x8xf32>
    %190 = arith.truncf %173 : vector<16x8xf32> to vector<16x8xbf16>
    %191 = arith.truncf %181 : vector<16x8xf32> to vector<16x8xbf16>
    %cst_132 = arith.constant dense<0.000000e+00> : vector<16x16xf32>
    %192 = tpu.matmul %190, %191, %cst_132 {dimension_numbers = #tpu.dot_dimension_numbers<[1], [1], [0], [0], [0, 0, 1, 0], [], []>} : vector<16x8xbf16>, vector<16x8xbf16>, vector<16x16xf32> -> vector<16x16xf32>
    %cst_133 = arith.constant 0.353553385 : f32
    %193 = vector.broadcast %cst_133 : f32 to vector<16x16xf32>
    %194 = arith.mulf %192, %193 : vector<16x16xf32>
    %cst_134 = arith.constant dense<0xFF800000> : vector<16xf32>
    %195 = vector.multi_reduction <maximumf>, %194, %cst_134 [1] : vector<16x16xf32> to vector<16xf32>
    %196 = vector.shape_cast %195 : vector<16xf32> to vector<16x1xf32>
    %197 = vector.broadcast %196 : vector<16x1xf32> to vector<16x16xf32>
    %198 = arith.subf %194, %197 : vector<16x16xf32>
    %199 = math.exp %198 : vector<16x16xf32>
    %cst_135 = arith.constant dense<0.000000e+00> : vector<16xf32>
    %200 = vector.multi_reduction <add>, %199, %cst_135 [1] : vector<16x16xf32> to vector<16xf32>
    %201 = vector.shape_cast %200 : vector<16xf32> to vector<16x1xf32>
    %202 = tpu.reciprocal %201 {approx = true} : vector<16x1xf32> -> vector<16x1xf32>
    %203 = vector.broadcast %202 : vector<16x1xf32> to vector<16x16xf32>
    %204 = arith.mulf %199, %203 : vector<16x16xf32>
    %205 = arith.truncf %204 : vector<16x16xf32> to vector<16x16xbf16>
    %206 = arith.truncf %189 : vector<16x8xf32> to vector<16x8xbf16>
    %cst_136 = arith.constant dense<0.000000e+00> : vector<16x8xf32>
    %207 = tpu.matmul %205, %206, %cst_136 {dimension_numbers = #tpu.dot_dimension_numbers<[1], [0], [0], [1], [0, 0, 1, 1], [], []>} : vector<16x16xbf16>, vector<16x8xbf16>, vector<16x8xf32> -> vector<16x8xf32>
    %208 = arith.truncf %207 : vector<16x8xf32> to vector<16x8xbf16>
    %c2_137 = arith.constant 2 : index
    %c0_138 = arith.constant 0 : index
    %c0_139 = arith.constant 0 : index
    %209 = vector.load %arg10[%c2_137, %c0_138, %c0_139] : memref<4x8x32xbf16, #tpu.memory_space<vmem>>, vector<1x8x32xbf16>
    %210 = vector.shape_cast %209 : vector<1x8x32xbf16> to vector<8x32xbf16>
    %cst_140 = arith.constant dense<0.000000e+00> : vector<16x32xf32>
    %211 = tpu.matmul %208, %210, %cst_140 {dimension_numbers = #tpu.dot_dimension_numbers<[1], [0], [0], [1], [0, 0, 1, 1], [], []>} : vector<16x8xbf16>, vector<8x32xbf16>, vector<16x32xf32> -> vector<16x32xf32>
    %212 = arith.addf %165, %211 : vector<16x32xf32>
    %c3 = arith.constant 3 : index
    %c0_141 = arith.constant 0 : index
    %c0_142 = arith.constant 0 : index
    %213 = vector.load %arg11[%c3, %c0_141, %c0_142] : memref<4x32x8xbf16, #tpu.memory_space<vmem>>, vector<1x32x8xbf16>
    %214 = vector.shape_cast %213 : vector<1x32x8xbf16> to vector<32x8xbf16>
    %c3_143 = arith.constant 3 : index
    %c0_144 = arith.constant 0 : index
    %c0_145 = arith.constant 0 : index
    %215 = vector.load %arg7[%c3_143, %c0_144, %c0_145] : memref<4x1x8xf32, #tpu.memory_space<vmem>>, vector<1x1x8xf32>
    %216 = vector.shape_cast %215 : vector<1x1x8xf32> to vector<1x8xf32>
    %217 = arith.truncf %72 : vector<16x32xf32> to vector<16x32xbf16>
    %cst_146 = arith.constant dense<0.000000e+00> : vector<16x8xf32>
    %218 = tpu.matmul %217, %214, %cst_146 {dimension_numbers = #tpu.dot_dimension_numbers<[1], [0], [0], [1], [0, 0, 1, 1], [], []>} : vector<16x32xbf16>, vector<32x8xbf16>, vector<16x8xf32> -> vector<16x8xf32>
    %219 = vector.broadcast %216 : vector<1x8xf32> to vector<16x8xf32>
    %220 = arith.addf %218, %219 : vector<16x8xf32>
    %c3_147 = arith.constant 3 : index
    %c0_148 = arith.constant 0 : index
    %c0_149 = arith.constant 0 : index
    %221 = vector.load %arg9[%c3_147, %c0_148, %c0_149] : memref<4x32x8xbf16, #tpu.memory_space<vmem>>, vector<1x32x8xbf16>
    %222 = vector.shape_cast %221 : vector<1x32x8xbf16> to vector<32x8xbf16>
    %c3_150 = arith.constant 3 : index
    %c0_151 = arith.constant 0 : index
    %c0_152 = arith.constant 0 : index
    %223 = vector.load %arg5[%c3_150, %c0_151, %c0_152] : memref<4x1x8xf32, #tpu.memory_space<vmem>>, vector<1x1x8xf32>
    %224 = vector.shape_cast %223 : vector<1x1x8xf32> to vector<1x8xf32>
    %225 = arith.truncf %72 : vector<16x32xf32> to vector<16x32xbf16>
    %cst_153 = arith.constant dense<0.000000e+00> : vector<16x8xf32>
    %226 = tpu.matmul %225, %222, %cst_153 {dimension_numbers = #tpu.dot_dimension_numbers<[1], [0], [0], [1], [0, 0, 1, 1], [], []>} : vector<16x32xbf16>, vector<32x8xbf16>, vector<16x8xf32> -> vector<16x8xf32>
    %227 = vector.broadcast %224 : vector<1x8xf32> to vector<16x8xf32>
    %228 = arith.addf %226, %227 : vector<16x8xf32>
    %c3_154 = arith.constant 3 : index
    %c0_155 = arith.constant 0 : index
    %c0_156 = arith.constant 0 : index
    %229 = vector.load %arg12[%c3_154, %c0_155, %c0_156] : memref<4x32x8xbf16, #tpu.memory_space<vmem>>, vector<1x32x8xbf16>
    %230 = vector.shape_cast %229 : vector<1x32x8xbf16> to vector<32x8xbf16>
    %c3_157 = arith.constant 3 : index
    %c0_158 = arith.constant 0 : index
    %c0_159 = arith.constant 0 : index
    %231 = vector.load %arg8[%c3_157, %c0_158, %c0_159] : memref<4x1x8xf32, #tpu.memory_space<vmem>>, vector<1x1x8xf32>
    %232 = vector.shape_cast %231 : vector<1x1x8xf32> to vector<1x8xf32>
    %233 = arith.truncf %72 : vector<16x32xf32> to vector<16x32xbf16>
    %cst_160 = arith.constant dense<0.000000e+00> : vector<16x8xf32>
    %234 = tpu.matmul %233, %230, %cst_160 {dimension_numbers = #tpu.dot_dimension_numbers<[1], [0], [0], [1], [0, 0, 1, 1], [], []>} : vector<16x32xbf16>, vector<32x8xbf16>, vector<16x8xf32> -> vector<16x8xf32>
    %235 = vector.broadcast %232 : vector<1x8xf32> to vector<16x8xf32>
    %236 = arith.addf %234, %235 : vector<16x8xf32>
    %237 = arith.truncf %220 : vector<16x8xf32> to vector<16x8xbf16>
    %238 = arith.truncf %228 : vector<16x8xf32> to vector<16x8xbf16>
    %cst_161 = arith.constant dense<0.000000e+00> : vector<16x16xf32>
    %239 = tpu.matmul %237, %238, %cst_161 {dimension_numbers = #tpu.dot_dimension_numbers<[1], [1], [0], [0], [0, 0, 1, 0], [], []>} : vector<16x8xbf16>, vector<16x8xbf16>, vector<16x16xf32> -> vector<16x16xf32>
    %cst_162 = arith.constant 0.353553385 : f32
    %240 = vector.broadcast %cst_162 : f32 to vector<16x16xf32>
    %241 = arith.mulf %239, %240 : vector<16x16xf32>
    %cst_163 = arith.constant dense<0xFF800000> : vector<16xf32>
    %242 = vector.multi_reduction <maximumf>, %241, %cst_163 [1] : vector<16x16xf32> to vector<16xf32>
    %243 = vector.shape_cast %242 : vector<16xf32> to vector<16x1xf32>
    %244 = vector.broadcast %243 : vector<16x1xf32> to vector<16x16xf32>
    %245 = arith.subf %241, %244 : vector<16x16xf32>
    %246 = math.exp %245 : vector<16x16xf32>
    %cst_164 = arith.constant dense<0.000000e+00> : vector<16xf32>
    %247 = vector.multi_reduction <add>, %246, %cst_164 [1] : vector<16x16xf32> to vector<16xf32>
    %248 = vector.shape_cast %247 : vector<16xf32> to vector<16x1xf32>
    %249 = tpu.reciprocal %248 {approx = true} : vector<16x1xf32> -> vector<16x1xf32>
    %250 = vector.broadcast %249 : vector<16x1xf32> to vector<16x16xf32>
    %251 = arith.mulf %246, %250 : vector<16x16xf32>
    %252 = arith.truncf %251 : vector<16x16xf32> to vector<16x16xbf16>
    %253 = arith.truncf %236 : vector<16x8xf32> to vector<16x8xbf16>
    %cst_165 = arith.constant dense<0.000000e+00> : vector<16x8xf32>
    %254 = tpu.matmul %252, %253, %cst_165 {dimension_numbers = #tpu.dot_dimension_numbers<[1], [0], [0], [1], [0, 0, 1, 1], [], []>} : vector<16x16xbf16>, vector<16x8xbf16>, vector<16x8xf32> -> vector<16x8xf32>
    %255 = arith.truncf %254 : vector<16x8xf32> to vector<16x8xbf16>
    %c3_166 = arith.constant 3 : index
    %c0_167 = arith.constant 0 : index
    %c0_168 = arith.constant 0 : index
    %256 = vector.load %arg10[%c3_166, %c0_167, %c0_168] : memref<4x8x32xbf16, #tpu.memory_space<vmem>>, vector<1x8x32xbf16>
    %257 = vector.shape_cast %256 : vector<1x8x32xbf16> to vector<8x32xbf16>
    %cst_169 = arith.constant dense<0.000000e+00> : vector<16x32xf32>
    %258 = tpu.matmul %255, %257, %cst_169 {dimension_numbers = #tpu.dot_dimension_numbers<[1], [0], [0], [1], [0, 0, 1, 1], [], []>} : vector<16x8xbf16>, vector<8x32xbf16>, vector<16x32xf32> -> vector<16x32xf32>
    %259 = arith.addf %212, %258 : vector<16x32xf32>
    %c0_170 = arith.constant 0 : index
    %c0_171 = arith.constant 0 : index
    %260 = vector.load %arg6[%c0_170, %c0_171] : memref<1x32xf32, #tpu.memory_space<vmem>>, vector<1x32xf32>
    %261 = vector.broadcast %260 : vector<1x32xf32> to vector<16x32xf32>
    %262 = arith.addf %259, %261 : vector<16x32xf32>
    %c0_172 = arith.constant 0 : index
    %c0_173 = arith.constant 0 : index
    %c0_174 = arith.constant 0 : index
    %263 = vector.load %arg27[%c0_172, %c0_173, %c0_174] : memref<4x32x8xbf16, #tpu.memory_space<vmem>>, vector<1x32x8xbf16>
    %264 = vector.shape_cast %263 : vector<1x32x8xbf16> to vector<32x8xbf16>
    %c0_175 = arith.constant 0 : index
    %c0_176 = arith.constant 0 : index
    %c0_177 = arith.constant 0 : index
    %265 = vector.load %arg23[%c0_175, %c0_176, %c0_177] : memref<4x1x8xf32, #tpu.memory_space<vmem>>, vector<1x1x8xf32>
    %266 = vector.shape_cast %265 : vector<1x1x8xf32> to vector<1x8xf32>
    %267 = arith.truncf %262 : vector<16x32xf32> to vector<16x32xbf16>
    %cst_178 = arith.constant dense<0.000000e+00> : vector<16x8xf32>
    %268 = tpu.matmul %267, %264, %cst_178 {dimension_numbers = #tpu.dot_dimension_numbers<[1], [0], [0], [1], [0, 0, 1, 1], [], []>} : vector<16x32xbf16>, vector<32x8xbf16>, vector<16x8xf32> -> vector<16x8xf32>
    %269 = vector.broadcast %266 : vector<1x8xf32> to vector<16x8xf32>
    %270 = arith.addf %268, %269 : vector<16x8xf32>
    %c0_179 = arith.constant 0 : index
    %c0_180 = arith.constant 0 : index
    %c0_181 = arith.constant 0 : index
    %271 = vector.load %arg25[%c0_179, %c0_180, %c0_181] : memref<4x32x8xbf16, #tpu.memory_space<vmem>>, vector<1x32x8xbf16>
    %272 = vector.shape_cast %271 : vector<1x32x8xbf16> to vector<32x8xbf16>
    %c0_182 = arith.constant 0 : index
    %c0_183 = arith.constant 0 : index
    %c0_184 = arith.constant 0 : index
    %273 = vector.load %arg21[%c0_182, %c0_183, %c0_184] : memref<4x1x8xf32, #tpu.memory_space<vmem>>, vector<1x1x8xf32>
    %274 = vector.shape_cast %273 : vector<1x1x8xf32> to vector<1x8xf32>
    %275 = arith.truncf %70 : vector<16x32xf32> to vector<16x32xbf16>
    %cst_185 = arith.constant dense<0.000000e+00> : vector<16x8xf32>
    %276 = tpu.matmul %275, %272, %cst_185 {dimension_numbers = #tpu.dot_dimension_numbers<[1], [0], [0], [1], [0, 0, 1, 1], [], []>} : vector<16x32xbf16>, vector<32x8xbf16>, vector<16x8xf32> -> vector<16x8xf32>
    %277 = vector.broadcast %274 : vector<1x8xf32> to vector<16x8xf32>
    %278 = arith.addf %276, %277 : vector<16x8xf32>
    %c0_186 = arith.constant 0 : index
    %c0_187 = arith.constant 0 : index
    %c0_188 = arith.constant 0 : index
    %279 = vector.load %arg28[%c0_186, %c0_187, %c0_188] : memref<4x32x8xbf16, #tpu.memory_space<vmem>>, vector<1x32x8xbf16>
    %280 = vector.shape_cast %279 : vector<1x32x8xbf16> to vector<32x8xbf16>
    %c0_189 = arith.constant 0 : index
    %c0_190 = arith.constant 0 : index
    %c0_191 = arith.constant 0 : index
    %281 = vector.load %arg24[%c0_189, %c0_190, %c0_191] : memref<4x1x8xf32, #tpu.memory_space<vmem>>, vector<1x1x8xf32>
    %282 = vector.shape_cast %281 : vector<1x1x8xf32> to vector<1x8xf32>
    %283 = arith.truncf %70 : vector<16x32xf32> to vector<16x32xbf16>
    %cst_192 = arith.constant dense<0.000000e+00> : vector<16x8xf32>
    %284 = tpu.matmul %283, %280, %cst_192 {dimension_numbers = #tpu.dot_dimension_numbers<[1], [0], [0], [1], [0, 0, 1, 1], [], []>} : vector<16x32xbf16>, vector<32x8xbf16>, vector<16x8xf32> -> vector<16x8xf32>
    %285 = vector.broadcast %282 : vector<1x8xf32> to vector<16x8xf32>
    %286 = arith.addf %284, %285 : vector<16x8xf32>
    %287 = arith.truncf %270 : vector<16x8xf32> to vector<16x8xbf16>
    %288 = arith.truncf %278 : vector<16x8xf32> to vector<16x8xbf16>
    %cst_193 = arith.constant dense<0.000000e+00> : vector<16x16xf32>
    %289 = tpu.matmul %287, %288, %cst_193 {dimension_numbers = #tpu.dot_dimension_numbers<[1], [1], [0], [0], [0, 0, 1, 0], [], []>} : vector<16x8xbf16>, vector<16x8xbf16>, vector<16x16xf32> -> vector<16x16xf32>
    %cst_194 = arith.constant 0.353553385 : f32
    %290 = vector.broadcast %cst_194 : f32 to vector<16x16xf32>
    %291 = arith.mulf %289, %290 : vector<16x16xf32>
    %cst_195 = arith.constant dense<0xFF800000> : vector<16xf32>
    %292 = vector.multi_reduction <maximumf>, %291, %cst_195 [1] : vector<16x16xf32> to vector<16xf32>
    %293 = vector.shape_cast %292 : vector<16xf32> to vector<16x1xf32>
    %294 = vector.broadcast %293 : vector<16x1xf32> to vector<16x16xf32>
    %295 = arith.subf %291, %294 : vector<16x16xf32>
    %296 = math.exp %295 : vector<16x16xf32>
    %cst_196 = arith.constant dense<0.000000e+00> : vector<16xf32>
    %297 = vector.multi_reduction <add>, %296, %cst_196 [1] : vector<16x16xf32> to vector<16xf32>
    %298 = vector.shape_cast %297 : vector<16xf32> to vector<16x1xf32>
    %299 = tpu.reciprocal %298 {approx = true} : vector<16x1xf32> -> vector<16x1xf32>
    %300 = vector.broadcast %299 : vector<16x1xf32> to vector<16x16xf32>
    %301 = arith.mulf %296, %300 : vector<16x16xf32>
    %302 = arith.truncf %301 : vector<16x16xf32> to vector<16x16xbf16>
    %303 = arith.truncf %286 : vector<16x8xf32> to vector<16x8xbf16>
    %cst_197 = arith.constant dense<0.000000e+00> : vector<16x8xf32>
    %304 = tpu.matmul %302, %303, %cst_197 {dimension_numbers = #tpu.dot_dimension_numbers<[1], [0], [0], [1], [0, 0, 1, 1], [], []>} : vector<16x16xbf16>, vector<16x8xbf16>, vector<16x8xf32> -> vector<16x8xf32>
    %305 = arith.truncf %304 : vector<16x8xf32> to vector<16x8xbf16>
    %c0_198 = arith.constant 0 : index
    %c0_199 = arith.constant 0 : index
    %c0_200 = arith.constant 0 : index
    %306 = vector.load %arg26[%c0_198, %c0_199, %c0_200] : memref<4x8x32xbf16, #tpu.memory_space<vmem>>, vector<1x8x32xbf16>
    %307 = vector.shape_cast %306 : vector<1x8x32xbf16> to vector<8x32xbf16>
    %cst_201 = arith.constant dense<0.000000e+00> : vector<16x32xf32>
    %308 = tpu.matmul %305, %307, %cst_201 {dimension_numbers = #tpu.dot_dimension_numbers<[1], [0], [0], [1], [0, 0, 1, 1], [], []>} : vector<16x8xbf16>, vector<8x32xbf16>, vector<16x32xf32> -> vector<16x32xf32>
    %c1_202 = arith.constant 1 : index
    %c0_203 = arith.constant 0 : index
    %c0_204 = arith.constant 0 : index
    %309 = vector.load %arg27[%c1_202, %c0_203, %c0_204] : memref<4x32x8xbf16, #tpu.memory_space<vmem>>, vector<1x32x8xbf16>
    %310 = vector.shape_cast %309 : vector<1x32x8xbf16> to vector<32x8xbf16>
    %c1_205 = arith.constant 1 : index
    %c0_206 = arith.constant 0 : index
    %c0_207 = arith.constant 0 : index
    %311 = vector.load %arg23[%c1_205, %c0_206, %c0_207] : memref<4x1x8xf32, #tpu.memory_space<vmem>>, vector<1x1x8xf32>
    %312 = vector.shape_cast %311 : vector<1x1x8xf32> to vector<1x8xf32>
    %313 = arith.truncf %262 : vector<16x32xf32> to vector<16x32xbf16>
    %cst_208 = arith.constant dense<0.000000e+00> : vector<16x8xf32>
    %314 = tpu.matmul %313, %310, %cst_208 {dimension_numbers = #tpu.dot_dimension_numbers<[1], [0], [0], [1], [0, 0, 1, 1], [], []>} : vector<16x32xbf16>, vector<32x8xbf16>, vector<16x8xf32> -> vector<16x8xf32>
    %315 = vector.broadcast %312 : vector<1x8xf32> to vector<16x8xf32>
    %316 = arith.addf %314, %315 : vector<16x8xf32>
    %c1_209 = arith.constant 1 : index
    %c0_210 = arith.constant 0 : index
    %c0_211 = arith.constant 0 : index
    %317 = vector.load %arg25[%c1_209, %c0_210, %c0_211] : memref<4x32x8xbf16, #tpu.memory_space<vmem>>, vector<1x32x8xbf16>
    %318 = vector.shape_cast %317 : vector<1x32x8xbf16> to vector<32x8xbf16>
    %c1_212 = arith.constant 1 : index
    %c0_213 = arith.constant 0 : index
    %c0_214 = arith.constant 0 : index
    %319 = vector.load %arg21[%c1_212, %c0_213, %c0_214] : memref<4x1x8xf32, #tpu.memory_space<vmem>>, vector<1x1x8xf32>
    %320 = vector.shape_cast %319 : vector<1x1x8xf32> to vector<1x8xf32>
    %321 = arith.truncf %70 : vector<16x32xf32> to vector<16x32xbf16>
    %cst_215 = arith.constant dense<0.000000e+00> : vector<16x8xf32>
    %322 = tpu.matmul %321, %318, %cst_215 {dimension_numbers = #tpu.dot_dimension_numbers<[1], [0], [0], [1], [0, 0, 1, 1], [], []>} : vector<16x32xbf16>, vector<32x8xbf16>, vector<16x8xf32> -> vector<16x8xf32>
    %323 = vector.broadcast %320 : vector<1x8xf32> to vector<16x8xf32>
    %324 = arith.addf %322, %323 : vector<16x8xf32>
    %c1_216 = arith.constant 1 : index
    %c0_217 = arith.constant 0 : index
    %c0_218 = arith.constant 0 : index
    %325 = vector.load %arg28[%c1_216, %c0_217, %c0_218] : memref<4x32x8xbf16, #tpu.memory_space<vmem>>, vector<1x32x8xbf16>
    %326 = vector.shape_cast %325 : vector<1x32x8xbf16> to vector<32x8xbf16>
    %c1_219 = arith.constant 1 : index
    %c0_220 = arith.constant 0 : index
    %c0_221 = arith.constant 0 : index
    %327 = vector.load %arg24[%c1_219, %c0_220, %c0_221] : memref<4x1x8xf32, #tpu.memory_space<vmem>>, vector<1x1x8xf32>
    %328 = vector.shape_cast %327 : vector<1x1x8xf32> to vector<1x8xf32>
    %329 = arith.truncf %70 : vector<16x32xf32> to vector<16x32xbf16>
    %cst_222 = arith.constant dense<0.000000e+00> : vector<16x8xf32>
    %330 = tpu.matmul %329, %326, %cst_222 {dimension_numbers = #tpu.dot_dimension_numbers<[1], [0], [0], [1], [0, 0, 1, 1], [], []>} : vector<16x32xbf16>, vector<32x8xbf16>, vector<16x8xf32> -> vector<16x8xf32>
    %331 = vector.broadcast %328 : vector<1x8xf32> to vector<16x8xf32>
    %332 = arith.addf %330, %331 : vector<16x8xf32>
    %333 = arith.truncf %316 : vector<16x8xf32> to vector<16x8xbf16>
    %334 = arith.truncf %324 : vector<16x8xf32> to vector<16x8xbf16>
    %cst_223 = arith.constant dense<0.000000e+00> : vector<16x16xf32>
    %335 = tpu.matmul %333, %334, %cst_223 {dimension_numbers = #tpu.dot_dimension_numbers<[1], [1], [0], [0], [0, 0, 1, 0], [], []>} : vector<16x8xbf16>, vector<16x8xbf16>, vector<16x16xf32> -> vector<16x16xf32>
    %cst_224 = arith.constant 0.353553385 : f32
    %336 = vector.broadcast %cst_224 : f32 to vector<16x16xf32>
    %337 = arith.mulf %335, %336 : vector<16x16xf32>
    %cst_225 = arith.constant dense<0xFF800000> : vector<16xf32>
    %338 = vector.multi_reduction <maximumf>, %337, %cst_225 [1] : vector<16x16xf32> to vector<16xf32>
    %339 = vector.shape_cast %338 : vector<16xf32> to vector<16x1xf32>
    %340 = vector.broadcast %339 : vector<16x1xf32> to vector<16x16xf32>
    %341 = arith.subf %337, %340 : vector<16x16xf32>
    %342 = math.exp %341 : vector<16x16xf32>
    %cst_226 = arith.constant dense<0.000000e+00> : vector<16xf32>
    %343 = vector.multi_reduction <add>, %342, %cst_226 [1] : vector<16x16xf32> to vector<16xf32>
    %344 = vector.shape_cast %343 : vector<16xf32> to vector<16x1xf32>
    %345 = tpu.reciprocal %344 {approx = true} : vector<16x1xf32> -> vector<16x1xf32>
    %346 = vector.broadcast %345 : vector<16x1xf32> to vector<16x16xf32>
    %347 = arith.mulf %342, %346 : vector<16x16xf32>
    %348 = arith.truncf %347 : vector<16x16xf32> to vector<16x16xbf16>
    %349 = arith.truncf %332 : vector<16x8xf32> to vector<16x8xbf16>
    %cst_227 = arith.constant dense<0.000000e+00> : vector<16x8xf32>
    %350 = tpu.matmul %348, %349, %cst_227 {dimension_numbers = #tpu.dot_dimension_numbers<[1], [0], [0], [1], [0, 0, 1, 1], [], []>} : vector<16x16xbf16>, vector<16x8xbf16>, vector<16x8xf32> -> vector<16x8xf32>
    %351 = arith.truncf %350 : vector<16x8xf32> to vector<16x8xbf16>
    %c1_228 = arith.constant 1 : index
    %c0_229 = arith.constant 0 : index
    %c0_230 = arith.constant 0 : index
    %352 = vector.load %arg26[%c1_228, %c0_229, %c0_230] : memref<4x8x32xbf16, #tpu.memory_space<vmem>>, vector<1x8x32xbf16>
    %353 = vector.shape_cast %352 : vector<1x8x32xbf16> to vector<8x32xbf16>
    %cst_231 = arith.constant dense<0.000000e+00> : vector<16x32xf32>
    %354 = tpu.matmul %351, %353, %cst_231 {dimension_numbers = #tpu.dot_dimension_numbers<[1], [0], [0], [1], [0, 0, 1, 1], [], []>} : vector<16x8xbf16>, vector<8x32xbf16>, vector<16x32xf32> -> vector<16x32xf32>
    %355 = arith.addf %308, %354 : vector<16x32xf32>
    %c2_232 = arith.constant 2 : index
    %c0_233 = arith.constant 0 : index
    %c0_234 = arith.constant 0 : index
    %356 = vector.load %arg27[%c2_232, %c0_233, %c0_234] : memref<4x32x8xbf16, #tpu.memory_space<vmem>>, vector<1x32x8xbf16>
    %357 = vector.shape_cast %356 : vector<1x32x8xbf16> to vector<32x8xbf16>
    %c2_235 = arith.constant 2 : index
    %c0_236 = arith.constant 0 : index
    %c0_237 = arith.constant 0 : index
    %358 = vector.load %arg23[%c2_235, %c0_236, %c0_237] : memref<4x1x8xf32, #tpu.memory_space<vmem>>, vector<1x1x8xf32>
    %359 = vector.shape_cast %358 : vector<1x1x8xf32> to vector<1x8xf32>
    %360 = arith.truncf %262 : vector<16x32xf32> to vector<16x32xbf16>
    %cst_238 = arith.constant dense<0.000000e+00> : vector<16x8xf32>
    %361 = tpu.matmul %360, %357, %cst_238 {dimension_numbers = #tpu.dot_dimension_numbers<[1], [0], [0], [1], [0, 0, 1, 1], [], []>} : vector<16x32xbf16>, vector<32x8xbf16>, vector<16x8xf32> -> vector<16x8xf32>
    %362 = vector.broadcast %359 : vector<1x8xf32> to vector<16x8xf32>
    %363 = arith.addf %361, %362 : vector<16x8xf32>
    %c2_239 = arith.constant 2 : index
    %c0_240 = arith.constant 0 : index
    %c0_241 = arith.constant 0 : index
    %364 = vector.load %arg25[%c2_239, %c0_240, %c0_241] : memref<4x32x8xbf16, #tpu.memory_space<vmem>>, vector<1x32x8xbf16>
    %365 = vector.shape_cast %364 : vector<1x32x8xbf16> to vector<32x8xbf16>
    %c2_242 = arith.constant 2 : index
    %c0_243 = arith.constant 0 : index
    %c0_244 = arith.constant 0 : index
    %366 = vector.load %arg21[%c2_242, %c0_243, %c0_244] : memref<4x1x8xf32, #tpu.memory_space<vmem>>, vector<1x1x8xf32>
    %367 = vector.shape_cast %366 : vector<1x1x8xf32> to vector<1x8xf32>
    %368 = arith.truncf %70 : vector<16x32xf32> to vector<16x32xbf16>
    %cst_245 = arith.constant dense<0.000000e+00> : vector<16x8xf32>
    %369 = tpu.matmul %368, %365, %cst_245 {dimension_numbers = #tpu.dot_dimension_numbers<[1], [0], [0], [1], [0, 0, 1, 1], [], []>} : vector<16x32xbf16>, vector<32x8xbf16>, vector<16x8xf32> -> vector<16x8xf32>
    %370 = vector.broadcast %367 : vector<1x8xf32> to vector<16x8xf32>
    %371 = arith.addf %369, %370 : vector<16x8xf32>
    %c2_246 = arith.constant 2 : index
    %c0_247 = arith.constant 0 : index
    %c0_248 = arith.constant 0 : index
    %372 = vector.load %arg28[%c2_246, %c0_247, %c0_248] : memref<4x32x8xbf16, #tpu.memory_space<vmem>>, vector<1x32x8xbf16>
    %373 = vector.shape_cast %372 : vector<1x32x8xbf16> to vector<32x8xbf16>
    %c2_249 = arith.constant 2 : index
    %c0_250 = arith.constant 0 : index
    %c0_251 = arith.constant 0 : index
    %374 = vector.load %arg24[%c2_249, %c0_250, %c0_251] : memref<4x1x8xf32, #tpu.memory_space<vmem>>, vector<1x1x8xf32>
    %375 = vector.shape_cast %374 : vector<1x1x8xf32> to vector<1x8xf32>
    %376 = arith.truncf %70 : vector<16x32xf32> to vector<16x32xbf16>
    %cst_252 = arith.constant dense<0.000000e+00> : vector<16x8xf32>
    %377 = tpu.matmul %376, %373, %cst_252 {dimension_numbers = #tpu.dot_dimension_numbers<[1], [0], [0], [1], [0, 0, 1, 1], [], []>} : vector<16x32xbf16>, vector<32x8xbf16>, vector<16x8xf32> -> vector<16x8xf32>
    %378 = vector.broadcast %375 : vector<1x8xf32> to vector<16x8xf32>
    %379 = arith.addf %377, %378 : vector<16x8xf32>
    %380 = arith.truncf %363 : vector<16x8xf32> to vector<16x8xbf16>
    %381 = arith.truncf %371 : vector<16x8xf32> to vector<16x8xbf16>
    %cst_253 = arith.constant dense<0.000000e+00> : vector<16x16xf32>
    %382 = tpu.matmul %380, %381, %cst_253 {dimension_numbers = #tpu.dot_dimension_numbers<[1], [1], [0], [0], [0, 0, 1, 0], [], []>} : vector<16x8xbf16>, vector<16x8xbf16>, vector<16x16xf32> -> vector<16x16xf32>
    %cst_254 = arith.constant 0.353553385 : f32
    %383 = vector.broadcast %cst_254 : f32 to vector<16x16xf32>
    %384 = arith.mulf %382, %383 : vector<16x16xf32>
    %cst_255 = arith.constant dense<0xFF800000> : vector<16xf32>
    %385 = vector.multi_reduction <maximumf>, %384, %cst_255 [1] : vector<16x16xf32> to vector<16xf32>
    %386 = vector.shape_cast %385 : vector<16xf32> to vector<16x1xf32>
    %387 = vector.broadcast %386 : vector<16x1xf32> to vector<16x16xf32>
    %388 = arith.subf %384, %387 : vector<16x16xf32>
    %389 = math.exp %388 : vector<16x16xf32>
    %cst_256 = arith.constant dense<0.000000e+00> : vector<16xf32>
    %390 = vector.multi_reduction <add>, %389, %cst_256 [1] : vector<16x16xf32> to vector<16xf32>
    %391 = vector.shape_cast %390 : vector<16xf32> to vector<16x1xf32>
    %392 = tpu.reciprocal %391 {approx = true} : vector<16x1xf32> -> vector<16x1xf32>
    %393 = vector.broadcast %392 : vector<16x1xf32> to vector<16x16xf32>
    %394 = arith.mulf %389, %393 : vector<16x16xf32>
    %395 = arith.truncf %394 : vector<16x16xf32> to vector<16x16xbf16>
    %396 = arith.truncf %379 : vector<16x8xf32> to vector<16x8xbf16>
    %cst_257 = arith.constant dense<0.000000e+00> : vector<16x8xf32>
    %397 = tpu.matmul %395, %396, %cst_257 {dimension_numbers = #tpu.dot_dimension_numbers<[1], [0], [0], [1], [0, 0, 1, 1], [], []>} : vector<16x16xbf16>, vector<16x8xbf16>, vector<16x8xf32> -> vector<16x8xf32>
    %398 = arith.truncf %397 : vector<16x8xf32> to vector<16x8xbf16>
    %c2_258 = arith.constant 2 : index
    %c0_259 = arith.constant 0 : index
    %c0_260 = arith.constant 0 : index
    %399 = vector.load %arg26[%c2_258, %c0_259, %c0_260] : memref<4x8x32xbf16, #tpu.memory_space<vmem>>, vector<1x8x32xbf16>
    %400 = vector.shape_cast %399 : vector<1x8x32xbf16> to vector<8x32xbf16>
    %cst_261 = arith.constant dense<0.000000e+00> : vector<16x32xf32>
    %401 = tpu.matmul %398, %400, %cst_261 {dimension_numbers = #tpu.dot_dimension_numbers<[1], [0], [0], [1], [0, 0, 1, 1], [], []>} : vector<16x8xbf16>, vector<8x32xbf16>, vector<16x32xf32> -> vector<16x32xf32>
    %402 = arith.addf %355, %401 : vector<16x32xf32>
    %c3_262 = arith.constant 3 : index
    %c0_263 = arith.constant 0 : index
    %c0_264 = arith.constant 0 : index
    %403 = vector.load %arg27[%c3_262, %c0_263, %c0_264] : memref<4x32x8xbf16, #tpu.memory_space<vmem>>, vector<1x32x8xbf16>
    %404 = vector.shape_cast %403 : vector<1x32x8xbf16> to vector<32x8xbf16>
    %c3_265 = arith.constant 3 : index
    %c0_266 = arith.constant 0 : index
    %c0_267 = arith.constant 0 : index
    %405 = vector.load %arg23[%c3_265, %c0_266, %c0_267] : memref<4x1x8xf32, #tpu.memory_space<vmem>>, vector<1x1x8xf32>
    %406 = vector.shape_cast %405 : vector<1x1x8xf32> to vector<1x8xf32>
    %407 = arith.truncf %262 : vector<16x32xf32> to vector<16x32xbf16>
    %cst_268 = arith.constant dense<0.000000e+00> : vector<16x8xf32>
    %408 = tpu.matmul %407, %404, %cst_268 {dimension_numbers = #tpu.dot_dimension_numbers<[1], [0], [0], [1], [0, 0, 1, 1], [], []>} : vector<16x32xbf16>, vector<32x8xbf16>, vector<16x8xf32> -> vector<16x8xf32>
    %409 = vector.broadcast %406 : vector<1x8xf32> to vector<16x8xf32>
    %410 = arith.addf %408, %409 : vector<16x8xf32>
    %c3_269 = arith.constant 3 : index
    %c0_270 = arith.constant 0 : index
    %c0_271 = arith.constant 0 : index
    %411 = vector.load %arg25[%c3_269, %c0_270, %c0_271] : memref<4x32x8xbf16, #tpu.memory_space<vmem>>, vector<1x32x8xbf16>
    %412 = vector.shape_cast %411 : vector<1x32x8xbf16> to vector<32x8xbf16>
    %c3_272 = arith.constant 3 : index
    %c0_273 = arith.constant 0 : index
    %c0_274 = arith.constant 0 : index
    %413 = vector.load %arg21[%c3_272, %c0_273, %c0_274] : memref<4x1x8xf32, #tpu.memory_space<vmem>>, vector<1x1x8xf32>
    %414 = vector.shape_cast %413 : vector<1x1x8xf32> to vector<1x8xf32>
    %415 = arith.truncf %70 : vector<16x32xf32> to vector<16x32xbf16>
    %cst_275 = arith.constant dense<0.000000e+00> : vector<16x8xf32>
    %416 = tpu.matmul %415, %412, %cst_275 {dimension_numbers = #tpu.dot_dimension_numbers<[1], [0], [0], [1], [0, 0, 1, 1], [], []>} : vector<16x32xbf16>, vector<32x8xbf16>, vector<16x8xf32> -> vector<16x8xf32>
    %417 = vector.broadcast %414 : vector<1x8xf32> to vector<16x8xf32>
    %418 = arith.addf %416, %417 : vector<16x8xf32>
    %c3_276 = arith.constant 3 : index
    %c0_277 = arith.constant 0 : index
    %c0_278 = arith.constant 0 : index
    %419 = vector.load %arg28[%c3_276, %c0_277, %c0_278] : memref<4x32x8xbf16, #tpu.memory_space<vmem>>, vector<1x32x8xbf16>
    %420 = vector.shape_cast %419 : vector<1x32x8xbf16> to vector<32x8xbf16>
    %c3_279 = arith.constant 3 : index
    %c0_280 = arith.constant 0 : index
    %c0_281 = arith.constant 0 : index
    %421 = vector.load %arg24[%c3_279, %c0_280, %c0_281] : memref<4x1x8xf32, #tpu.memory_space<vmem>>, vector<1x1x8xf32>
    %422 = vector.shape_cast %421 : vector<1x1x8xf32> to vector<1x8xf32>
    %423 = arith.truncf %70 : vector<16x32xf32> to vector<16x32xbf16>
    %cst_282 = arith.constant dense<0.000000e+00> : vector<16x8xf32>
    %424 = tpu.matmul %423, %420, %cst_282 {dimension_numbers = #tpu.dot_dimension_numbers<[1], [0], [0], [1], [0, 0, 1, 1], [], []>} : vector<16x32xbf16>, vector<32x8xbf16>, vector<16x8xf32> -> vector<16x8xf32>
    %425 = vector.broadcast %422 : vector<1x8xf32> to vector<16x8xf32>
    %426 = arith.addf %424, %425 : vector<16x8xf32>
    %427 = arith.truncf %410 : vector<16x8xf32> to vector<16x8xbf16>
    %428 = arith.truncf %418 : vector<16x8xf32> to vector<16x8xbf16>
    %cst_283 = arith.constant dense<0.000000e+00> : vector<16x16xf32>
    %429 = tpu.matmul %427, %428, %cst_283 {dimension_numbers = #tpu.dot_dimension_numbers<[1], [1], [0], [0], [0, 0, 1, 0], [], []>} : vector<16x8xbf16>, vector<16x8xbf16>, vector<16x16xf32> -> vector<16x16xf32>
    %cst_284 = arith.constant 0.353553385 : f32
    %430 = vector.broadcast %cst_284 : f32 to vector<16x16xf32>
    %431 = arith.mulf %429, %430 : vector<16x16xf32>
    %cst_285 = arith.constant dense<0xFF800000> : vector<16xf32>
    %432 = vector.multi_reduction <maximumf>, %431, %cst_285 [1] : vector<16x16xf32> to vector<16xf32>
    %433 = vector.shape_cast %432 : vector<16xf32> to vector<16x1xf32>
    %434 = vector.broadcast %433 : vector<16x1xf32> to vector<16x16xf32>
    %435 = arith.subf %431, %434 : vector<16x16xf32>
    %436 = math.exp %435 : vector<16x16xf32>
    %cst_286 = arith.constant dense<0.000000e+00> : vector<16xf32>
    %437 = vector.multi_reduction <add>, %436, %cst_286 [1] : vector<16x16xf32> to vector<16xf32>
    %438 = vector.shape_cast %437 : vector<16xf32> to vector<16x1xf32>
    %439 = tpu.reciprocal %438 {approx = true} : vector<16x1xf32> -> vector<16x1xf32>
    %440 = vector.broadcast %439 : vector<16x1xf32> to vector<16x16xf32>
    %441 = arith.mulf %436, %440 : vector<16x16xf32>
    %442 = arith.truncf %441 : vector<16x16xf32> to vector<16x16xbf16>
    %443 = arith.truncf %426 : vector<16x8xf32> to vector<16x8xbf16>
    %cst_287 = arith.constant dense<0.000000e+00> : vector<16x8xf32>
    %444 = tpu.matmul %442, %443, %cst_287 {dimension_numbers = #tpu.dot_dimension_numbers<[1], [0], [0], [1], [0, 0, 1, 1], [], []>} : vector<16x16xbf16>, vector<16x8xbf16>, vector<16x8xf32> -> vector<16x8xf32>
    %445 = arith.truncf %444 : vector<16x8xf32> to vector<16x8xbf16>
    %c3_288 = arith.constant 3 : index
    %c0_289 = arith.constant 0 : index
    %c0_290 = arith.constant 0 : index
    %446 = vector.load %arg26[%c3_288, %c0_289, %c0_290] : memref<4x8x32xbf16, #tpu.memory_space<vmem>>, vector<1x8x32xbf16>
    %447 = vector.shape_cast %446 : vector<1x8x32xbf16> to vector<8x32xbf16>
    %cst_291 = arith.constant dense<0.000000e+00> : vector<16x32xf32>
    %448 = tpu.matmul %445, %447, %cst_291 {dimension_numbers = #tpu.dot_dimension_numbers<[1], [0], [0], [1], [0, 0, 1, 1], [], []>} : vector<16x8xbf16>, vector<8x32xbf16>, vector<16x32xf32> -> vector<16x32xf32>
    %449 = arith.addf %402, %448 : vector<16x32xf32>
    %c0_292 = arith.constant 0 : index
    %c0_293 = arith.constant 0 : index
    %450 = vector.load %arg22[%c0_292, %c0_293] : memref<1x32xf32, #tpu.memory_space<vmem>>, vector<1x32xf32>
    %451 = vector.broadcast %450 : vector<1x32xf32> to vector<16x32xf32>
    %452 = arith.addf %449, %451 : vector<16x32xf32>
    %c0_294 = arith.constant 0 : index
    %c0_295 = arith.constant 0 : index
    %453 = vector.load %arg45[%c0_294, %c0_295] : memref<32x64xbf16, #tpu.memory_space<vmem>>, vector<32x64xbf16>
    %c0_296 = arith.constant 0 : index
    %c0_297 = arith.constant 0 : index
    %454 = vector.load %arg41[%c0_296, %c0_297] : memref<1x64xf32, #tpu.memory_space<vmem>>, vector<1x64xf32>
    %455 = arith.truncf %452 : vector<16x32xf32> to vector<16x32xbf16>
    %cst_298 = arith.constant dense<0.000000e+00> : vector<16x64xf32>
    %456 = tpu.matmul %455, %453, %cst_298 {dimension_numbers = #tpu.dot_dimension_numbers<[1], [0], [0], [1], [0, 0, 1, 1], [], []>} : vector<16x32xbf16>, vector<32x64xbf16>, vector<16x64xf32> -> vector<16x64xf32>
    %457 = vector.broadcast %454 : vector<1x64xf32> to vector<16x64xf32>
    %458 = arith.addf %456, %457 : vector<16x64xf32>
    %cst_299 = arith.constant 0.000000e+00 : f32
    %459 = vector.broadcast %cst_299 : f32 to vector<16x64xf32>
    %460 = arith.maximumf %458, %459 : vector<16x64xf32>
    %c0_300 = arith.constant 0 : index
    %c0_301 = arith.constant 0 : index
    %461 = vector.load %arg46[%c0_300, %c0_301] : memref<64x32xbf16, #tpu.memory_space<vmem>>, vector<64x32xbf16>
    %c0_302 = arith.constant 0 : index
    %c0_303 = arith.constant 0 : index
    %462 = vector.load %arg42[%c0_302, %c0_303] : memref<1x32xf32, #tpu.memory_space<vmem>>, vector<1x32xf32>
    %463 = arith.truncf %460 : vector<16x64xf32> to vector<16x64xbf16>
    %cst_304 = arith.constant dense<0.000000e+00> : vector<16x32xf32>
    %464 = tpu.matmul %463, %461, %cst_304 {dimension_numbers = #tpu.dot_dimension_numbers<[1], [0], [0], [1], [0, 0, 1, 1], [], []>} : vector<16x64xbf16>, vector<64x32xbf16>, vector<16x32xf32> -> vector<16x32xf32>
    %465 = vector.broadcast %462 : vector<1x32xf32> to vector<16x32xf32>
    %466 = arith.addf %464, %465 : vector<16x32xf32>
    %c0_305 = arith.constant 0 : index
    %c0_306 = arith.constant 0 : index
    %467 = vector.load %arg44[%c0_305, %c0_306] : memref<1x32xf32, #tpu.memory_space<vmem>>, vector<1x32xf32>
    %c0_307 = arith.constant 0 : index
    %c0_308 = arith.constant 0 : index
    %468 = vector.load %arg43[%c0_307, %c0_308] : memref<1x32xf32, #tpu.memory_space<vmem>>, vector<1x32xf32>
    %cst_309 = arith.constant dense<0.000000e+00> : vector<16xf32>
    %469 = vector.multi_reduction <add>, %466, %cst_309 [1] : vector<16x32xf32> to vector<16xf32>
    %470 = vector.shape_cast %469 : vector<16xf32> to vector<16x1xf32>
    %cst_310 = arith.constant 3.200000e+01 : f32
    %471 = vector.broadcast %cst_310 : f32 to vector<16x1xf32>
    %472 = arith.divf %470, %471 : vector<16x1xf32>
    %473 = vector.broadcast %472 : vector<16x1xf32> to vector<16x32xf32>
    %474 = arith.subf %466, %473 : vector<16x32xf32>
    %475 = arith.mulf %474, %474 : vector<16x32xf32>
    %cst_311 = arith.constant dense<0.000000e+00> : vector<16xf32>
    %476 = vector.multi_reduction <add>, %475, %cst_311 [1] : vector<16x32xf32> to vector<16xf32>
    %477 = vector.shape_cast %476 : vector<16xf32> to vector<16x1xf32>
    %cst_312 = arith.constant 3.200000e+01 : f32
    %478 = vector.broadcast %cst_312 : f32 to vector<16x1xf32>
    %479 = arith.divf %477, %478 : vector<16x1xf32>
    %480 = vector.broadcast %472 : vector<16x1xf32> to vector<16x32xf32>
    %481 = arith.subf %466, %480 : vector<16x32xf32>
    %cst_313 = arith.constant 9.99999974E-6 : f32
    %482 = vector.broadcast %cst_313 : f32 to vector<16x1xf32>
    %483 = arith.addf %479, %482 : vector<16x1xf32>
    %484 = math.rsqrt %483 : vector<16x1xf32>
    %485 = vector.broadcast %484 : vector<16x1xf32> to vector<16x32xf32>
    %486 = arith.mulf %481, %485 : vector<16x32xf32>
    %487 = vector.broadcast %467 : vector<1x32xf32> to vector<16x32xf32>
    %488 = arith.mulf %486, %487 : vector<16x32xf32>
    %489 = vector.broadcast %468 : vector<1x32xf32> to vector<16x32xf32>
    %490 = arith.addf %488, %489 : vector<16x32xf32>
    %c0_314 = arith.constant 0 : index
    %c0_315 = arith.constant 0 : index
    %c0_316 = arith.constant 0 : index
    %491 = vector.load %arg19[%c0_314, %c0_315, %c0_316] : memref<4x32x8xbf16, #tpu.memory_space<vmem>>, vector<1x32x8xbf16>
    %492 = vector.shape_cast %491 : vector<1x32x8xbf16> to vector<32x8xbf16>
    %c0_317 = arith.constant 0 : index
    %c0_318 = arith.constant 0 : index
    %c0_319 = arith.constant 0 : index
    %493 = vector.load %arg15[%c0_317, %c0_318, %c0_319] : memref<4x1x8xf32, #tpu.memory_space<vmem>>, vector<1x1x8xf32>
    %494 = vector.shape_cast %493 : vector<1x1x8xf32> to vector<1x8xf32>
    %495 = arith.truncf %490 : vector<16x32xf32> to vector<16x32xbf16>
    %cst_320 = arith.constant dense<0.000000e+00> : vector<16x8xf32>
    %496 = tpu.matmul %495, %492, %cst_320 {dimension_numbers = #tpu.dot_dimension_numbers<[1], [0], [0], [1], [0, 0, 1, 1], [], []>} : vector<16x32xbf16>, vector<32x8xbf16>, vector<16x8xf32> -> vector<16x8xf32>
    %497 = vector.broadcast %494 : vector<1x8xf32> to vector<16x8xf32>
    %498 = arith.addf %496, %497 : vector<16x8xf32>
    %c0_321 = arith.constant 0 : index
    %c0_322 = arith.constant 0 : index
    %c0_323 = arith.constant 0 : index
    %499 = vector.load %arg17[%c0_321, %c0_322, %c0_323] : memref<4x32x8xbf16, #tpu.memory_space<vmem>>, vector<1x32x8xbf16>
    %500 = vector.shape_cast %499 : vector<1x32x8xbf16> to vector<32x8xbf16>
    %c0_324 = arith.constant 0 : index
    %c0_325 = arith.constant 0 : index
    %c0_326 = arith.constant 0 : index
    %501 = vector.load %arg13[%c0_324, %c0_325, %c0_326] : memref<4x1x8xf32, #tpu.memory_space<vmem>>, vector<1x1x8xf32>
    %502 = vector.shape_cast %501 : vector<1x1x8xf32> to vector<1x8xf32>
    %503 = arith.truncf %490 : vector<16x32xf32> to vector<16x32xbf16>
    %cst_327 = arith.constant dense<0.000000e+00> : vector<16x8xf32>
    %504 = tpu.matmul %503, %500, %cst_327 {dimension_numbers = #tpu.dot_dimension_numbers<[1], [0], [0], [1], [0, 0, 1, 1], [], []>} : vector<16x32xbf16>, vector<32x8xbf16>, vector<16x8xf32> -> vector<16x8xf32>
    %505 = vector.broadcast %502 : vector<1x8xf32> to vector<16x8xf32>
    %506 = arith.addf %504, %505 : vector<16x8xf32>
    %c0_328 = arith.constant 0 : index
    %c0_329 = arith.constant 0 : index
    %c0_330 = arith.constant 0 : index
    %507 = vector.load %arg20[%c0_328, %c0_329, %c0_330] : memref<4x32x8xbf16, #tpu.memory_space<vmem>>, vector<1x32x8xbf16>
    %508 = vector.shape_cast %507 : vector<1x32x8xbf16> to vector<32x8xbf16>
    %c0_331 = arith.constant 0 : index
    %c0_332 = arith.constant 0 : index
    %c0_333 = arith.constant 0 : index
    %509 = vector.load %arg16[%c0_331, %c0_332, %c0_333] : memref<4x1x8xf32, #tpu.memory_space<vmem>>, vector<1x1x8xf32>
    %510 = vector.shape_cast %509 : vector<1x1x8xf32> to vector<1x8xf32>
    %511 = arith.truncf %490 : vector<16x32xf32> to vector<16x32xbf16>
    %cst_334 = arith.constant dense<0.000000e+00> : vector<16x8xf32>
    %512 = tpu.matmul %511, %508, %cst_334 {dimension_numbers = #tpu.dot_dimension_numbers<[1], [0], [0], [1], [0, 0, 1, 1], [], []>} : vector<16x32xbf16>, vector<32x8xbf16>, vector<16x8xf32> -> vector<16x8xf32>
    %513 = vector.broadcast %510 : vector<1x8xf32> to vector<16x8xf32>
    %514 = arith.addf %512, %513 : vector<16x8xf32>
    %515 = arith.truncf %498 : vector<16x8xf32> to vector<16x8xbf16>
    %516 = arith.truncf %506 : vector<16x8xf32> to vector<16x8xbf16>
    %cst_335 = arith.constant dense<0.000000e+00> : vector<16x16xf32>
    %517 = tpu.matmul %515, %516, %cst_335 {dimension_numbers = #tpu.dot_dimension_numbers<[1], [1], [0], [0], [0, 0, 1, 0], [], []>} : vector<16x8xbf16>, vector<16x8xbf16>, vector<16x16xf32> -> vector<16x16xf32>
    %cst_336 = arith.constant 0.353553385 : f32
    %518 = vector.broadcast %cst_336 : f32 to vector<16x16xf32>
    %519 = arith.mulf %517, %518 : vector<16x16xf32>
    %cst_337 = arith.constant dense<0xFF800000> : vector<16xf32>
    %520 = vector.multi_reduction <maximumf>, %519, %cst_337 [1] : vector<16x16xf32> to vector<16xf32>
    %521 = vector.shape_cast %520 : vector<16xf32> to vector<16x1xf32>
    %522 = vector.broadcast %521 : vector<16x1xf32> to vector<16x16xf32>
    %523 = arith.subf %519, %522 : vector<16x16xf32>
    %524 = math.exp %523 : vector<16x16xf32>
    %cst_338 = arith.constant dense<0.000000e+00> : vector<16xf32>
    %525 = vector.multi_reduction <add>, %524, %cst_338 [1] : vector<16x16xf32> to vector<16xf32>
    %526 = vector.shape_cast %525 : vector<16xf32> to vector<16x1xf32>
    %527 = tpu.reciprocal %526 {approx = true} : vector<16x1xf32> -> vector<16x1xf32>
    %528 = vector.broadcast %527 : vector<16x1xf32> to vector<16x16xf32>
    %529 = arith.mulf %524, %528 : vector<16x16xf32>
    %530 = arith.truncf %529 : vector<16x16xf32> to vector<16x16xbf16>
    %531 = arith.truncf %514 : vector<16x8xf32> to vector<16x8xbf16>
    %cst_339 = arith.constant dense<0.000000e+00> : vector<16x8xf32>
    %532 = tpu.matmul %530, %531, %cst_339 {dimension_numbers = #tpu.dot_dimension_numbers<[1], [0], [0], [1], [0, 0, 1, 1], [], []>} : vector<16x16xbf16>, vector<16x8xbf16>, vector<16x8xf32> -> vector<16x8xf32>
    %533 = arith.truncf %532 : vector<16x8xf32> to vector<16x8xbf16>
    %c0_340 = arith.constant 0 : index
    %c0_341 = arith.constant 0 : index
    %c0_342 = arith.constant 0 : index
    %534 = vector.load %arg18[%c0_340, %c0_341, %c0_342] : memref<4x8x32xbf16, #tpu.memory_space<vmem>>, vector<1x8x32xbf16>
    %535 = vector.shape_cast %534 : vector<1x8x32xbf16> to vector<8x32xbf16>
    %cst_343 = arith.constant dense<0.000000e+00> : vector<16x32xf32>
    %536 = tpu.matmul %533, %535, %cst_343 {dimension_numbers = #tpu.dot_dimension_numbers<[1], [0], [0], [1], [0, 0, 1, 1], [], []>} : vector<16x8xbf16>, vector<8x32xbf16>, vector<16x32xf32> -> vector<16x32xf32>
    %c1_344 = arith.constant 1 : index
    %c0_345 = arith.constant 0 : index
    %c0_346 = arith.constant 0 : index
    %537 = vector.load %arg19[%c1_344, %c0_345, %c0_346] : memref<4x32x8xbf16, #tpu.memory_space<vmem>>, vector<1x32x8xbf16>
    %538 = vector.shape_cast %537 : vector<1x32x8xbf16> to vector<32x8xbf16>
    %c1_347 = arith.constant 1 : index
    %c0_348 = arith.constant 0 : index
    %c0_349 = arith.constant 0 : index
    %539 = vector.load %arg15[%c1_347, %c0_348, %c0_349] : memref<4x1x8xf32, #tpu.memory_space<vmem>>, vector<1x1x8xf32>
    %540 = vector.shape_cast %539 : vector<1x1x8xf32> to vector<1x8xf32>
    %541 = arith.truncf %490 : vector<16x32xf32> to vector<16x32xbf16>
    %cst_350 = arith.constant dense<0.000000e+00> : vector<16x8xf32>
    %542 = tpu.matmul %541, %538, %cst_350 {dimension_numbers = #tpu.dot_dimension_numbers<[1], [0], [0], [1], [0, 0, 1, 1], [], []>} : vector<16x32xbf16>, vector<32x8xbf16>, vector<16x8xf32> -> vector<16x8xf32>
    %543 = vector.broadcast %540 : vector<1x8xf32> to vector<16x8xf32>
    %544 = arith.addf %542, %543 : vector<16x8xf32>
    %c1_351 = arith.constant 1 : index
    %c0_352 = arith.constant 0 : index
    %c0_353 = arith.constant 0 : index
    %545 = vector.load %arg17[%c1_351, %c0_352, %c0_353] : memref<4x32x8xbf16, #tpu.memory_space<vmem>>, vector<1x32x8xbf16>
    %546 = vector.shape_cast %545 : vector<1x32x8xbf16> to vector<32x8xbf16>
    %c1_354 = arith.constant 1 : index
    %c0_355 = arith.constant 0 : index
    %c0_356 = arith.constant 0 : index
    %547 = vector.load %arg13[%c1_354, %c0_355, %c0_356] : memref<4x1x8xf32, #tpu.memory_space<vmem>>, vector<1x1x8xf32>
    %548 = vector.shape_cast %547 : vector<1x1x8xf32> to vector<1x8xf32>
    %549 = arith.truncf %490 : vector<16x32xf32> to vector<16x32xbf16>
    %cst_357 = arith.constant dense<0.000000e+00> : vector<16x8xf32>
    %550 = tpu.matmul %549, %546, %cst_357 {dimension_numbers = #tpu.dot_dimension_numbers<[1], [0], [0], [1], [0, 0, 1, 1], [], []>} : vector<16x32xbf16>, vector<32x8xbf16>, vector<16x8xf32> -> vector<16x8xf32>
    %551 = vector.broadcast %548 : vector<1x8xf32> to vector<16x8xf32>
    %552 = arith.addf %550, %551 : vector<16x8xf32>
    %c1_358 = arith.constant 1 : index
    %c0_359 = arith.constant 0 : index
    %c0_360 = arith.constant 0 : index
    %553 = vector.load %arg20[%c1_358, %c0_359, %c0_360] : memref<4x32x8xbf16, #tpu.memory_space<vmem>>, vector<1x32x8xbf16>
    %554 = vector.shape_cast %553 : vector<1x32x8xbf16> to vector<32x8xbf16>
    %c1_361 = arith.constant 1 : index
    %c0_362 = arith.constant 0 : index
    %c0_363 = arith.constant 0 : index
    %555 = vector.load %arg16[%c1_361, %c0_362, %c0_363] : memref<4x1x8xf32, #tpu.memory_space<vmem>>, vector<1x1x8xf32>
    %556 = vector.shape_cast %555 : vector<1x1x8xf32> to vector<1x8xf32>
    %557 = arith.truncf %490 : vector<16x32xf32> to vector<16x32xbf16>
    %cst_364 = arith.constant dense<0.000000e+00> : vector<16x8xf32>
    %558 = tpu.matmul %557, %554, %cst_364 {dimension_numbers = #tpu.dot_dimension_numbers<[1], [0], [0], [1], [0, 0, 1, 1], [], []>} : vector<16x32xbf16>, vector<32x8xbf16>, vector<16x8xf32> -> vector<16x8xf32>
    %559 = vector.broadcast %556 : vector<1x8xf32> to vector<16x8xf32>
    %560 = arith.addf %558, %559 : vector<16x8xf32>
    %561 = arith.truncf %544 : vector<16x8xf32> to vector<16x8xbf16>
    %562 = arith.truncf %552 : vector<16x8xf32> to vector<16x8xbf16>
    %cst_365 = arith.constant dense<0.000000e+00> : vector<16x16xf32>
    %563 = tpu.matmul %561, %562, %cst_365 {dimension_numbers = #tpu.dot_dimension_numbers<[1], [1], [0], [0], [0, 0, 1, 0], [], []>} : vector<16x8xbf16>, vector<16x8xbf16>, vector<16x16xf32> -> vector<16x16xf32>
    %cst_366 = arith.constant 0.353553385 : f32
    %564 = vector.broadcast %cst_366 : f32 to vector<16x16xf32>
    %565 = arith.mulf %563, %564 : vector<16x16xf32>
    %cst_367 = arith.constant dense<0xFF800000> : vector<16xf32>
    %566 = vector.multi_reduction <maximumf>, %565, %cst_367 [1] : vector<16x16xf32> to vector<16xf32>
    %567 = vector.shape_cast %566 : vector<16xf32> to vector<16x1xf32>
    %568 = vector.broadcast %567 : vector<16x1xf32> to vector<16x16xf32>
    %569 = arith.subf %565, %568 : vector<16x16xf32>
    %570 = math.exp %569 : vector<16x16xf32>
    %cst_368 = arith.constant dense<0.000000e+00> : vector<16xf32>
    %571 = vector.multi_reduction <add>, %570, %cst_368 [1] : vector<16x16xf32> to vector<16xf32>
    %572 = vector.shape_cast %571 : vector<16xf32> to vector<16x1xf32>
    %573 = tpu.reciprocal %572 {approx = true} : vector<16x1xf32> -> vector<16x1xf32>
    %574 = vector.broadcast %573 : vector<16x1xf32> to vector<16x16xf32>
    %575 = arith.mulf %570, %574 : vector<16x16xf32>
    %576 = arith.truncf %575 : vector<16x16xf32> to vector<16x16xbf16>
    %577 = arith.truncf %560 : vector<16x8xf32> to vector<16x8xbf16>
    %cst_369 = arith.constant dense<0.000000e+00> : vector<16x8xf32>
    %578 = tpu.matmul %576, %577, %cst_369 {dimension_numbers = #tpu.dot_dimension_numbers<[1], [0], [0], [1], [0, 0, 1, 1], [], []>} : vector<16x16xbf16>, vector<16x8xbf16>, vector<16x8xf32> -> vector<16x8xf32>
    %579 = arith.truncf %578 : vector<16x8xf32> to vector<16x8xbf16>
    %c1_370 = arith.constant 1 : index
    %c0_371 = arith.constant 0 : index
    %c0_372 = arith.constant 0 : index
    %580 = vector.load %arg18[%c1_370, %c0_371, %c0_372] : memref<4x8x32xbf16, #tpu.memory_space<vmem>>, vector<1x8x32xbf16>
    %581 = vector.shape_cast %580 : vector<1x8x32xbf16> to vector<8x32xbf16>
    %cst_373 = arith.constant dense<0.000000e+00> : vector<16x32xf32>
    %582 = tpu.matmul %579, %581, %cst_373 {dimension_numbers = #tpu.dot_dimension_numbers<[1], [0], [0], [1], [0, 0, 1, 1], [], []>} : vector<16x8xbf16>, vector<8x32xbf16>, vector<16x32xf32> -> vector<16x32xf32>
    %583 = arith.addf %536, %582 : vector<16x32xf32>
    %c2_374 = arith.constant 2 : index
    %c0_375 = arith.constant 0 : index
    %c0_376 = arith.constant 0 : index
    %584 = vector.load %arg19[%c2_374, %c0_375, %c0_376] : memref<4x32x8xbf16, #tpu.memory_space<vmem>>, vector<1x32x8xbf16>
    %585 = vector.shape_cast %584 : vector<1x32x8xbf16> to vector<32x8xbf16>
    %c2_377 = arith.constant 2 : index
    %c0_378 = arith.constant 0 : index
    %c0_379 = arith.constant 0 : index
    %586 = vector.load %arg15[%c2_377, %c0_378, %c0_379] : memref<4x1x8xf32, #tpu.memory_space<vmem>>, vector<1x1x8xf32>
    %587 = vector.shape_cast %586 : vector<1x1x8xf32> to vector<1x8xf32>
    %588 = arith.truncf %490 : vector<16x32xf32> to vector<16x32xbf16>
    %cst_380 = arith.constant dense<0.000000e+00> : vector<16x8xf32>
    %589 = tpu.matmul %588, %585, %cst_380 {dimension_numbers = #tpu.dot_dimension_numbers<[1], [0], [0], [1], [0, 0, 1, 1], [], []>} : vector<16x32xbf16>, vector<32x8xbf16>, vector<16x8xf32> -> vector<16x8xf32>
    %590 = vector.broadcast %587 : vector<1x8xf32> to vector<16x8xf32>
    %591 = arith.addf %589, %590 : vector<16x8xf32>
    %c2_381 = arith.constant 2 : index
    %c0_382 = arith.constant 0 : index
    %c0_383 = arith.constant 0 : index
    %592 = vector.load %arg17[%c2_381, %c0_382, %c0_383] : memref<4x32x8xbf16, #tpu.memory_space<vmem>>, vector<1x32x8xbf16>
    %593 = vector.shape_cast %592 : vector<1x32x8xbf16> to vector<32x8xbf16>
    %c2_384 = arith.constant 2 : index
    %c0_385 = arith.constant 0 : index
    %c0_386 = arith.constant 0 : index
    %594 = vector.load %arg13[%c2_384, %c0_385, %c0_386] : memref<4x1x8xf32, #tpu.memory_space<vmem>>, vector<1x1x8xf32>
    %595 = vector.shape_cast %594 : vector<1x1x8xf32> to vector<1x8xf32>
    %596 = arith.truncf %490 : vector<16x32xf32> to vector<16x32xbf16>
    %cst_387 = arith.constant dense<0.000000e+00> : vector<16x8xf32>
    %597 = tpu.matmul %596, %593, %cst_387 {dimension_numbers = #tpu.dot_dimension_numbers<[1], [0], [0], [1], [0, 0, 1, 1], [], []>} : vector<16x32xbf16>, vector<32x8xbf16>, vector<16x8xf32> -> vector<16x8xf32>
    %598 = vector.broadcast %595 : vector<1x8xf32> to vector<16x8xf32>
    %599 = arith.addf %597, %598 : vector<16x8xf32>
    %c2_388 = arith.constant 2 : index
    %c0_389 = arith.constant 0 : index
    %c0_390 = arith.constant 0 : index
    %600 = vector.load %arg20[%c2_388, %c0_389, %c0_390] : memref<4x32x8xbf16, #tpu.memory_space<vmem>>, vector<1x32x8xbf16>
    %601 = vector.shape_cast %600 : vector<1x32x8xbf16> to vector<32x8xbf16>
    %c2_391 = arith.constant 2 : index
    %c0_392 = arith.constant 0 : index
    %c0_393 = arith.constant 0 : index
    %602 = vector.load %arg16[%c2_391, %c0_392, %c0_393] : memref<4x1x8xf32, #tpu.memory_space<vmem>>, vector<1x1x8xf32>
    %603 = vector.shape_cast %602 : vector<1x1x8xf32> to vector<1x8xf32>
    %604 = arith.truncf %490 : vector<16x32xf32> to vector<16x32xbf16>
    %cst_394 = arith.constant dense<0.000000e+00> : vector<16x8xf32>
    %605 = tpu.matmul %604, %601, %cst_394 {dimension_numbers = #tpu.dot_dimension_numbers<[1], [0], [0], [1], [0, 0, 1, 1], [], []>} : vector<16x32xbf16>, vector<32x8xbf16>, vector<16x8xf32> -> vector<16x8xf32>
    %606 = vector.broadcast %603 : vector<1x8xf32> to vector<16x8xf32>
    %607 = arith.addf %605, %606 : vector<16x8xf32>
    %608 = arith.truncf %591 : vector<16x8xf32> to vector<16x8xbf16>
    %609 = arith.truncf %599 : vector<16x8xf32> to vector<16x8xbf16>
    %cst_395 = arith.constant dense<0.000000e+00> : vector<16x16xf32>
    %610 = tpu.matmul %608, %609, %cst_395 {dimension_numbers = #tpu.dot_dimension_numbers<[1], [1], [0], [0], [0, 0, 1, 0], [], []>} : vector<16x8xbf16>, vector<16x8xbf16>, vector<16x16xf32> -> vector<16x16xf32>
    %cst_396 = arith.constant 0.353553385 : f32
    %611 = vector.broadcast %cst_396 : f32 to vector<16x16xf32>
    %612 = arith.mulf %610, %611 : vector<16x16xf32>
    %cst_397 = arith.constant dense<0xFF800000> : vector<16xf32>
    %613 = vector.multi_reduction <maximumf>, %612, %cst_397 [1] : vector<16x16xf32> to vector<16xf32>
    %614 = vector.shape_cast %613 : vector<16xf32> to vector<16x1xf32>
    %615 = vector.broadcast %614 : vector<16x1xf32> to vector<16x16xf32>
    %616 = arith.subf %612, %615 : vector<16x16xf32>
    %617 = math.exp %616 : vector<16x16xf32>
    %cst_398 = arith.constant dense<0.000000e+00> : vector<16xf32>
    %618 = vector.multi_reduction <add>, %617, %cst_398 [1] : vector<16x16xf32> to vector<16xf32>
    %619 = vector.shape_cast %618 : vector<16xf32> to vector<16x1xf32>
    %620 = tpu.reciprocal %619 {approx = true} : vector<16x1xf32> -> vector<16x1xf32>
    %621 = vector.broadcast %620 : vector<16x1xf32> to vector<16x16xf32>
    %622 = arith.mulf %617, %621 : vector<16x16xf32>
    %623 = arith.truncf %622 : vector<16x16xf32> to vector<16x16xbf16>
    %624 = arith.truncf %607 : vector<16x8xf32> to vector<16x8xbf16>
    %cst_399 = arith.constant dense<0.000000e+00> : vector<16x8xf32>
    %625 = tpu.matmul %623, %624, %cst_399 {dimension_numbers = #tpu.dot_dimension_numbers<[1], [0], [0], [1], [0, 0, 1, 1], [], []>} : vector<16x16xbf16>, vector<16x8xbf16>, vector<16x8xf32> -> vector<16x8xf32>
    %626 = arith.truncf %625 : vector<16x8xf32> to vector<16x8xbf16>
    %c2_400 = arith.constant 2 : index
    %c0_401 = arith.constant 0 : index
    %c0_402 = arith.constant 0 : index
    %627 = vector.load %arg18[%c2_400, %c0_401, %c0_402] : memref<4x8x32xbf16, #tpu.memory_space<vmem>>, vector<1x8x32xbf16>
    %628 = vector.shape_cast %627 : vector<1x8x32xbf16> to vector<8x32xbf16>
    %cst_403 = arith.constant dense<0.000000e+00> : vector<16x32xf32>
    %629 = tpu.matmul %626, %628, %cst_403 {dimension_numbers = #tpu.dot_dimension_numbers<[1], [0], [0], [1], [0, 0, 1, 1], [], []>} : vector<16x8xbf16>, vector<8x32xbf16>, vector<16x32xf32> -> vector<16x32xf32>
    %630 = arith.addf %583, %629 : vector<16x32xf32>
    %c3_404 = arith.constant 3 : index
    %c0_405 = arith.constant 0 : index
    %c0_406 = arith.constant 0 : index
    %631 = vector.load %arg19[%c3_404, %c0_405, %c0_406] : memref<4x32x8xbf16, #tpu.memory_space<vmem>>, vector<1x32x8xbf16>
    %632 = vector.shape_cast %631 : vector<1x32x8xbf16> to vector<32x8xbf16>
    %c3_407 = arith.constant 3 : index
    %c0_408 = arith.constant 0 : index
    %c0_409 = arith.constant 0 : index
    %633 = vector.load %arg15[%c3_407, %c0_408, %c0_409] : memref<4x1x8xf32, #tpu.memory_space<vmem>>, vector<1x1x8xf32>
    %634 = vector.shape_cast %633 : vector<1x1x8xf32> to vector<1x8xf32>
    %635 = arith.truncf %490 : vector<16x32xf32> to vector<16x32xbf16>
    %cst_410 = arith.constant dense<0.000000e+00> : vector<16x8xf32>
    %636 = tpu.matmul %635, %632, %cst_410 {dimension_numbers = #tpu.dot_dimension_numbers<[1], [0], [0], [1], [0, 0, 1, 1], [], []>} : vector<16x32xbf16>, vector<32x8xbf16>, vector<16x8xf32> -> vector<16x8xf32>
    %637 = vector.broadcast %634 : vector<1x8xf32> to vector<16x8xf32>
    %638 = arith.addf %636, %637 : vector<16x8xf32>
    %c3_411 = arith.constant 3 : index
    %c0_412 = arith.constant 0 : index
    %c0_413 = arith.constant 0 : index
    %639 = vector.load %arg17[%c3_411, %c0_412, %c0_413] : memref<4x32x8xbf16, #tpu.memory_space<vmem>>, vector<1x32x8xbf16>
    %640 = vector.shape_cast %639 : vector<1x32x8xbf16> to vector<32x8xbf16>
    %c3_414 = arith.constant 3 : index
    %c0_415 = arith.constant 0 : index
    %c0_416 = arith.constant 0 : index
    %641 = vector.load %arg13[%c3_414, %c0_415, %c0_416] : memref<4x1x8xf32, #tpu.memory_space<vmem>>, vector<1x1x8xf32>
    %642 = vector.shape_cast %641 : vector<1x1x8xf32> to vector<1x8xf32>
    %643 = arith.truncf %490 : vector<16x32xf32> to vector<16x32xbf16>
    %cst_417 = arith.constant dense<0.000000e+00> : vector<16x8xf32>
    %644 = tpu.matmul %643, %640, %cst_417 {dimension_numbers = #tpu.dot_dimension_numbers<[1], [0], [0], [1], [0, 0, 1, 1], [], []>} : vector<16x32xbf16>, vector<32x8xbf16>, vector<16x8xf32> -> vector<16x8xf32>
    %645 = vector.broadcast %642 : vector<1x8xf32> to vector<16x8xf32>
    %646 = arith.addf %644, %645 : vector<16x8xf32>
    %c3_418 = arith.constant 3 : index
    %c0_419 = arith.constant 0 : index
    %c0_420 = arith.constant 0 : index
    %647 = vector.load %arg20[%c3_418, %c0_419, %c0_420] : memref<4x32x8xbf16, #tpu.memory_space<vmem>>, vector<1x32x8xbf16>
    %648 = vector.shape_cast %647 : vector<1x32x8xbf16> to vector<32x8xbf16>
    %c3_421 = arith.constant 3 : index
    %c0_422 = arith.constant 0 : index
    %c0_423 = arith.constant 0 : index
    %649 = vector.load %arg16[%c3_421, %c0_422, %c0_423] : memref<4x1x8xf32, #tpu.memory_space<vmem>>, vector<1x1x8xf32>
    %650 = vector.shape_cast %649 : vector<1x1x8xf32> to vector<1x8xf32>
    %651 = arith.truncf %490 : vector<16x32xf32> to vector<16x32xbf16>
    %cst_424 = arith.constant dense<0.000000e+00> : vector<16x8xf32>
    %652 = tpu.matmul %651, %648, %cst_424 {dimension_numbers = #tpu.dot_dimension_numbers<[1], [0], [0], [1], [0, 0, 1, 1], [], []>} : vector<16x32xbf16>, vector<32x8xbf16>, vector<16x8xf32> -> vector<16x8xf32>
    %653 = vector.broadcast %650 : vector<1x8xf32> to vector<16x8xf32>
    %654 = arith.addf %652, %653 : vector<16x8xf32>
    %655 = arith.truncf %638 : vector<16x8xf32> to vector<16x8xbf16>
    %656 = arith.truncf %646 : vector<16x8xf32> to vector<16x8xbf16>
    %cst_425 = arith.constant dense<0.000000e+00> : vector<16x16xf32>
    %657 = tpu.matmul %655, %656, %cst_425 {dimension_numbers = #tpu.dot_dimension_numbers<[1], [1], [0], [0], [0, 0, 1, 0], [], []>} : vector<16x8xbf16>, vector<16x8xbf16>, vector<16x16xf32> -> vector<16x16xf32>
    %cst_426 = arith.constant 0.353553385 : f32
    %658 = vector.broadcast %cst_426 : f32 to vector<16x16xf32>
    %659 = arith.mulf %657, %658 : vector<16x16xf32>
    %cst_427 = arith.constant dense<0xFF800000> : vector<16xf32>
    %660 = vector.multi_reduction <maximumf>, %659, %cst_427 [1] : vector<16x16xf32> to vector<16xf32>
    %661 = vector.shape_cast %660 : vector<16xf32> to vector<16x1xf32>
    %662 = vector.broadcast %661 : vector<16x1xf32> to vector<16x16xf32>
    %663 = arith.subf %659, %662 : vector<16x16xf32>
    %664 = math.exp %663 : vector<16x16xf32>
    %cst_428 = arith.constant dense<0.000000e+00> : vector<16xf32>
    %665 = vector.multi_reduction <add>, %664, %cst_428 [1] : vector<16x16xf32> to vector<16xf32>
    %666 = vector.shape_cast %665 : vector<16xf32> to vector<16x1xf32>
    %667 = tpu.reciprocal %666 {approx = true} : vector<16x1xf32> -> vector<16x1xf32>
    %668 = vector.broadcast %667 : vector<16x1xf32> to vector<16x16xf32>
    %669 = arith.mulf %664, %668 : vector<16x16xf32>
    %670 = arith.truncf %669 : vector<16x16xf32> to vector<16x16xbf16>
    %671 = arith.truncf %654 : vector<16x8xf32> to vector<16x8xbf16>
    %cst_429 = arith.constant dense<0.000000e+00> : vector<16x8xf32>
    %672 = tpu.matmul %670, %671, %cst_429 {dimension_numbers = #tpu.dot_dimension_numbers<[1], [0], [0], [1], [0, 0, 1, 1], [], []>} : vector<16x16xbf16>, vector<16x8xbf16>, vector<16x8xf32> -> vector<16x8xf32>
    %673 = arith.truncf %672 : vector<16x8xf32> to vector<16x8xbf16>
    %c3_430 = arith.constant 3 : index
    %c0_431 = arith.constant 0 : index
    %c0_432 = arith.constant 0 : index
    %674 = vector.load %arg18[%c3_430, %c0_431, %c0_432] : memref<4x8x32xbf16, #tpu.memory_space<vmem>>, vector<1x8x32xbf16>
    %675 = vector.shape_cast %674 : vector<1x8x32xbf16> to vector<8x32xbf16>
    %cst_433 = arith.constant dense<0.000000e+00> : vector<16x32xf32>
    %676 = tpu.matmul %673, %675, %cst_433 {dimension_numbers = #tpu.dot_dimension_numbers<[1], [0], [0], [1], [0, 0, 1, 1], [], []>} : vector<16x8xbf16>, vector<8x32xbf16>, vector<16x32xf32> -> vector<16x32xf32>
    %677 = arith.addf %630, %676 : vector<16x32xf32>
    %c0_434 = arith.constant 0 : index
    %c0_435 = arith.constant 0 : index
    %678 = vector.load %arg14[%c0_434, %c0_435] : memref<1x32xf32, #tpu.memory_space<vmem>>, vector<1x32xf32>
    %679 = vector.broadcast %678 : vector<1x32xf32> to vector<16x32xf32>
    %680 = arith.addf %677, %679 : vector<16x32xf32>
    %c0_436 = arith.constant 0 : index
    %c0_437 = arith.constant 0 : index
    %c0_438 = arith.constant 0 : index
    %681 = vector.load %arg35[%c0_436, %c0_437, %c0_438] : memref<4x32x8xbf16, #tpu.memory_space<vmem>>, vector<1x32x8xbf16>
    %682 = vector.shape_cast %681 : vector<1x32x8xbf16> to vector<32x8xbf16>
    %c0_439 = arith.constant 0 : index
    %c0_440 = arith.constant 0 : index
    %c0_441 = arith.constant 0 : index
    %683 = vector.load %arg31[%c0_439, %c0_440, %c0_441] : memref<4x1x8xf32, #tpu.memory_space<vmem>>, vector<1x1x8xf32>
    %684 = vector.shape_cast %683 : vector<1x1x8xf32> to vector<1x8xf32>
    %685 = arith.truncf %680 : vector<16x32xf32> to vector<16x32xbf16>
    %cst_442 = arith.constant dense<0.000000e+00> : vector<16x8xf32>
    %686 = tpu.matmul %685, %682, %cst_442 {dimension_numbers = #tpu.dot_dimension_numbers<[1], [0], [0], [1], [0, 0, 1, 1], [], []>} : vector<16x32xbf16>, vector<32x8xbf16>, vector<16x8xf32> -> vector<16x8xf32>
    %687 = vector.broadcast %684 : vector<1x8xf32> to vector<16x8xf32>
    %688 = arith.addf %686, %687 : vector<16x8xf32>
    %c0_443 = arith.constant 0 : index
    %c0_444 = arith.constant 0 : index
    %c0_445 = arith.constant 0 : index
    %689 = vector.load %arg33[%c0_443, %c0_444, %c0_445] : memref<4x32x8xbf16, #tpu.memory_space<vmem>>, vector<1x32x8xbf16>
    %690 = vector.shape_cast %689 : vector<1x32x8xbf16> to vector<32x8xbf16>
    %c0_446 = arith.constant 0 : index
    %c0_447 = arith.constant 0 : index
    %c0_448 = arith.constant 0 : index
    %691 = vector.load %arg29[%c0_446, %c0_447, %c0_448] : memref<4x1x8xf32, #tpu.memory_space<vmem>>, vector<1x1x8xf32>
    %692 = vector.shape_cast %691 : vector<1x1x8xf32> to vector<1x8xf32>
    %693 = arith.truncf %70 : vector<16x32xf32> to vector<16x32xbf16>
    %cst_449 = arith.constant dense<0.000000e+00> : vector<16x8xf32>
    %694 = tpu.matmul %693, %690, %cst_449 {dimension_numbers = #tpu.dot_dimension_numbers<[1], [0], [0], [1], [0, 0, 1, 1], [], []>} : vector<16x32xbf16>, vector<32x8xbf16>, vector<16x8xf32> -> vector<16x8xf32>
    %695 = vector.broadcast %692 : vector<1x8xf32> to vector<16x8xf32>
    %696 = arith.addf %694, %695 : vector<16x8xf32>
    %c0_450 = arith.constant 0 : index
    %c0_451 = arith.constant 0 : index
    %c0_452 = arith.constant 0 : index
    %697 = vector.load %arg36[%c0_450, %c0_451, %c0_452] : memref<4x32x8xbf16, #tpu.memory_space<vmem>>, vector<1x32x8xbf16>
    %698 = vector.shape_cast %697 : vector<1x32x8xbf16> to vector<32x8xbf16>
    %c0_453 = arith.constant 0 : index
    %c0_454 = arith.constant 0 : index
    %c0_455 = arith.constant 0 : index
    %699 = vector.load %arg32[%c0_453, %c0_454, %c0_455] : memref<4x1x8xf32, #tpu.memory_space<vmem>>, vector<1x1x8xf32>
    %700 = vector.shape_cast %699 : vector<1x1x8xf32> to vector<1x8xf32>
    %701 = arith.truncf %70 : vector<16x32xf32> to vector<16x32xbf16>
    %cst_456 = arith.constant dense<0.000000e+00> : vector<16x8xf32>
    %702 = tpu.matmul %701, %698, %cst_456 {dimension_numbers = #tpu.dot_dimension_numbers<[1], [0], [0], [1], [0, 0, 1, 1], [], []>} : vector<16x32xbf16>, vector<32x8xbf16>, vector<16x8xf32> -> vector<16x8xf32>
    %703 = vector.broadcast %700 : vector<1x8xf32> to vector<16x8xf32>
    %704 = arith.addf %702, %703 : vector<16x8xf32>
    %705 = arith.truncf %688 : vector<16x8xf32> to vector<16x8xbf16>
    %706 = arith.truncf %696 : vector<16x8xf32> to vector<16x8xbf16>
    %cst_457 = arith.constant dense<0.000000e+00> : vector<16x16xf32>
    %707 = tpu.matmul %705, %706, %cst_457 {dimension_numbers = #tpu.dot_dimension_numbers<[1], [1], [0], [0], [0, 0, 1, 0], [], []>} : vector<16x8xbf16>, vector<16x8xbf16>, vector<16x16xf32> -> vector<16x16xf32>
    %cst_458 = arith.constant 0.353553385 : f32
    %708 = vector.broadcast %cst_458 : f32 to vector<16x16xf32>
    %709 = arith.mulf %707, %708 : vector<16x16xf32>
    %cst_459 = arith.constant dense<0xFF800000> : vector<16xf32>
    %710 = vector.multi_reduction <maximumf>, %709, %cst_459 [1] : vector<16x16xf32> to vector<16xf32>
    %711 = vector.shape_cast %710 : vector<16xf32> to vector<16x1xf32>
    %712 = vector.broadcast %711 : vector<16x1xf32> to vector<16x16xf32>
    %713 = arith.subf %709, %712 : vector<16x16xf32>
    %714 = math.exp %713 : vector<16x16xf32>
    %cst_460 = arith.constant dense<0.000000e+00> : vector<16xf32>
    %715 = vector.multi_reduction <add>, %714, %cst_460 [1] : vector<16x16xf32> to vector<16xf32>
    %716 = vector.shape_cast %715 : vector<16xf32> to vector<16x1xf32>
    %717 = tpu.reciprocal %716 {approx = true} : vector<16x1xf32> -> vector<16x1xf32>
    %718 = vector.broadcast %717 : vector<16x1xf32> to vector<16x16xf32>
    %719 = arith.mulf %714, %718 : vector<16x16xf32>
    %720 = arith.truncf %719 : vector<16x16xf32> to vector<16x16xbf16>
    %721 = arith.truncf %704 : vector<16x8xf32> to vector<16x8xbf16>
    %cst_461 = arith.constant dense<0.000000e+00> : vector<16x8xf32>
    %722 = tpu.matmul %720, %721, %cst_461 {dimension_numbers = #tpu.dot_dimension_numbers<[1], [0], [0], [1], [0, 0, 1, 1], [], []>} : vector<16x16xbf16>, vector<16x8xbf16>, vector<16x8xf32> -> vector<16x8xf32>
    %723 = arith.truncf %722 : vector<16x8xf32> to vector<16x8xbf16>
    %c0_462 = arith.constant 0 : index
    %c0_463 = arith.constant 0 : index
    %c0_464 = arith.constant 0 : index
    %724 = vector.load %arg34[%c0_462, %c0_463, %c0_464] : memref<4x8x32xbf16, #tpu.memory_space<vmem>>, vector<1x8x32xbf16>
    %725 = vector.shape_cast %724 : vector<1x8x32xbf16> to vector<8x32xbf16>
    %cst_465 = arith.constant dense<0.000000e+00> : vector<16x32xf32>
    %726 = tpu.matmul %723, %725, %cst_465 {dimension_numbers = #tpu.dot_dimension_numbers<[1], [0], [0], [1], [0, 0, 1, 1], [], []>} : vector<16x8xbf16>, vector<8x32xbf16>, vector<16x32xf32> -> vector<16x32xf32>
    %c1_466 = arith.constant 1 : index
    %c0_467 = arith.constant 0 : index
    %c0_468 = arith.constant 0 : index
    %727 = vector.load %arg35[%c1_466, %c0_467, %c0_468] : memref<4x32x8xbf16, #tpu.memory_space<vmem>>, vector<1x32x8xbf16>
    %728 = vector.shape_cast %727 : vector<1x32x8xbf16> to vector<32x8xbf16>
    %c1_469 = arith.constant 1 : index
    %c0_470 = arith.constant 0 : index
    %c0_471 = arith.constant 0 : index
    %729 = vector.load %arg31[%c1_469, %c0_470, %c0_471] : memref<4x1x8xf32, #tpu.memory_space<vmem>>, vector<1x1x8xf32>
    %730 = vector.shape_cast %729 : vector<1x1x8xf32> to vector<1x8xf32>
    %731 = arith.truncf %680 : vector<16x32xf32> to vector<16x32xbf16>
    %cst_472 = arith.constant dense<0.000000e+00> : vector<16x8xf32>
    %732 = tpu.matmul %731, %728, %cst_472 {dimension_numbers = #tpu.dot_dimension_numbers<[1], [0], [0], [1], [0, 0, 1, 1], [], []>} : vector<16x32xbf16>, vector<32x8xbf16>, vector<16x8xf32> -> vector<16x8xf32>
    %733 = vector.broadcast %730 : vector<1x8xf32> to vector<16x8xf32>
    %734 = arith.addf %732, %733 : vector<16x8xf32>
    %c1_473 = arith.constant 1 : index
    %c0_474 = arith.constant 0 : index
    %c0_475 = arith.constant 0 : index
    %735 = vector.load %arg33[%c1_473, %c0_474, %c0_475] : memref<4x32x8xbf16, #tpu.memory_space<vmem>>, vector<1x32x8xbf16>
    %736 = vector.shape_cast %735 : vector<1x32x8xbf16> to vector<32x8xbf16>
    %c1_476 = arith.constant 1 : index
    %c0_477 = arith.constant 0 : index
    %c0_478 = arith.constant 0 : index
    %737 = vector.load %arg29[%c1_476, %c0_477, %c0_478] : memref<4x1x8xf32, #tpu.memory_space<vmem>>, vector<1x1x8xf32>
    %738 = vector.shape_cast %737 : vector<1x1x8xf32> to vector<1x8xf32>
    %739 = arith.truncf %70 : vector<16x32xf32> to vector<16x32xbf16>
    %cst_479 = arith.constant dense<0.000000e+00> : vector<16x8xf32>
    %740 = tpu.matmul %739, %736, %cst_479 {dimension_numbers = #tpu.dot_dimension_numbers<[1], [0], [0], [1], [0, 0, 1, 1], [], []>} : vector<16x32xbf16>, vector<32x8xbf16>, vector<16x8xf32> -> vector<16x8xf32>
    %741 = vector.broadcast %738 : vector<1x8xf32> to vector<16x8xf32>
    %742 = arith.addf %740, %741 : vector<16x8xf32>
    %c1_480 = arith.constant 1 : index
    %c0_481 = arith.constant 0 : index
    %c0_482 = arith.constant 0 : index
    %743 = vector.load %arg36[%c1_480, %c0_481, %c0_482] : memref<4x32x8xbf16, #tpu.memory_space<vmem>>, vector<1x32x8xbf16>
    %744 = vector.shape_cast %743 : vector<1x32x8xbf16> to vector<32x8xbf16>
    %c1_483 = arith.constant 1 : index
    %c0_484 = arith.constant 0 : index
    %c0_485 = arith.constant 0 : index
    %745 = vector.load %arg32[%c1_483, %c0_484, %c0_485] : memref<4x1x8xf32, #tpu.memory_space<vmem>>, vector<1x1x8xf32>
    %746 = vector.shape_cast %745 : vector<1x1x8xf32> to vector<1x8xf32>
    %747 = arith.truncf %70 : vector<16x32xf32> to vector<16x32xbf16>
    %cst_486 = arith.constant dense<0.000000e+00> : vector<16x8xf32>
    %748 = tpu.matmul %747, %744, %cst_486 {dimension_numbers = #tpu.dot_dimension_numbers<[1], [0], [0], [1], [0, 0, 1, 1], [], []>} : vector<16x32xbf16>, vector<32x8xbf16>, vector<16x8xf32> -> vector<16x8xf32>
    %749 = vector.broadcast %746 : vector<1x8xf32> to vector<16x8xf32>
    %750 = arith.addf %748, %749 : vector<16x8xf32>
    %751 = arith.truncf %734 : vector<16x8xf32> to vector<16x8xbf16>
    %752 = arith.truncf %742 : vector<16x8xf32> to vector<16x8xbf16>
    %cst_487 = arith.constant dense<0.000000e+00> : vector<16x16xf32>
    %753 = tpu.matmul %751, %752, %cst_487 {dimension_numbers = #tpu.dot_dimension_numbers<[1], [1], [0], [0], [0, 0, 1, 0], [], []>} : vector<16x8xbf16>, vector<16x8xbf16>, vector<16x16xf32> -> vector<16x16xf32>
    %cst_488 = arith.constant 0.353553385 : f32
    %754 = vector.broadcast %cst_488 : f32 to vector<16x16xf32>
    %755 = arith.mulf %753, %754 : vector<16x16xf32>
    %cst_489 = arith.constant dense<0xFF800000> : vector<16xf32>
    %756 = vector.multi_reduction <maximumf>, %755, %cst_489 [1] : vector<16x16xf32> to vector<16xf32>
    %757 = vector.shape_cast %756 : vector<16xf32> to vector<16x1xf32>
    %758 = vector.broadcast %757 : vector<16x1xf32> to vector<16x16xf32>
    %759 = arith.subf %755, %758 : vector<16x16xf32>
    %760 = math.exp %759 : vector<16x16xf32>
    %cst_490 = arith.constant dense<0.000000e+00> : vector<16xf32>
    %761 = vector.multi_reduction <add>, %760, %cst_490 [1] : vector<16x16xf32> to vector<16xf32>
    %762 = vector.shape_cast %761 : vector<16xf32> to vector<16x1xf32>
    %763 = tpu.reciprocal %762 {approx = true} : vector<16x1xf32> -> vector<16x1xf32>
    %764 = vector.broadcast %763 : vector<16x1xf32> to vector<16x16xf32>
    %765 = arith.mulf %760, %764 : vector<16x16xf32>
    %766 = arith.truncf %765 : vector<16x16xf32> to vector<16x16xbf16>
    %767 = arith.truncf %750 : vector<16x8xf32> to vector<16x8xbf16>
    %cst_491 = arith.constant dense<0.000000e+00> : vector<16x8xf32>
    %768 = tpu.matmul %766, %767, %cst_491 {dimension_numbers = #tpu.dot_dimension_numbers<[1], [0], [0], [1], [0, 0, 1, 1], [], []>} : vector<16x16xbf16>, vector<16x8xbf16>, vector<16x8xf32> -> vector<16x8xf32>
    %769 = arith.truncf %768 : vector<16x8xf32> to vector<16x8xbf16>
    %c1_492 = arith.constant 1 : index
    %c0_493 = arith.constant 0 : index
    %c0_494 = arith.constant 0 : index
    %770 = vector.load %arg34[%c1_492, %c0_493, %c0_494] : memref<4x8x32xbf16, #tpu.memory_space<vmem>>, vector<1x8x32xbf16>
    %771 = vector.shape_cast %770 : vector<1x8x32xbf16> to vector<8x32xbf16>
    %cst_495 = arith.constant dense<0.000000e+00> : vector<16x32xf32>
    %772 = tpu.matmul %769, %771, %cst_495 {dimension_numbers = #tpu.dot_dimension_numbers<[1], [0], [0], [1], [0, 0, 1, 1], [], []>} : vector<16x8xbf16>, vector<8x32xbf16>, vector<16x32xf32> -> vector<16x32xf32>
    %773 = arith.addf %726, %772 : vector<16x32xf32>
    %c2_496 = arith.constant 2 : index
    %c0_497 = arith.constant 0 : index
    %c0_498 = arith.constant 0 : index
    %774 = vector.load %arg35[%c2_496, %c0_497, %c0_498] : memref<4x32x8xbf16, #tpu.memory_space<vmem>>, vector<1x32x8xbf16>
    %775 = vector.shape_cast %774 : vector<1x32x8xbf16> to vector<32x8xbf16>
    %c2_499 = arith.constant 2 : index
    %c0_500 = arith.constant 0 : index
    %c0_501 = arith.constant 0 : index
    %776 = vector.load %arg31[%c2_499, %c0_500, %c0_501] : memref<4x1x8xf32, #tpu.memory_space<vmem>>, vector<1x1x8xf32>
    %777 = vector.shape_cast %776 : vector<1x1x8xf32> to vector<1x8xf32>
    %778 = arith.truncf %680 : vector<16x32xf32> to vector<16x32xbf16>
    %cst_502 = arith.constant dense<0.000000e+00> : vector<16x8xf32>
    %779 = tpu.matmul %778, %775, %cst_502 {dimension_numbers = #tpu.dot_dimension_numbers<[1], [0], [0], [1], [0, 0, 1, 1], [], []>} : vector<16x32xbf16>, vector<32x8xbf16>, vector<16x8xf32> -> vector<16x8xf32>
    %780 = vector.broadcast %777 : vector<1x8xf32> to vector<16x8xf32>
    %781 = arith.addf %779, %780 : vector<16x8xf32>
    %c2_503 = arith.constant 2 : index
    %c0_504 = arith.constant 0 : index
    %c0_505 = arith.constant 0 : index
    %782 = vector.load %arg33[%c2_503, %c0_504, %c0_505] : memref<4x32x8xbf16, #tpu.memory_space<vmem>>, vector<1x32x8xbf16>
    %783 = vector.shape_cast %782 : vector<1x32x8xbf16> to vector<32x8xbf16>
    %c2_506 = arith.constant 2 : index
    %c0_507 = arith.constant 0 : index
    %c0_508 = arith.constant 0 : index
    %784 = vector.load %arg29[%c2_506, %c0_507, %c0_508] : memref<4x1x8xf32, #tpu.memory_space<vmem>>, vector<1x1x8xf32>
    %785 = vector.shape_cast %784 : vector<1x1x8xf32> to vector<1x8xf32>
    %786 = arith.truncf %70 : vector<16x32xf32> to vector<16x32xbf16>
    %cst_509 = arith.constant dense<0.000000e+00> : vector<16x8xf32>
    %787 = tpu.matmul %786, %783, %cst_509 {dimension_numbers = #tpu.dot_dimension_numbers<[1], [0], [0], [1], [0, 0, 1, 1], [], []>} : vector<16x32xbf16>, vector<32x8xbf16>, vector<16x8xf32> -> vector<16x8xf32>
    %788 = vector.broadcast %785 : vector<1x8xf32> to vector<16x8xf32>
    %789 = arith.addf %787, %788 : vector<16x8xf32>
    %c2_510 = arith.constant 2 : index
    %c0_511 = arith.constant 0 : index
    %c0_512 = arith.constant 0 : index
    %790 = vector.load %arg36[%c2_510, %c0_511, %c0_512] : memref<4x32x8xbf16, #tpu.memory_space<vmem>>, vector<1x32x8xbf16>
    %791 = vector.shape_cast %790 : vector<1x32x8xbf16> to vector<32x8xbf16>
    %c2_513 = arith.constant 2 : index
    %c0_514 = arith.constant 0 : index
    %c0_515 = arith.constant 0 : index
    %792 = vector.load %arg32[%c2_513, %c0_514, %c0_515] : memref<4x1x8xf32, #tpu.memory_space<vmem>>, vector<1x1x8xf32>
    %793 = vector.shape_cast %792 : vector<1x1x8xf32> to vector<1x8xf32>
    %794 = arith.truncf %70 : vector<16x32xf32> to vector<16x32xbf16>
    %cst_516 = arith.constant dense<0.000000e+00> : vector<16x8xf32>
    %795 = tpu.matmul %794, %791, %cst_516 {dimension_numbers = #tpu.dot_dimension_numbers<[1], [0], [0], [1], [0, 0, 1, 1], [], []>} : vector<16x32xbf16>, vector<32x8xbf16>, vector<16x8xf32> -> vector<16x8xf32>
    %796 = vector.broadcast %793 : vector<1x8xf32> to vector<16x8xf32>
    %797 = arith.addf %795, %796 : vector<16x8xf32>
    %798 = arith.truncf %781 : vector<16x8xf32> to vector<16x8xbf16>
    %799 = arith.truncf %789 : vector<16x8xf32> to vector<16x8xbf16>
    %cst_517 = arith.constant dense<0.000000e+00> : vector<16x16xf32>
    %800 = tpu.matmul %798, %799, %cst_517 {dimension_numbers = #tpu.dot_dimension_numbers<[1], [1], [0], [0], [0, 0, 1, 0], [], []>} : vector<16x8xbf16>, vector<16x8xbf16>, vector<16x16xf32> -> vector<16x16xf32>
    %cst_518 = arith.constant 0.353553385 : f32
    %801 = vector.broadcast %cst_518 : f32 to vector<16x16xf32>
    %802 = arith.mulf %800, %801 : vector<16x16xf32>
    %cst_519 = arith.constant dense<0xFF800000> : vector<16xf32>
    %803 = vector.multi_reduction <maximumf>, %802, %cst_519 [1] : vector<16x16xf32> to vector<16xf32>
    %804 = vector.shape_cast %803 : vector<16xf32> to vector<16x1xf32>
    %805 = vector.broadcast %804 : vector<16x1xf32> to vector<16x16xf32>
    %806 = arith.subf %802, %805 : vector<16x16xf32>
    %807 = math.exp %806 : vector<16x16xf32>
    %cst_520 = arith.constant dense<0.000000e+00> : vector<16xf32>
    %808 = vector.multi_reduction <add>, %807, %cst_520 [1] : vector<16x16xf32> to vector<16xf32>
    %809 = vector.shape_cast %808 : vector<16xf32> to vector<16x1xf32>
    %810 = tpu.reciprocal %809 {approx = true} : vector<16x1xf32> -> vector<16x1xf32>
    %811 = vector.broadcast %810 : vector<16x1xf32> to vector<16x16xf32>
    %812 = arith.mulf %807, %811 : vector<16x16xf32>
    %813 = arith.truncf %812 : vector<16x16xf32> to vector<16x16xbf16>
    %814 = arith.truncf %797 : vector<16x8xf32> to vector<16x8xbf16>
    %cst_521 = arith.constant dense<0.000000e+00> : vector<16x8xf32>
    %815 = tpu.matmul %813, %814, %cst_521 {dimension_numbers = #tpu.dot_dimension_numbers<[1], [0], [0], [1], [0, 0, 1, 1], [], []>} : vector<16x16xbf16>, vector<16x8xbf16>, vector<16x8xf32> -> vector<16x8xf32>
    %816 = arith.truncf %815 : vector<16x8xf32> to vector<16x8xbf16>
    %c2_522 = arith.constant 2 : index
    %c0_523 = arith.constant 0 : index
    %c0_524 = arith.constant 0 : index
    %817 = vector.load %arg34[%c2_522, %c0_523, %c0_524] : memref<4x8x32xbf16, #tpu.memory_space<vmem>>, vector<1x8x32xbf16>
    %818 = vector.shape_cast %817 : vector<1x8x32xbf16> to vector<8x32xbf16>
    %cst_525 = arith.constant dense<0.000000e+00> : vector<16x32xf32>
    %819 = tpu.matmul %816, %818, %cst_525 {dimension_numbers = #tpu.dot_dimension_numbers<[1], [0], [0], [1], [0, 0, 1, 1], [], []>} : vector<16x8xbf16>, vector<8x32xbf16>, vector<16x32xf32> -> vector<16x32xf32>
    %820 = arith.addf %773, %819 : vector<16x32xf32>
    %c3_526 = arith.constant 3 : index
    %c0_527 = arith.constant 0 : index
    %c0_528 = arith.constant 0 : index
    %821 = vector.load %arg35[%c3_526, %c0_527, %c0_528] : memref<4x32x8xbf16, #tpu.memory_space<vmem>>, vector<1x32x8xbf16>
    %822 = vector.shape_cast %821 : vector<1x32x8xbf16> to vector<32x8xbf16>
    %c3_529 = arith.constant 3 : index
    %c0_530 = arith.constant 0 : index
    %c0_531 = arith.constant 0 : index
    %823 = vector.load %arg31[%c3_529, %c0_530, %c0_531] : memref<4x1x8xf32, #tpu.memory_space<vmem>>, vector<1x1x8xf32>
    %824 = vector.shape_cast %823 : vector<1x1x8xf32> to vector<1x8xf32>
    %825 = arith.truncf %680 : vector<16x32xf32> to vector<16x32xbf16>
    %cst_532 = arith.constant dense<0.000000e+00> : vector<16x8xf32>
    %826 = tpu.matmul %825, %822, %cst_532 {dimension_numbers = #tpu.dot_dimension_numbers<[1], [0], [0], [1], [0, 0, 1, 1], [], []>} : vector<16x32xbf16>, vector<32x8xbf16>, vector<16x8xf32> -> vector<16x8xf32>
    %827 = vector.broadcast %824 : vector<1x8xf32> to vector<16x8xf32>
    %828 = arith.addf %826, %827 : vector<16x8xf32>
    %c3_533 = arith.constant 3 : index
    %c0_534 = arith.constant 0 : index
    %c0_535 = arith.constant 0 : index
    %829 = vector.load %arg33[%c3_533, %c0_534, %c0_535] : memref<4x32x8xbf16, #tpu.memory_space<vmem>>, vector<1x32x8xbf16>
    %830 = vector.shape_cast %829 : vector<1x32x8xbf16> to vector<32x8xbf16>
    %c3_536 = arith.constant 3 : index
    %c0_537 = arith.constant 0 : index
    %c0_538 = arith.constant 0 : index
    %831 = vector.load %arg29[%c3_536, %c0_537, %c0_538] : memref<4x1x8xf32, #tpu.memory_space<vmem>>, vector<1x1x8xf32>
    %832 = vector.shape_cast %831 : vector<1x1x8xf32> to vector<1x8xf32>
    %833 = arith.truncf %70 : vector<16x32xf32> to vector<16x32xbf16>
    %cst_539 = arith.constant dense<0.000000e+00> : vector<16x8xf32>
    %834 = tpu.matmul %833, %830, %cst_539 {dimension_numbers = #tpu.dot_dimension_numbers<[1], [0], [0], [1], [0, 0, 1, 1], [], []>} : vector<16x32xbf16>, vector<32x8xbf16>, vector<16x8xf32> -> vector<16x8xf32>
    %835 = vector.broadcast %832 : vector<1x8xf32> to vector<16x8xf32>
    %836 = arith.addf %834, %835 : vector<16x8xf32>
    %c3_540 = arith.constant 3 : index
    %c0_541 = arith.constant 0 : index
    %c0_542 = arith.constant 0 : index
    %837 = vector.load %arg36[%c3_540, %c0_541, %c0_542] : memref<4x32x8xbf16, #tpu.memory_space<vmem>>, vector<1x32x8xbf16>
    %838 = vector.shape_cast %837 : vector<1x32x8xbf16> to vector<32x8xbf16>
    %c3_543 = arith.constant 3 : index
    %c0_544 = arith.constant 0 : index
    %c0_545 = arith.constant 0 : index
    %839 = vector.load %arg32[%c3_543, %c0_544, %c0_545] : memref<4x1x8xf32, #tpu.memory_space<vmem>>, vector<1x1x8xf32>
    %840 = vector.shape_cast %839 : vector<1x1x8xf32> to vector<1x8xf32>
    %841 = arith.truncf %70 : vector<16x32xf32> to vector<16x32xbf16>
    %cst_546 = arith.constant dense<0.000000e+00> : vector<16x8xf32>
    %842 = tpu.matmul %841, %838, %cst_546 {dimension_numbers = #tpu.dot_dimension_numbers<[1], [0], [0], [1], [0, 0, 1, 1], [], []>} : vector<16x32xbf16>, vector<32x8xbf16>, vector<16x8xf32> -> vector<16x8xf32>
    %843 = vector.broadcast %840 : vector<1x8xf32> to vector<16x8xf32>
    %844 = arith.addf %842, %843 : vector<16x8xf32>
    %845 = arith.truncf %828 : vector<16x8xf32> to vector<16x8xbf16>
    %846 = arith.truncf %836 : vector<16x8xf32> to vector<16x8xbf16>
    %cst_547 = arith.constant dense<0.000000e+00> : vector<16x16xf32>
    %847 = tpu.matmul %845, %846, %cst_547 {dimension_numbers = #tpu.dot_dimension_numbers<[1], [1], [0], [0], [0, 0, 1, 0], [], []>} : vector<16x8xbf16>, vector<16x8xbf16>, vector<16x16xf32> -> vector<16x16xf32>
    %cst_548 = arith.constant 0.353553385 : f32
    %848 = vector.broadcast %cst_548 : f32 to vector<16x16xf32>
    %849 = arith.mulf %847, %848 : vector<16x16xf32>
    %cst_549 = arith.constant dense<0xFF800000> : vector<16xf32>
    %850 = vector.multi_reduction <maximumf>, %849, %cst_549 [1] : vector<16x16xf32> to vector<16xf32>
    %851 = vector.shape_cast %850 : vector<16xf32> to vector<16x1xf32>
    %852 = vector.broadcast %851 : vector<16x1xf32> to vector<16x16xf32>
    %853 = arith.subf %849, %852 : vector<16x16xf32>
    %854 = math.exp %853 : vector<16x16xf32>
    %cst_550 = arith.constant dense<0.000000e+00> : vector<16xf32>
    %855 = vector.multi_reduction <add>, %854, %cst_550 [1] : vector<16x16xf32> to vector<16xf32>
    %856 = vector.shape_cast %855 : vector<16xf32> to vector<16x1xf32>
    %857 = tpu.reciprocal %856 {approx = true} : vector<16x1xf32> -> vector<16x1xf32>
    %858 = vector.broadcast %857 : vector<16x1xf32> to vector<16x16xf32>
    %859 = arith.mulf %854, %858 : vector<16x16xf32>
    %860 = arith.truncf %859 : vector<16x16xf32> to vector<16x16xbf16>
    %861 = arith.truncf %844 : vector<16x8xf32> to vector<16x8xbf16>
    %cst_551 = arith.constant dense<0.000000e+00> : vector<16x8xf32>
    %862 = tpu.matmul %860, %861, %cst_551 {dimension_numbers = #tpu.dot_dimension_numbers<[1], [0], [0], [1], [0, 0, 1, 1], [], []>} : vector<16x16xbf16>, vector<16x8xbf16>, vector<16x8xf32> -> vector<16x8xf32>
    %863 = arith.truncf %862 : vector<16x8xf32> to vector<16x8xbf16>
    %c3_552 = arith.constant 3 : index
    %c0_553 = arith.constant 0 : index
    %c0_554 = arith.constant 0 : index
    %864 = vector.load %arg34[%c3_552, %c0_553, %c0_554] : memref<4x8x32xbf16, #tpu.memory_space<vmem>>, vector<1x8x32xbf16>
    %865 = vector.shape_cast %864 : vector<1x8x32xbf16> to vector<8x32xbf16>
    %cst_555 = arith.constant dense<0.000000e+00> : vector<16x32xf32>
    %866 = tpu.matmul %863, %865, %cst_555 {dimension_numbers = #tpu.dot_dimension_numbers<[1], [0], [0], [1], [0, 0, 1, 1], [], []>} : vector<16x8xbf16>, vector<8x32xbf16>, vector<16x32xf32> -> vector<16x32xf32>
    %867 = arith.addf %820, %866 : vector<16x32xf32>
    %c0_556 = arith.constant 0 : index
    %c0_557 = arith.constant 0 : index
    %868 = vector.load %arg30[%c0_556, %c0_557] : memref<1x32xf32, #tpu.memory_space<vmem>>, vector<1x32xf32>
    %869 = vector.broadcast %868 : vector<1x32xf32> to vector<16x32xf32>
    %870 = arith.addf %867, %869 : vector<16x32xf32>
    %c0_558 = arith.constant 0 : index
    %c0_559 = arith.constant 0 : index
    %871 = vector.load %arg51[%c0_558, %c0_559] : memref<32x64xbf16, #tpu.memory_space<vmem>>, vector<32x64xbf16>
    %c0_560 = arith.constant 0 : index
    %c0_561 = arith.constant 0 : index
    %872 = vector.load %arg47[%c0_560, %c0_561] : memref<1x64xf32, #tpu.memory_space<vmem>>, vector<1x64xf32>
    %873 = arith.truncf %870 : vector<16x32xf32> to vector<16x32xbf16>
    %cst_562 = arith.constant dense<0.000000e+00> : vector<16x64xf32>
    %874 = tpu.matmul %873, %871, %cst_562 {dimension_numbers = #tpu.dot_dimension_numbers<[1], [0], [0], [1], [0, 0, 1, 1], [], []>} : vector<16x32xbf16>, vector<32x64xbf16>, vector<16x64xf32> -> vector<16x64xf32>
    %875 = vector.broadcast %872 : vector<1x64xf32> to vector<16x64xf32>
    %876 = arith.addf %874, %875 : vector<16x64xf32>
    %cst_563 = arith.constant 0.000000e+00 : f32
    %877 = vector.broadcast %cst_563 : f32 to vector<16x64xf32>
    %878 = arith.maximumf %876, %877 : vector<16x64xf32>
    %c0_564 = arith.constant 0 : index
    %c0_565 = arith.constant 0 : index
    %879 = vector.load %arg52[%c0_564, %c0_565] : memref<64x32xbf16, #tpu.memory_space<vmem>>, vector<64x32xbf16>
    %c0_566 = arith.constant 0 : index
    %c0_567 = arith.constant 0 : index
    %880 = vector.load %arg48[%c0_566, %c0_567] : memref<1x32xf32, #tpu.memory_space<vmem>>, vector<1x32xf32>
    %881 = arith.truncf %878 : vector<16x64xf32> to vector<16x64xbf16>
    %cst_568 = arith.constant dense<0.000000e+00> : vector<16x32xf32>
    %882 = tpu.matmul %881, %879, %cst_568 {dimension_numbers = #tpu.dot_dimension_numbers<[1], [0], [0], [1], [0, 0, 1, 1], [], []>} : vector<16x64xbf16>, vector<64x32xbf16>, vector<16x32xf32> -> vector<16x32xf32>
    %883 = vector.broadcast %880 : vector<1x32xf32> to vector<16x32xf32>
    %884 = arith.addf %882, %883 : vector<16x32xf32>
    %c0_569 = arith.constant 0 : index
    %c0_570 = arith.constant 0 : index
    %885 = vector.load %arg50[%c0_569, %c0_570] : memref<1x32xf32, #tpu.memory_space<vmem>>, vector<1x32xf32>
    %c0_571 = arith.constant 0 : index
    %c0_572 = arith.constant 0 : index
    %886 = vector.load %arg49[%c0_571, %c0_572] : memref<1x32xf32, #tpu.memory_space<vmem>>, vector<1x32xf32>
    %cst_573 = arith.constant dense<0.000000e+00> : vector<16xf32>
    %887 = vector.multi_reduction <add>, %884, %cst_573 [1] : vector<16x32xf32> to vector<16xf32>
    %888 = vector.shape_cast %887 : vector<16xf32> to vector<16x1xf32>
    %cst_574 = arith.constant 3.200000e+01 : f32
    %889 = vector.broadcast %cst_574 : f32 to vector<16x1xf32>
    %890 = arith.divf %888, %889 : vector<16x1xf32>
    %891 = vector.broadcast %890 : vector<16x1xf32> to vector<16x32xf32>
    %892 = arith.subf %884, %891 : vector<16x32xf32>
    %893 = arith.mulf %892, %892 : vector<16x32xf32>
    %cst_575 = arith.constant dense<0.000000e+00> : vector<16xf32>
    %894 = vector.multi_reduction <add>, %893, %cst_575 [1] : vector<16x32xf32> to vector<16xf32>
    %895 = vector.shape_cast %894 : vector<16xf32> to vector<16x1xf32>
    %cst_576 = arith.constant 3.200000e+01 : f32
    %896 = vector.broadcast %cst_576 : f32 to vector<16x1xf32>
    %897 = arith.divf %895, %896 : vector<16x1xf32>
    %898 = vector.broadcast %890 : vector<16x1xf32> to vector<16x32xf32>
    %899 = arith.subf %884, %898 : vector<16x32xf32>
    %cst_577 = arith.constant 9.99999974E-6 : f32
    %900 = vector.broadcast %cst_577 : f32 to vector<16x1xf32>
    %901 = arith.addf %897, %900 : vector<16x1xf32>
    %902 = math.rsqrt %901 : vector<16x1xf32>
    %903 = vector.broadcast %902 : vector<16x1xf32> to vector<16x32xf32>
    %904 = arith.mulf %899, %903 : vector<16x32xf32>
    %905 = vector.broadcast %885 : vector<1x32xf32> to vector<16x32xf32>
    %906 = arith.mulf %904, %905 : vector<16x32xf32>
    %907 = vector.broadcast %886 : vector<1x32xf32> to vector<16x32xf32>
    %908 = arith.addf %906, %907 : vector<16x32xf32>
    %c0_578 = arith.constant 0 : index
    %c0_579 = arith.constant 0 : index
    %909 = vector.load %arg38[%c0_578, %c0_579] : memref<32x32xbf16, #tpu.memory_space<vmem>>, vector<32x32xbf16>
    %c0_580 = arith.constant 0 : index
    %c0_581 = arith.constant 0 : index
    %910 = vector.load %arg37[%c0_580, %c0_581] : memref<1x32xf32, #tpu.memory_space<vmem>>, vector<1x32xf32>
    %911 = arith.truncf %908 : vector<16x32xf32> to vector<16x32xbf16>
    %cst_582 = arith.constant dense<0.000000e+00> : vector<16x32xf32>
    %912 = tpu.matmul %911, %909, %cst_582 {dimension_numbers = #tpu.dot_dimension_numbers<[1], [0], [0], [1], [0, 0, 1, 1], [], []>} : vector<16x32xbf16>, vector<32x32xbf16>, vector<16x32xf32> -> vector<16x32xf32>
    %913 = vector.broadcast %910 : vector<1x32xf32> to vector<16x32xf32>
    %914 = arith.addf %912, %913 : vector<16x32xf32>
    %cst_583 = arith.constant 0.000000e+00 : f32
    %915 = vector.broadcast %cst_583 : f32 to vector<16x32xf32>
    %916 = arith.cmpf oge, %914, %915 : vector<16x32xf32>
    %cst_584 = arith.constant 0.00999999977 : f32
    %917 = vector.broadcast %cst_584 : f32 to vector<16x32xf32>
    %918 = arith.mulf %917, %914 : vector<16x32xf32>
    %919 = arith.select %916, %914, %918 : vector<16x32xi1>, vector<16x32xf32>
    %c0_585 = arith.constant 0 : index
    %c0_586 = arith.constant 0 : index
    %920 = vector.load %arg40[%c0_585, %c0_586] : memref<32x32xbf16, #tpu.memory_space<vmem>>, vector<32x32xbf16>
    %c0_587 = arith.constant 0 : index
    %c0_588 = arith.constant 0 : index
    %921 = vector.load %arg39[%c0_587, %c0_588] : memref<1x32xf32, #tpu.memory_space<vmem>>, vector<1x32xf32>
    %922 = arith.truncf %919 : vector<16x32xf32> to vector<16x32xbf16>
    %cst_589 = arith.constant dense<0.000000e+00> : vector<16x32xf32>
    %923 = tpu.matmul %922, %920, %cst_589 {dimension_numbers = #tpu.dot_dimension_numbers<[1], [0], [0], [1], [0, 0, 1, 1], [], []>} : vector<16x32xbf16>, vector<32x32xbf16>, vector<16x32xf32> -> vector<16x32xf32>
    %924 = vector.broadcast %921 : vector<1x32xf32> to vector<16x32xf32>
    %925 = arith.addf %923, %924 : vector<16x32xf32>
    %926 = arith.mulf %64, %925 : vector<16x32xf32>
    %c0_590 = arith.constant 0 : index
    %c0_591 = arith.constant 0 : index
    %927 = vector.load %arg68[%c0_590, %c0_591] : memref<32x32xbf16, #tpu.memory_space<vmem>>, vector<32x32xbf16>
    %c0_592 = arith.constant 0 : index
    %c0_593 = arith.constant 0 : index
    %928 = vector.load %arg67[%c0_592, %c0_593] : memref<1x32xf32, #tpu.memory_space<vmem>>, vector<1x32xf32>
    %929 = arith.truncf %926 : vector<16x32xf32> to vector<16x32xbf16>
    %cst_594 = arith.constant dense<0.000000e+00> : vector<16x32xf32>
    %930 = tpu.matmul %929, %927, %cst_594 {dimension_numbers = #tpu.dot_dimension_numbers<[1], [0], [0], [1], [0, 0, 1, 1], [], []>} : vector<16x32xbf16>, vector<32x32xbf16>, vector<16x32xf32> -> vector<16x32xf32>
    %931 = vector.broadcast %928 : vector<1x32xf32> to vector<16x32xf32>
    %932 = arith.addf %930, %931 : vector<16x32xf32>
    %cst_595 = arith.constant 0.000000e+00 : f32
    %933 = vector.broadcast %cst_595 : f32 to vector<16x32xf32>
    %934 = arith.cmpf oge, %932, %933 : vector<16x32xf32>
    %cst_596 = arith.constant 0.00999999977 : f32
    %935 = vector.broadcast %cst_596 : f32 to vector<16x32xf32>
    %936 = arith.mulf %935, %932 : vector<16x32xf32>
    %937 = arith.select %934, %932, %936 : vector<16x32xi1>, vector<16x32xf32>
    %c0_597 = arith.constant 0 : index
    %c0_598 = arith.constant 0 : index
    %938 = vector.load %arg70[%c0_597, %c0_598] : memref<32x32xbf16, #tpu.memory_space<vmem>>, vector<32x32xbf16>
    %c0_599 = arith.constant 0 : index
    %c0_600 = arith.constant 0 : index
    %939 = vector.load %arg69[%c0_599, %c0_600] : memref<1x32xf32, #tpu.memory_space<vmem>>, vector<1x32xf32>
    %940 = arith.truncf %937 : vector<16x32xf32> to vector<16x32xbf16>
    %cst_601 = arith.constant dense<0.000000e+00> : vector<16x32xf32>
    %941 = tpu.matmul %940, %938, %cst_601 {dimension_numbers = #tpu.dot_dimension_numbers<[1], [0], [0], [1], [0, 0, 1, 1], [], []>} : vector<16x32xbf16>, vector<32x32xbf16>, vector<16x32xf32> -> vector<16x32xf32>
    %942 = vector.broadcast %939 : vector<1x32xf32> to vector<16x32xf32>
    %943 = arith.addf %941, %942 : vector<16x32xf32>
    %cst_602 = arith.constant 0.000000e+00 : f32
    %944 = vector.broadcast %cst_602 : f32 to vector<16x32xf32>
    %945 = arith.cmpf oge, %943, %944 : vector<16x32xf32>
    %cst_603 = arith.constant 0.00999999977 : f32
    %946 = vector.broadcast %cst_603 : f32 to vector<16x32xf32>
    %947 = arith.mulf %946, %943 : vector<16x32xf32>
    %948 = arith.select %945, %943, %947 : vector<16x32xi1>, vector<16x32xf32>
    %949 = arith.negf %948 : vector<16x32xf32>
    %950 = math.exp %949 : vector<16x32xf32>
    %cst_604 = arith.constant 1.000000e+00 : f32
    %951 = vector.broadcast %cst_604 : f32 to vector<16x32xf32>
    %952 = arith.addf %951, %950 : vector<16x32xf32>
    %953 = arith.divf %951, %952 : vector<16x32xf32>
    %c0_605 = arith.constant 0 : index
    %c0_606 = arith.constant 0 : index
    %c0_607 = arith.constant 0 : index
    %954 = vector.load %arg71[%c0_605, %c0_606, %c0_607] : memref<1x16x32xf32, #tpu.memory_space<vmem>>, vector<1x16x32xf32>
    %955 = vector.shape_cast %954 : vector<1x16x32xf32> to vector<16x32xf32>
    %956 = vector.shape_cast %925 : vector<16x32xf32> to vector<1x16x32xf32>
    tpu.vector_store %arg71[%c0_605, %c0_606, %c0_607], %956 {strides = array<i32>} : memref<1x16x32xf32, #tpu.memory_space<vmem>>, vector<1x16x32xf32>,
    %c0_608 = arith.constant 0 : index
    %c0_609 = arith.constant 0 : index
    %c0_610 = arith.constant 0 : index
    %957 = vector.load %arg72[%c0_608, %c0_609, %c0_610] : memref<1x16x32xf32, #tpu.memory_space<vmem>>, vector<1x16x32xf32>
    %958 = vector.shape_cast %957 : vector<1x16x32xf32> to vector<16x32xf32>
    %959 = vector.shape_cast %926 : vector<16x32xf32> to vector<1x16x32xf32>
    tpu.vector_store %arg72[%c0_608, %c0_609, %c0_610], %959 {strides = array<i32>} : memref<1x16x32xf32, #tpu.memory_space<vmem>>, vector<1x16x32xf32>,
    %c0_611 = arith.constant 0 : index
    %c0_612 = arith.constant 0 : index
    %c0_613 = arith.constant 0 : index
    %960 = vector.load %arg73[%c0_611, %c0_612, %c0_613] : memref<1x16x32xf32, #tpu.memory_space<vmem>>, vector<1x16x32xf32>
    %961 = vector.shape_cast %960 : vector<1x16x32xf32> to vector<16x32xf32>
    %962 = vector.shape_cast %953 : vector<16x32xf32> to vector<1x16x32xf32>
    tpu.vector_store %arg73[%c0_611, %c0_612, %c0_613], %962 {strides = array<i32>} : memref<1x16x32xf32, #tpu.memory_space<vmem>>, vector<1x16x32xf32>,
    return
  }
  func.func @transform_0(%arg0: i32) -> (i32, i32, i32) {
    %c0_i32 = arith.constant 0 : i32
    %c0_i32_0 = arith.constant 0 : i32
    %c0_i32_1 = arith.constant 0 : i32
    return %arg0, %c0_i32, %c0_i32_0 : i32, i32, i32
  }
  func.func @transform_1(%arg0: i32) -> (i32, i32, i32) {
    %c0_i32 = arith.constant 0 : i32
    %c0_i32_0 = arith.constant 0 : i32
    %c0_i32_1 = arith.constant 0 : i32
    return %arg0, %c0_i32, %c0_i32_0 : i32, i32, i32
  }
  func.func @transform_2(%arg0: i32) -> (i32, i32, i32) {
    %c0_i32 = arith.constant 0 : i32
    %c0_i32_0 = arith.constant 0 : i32
    %c0_i32_1 = arith.constant 0 : i32
    return %arg0, %c0_i32, %c0_i32_0 : i32, i32, i32
  }
  func.func @transform_3(%arg0: i32) -> (i32, i32) {
    %c0_i32 = arith.constant 0 : i32
    %c0_i32_0 = arith.constant 0 : i32
    %c0_i32_1 = arith.constant 0 : i32
    return %c0_i32, %c0_i32_0 : i32, i32
  }
  func.func @transform_4(%arg0: i32) -> (i32, i32, i32) {
    %c0_i32 = arith.constant 0 : i32
    %c0_i32_0 = arith.constant 0 : i32
    %c0_i32_1 = arith.constant 0 : i32
    %c0_i32_2 = arith.constant 0 : i32
    return %c0_i32, %c0_i32_0, %c0_i32_1 : i32, i32, i32
  }
  func.func @transform_5(%arg0: i32) -> (i32, i32) {
    %c0_i32 = arith.constant 0 : i32
    %c0_i32_0 = arith.constant 0 : i32
    %c0_i32_1 = arith.constant 0 : i32
    return %c0_i32, %c0_i32_0 : i32, i32
  }
  func.func @transform_6(%arg0: i32) -> (i32, i32, i32) {
    %c0_i32 = arith.constant 0 : i32
    %c0_i32_0 = arith.constant 0 : i32
    %c0_i32_1 = arith.constant 0 : i32
    %c0_i32_2 = arith.constant 0 : i32
    return %c0_i32, %c0_i32_0, %c0_i32_1 : i32, i32, i32
  }
  func.func @transform_7(%arg0: i32) -> (i32, i32, i32) {
    %c0_i32 = arith.constant 0 : i32
    %c0_i32_0 = arith.constant 0 : i32
    %c0_i32_1 = arith.constant 0 : i32
    %c0_i32_2 = arith.constant 0 : i32
    return %c0_i32, %c0_i32_0, %c0_i32_1 : i32, i32, i32
  }
  func.func @transform_8(%arg0: i32) -> (i32, i32, i32) {
    %c0_i32 = arith.constant 0 : i32
    %c0_i32_0 = arith.constant 0 : i32
    %c0_i32_1 = arith.constant 0 : i32
    %c0_i32_2 = arith.constant 0 : i32
    return %c0_i32, %c0_i32_0, %c0_i32_1 : i32, i32, i32
  }
  func.func @transform_9(%arg0: i32) -> (i32, i32, i32) {
    %c0_i32 = arith.constant 0 : i32
    %c0_i32_0 = arith.constant 0 : i32
    %c0_i32_1 = arith.constant 0 : i32
    %c0_i32_2 = arith.constant 0 : i32
    return %c0_i32, %c0_i32_0, %c0_i32_1 : i32, i32, i32
  }
  func.func @transform_10(%arg0: i32) -> (i32, i32, i32) {
    %c0_i32 = arith.constant 0 : i32
    %c0_i32_0 = arith.constant 0 : i32
    %c0_i32_1 = arith.constant 0 : i32
    %c0_i32_2 = arith.constant 0 : i32
    return %c0_i32, %c0_i32_0, %c0_i32_1 : i32, i32, i32
  }
  func.func @transform_11(%arg0: i32) -> (i32, i32, i32) {
    %c0_i32 = arith.constant 0 : i32
    %c0_i32_0 = arith.constant 0 : i32
    %c0_i32_1 = arith.constant 0 : i32
    %c0_i32_2 = arith.constant 0 : i32
    return %c0_i32, %c0_i32_0, %c0_i32_1 : i32, i32, i32
  }
  func.func @transform_12(%arg0: i32) -> (i32, i32, i32) {
    %c0_i32 = arith.constant 0 : i32
    %c0_i32_0 = arith.constant 0 : i32
    %c0_i32_1 = arith.constant 0 : i32
    %c0_i32_2 = arith.constant 0 : i32
    return %c0_i32, %c0_i32_0, %c0_i32_1 : i32, i32, i32
  }
  func.func @transform_13(%arg0: i32) -> (i32, i32) {
    %c0_i32 = arith.constant 0 : i32
    %c0_i32_0 = arith.constant 0 : i32
    %c0_i32_1 = arith.constant 0 : i32
    return %c0_i32, %c0_i32_0 : i32, i32
  }
  func.func @transform_14(%arg0: i32) -> (i32, i32, i32) {
    %c0_i32 = arith.constant 0 : i32
    %c0_i32_0 = arith.constant 0 : i32
    %c0_i32_1 = arith.constant 0 : i32
    %c0_i32_2 = arith.constant 0 : i32
    return %c0_i32, %c0_i32_0, %c0_i32_1 : i32, i32, i32
  }
  func.func @transform_15(%arg0: i32) -> (i32, i32, i32) {
    %c0_i32 = arith.constant 0 : i32
    %c0_i32_0 = arith.constant 0 : i32
    %c0_i32_1 = arith.constant 0 : i32
    %c0_i32_2 = arith.constant 0 : i32
    return %c0_i32, %c0_i32_0, %c0_i32_1 : i32, i32, i32
  }
  func.func @transform_16(%arg0: i32) -> (i32, i32, i32) {
    %c0_i32 = arith.constant 0 : i32
    %c0_i32_0 = arith.constant 0 : i32
    %c0_i32_1 = arith.constant 0 : i32
    %c0_i32_2 = arith.constant 0 : i32
    return %c0_i32, %c0_i32_0, %c0_i32_1 : i32, i32, i32
  }
  func.func @transform_17(%arg0: i32) -> (i32, i32, i32) {
    %c0_i32 = arith.constant 0 : i32
    %c0_i32_0 = arith.constant 0 : i32
    %c0_i32_1 = arith.constant 0 : i32
    %c0_i32_2 = arith.constant 0 : i32
    return %c0_i32, %c0_i32_0, %c0_i32_1 : i32, i32, i32
  }
  func.func @transform_18(%arg0: i32) -> (i32, i32, i32) {
    %c0_i32 = arith.constant 0 : i32
    %c0_i32_0 = arith.constant 0 : i32
    %c0_i32_1 = arith.constant 0 : i32
    %c0_i32_2 = arith.constant 0 : i32
    return %c0_i32, %c0_i32_0, %c0_i32_1 : i32, i32, i32
  }
  func.func @transform_19(%arg0: i32) -> (i32, i32, i32) {
    %c0_i32 = arith.constant 0 : i32
    %c0_i32_0 = arith.constant 0 : i32
    %c0_i32_1 = arith.constant 0 : i32
    %c0_i32_2 = arith.constant 0 : i32
    return %c0_i32, %c0_i32_0, %c0_i32_1 : i32, i32, i32
  }
  func.func @transform_20(%arg0: i32) -> (i32, i32, i32) {
    %c0_i32 = arith.constant 0 : i32
    %c0_i32_0 = arith.constant 0 : i32
    %c0_i32_1 = arith.constant 0 : i32
    %c0_i32_2 = arith.constant 0 : i32
    return %c0_i32, %c0_i32_0, %c0_i32_1 : i32, i32, i32
  }
  func.func @transform_21(%arg0: i32) -> (i32, i32) {
    %c0_i32 = arith.constant 0 : i32
    %c0_i32_0 = arith.constant 0 : i32
    %c0_i32_1 = arith.constant 0 : i32
    return %c0_i32, %c0_i32_0 : i32, i32
  }
  func.func @transform_22(%arg0: i32) -> (i32, i32, i32) {
    %c0_i32 = arith.constant 0 : i32
    %c0_i32_0 = arith.constant 0 : i32
    %c0_i32_1 = arith.constant 0 : i32
    %c0_i32_2 = arith.constant 0 : i32
    return %c0_i32, %c0_i32_0, %c0_i32_1 : i32, i32, i32
  }
  func.func @transform_23(%arg0: i32) -> (i32, i32, i32) {
    %c0_i32 = arith.constant 0 : i32
    %c0_i32_0 = arith.constant 0 : i32
    %c0_i32_1 = arith.constant 0 : i32
    %c0_i32_2 = arith.constant 0 : i32
    return %c0_i32, %c0_i32_0, %c0_i32_1 : i32, i32, i32
  }
  func.func @transform_24(%arg0: i32) -> (i32, i32, i32) {
    %c0_i32 = arith.constant 0 : i32
    %c0_i32_0 = arith.constant 0 : i32
    %c0_i32_1 = arith.constant 0 : i32
    %c0_i32_2 = arith.constant 0 : i32
    return %c0_i32, %c0_i32_0, %c0_i32_1 : i32, i32, i32
  }
  func.func @transform_25(%arg0: i32) -> (i32, i32, i32) {
    %c0_i32 = arith.constant 0 : i32
    %c0_i32_0 = arith.constant 0 : i32
    %c0_i32_1 = arith.constant 0 : i32
    %c0_i32_2 = arith.constant 0 : i32
    return %c0_i32, %c0_i32_0, %c0_i32_1 : i32, i32, i32
  }
  func.func @transform_26(%arg0: i32) -> (i32, i32, i32) {
    %c0_i32 = arith.constant 0 : i32
    %c0_i32_0 = arith.constant 0 : i32
    %c0_i32_1 = arith.constant 0 : i32
    %c0_i32_2 = arith.constant 0 : i32
    return %c0_i32, %c0_i32_0, %c0_i32_1 : i32, i32, i32
  }
  func.func @transform_27(%arg0: i32) -> (i32, i32, i32) {
    %c0_i32 = arith.constant 0 : i32
    %c0_i32_0 = arith.constant 0 : i32
    %c0_i32_1 = arith.constant 0 : i32
    %c0_i32_2 = arith.constant 0 : i32
    return %c0_i32, %c0_i32_0, %c0_i32_1 : i32, i32, i32
  }
  func.func @transform_28(%arg0: i32) -> (i32, i32, i32) {
    %c0_i32 = arith.constant 0 : i32
    %c0_i32_0 = arith.constant 0 : i32
    %c0_i32_1 = arith.constant 0 : i32
    %c0_i32_2 = arith.constant 0 : i32
    return %c0_i32, %c0_i32_0, %c0_i32_1 : i32, i32, i32
  }
  func.func @transform_29(%arg0: i32) -> (i32, i32) {
    %c0_i32 = arith.constant 0 : i32
    %c0_i32_0 = arith.constant 0 : i32
    %c0_i32_1 = arith.constant 0 : i32
    return %c0_i32, %c0_i32_0 : i32, i32
  }
  func.func @transform_30(%arg0: i32) -> (i32, i32, i32) {
    %c0_i32 = arith.constant 0 : i32
    %c0_i32_0 = arith.constant 0 : i32
    %c0_i32_1 = arith.constant 0 : i32
    %c0_i32_2 = arith.constant 0 : i32
    return %c0_i32, %c0_i32_0, %c0_i32_1 : i32, i32, i32
  }
  func.func @transform_31(%arg0: i32) -> (i32, i32, i32) {
    %c0_i32 = arith.constant 0 : i32
    %c0_i32_0 = arith.constant 0 : i32
    %c0_i32_1 = arith.constant 0 : i32
    %c0_i32_2 = arith.constant 0 : i32
    return %c0_i32, %c0_i32_0, %c0_i32_1 : i32, i32, i32
  }
  func.func @transform_32(%arg0: i32) -> (i32, i32, i32) {
    %c0_i32 = arith.constant 0 : i32
    %c0_i32_0 = arith.constant 0 : i32
    %c0_i32_1 = arith.constant 0 : i32
    %c0_i32_2 = arith.constant 0 : i32
    return %c0_i32, %c0_i32_0, %c0_i32_1 : i32, i32, i32
  }
  func.func @transform_33(%arg0: i32) -> (i32, i32, i32) {
    %c0_i32 = arith.constant 0 : i32
    %c0_i32_0 = arith.constant 0 : i32
    %c0_i32_1 = arith.constant 0 : i32
    %c0_i32_2 = arith.constant 0 : i32
    return %c0_i32, %c0_i32_0, %c0_i32_1 : i32, i32, i32
  }
  func.func @transform_34(%arg0: i32) -> (i32, i32, i32) {
    %c0_i32 = arith.constant 0 : i32
    %c0_i32_0 = arith.constant 0 : i32
    %c0_i32_1 = arith.constant 0 : i32
    %c0_i32_2 = arith.constant 0 : i32
    return %c0_i32, %c0_i32_0, %c0_i32_1 : i32, i32, i32
  }
  func.func @transform_35(%arg0: i32) -> (i32, i32, i32) {
    %c0_i32 = arith.constant 0 : i32
    %c0_i32_0 = arith.constant 0 : i32
    %c0_i32_1 = arith.constant 0 : i32
    %c0_i32_2 = arith.constant 0 : i32
    return %c0_i32, %c0_i32_0, %c0_i32_1 : i32, i32, i32
  }
  func.func @transform_36(%arg0: i32) -> (i32, i32) {
    %c0_i32 = arith.constant 0 : i32
    %c0_i32_0 = arith.constant 0 : i32
    %c0_i32_1 = arith.constant 0 : i32
    return %c0_i32, %c0_i32_0 : i32, i32
  }
  func.func @transform_37(%arg0: i32) -> (i32, i32) {
    %c0_i32 = arith.constant 0 : i32
    %c0_i32_0 = arith.constant 0 : i32
    %c0_i32_1 = arith.constant 0 : i32
    return %c0_i32, %c0_i32_0 : i32, i32
  }
  func.func @transform_38(%arg0: i32) -> (i32, i32) {
    %c0_i32 = arith.constant 0 : i32
    %c0_i32_0 = arith.constant 0 : i32
    %c0_i32_1 = arith.constant 0 : i32
    return %c0_i32, %c0_i32_0 : i32, i32
  }
  func.func @transform_39(%arg0: i32) -> (i32, i32) {
    %c0_i32 = arith.constant 0 : i32
    %c0_i32_0 = arith.constant 0 : i32
    %c0_i32_1 = arith.constant 0 : i32
    return %c0_i32, %c0_i32_0 : i32, i32
  }
  func.func @transform_40(%arg0: i32) -> (i32, i32) {
    %c0_i32 = arith.constant 0 : i32
    %c0_i32_0 = arith.constant 0 : i32
    %c0_i32_1 = arith.constant 0 : i32
    return %c0_i32, %c0_i32_0 : i32, i32
  }
  func.func @transform_41(%arg0: i32) -> (i32, i32) {
    %c0_i32 = arith.constant 0 : i32
    %c0_i32_0 = arith.constant 0 : i32
    %c0_i32_1 = arith.constant 0 : i32
    return %c0_i32, %c0_i32_0 : i32, i32
  }
  func.func @transform_42(%arg0: i32) -> (i32, i32) {
    %c0_i32 = arith.constant 0 : i32
    %c0_i32_0 = arith.constant 0 : i32
    %c0_i32_1 = arith.constant 0 : i32
    return %c0_i32, %c0_i32_0 : i32, i32
  }
  func.func @transform_43(%arg0: i32) -> (i32, i32) {
    %c0_i32 = arith.constant 0 : i32
    %c0_i32_0 = arith.constant 0 : i32
    %c0_i32_1 = arith.constant 0 : i32
    return %c0_i32, %c0_i32_0 : i32, i32
  }
  func.func @transform_44(%arg0: i32) -> (i32, i32) {
    %c0_i32 = arith.constant 0 : i32
    %c0_i32_0 = arith.constant 0 : i32
    %c0_i32_1 = arith.constant 0 : i32
    return %c0_i32, %c0_i32_0 : i32, i32
  }
  func.func @transform_45(%arg0: i32) -> (i32, i32) {
    %c0_i32 = arith.constant 0 : i32
    %c0_i32_0 = arith.constant 0 : i32
    %c0_i32_1 = arith.constant 0 : i32
    return %c0_i32, %c0_i32_0 : i32, i32
  }
  func.func @transform_46(%arg0: i32) -> (i32, i32) {
    %c0_i32 = arith.constant 0 : i32
    %c0_i32_0 = arith.constant 0 : i32
    %c0_i32_1 = arith.constant 0 : i32
    return %c0_i32, %c0_i32_0 : i32, i32
  }
  func.func @transform_47(%arg0: i32) -> (i32, i32) {
    %c0_i32 = arith.constant 0 : i32
    %c0_i32_0 = arith.constant 0 : i32
    %c0_i32_1 = arith.constant 0 : i32
    return %c0_i32, %c0_i32_0 : i32, i32
  }
  func.func @transform_48(%arg0: i32) -> (i32, i32) {
    %c0_i32 = arith.constant 0 : i32
    %c0_i32_0 = arith.constant 0 : i32
    %c0_i32_1 = arith.constant 0 : i32
    return %c0_i32, %c0_i32_0 : i32, i32
  }
  func.func @transform_49(%arg0: i32) -> (i32, i32) {
    %c0_i32 = arith.constant 0 : i32
    %c0_i32_0 = arith.constant 0 : i32
    %c0_i32_1 = arith.constant 0 : i32
    return %c0_i32, %c0_i32_0 : i32, i32
  }
  func.func @transform_50(%arg0: i32) -> (i32, i32) {
    %c0_i32 = arith.constant 0 : i32
    %c0_i32_0 = arith.constant 0 : i32
    %c0_i32_1 = arith.constant 0 : i32
    return %c0_i32, %c0_i32_0 : i32, i32
  }
  func.func @transform_51(%arg0: i32) -> (i32, i32) {
    %c0_i32 = arith.constant 0 : i32
    %c0_i32_0 = arith.constant 0 : i32
    %c0_i32_1 = arith.constant 0 : i32
    return %c0_i32, %c0_i32_0 : i32, i32
  }
  func.func @transform_52(%arg0: i32) -> (i32, i32) {
    %c0_i32 = arith.constant 0 : i32
    %c0_i32_0 = arith.constant 0 : i32
    %c0_i32_1 = arith.constant 0 : i32
    return %c0_i32, %c0_i32_0 : i32, i32
  }
  func.func @transform_53(%arg0: i32) -> (i32, i32) {
    %c0_i32 = arith.constant 0 : i32
    %c0_i32_0 = arith.constant 0 : i32
    %c0_i32_1 = arith.constant 0 : i32
    return %c0_i32, %c0_i32_0 : i32, i32
  }
  func.func @transform_54(%arg0: i32) -> (i32, i32) {
    %c0_i32 = arith.constant 0 : i32
    %c0_i32_0 = arith.constant 0 : i32
    %c0_i32_1 = arith.constant 0 : i32
    return %c0_i32, %c0_i32_0 : i32, i32
  }
  func.func @transform_55(%arg0: i32) -> (i32, i32) {
    %c0_i32 = arith.constant 0 : i32
    %c0_i32_0 = arith.constant 0 : i32
    %c0_i32_1 = arith.constant 0 : i32
    return %c0_i32, %c0_i32_0 : i32, i32
  }
  func.func @transform_56(%arg0: i32) -> (i32, i32) {
    %c0_i32 = arith.constant 0 : i32
    %c0_i32_0 = arith.constant 0 : i32
    %c0_i32_1 = arith.constant 0 : i32
    return %c0_i32, %c0_i32_0 : i32, i32
  }
  func.func @transform_57(%arg0: i32) -> (i32, i32) {
    %c0_i32 = arith.constant 0 : i32
    %c0_i32_0 = arith.constant 0 : i32
    %c0_i32_1 = arith.constant 0 : i32
    return %c0_i32, %c0_i32_0 : i32, i32
  }
  func.func @transform_58(%arg0: i32) -> (i32, i32) {
    %c0_i32 = arith.constant 0 : i32
    %c0_i32_0 = arith.constant 0 : i32
    %c0_i32_1 = arith.constant 0 : i32
    return %c0_i32, %c0_i32_0 : i32, i32
  }
  func.func @transform_59(%arg0: i32) -> (i32, i32) {
    %c0_i32 = arith.constant 0 : i32
    %c0_i32_0 = arith.constant 0 : i32
    %c0_i32_1 = arith.constant 0 : i32
    return %c0_i32, %c0_i32_0 : i32, i32
  }
  func.func @transform_60(%arg0: i32) -> (i32, i32) {
    %c0_i32 = arith.constant 0 : i32
    %c0_i32_0 = arith.constant 0 : i32
    %c0_i32_1 = arith.constant 0 : i32
    return %c0_i32, %c0_i32_0 : i32, i32
  }
  func.func @transform_61(%arg0: i32) -> (i32, i32) {
    %c0_i32 = arith.constant 0 : i32
    %c0_i32_0 = arith.constant 0 : i32
    %c0_i32_1 = arith.constant 0 : i32
    return %c0_i32, %c0_i32_0 : i32, i32
  }
  func.func @transform_62(%arg0: i32) -> (i32, i32) {
    %c0_i32 = arith.constant 0 : i32
    %c0_i32_0 = arith.constant 0 : i32
    %c0_i32_1 = arith.constant 0 : i32
    return %c0_i32, %c0_i32_0 : i32, i32
  }
  func.func @transform_63(%arg0: i32) -> (i32, i32) {
    %c0_i32 = arith.constant 0 : i32
    %c0_i32_0 = arith.constant 0 : i32
    %c0_i32_1 = arith.constant 0 : i32
    return %c0_i32, %c0_i32_0 : i32, i32
  }
  func.func @transform_64(%arg0: i32) -> (i32, i32) {
    %c0_i32 = arith.constant 0 : i32
    %c0_i32_0 = arith.constant 0 : i32
    %c0_i32_1 = arith.constant 0 : i32
    return %c0_i32, %c0_i32_0 : i32, i32
  }
  func.func @transform_65(%arg0: i32) -> (i32, i32) {
    %c0_i32 = arith.constant 0 : i32
    %c0_i32_0 = arith.constant 0 : i32
    %c0_i32_1 = arith.constant 0 : i32
    return %c0_i32, %c0_i32_0 : i32, i32
  }
  func.func @transform_66(%arg0: i32) -> (i32, i32) {
    %c0_i32 = arith.constant 0 : i32
    %c0_i32_0 = arith.constant 0 : i32
    %c0_i32_1 = arith.constant 0 : i32
    return %c0_i32, %c0_i32_0 : i32, i32
  }
  func.func @transform_67(%arg0: i32) -> (i32, i32) {
    %c0_i32 = arith.constant 0 : i32
    %c0_i32_0 = arith.constant 0 : i32
    %c0_i32_1 = arith.constant 0 : i32
    return %c0_i32, %c0_i32_0 : i32, i32
  }
  func.func @transform_68(%arg0: i32) -> (i32, i32) {
    %c0_i32 = arith.constant 0 : i32
    %c0_i32_0 = arith.constant 0 : i32
    %c0_i32_1 = arith.constant 0 : i32
    return %c0_i32, %c0_i32_0 : i32, i32
  }
  func.func @transform_69(%arg0: i32) -> (i32, i32) {
    %c0_i32 = arith.constant 0 : i32
    %c0_i32_0 = arith.constant 0 : i32
    %c0_i32_1 = arith.constant 0 : i32
    return %c0_i32, %c0_i32_0 : i32, i32
  }
  func.func @transform_70(%arg0: i32) -> (i32, i32, i32) {
    %c0_i32 = arith.constant 0 : i32
    %c0_i32_0 = arith.constant 0 : i32
    %c0_i32_1 = arith.constant 0 : i32
    return %arg0, %c0_i32, %c0_i32_0 : i32, i32, i32
  }
  func.func @transform_71(%arg0: i32) -> (i32, i32, i32) {
    %c0_i32 = arith.constant 0 : i32
    %c0_i32_0 = arith.constant 0 : i32
    %c0_i32_1 = arith.constant 0 : i32
    return %arg0, %c0_i32, %c0_i32_0 : i32, i32, i32
  }
  func.func @transform_72(%arg0: i32) -> (i32, i32, i32) {
    %c0_i32 = arith.constant 0 : i32
    %c0_i32_0 = arith.constant 0 : i32
    %c0_i32_1 = arith.constant 0 : i32
    return %arg0, %c0_i32, %c0_i32_0 : i32, i32, i32
  }
}

</mosaic_0001>

<llo_original>
// kernel: decoder_forward.1
$region0: #{decoder_forward.1}
  #allocation0 [shape = 'u32[]', space=smem, size = 0x4, offset = 0x4, fixed_abs, tag = 'smem constant byte address 0x4 - core index']
  #allocation1 [shape = 'u32[72,128]{1,0:T(1,128)}', space=vmem, size = 0x9000, scoped, tag = 'internal scratch']
  %s0 = inlined_call_operand.smem [shape: u32[73], index: -1, kind: input, shape index: {}]
  %s1 = sld [smem:[%s0]]
  %s2 = scalar_lea.smem %s0, 1
  %s3 = sld [smem:[%s2]]
  %s4 = scalar_lea.smem %s0, 2
  %s5 = sld [smem:[%s4]]
  %s6 = scalar_lea.smem %s0, 3
  %s7 = sld [smem:[%s6]]
  %s8 = scalar_lea.smem %s0, 4
  %s9 = sld [smem:[%s8]]
  %s10 = scalar_lea.smem %s0, 5
  %s11 = sld [smem:[%s10]]
  %s12 = scalar_lea.smem %s0, 6
  %s13 = sld [smem:[%s12]]
  %s14 = scalar_lea.smem %s0, 7
  %s15 = sld [smem:[%s14]]
  %s16 = scalar_lea.smem %s0, 8
  %s17 = sld [smem:[%s16]]
  %s18 = scalar_lea.smem %s0, 9
  %s19 = sld [smem:[%s18]]
  %s20 = scalar_lea.smem %s0, 10
  %s21 = sld [smem:[%s20]]
  %s22 = scalar_lea.smem %s0, 11
  %s23 = sld [smem:[%s22]]
  %s24 = scalar_lea.smem %s0, 12
  %s25 = sld [smem:[%s24]]
  %s26 = scalar_lea.smem %s0, 13
  %s27 = sld [smem:[%s26]]
  %s28 = scalar_lea.smem %s0, 14
  %s29 = sld [smem:[%s28]]
  %s30 = scalar_lea.smem %s0, 15
  %s31 = sld [smem:[%s30]]
  %s32 = scalar_lea.smem %s0, 16
  %s33 = sld [smem:[%s32]]
  %s34 = scalar_lea.smem %s0, 17
  %s35 = sld [smem:[%s34]]
  %s36 = scalar_lea.smem %s0, 18
  %s37 = sld [smem:[%s36]]
  %s38 = scalar_lea.smem %s0, 19
  %s39 = sld [smem:[%s38]]
  %s40 = scalar_lea.smem %s0, 20
  %s41 = sld [smem:[%s40]]
  %s42 = scalar_lea.smem %s0, 21
  %s43 = sld [smem:[%s42]]
  %s44 = scalar_lea.smem %s0, 22
  %s45 = sld [smem:[%s44]]
  %s46 = scalar_lea.smem %s0, 23
  %s47 = sld [smem:[%s46]]
  %s48 = scalar_lea.smem %s0, 24
  %s49 = sld [smem:[%s48]]
  %s50 = scalar_lea.smem %s0, 25
  %s51 = sld [smem:[%s50]]
  %s52 = scalar_lea.smem %s0, 26
  %s53 = sld [smem:[%s52]]
  %s54 = scalar_lea.smem %s0, 27
  %s55 = sld [smem:[%s54]]
  %s56 = scalar_lea.smem %s0, 28
  %s57 = sld [smem:[%s56]]
  %s58 = scalar_lea.smem %s0, 29
  %s59 = sld [smem:[%s58]]
  %s60 = scalar_lea.smem %s0, 30
  %s61 = sld [smem:[%s60]]
  %s62 = scalar_lea.smem %s0, 31
  %s63 = sld [smem:[%s62]]
  %s64 = scalar_lea.smem %s0, 32
  %s65 = sld [smem:[%s64]]
  %s66 = scalar_lea.smem %s0, 33
  %s67 = sld [smem:[%s66]]
  %s68 = scalar_lea.smem %s0, 34
  %s69 = sld [smem:[%s68]]
  %s70 = scalar_lea.smem %s0, 35
  %s71 = sld [smem:[%s70]]
  %s72 = scalar_lea.smem %s0, 36
  %s73 = sld [smem:[%s72]]
  %s74 = scalar_lea.smem %s0, 37
  %s75 = sld [smem:[%s74]]
  %s76 = scalar_lea.smem %s0, 38
  %s77 = sld [smem:[%s76]]
  %s78 = scalar_lea.smem %s0, 39
  %s79 = sld [smem:[%s78]]
  %s80 = scalar_lea.smem %s0, 40
  %s81 = sld [smem:[%s80]]
  %s82 = scalar_lea.smem %s0, 41
  %s83 = sld [smem:[%s82]]
  %s84 = scalar_lea.smem %s0, 42
  %s85 = sld [smem:[%s84]]
  %s86 = scalar_lea.smem %s0, 43
  %s87 = sld [smem:[%s86]]
  %s88 = scalar_lea.smem %s0, 44
  %s89 = sld [smem:[%s88]]
  %s90 = scalar_lea.smem %s0, 45
  %s91 = sld [smem:[%s90]]
  %s92 = scalar_lea.smem %s0, 46
  %s93 = sld [smem:[%s92]]
  %s94 = scalar_lea.smem %s0, 47
  %s95 = sld [smem:[%s94]]
  %s96 = scalar_lea.smem %s0, 48
  %s97 = sld [smem:[%s96]]
  %s98 = scalar_lea.smem %s0, 49
  %s99 = sld [smem:[%s98]]
  %s100 = scalar_lea.smem %s0, 50
  %s101 = sld [smem:[%s100]]
  %s102 = scalar_lea.smem %s0, 51
  %s103 = sld [smem:[%s102]]
  %s104 = scalar_lea.smem %s0, 52
  %s105 = sld [smem:[%s104]]
  %s106 = scalar_lea.smem %s0, 53
  %s107 = sld [smem:[%s106]]
  %s108 = scalar_lea.smem %s0, 54
  %s109 = sld [smem:[%s108]]
  %s110 = scalar_lea.smem %s0, 55
  %s111 = sld [smem:[%s110]]
  %s112 = scalar_lea.smem %s0, 56
  %s113 = sld [smem:[%s112]]
  %s114 = scalar_lea.smem %s0, 57
  %s115 = sld [smem:[%s114]]
  %s116 = scalar_lea.smem %s0, 58
  %s117 = sld [smem:[%s116]]
  %s118 = scalar_lea.smem %s0, 59
  %s119 = sld [smem:[%s118]]
  %s120 = scalar_lea.smem %s0, 60
  %s121 = sld [smem:[%s120]]
  %s122 = scalar_lea.smem %s0, 61
  %s123 = sld [smem:[%s122]]
  %s124 = scalar_lea.smem %s0, 62
  %s125 = sld [smem:[%s124]]
  %s126 = scalar_lea.smem %s0, 63
  %s127 = sld [smem:[%s126]]
  %s128 = scalar_lea.smem %s0, 64
  %s129 = sld [smem:[%s128]]
  %s130 = scalar_lea.smem %s0, 65
  %s131 = sld [smem:[%s130]]
  %s132 = scalar_lea.smem %s0, 66
  %s133 = sld [smem:[%s132]]
  %s134 = scalar_lea.smem %s0, 67
  %s135 = sld [smem:[%s134]]
  %s136 = scalar_lea.smem %s0, 68
  %s137 = sld [smem:[%s136]]
  %s138 = scalar_lea.smem %s0, 69
  %s139 = sld [smem:[%s138]]
  %s140 = scalar_lea.smem %s0, 70
  %s141 = sld [smem:[%s140]]
  %s142 = scalar_lea.smem %s0, 71
  %s143 = sld [smem:[%s142]]
  %s144 = scalar_lea.smem %s0, 72
  %s145 = sld [smem:[%s144]]
  %146 = xla_tuple %s141, %s143, %s145
  %s147 = sld [smem:[#allocation0]]
  $region405: #{decoder_forward.1} parent=0
    _
  %s149 = ssub.s32 1, %s147
  %s150 = scalar_select 0, %s149, %s147
  $region1: #{decoder_forward.1} parent=0
    #allocation2 [shape = 'u8[512]{0}', space=vmem, size = 0x400, scoped, tag = 'input window, operand 36, single buffered']
    #allocation3 [shape = 's32[2]{0}', space=sflag, size = 0x8, scoped, tag = 'scoped memory for decoder_forward.1']
    #allocation4 [shape = 's32[2]{0}', space=sflag, size = 0x8, scoped, tag = 'scoped memory for decoder_forward.1']
    #allocation5 [shape = 'u8[512]{0}', space=vmem, size = 0x400, scoped, tag = 'input window, operand 38, single buffered']
    #allocation6 [shape = 's32[1]{0}', space=sflag, size = 0x4, scoped, tag = 'scoped memory for decoder_forward.1']
    #allocation7 [shape = 'u8[512]{0}', space=vmem, size = 0x400, scoped, tag = 'input window, operand 40, single buffered']
    #allocation8 [shape = 'u8[512]{0}', space=vmem, size = 0x400, scoped, tag = 'input window, operand 41, single buffered']
    #allocation9 [shape = 's32[1]{0}', space=sflag, size = 0x4, scoped, tag = 'scoped memory for decoder_forward.1']
    #allocation10 [shape = 'u8[512]{0}', space=vmem, size = 0x400, scoped, tag = 'input window, operand 42, single buffered']
    #allocation11 [shape = 'u8[512]{0}', space=vmem, size = 0x400, scoped, tag = 'input window, operand 43, single buffered']
    #allocation12 [shape = 's32[1]{0}', space=sflag, size = 0x4, scoped, tag = 'scoped memory for decoder_forward.1']
    #allocation13 [shape = 'u8[512]{0}', space=vmem, size = 0x400, scoped, tag = 'input window, operand 46, single buffered']
    #allocation14 [shape = 'u8[512]{0}', space=vmem, size = 0x400, scoped, tag = 'input window, operand 47, single buffered']
    #allocation15 [shape = 's32[1]{0}', space=sflag, size = 0x4, scoped, tag = 'scoped memory for decoder_forward.1']
    #allocation16 [shape = 'u8[512]{0}', space=vmem, size = 0x400, scoped, tag = 'input window, operand 48, single buffered']
    #allocation17 [shape = 'u8[512]{0}', space=vmem, size = 0x400, scoped, tag = 'input window, operand 49, single buffered']
    #allocation18 [shape = 's32[1]{0}', space=sflag, size = 0x4, scoped, tag = 'scoped memory for decoder_forward.1']
    #allocation19 [shape = 'u8[512]{0}', space=vmem, size = 0x400, scoped, tag = 'input window, operand 52, single buffered']
    #allocation20 [shape = 'u8[512]{0}', space=vmem, size = 0x400, scoped, tag = 'input window, operand 54, single buffered']
    #allocation21 [shape = 's32[1]{0}', space=sflag, size = 0x4, scoped, tag = 'scoped memory for decoder_forward.1']
    #allocation22 [shape = 'u8[512]{0}', space=vmem, size = 0x400, scoped, tag = 'input window, operand 56, single buffered']
    #allocation23 [shape = 'u8[512]{0}', space=vmem, size = 0x400, scoped, tag = 'input window, operand 58, single buffered']
    #allocation24 [shape = 's32[1]{0}', space=sflag, size = 0x4, scoped, tag = 'scoped memory for decoder_forward.1']
    #allocation25 [shape = 'u8[512]{0}', space=vmem, size = 0x400, scoped, tag = 'input window, operand 60, single buffered']
    #allocation26 [shape = 'u8[512]{0}', space=vmem, size = 0x400, scoped, tag = 'input window, operand 62, single buffered']
    #allocation27 [shape = 's32[1]{0}', space=sflag, size = 0x4, scoped, tag = 'scoped memory for decoder_forward.1']
    #allocation28 [shape = 'u8[512]{0}', space=vmem, size = 0x400, scoped, tag = 'input window, operand 64, single buffered']
    #allocation29 [shape = 'u8[512]{0}', space=vmem, size = 0x400, scoped, tag = 'input window, operand 66, single buffered']
    #allocation30 [shape = 's32[1]{0}', space=sflag, size = 0x4, scoped, tag = 'scoped memory for decoder_forward.1']
    #allocation31 [shape = 'u8[512]{0}', space=vmem, size = 0x400, scoped, tag = 'input window, operand 68, single buffered']
    #allocation32 [shape = 'u8[16384]{0}', space=vmem, size = 0x4000, scoped, tag = 'output window, operand 0']
    #allocation33 [shape = 'u8[16384]{0}', space=vmem, size = 0x4000, scoped, tag = 'output window, operand 1']
    #allocation34 [shape = 's32[2]{0}', space=sflag, size = 0x8, scoped, tag = 'scoped memory for decoder_forward.1']
    #allocation35 [shape = 'u8[16384]{0}', space=vmem, size = 0x4000, scoped, tag = 'output window, operand 2']
    %151 = vsyncpa [#allocation3], 0
    %152 = vsyncpa [#allocation6], 0
    %153 = vsyncpa [#allocation9], 0
    %154 = vsyncpa [#allocation12], 0
    %155 = vsyncpa [#allocation15], 0
    %156 = vsyncpa [#allocation18], 0
    %157 = vsyncpa [#allocation21], 0
    %158 = vsyncpa [#allocation24], 0
    %159 = vsyncpa [#allocation27], 0
    %160 = vsyncpa [#allocation30], 0
    %161 = vsyncpa [#allocation4], 0
    %s162 = scalar_lea.sflag [#allocation4], 1
    %163 = vsyncpa %s162, 0
    %164 = vsyncpa [#allocation34], 0
    %s165 = scalar_lea.sflag [#allocation34], 1
    %166 = vsyncpa %s165, 0
    loop: start=0, step=1, limit=4
    $region2: #{decoder_forward.1} parent=1 // loop_pre_header
      _
    $region3: #{decoder_forward.1} parent=1 // loop_header
      %s168 = sphi 0, %s172
      %p169 = scmp.ge.s32.totalorder %s168, 4
      %s178 = sphi 0, %s180
      %s181 = sphi 0, %s178
      %s182 = sphi 0, %s181
      %s198 = sphi 0, %s182
      %s204 = sphi 0, %s206
      %s207 = sphi 0, %s204
      %s208 = sphi 0, %s207
      %s224 = sphi 0, %s208
      %s230 = sphi 0, %s232
      %s233 = sphi 0, %s230
      %s234 = sphi 0, %s233
      %s250 = sphi 0, %s234
      %s254 = sphi 0, %s254
      %s256 = sphi 0, %s254
      %s257 = sphi 0, %s256
      %s271 = sphi 0, %s257
      %s275 = sphi 0, %s275
      %s277 = sphi 0, %s275
      %s278 = sphi 0, %s277
      %s292 = sphi 0, %s278
      %s296 = sphi 0, %s296
      %s298 = sphi 0, %s296
      %s299 = sphi 0, %s298
      %s313 = sphi 0, %s299
      %s317 = sphi 0, %s317
      %s319 = sphi 0, %s317
      %s320 = sphi 0, %s319
      %s334 = sphi 0, %s320
      %s338 = sphi 0, %s338
      %s340 = sphi 0, %s338
      %s341 = sphi 0, %s340
      %s355 = sphi 0, %s341
      %s359 = sphi 0, %s359
      %s361 = sphi 0, %s359
      %s362 = sphi 0, %s361
      %s376 = sphi 0, %s362
      %s380 = sphi 0, %s380
      %s382 = sphi 0, %s380
      %s383 = sphi 0, %s382
      %s397 = sphi 0, %s383
      %s401 = sphi 0, %s401
      %s403 = sphi 0, %s401
      %s404 = sphi 0, %s403
      %s418 = sphi 0, %s404
      %s422 = sphi 0, %s422
      %s424 = sphi 0, %s422
      %s425 = sphi 0, %s424
      %s439 = sphi 0, %s425
      %s443 = sphi 0, %s443
      %s445 = sphi 0, %s443
      %s446 = sphi 0, %s445
      %s460 = sphi 0, %s446
      %s464 = sphi 0, %s464
      %s466 = sphi 0, %s464
      %s467 = sphi 0, %s466
      %s481 = sphi 0, %s467
      %s485 = sphi 0, %s485
      %s487 = sphi 0, %s485
      %s488 = sphi 0, %s487
      %s502 = sphi 0, %s488
      %s506 = sphi 0, %s506
      %s508 = sphi 0, %s506
      %s509 = sphi 0, %s508
      %s523 = sphi 0, %s509
      %s527 = sphi 0, %s527
      %s529 = sphi 0, %s527
      %s530 = sphi 0, %s529
      %s544 = sphi 0, %s530
      %s548 = sphi 0, %s548
      %s550 = sphi 0, %s548
      %s551 = sphi 0, %s550
      %s565 = sphi 0, %s551
      %s569 = sphi 0, %s569
      %s571 = sphi 0, %s569
      %s572 = sphi 0, %s571
      %s586 = sphi 0, %s572
      %s590 = sphi 0, %s590
      %s592 = sphi 0, %s590
      %s593 = sphi 0, %s592
      %s607 = sphi 0, %s593
      %s611 = sphi 0, %s611
      %s613 = sphi 0, %s611
      %s614 = sphi 0, %s613
      %s628 = sphi 0, %s614
      %s632 = sphi 0, %s632
      %s634 = sphi 0, %s632
      %s635 = sphi 0, %s634
      %s649 = sphi 0, %s635
      %s653 = sphi 0, %s653
      %s655 = sphi 0, %s653
      %s656 = sphi 0, %s655
      %s670 = sphi 0, %s656
      %s674 = sphi 0, %s674
      %s676 = sphi 0, %s674
      %s677 = sphi 0, %s676
      %s691 = sphi 0, %s677
      %s695 = sphi 0, %s695
      %s697 = sphi 0, %s695
      %s698 = sphi 0, %s697
      %s712 = sphi 0, %s698
      %s716 = sphi 0, %s716
      %s718 = sphi 0, %s716
      %s719 = sphi 0, %s718
      %s733 = sphi 0, %s719
      %s737 = sphi 0, %s737
      %s739 = sphi 0, %s737
      %s740 = sphi 0, %s739
      %s754 = sphi 0, %s740
      %s758 = sphi 0, %s758
      %s760 = sphi 0, %s758
      %s761 = sphi 0, %s760
      %s775 = sphi 0, %s761
      %s779 = sphi 0, %s779
      %s781 = sphi 0, %s779
      %s782 = sphi 0, %s781
      %s796 = sphi 0, %s782
      %s800 = sphi 0, %s800
      %s802 = sphi 0, %s800
      %s803 = sphi 0, %s802
      %s817 = sphi 0, %s803
      %s821 = sphi 0, %s821
      %s823 = sphi 0, %s821
      %s824 = sphi 0, %s823
      %s838 = sphi 0, %s824
      %s842 = sphi 0, %s842
      %s844 = sphi 0, %s842
      %s845 = sphi 0, %s844
      %s859 = sphi 0, %s845
      %s863 = sphi 0, %s863
      %s865 = sphi 0, %s863
      %s866 = sphi 0, %s865
      %s880 = sphi 0, %s866
      %s884 = sphi 0, %s884
      %s886 = sphi 0, %s884
      %s887 = sphi 0, %s886
      %s901 = sphi 0, %s887
      %s905 = sphi 0, %s905
      %s907 = sphi 0, %s905
      %s908 = sphi 0, %s907
      %s922 = sphi 0, %s908
      %s926 = sphi 0, %s926
      %s928 = sphi 0, %s926
      %s929 = sphi 0, %s928
      %s943 = sphi 0, %s929
      %s947 = sphi 0, %s947
      %s949 = sphi 0, %s947
      %s950 = sphi 0, %s949
      %s964 = sphi 0, %s950
      %s968 = sphi 0, %s968
      %s970 = sphi 0, %s968
      %s971 = sphi 0, %s970
      %s985 = sphi 0, %s971
      %s989 = sphi 0, %s989
      %s991 = sphi 0, %s989
      %s992 = sphi 0, %s991
      %s1006 = sphi 0, %s992
      %s1010 = sphi 0, %s1010
      %s1012 = sphi 0, %s1010
      %s1013 = sphi 0, %s1012
      %s1027 = sphi 0, %s1013
      %s1031 = sphi 0, %s1031
      %s1033 = sphi 0, %s1031
      %s1034 = sphi 0, %s1033
      %s1048 = sphi 0, %s1034
      %s1052 = sphi 0, %s1052
      %s1054 = sphi 0, %s1052
      %s1055 = sphi 0, %s1054
      %s1069 = sphi 0, %s1055
      %s1073 = sphi 0, %s1073
      %s1075 = sphi 0, %s1073
      %s1076 = sphi 0, %s1075
      %s1090 = sphi 0, %s1076
      %s1094 = sphi 0, %s1094
      %s1096 = sphi 0, %s1094
      %s1097 = sphi 0, %s1096
      %s1111 = sphi 0, %s1097
      %s1115 = sphi 0, %s1115
      %s1117 = sphi 0, %s1115
      %s1118 = sphi 0, %s1117
      %s1132 = sphi 0, %s1118
      %s1136 = sphi 0, %s1136
      %s1138 = sphi 0, %s1136
      %s1139 = sphi 0, %s1138
      %s1153 = sphi 0, %s1139
      %s1157 = sphi 0, %s1157
      %s1159 = sphi 0, %s1157
      %s1160 = sphi 0, %s1159
      %s1174 = sphi 0, %s1160
      %s1178 = sphi 0, %s1178
      %s1180 = sphi 0, %s1178
      %s1181 = sphi 0, %s1180
      %s1195 = sphi 0, %s1181
      %s1199 = sphi 0, %s1199
      %s1201 = sphi 0, %s1199
      %s1202 = sphi 0, %s1201
      %s1216 = sphi 0, %s1202
      %s1220 = sphi 0, %s1220
      %s1222 = sphi 0, %s1220
      %s1223 = sphi 0, %s1222
      %s1237 = sphi 0, %s1223
      %s1241 = sphi 0, %s1241
      %s1243 = sphi 0, %s1241
      %s1244 = sphi 0, %s1243
      %s1258 = sphi 0, %s1244
      %s1262 = sphi 0, %s1262
      %s1264 = sphi 0, %s1262
      %s1265 = sphi 0, %s1264
      %s1279 = sphi 0, %s1265
      %s1283 = sphi 0, %s1283
      %s1285 = sphi 0, %s1283
      %s1286 = sphi 0, %s1285
      %s1300 = sphi 0, %s1286
      %s1304 = sphi 0, %s1304
      %s1306 = sphi 0, %s1304
      %s1307 = sphi 0, %s1306
      %s1321 = sphi 0, %s1307
      %s1325 = sphi 0, %s1325
      %s1327 = sphi 0, %s1325
      %s1328 = sphi 0, %s1327
      %s1342 = sphi 0, %s1328
      %s1346 = sphi 0, %s1346
      %s1348 = sphi 0, %s1346
      %s1349 = sphi 0, %s1348
      %s1363 = sphi 0, %s1349
      %s1367 = sphi 0, %s1367
      %s1369 = sphi 0, %s1367
      %s1370 = sphi 0, %s1369
      %s1384 = sphi 0, %s1370
      %s1388 = sphi 0, %s1388
      %s1390 = sphi 0, %s1388
      %s1391 = sphi 0, %s1390
      %s1405 = sphi 0, %s1391
      %s1409 = sphi 0, %s1409
      %s1411 = sphi 0, %s1409
      %s1412 = sphi 0, %s1411
      %s1426 = sphi 0, %s1412
      %s1430 = sphi 0, %s1430
      %s1432 = sphi 0, %s1430
      %s1433 = sphi 0, %s1432
      %s1447 = sphi 0, %s1433
      %s1451 = sphi 0, %s1451
      %s1453 = sphi 0, %s1451
      %s1454 = sphi 0, %s1453
      %s1468 = sphi 0, %s1454
      %s1472 = sphi 0, %s1472
      %s1474 = sphi 0, %s1472
      %s1475 = sphi 0, %s1474
      %s1489 = sphi 0, %s1475
      %s1493 = sphi 0, %s1493
      %s1495 = sphi 0, %s1493
      %s1496 = sphi 0, %s1495
      %s1510 = sphi 0, %s1496
      %s1514 = sphi 0, %s1514
      %s1516 = sphi 0, %s1514
      %s1517 = sphi 0, %s1516
      %s1531 = sphi 0, %s1517
      %s1535 = sphi 0, %s1535
      %s1537 = sphi 0, %s1535
      %s1538 = sphi 0, %s1537
      %s1552 = sphi 0, %s1538
      %s1556 = sphi 0, %s1556
      %s1558 = sphi 0, %s1556
      %s1559 = sphi 0, %s1558
      %s1573 = sphi 0, %s1559
      %s1577 = sphi 0, %s1577
      %s1579 = sphi 0, %s1577
      %s1580 = sphi 0, %s1579
      %s1594 = sphi 0, %s1580
      %s1598 = sphi 0, %s1598
      %s1600 = sphi 0, %s1598
      %s1601 = sphi 0, %s1600
      %s1615 = sphi 0, %s1601
      %s1619 = sphi 0, %s1619
      %s1621 = sphi 0, %s1619
      %s1622 = sphi 0, %s1621
      %s1636 = sphi 0, %s1622
      %s1640 = sphi 0, %s1640
      %s1642 = sphi 0, %s1640
      %s1643 = sphi 0, %s1642
      %s1657 = sphi 0, %s1643
      %s1663 = sphi 0, %s1665
      %s1666 = sphi 0, %s1663
      %s1667 = sphi 0, %s1666
      %s1683 = sphi 0, %s1667
      %s1689 = sphi 0, %s1691
      %s1692 = sphi 0, %s1689
      %s1693 = sphi 0, %s1692
      %s1709 = sphi 0, %s1693
      %s1715 = sphi 0, %s1717
      %s1718 = sphi 0, %s1715
      %s1719 = sphi 0, %s1718
      %s1735 = sphi 0, %s1719
    $region4: #{decoder_forward.1} parent=1 // loop_header_branch
      %171 = sbr.rel (%p169) target = $region8
    $region5: #{decoder_forward.1} parent=1 // loop_body
      %s173 = ssub.s32 %s168, 1
      %s174 = ssub.s32 %s168, 2
      %s175 = sadd.s32 %s168, 1
      %s176 = ssub.s32 %s168, %s175
      %p177 = scmp.eq.s32.totalorder %s176, 0
      %s179 = sadd.s32 %s178, 1
      %s180 = scalar_select %p177, %s178, %s179
      %p183 = pneg %p177
      %p184 = scmp.eq.s32.totalorder %s168, 1
      %p185 = por %p183, %p184
      %p186 = scmp.ne.s32.totalorder %s178, %s181
      %p187 = scmp.eq.s32.totalorder %s168, 0
      %p188 = por %p186, %p187
      %p189 = scmp.ne.s32.totalorder %s178, %s181
      %p190 = scmp.eq.s32.totalorder %s173, 1
      %p191 = por %p189, %p190
      %p192 = scmp.ne.s32.totalorder %s181, %s182
      %p193 = scmp.eq.s32.totalorder %s173, 0
      %p194 = por %p192, %p193
      %p195 = scmp.ne.s32.totalorder %s181, %s182
      %p196 = scmp.eq.s32.totalorder %s174, 1
      %p197 = por %p195, %p196
      %p199 = scmp.ne.s32.totalorder %s182, %s198
      %p200 = scmp.eq.s32.totalorder %s174, 0
      %p201 = por %p199, %p200
      %s202 = ssub.s32 %s168, %s175
      %p203 = scmp.eq.s32.totalorder %s202, 0
      %s205 = sadd.s32 %s204, 1
      %s206 = scalar_select %p203, %s204, %s205
      %p209 = pneg %p203
      %p210 = scmp.eq.s32.totalorder %s168, 1
      %p211 = por %p209, %p210
      %p212 = scmp.ne.s32.totalorder %s204, %s207
      %p213 = scmp.eq.s32.totalorder %s168, 0
      %p214 = por %p212, %p213
      %p215 = scmp.ne.s32.totalorder %s204, %s207
      %p216 = scmp.eq.s32.totalorder %s173, 1
      %p217 = por %p215, %p216
      %p218 = scmp.ne.s32.totalorder %s207, %s208
      %p219 = scmp.eq.s32.totalorder %s173, 0
      %p220 = por %p218, %p219
      %p221 = scmp.ne.s32.totalorder %s207, %s208
      %p222 = scmp.eq.s32.totalorder %s174, 1
      %p223 = por %p221, %p222
      %p225 = scmp.ne.s32.totalorder %s208, %s224
      %p226 = scmp.eq.s32.totalorder %s174, 0
      %p227 = por %p225, %p226
      %s228 = ssub.s32 %s168, %s175
      %p229 = scmp.eq.s32.totalorder %s228, 0
      %s231 = sadd.s32 %s230, 1
      %s232 = scalar_select %p229, %s230, %s231
      %p235 = pneg %p229
      %p236 = scmp.eq.s32.totalorder %s168, 1
      %p237 = por %p235, %p236
      %p238 = scmp.ne.s32.totalorder %s230, %s233
      %p239 = scmp.eq.s32.totalorder %s168, 0
      %p240 = por %p238, %p239
      %p241 = scmp.ne.s32.totalorder %s230, %s233
      %p242 = scmp.eq.s32.totalorder %s173, 1
      %p243 = por %p241, %p242
      %p244 = scmp.ne.s32.totalorder %s233, %s234
      %p245 = scmp.eq.s32.totalorder %s173, 0
      %p246 = por %p244, %p245
      %p247 = scmp.ne.s32.totalorder %s233, %s234
      %p248 = scmp.eq.s32.totalorder %s174, 1
      %p249 = por %p247, %p248
      %p251 = scmp.ne.s32.totalorder %s234, %s250
      %p252 = scmp.eq.s32.totalorder %s174, 0
      %p253 = por %p251, %p252
      %s255 = sadd.s32 %s254, 1
      %p258 = scmp.eq.s32.totalorder %s168, 1
      %p259 = scmp.ne.s32.totalorder %s254, %s256
      %p260 = scmp.eq.s32.totalorder %s168, 0
      %p261 = por %p259, %p260
      %p262 = scmp.ne.s32.totalorder %s254, %s256
      %p263 = scmp.eq.s32.totalorder %s173, 1
      %p264 = por %p262, %p263
      %p265 = scmp.ne.s32.totalorder %s256, %s257
      %p266 = scmp.eq.s32.totalorder %s173, 0
      %p267 = por %p265, %p266
      %p268 = scmp.ne.s32.totalorder %s256, %s257
      %p269 = scmp.eq.s32.totalorder %s174, 1
      %p270 = por %p268, %p269
      %p272 = scmp.ne.s32.totalorder %s257, %s271
      %p273 = scmp.eq.s32.totalorder %s174, 0
      %p274 = por %p272, %p273
      %s276 = sadd.s32 %s275, 1
      %p279 = scmp.eq.s32.totalorder %s168, 1
      %p280 = scmp.ne.s32.totalorder %s275, %s277
      %p281 = scmp.eq.s32.totalorder %s168, 0
      %p282 = por %p280, %p281
      %p283 = scmp.ne.s32.totalorder %s275, %s277
      %p284 = scmp.eq.s32.totalorder %s173, 1
      %p285 = por %p283, %p284
      %p286 = scmp.ne.s32.totalorder %s277, %s278
      %p287 = scmp.eq.s32.totalorder %s173, 0
      %p288 = por %p286, %p287
      %p289 = scmp.ne.s32.totalorder %s277, %s278
      %p290 = scmp.eq.s32.totalorder %s174, 1
      %p291 = por %p289, %p290
      %p293 = scmp.ne.s32.totalorder %s278, %s292
      %p294 = scmp.eq.s32.totalorder %s174, 0
      %p295 = por %p293, %p294
      %s297 = sadd.s32 %s296, 1
      %p300 = scmp.eq.s32.totalorder %s168, 1
      %p301 = scmp.ne.s32.totalorder %s296, %s298
      %p302 = scmp.eq.s32.totalorder %s168, 0
      %p303 = por %p301, %p302
      %p304 = scmp.ne.s32.totalorder %s296, %s298
      %p305 = scmp.eq.s32.totalorder %s173, 1
      %p306 = por %p304, %p305
      %p307 = scmp.ne.s32.totalorder %s298, %s299
      %p308 = scmp.eq.s32.totalorder %s173, 0
      %p309 = por %p307, %p308
      %p310 = scmp.ne.s32.totalorder %s298, %s299
      %p311 = scmp.eq.s32.totalorder %s174, 1
      %p312 = por %p310, %p311
      %p314 = scmp.ne.s32.totalorder %s299, %s313
      %p315 = scmp.eq.s32.totalorder %s174, 0
      %p316 = por %p314, %p315
      %s318 = sadd.s32 %s317, 1
      %p321 = scmp.eq.s32.totalorder %s168, 1
      %p322 = scmp.ne.s32.totalorder %s317, %s319
      %p323 = scmp.eq.s32.totalorder %s168, 0
      %p324 = por %p322, %p323
      %p325 = scmp.ne.s32.totalorder %s317, %s319
      %p326 = scmp.eq.s32.totalorder %s173, 1
      %p327 = por %p325, %p326
      %p328 = scmp.ne.s32.totalorder %s319, %s320
      %p329 = scmp.eq.s32.totalorder %s173, 0
      %p330 = por %p328, %p329
      %p331 = scmp.ne.s32.totalorder %s319, %s320
      %p332 = scmp.eq.s32.totalorder %s174, 1
      %p333 = por %p331, %p332
      %p335 = scmp.ne.s32.totalorder %s320, %s334
      %p336 = scmp.eq.s32.totalorder %s174, 0
      %p337 = por %p335, %p336
      %s339 = sadd.s32 %s338, 1
      %p342 = scmp.eq.s32.totalorder %s168, 1
      %p343 = scmp.ne.s32.totalorder %s338, %s340
      %p344 = scmp.eq.s32.totalorder %s168, 0
      %p345 = por %p343, %p344
      %p346 = scmp.ne.s32.totalorder %s338, %s340
      %p347 = scmp.eq.s32.totalorder %s173, 1
      %p348 = por %p346, %p347
      %p349 = scmp.ne.s32.totalorder %s340, %s341
      %p350 = scmp.eq.s32.totalorder %s173, 0
      %p351 = por %p349, %p350
      %p352 = scmp.ne.s32.totalorder %s340, %s341
      %p353 = scmp.eq.s32.totalorder %s174, 1
      %p354 = por %p352, %p353
      %p356 = scmp.ne.s32.totalorder %s341, %s355
      %p357 = scmp.eq.s32.totalorder %s174, 0
      %p358 = por %p356, %p357
      %s360 = sadd.s32 %s359, 1
      %p363 = scmp.eq.s32.totalorder %s168, 1
      %p364 = scmp.ne.s32.totalorder %s359, %s361
      %p365 = scmp.eq.s32.totalorder %s168, 0
      %p366 = por %p364, %p365
      %p367 = scmp.ne.s32.totalorder %s359, %s361
      %p368 = scmp.eq.s32.totalorder %s173, 1
      %p369 = por %p367, %p368
      %p370 = scmp.ne.s32.totalorder %s361, %s362
      %p371 = scmp.eq.s32.totalorder %s173, 0
      %p372 = por %p370, %p371
      %p373 = scmp.ne.s32.totalorder %s361, %s362
      %p374 = scmp.eq.s32.totalorder %s174, 1
      %p375 = por %p373, %p374
      %p377 = scmp.ne.s32.totalorder %s362, %s376
      %p378 = scmp.eq.s32.totalorder %s174, 0
      %p379 = por %p377, %p378
      %s381 = sadd.s32 %s380, 1
      %p384 = scmp.eq.s32.totalorder %s168, 1
      %p385 = scmp.ne.s32.totalorder %s380, %s382
      %p386 = scmp.eq.s32.totalorder %s168, 0
      %p387 = por %p385, %p386
      %p388 = scmp.ne.s32.totalorder %s380, %s382
      %p389 = scmp.eq.s32.totalorder %s173, 1
      %p390 = por %p388, %p389
      %p391 = scmp.ne.s32.totalorder %s382, %s383
      %p392 = scmp.eq.s32.totalorder %s173, 0
      %p393 = por %p391, %p392
      %p394 = scmp.ne.s32.totalorder %s382, %s383
      %p395 = scmp.eq.s32.totalorder %s174, 1
      %p396 = por %p394, %p395
      %p398 = scmp.ne.s32.totalorder %s383, %s397
      %p399 = scmp.eq.s32.totalorder %s174, 0
      %p400 = por %p398, %p399
      %s402 = sadd.s32 %s401, 1
      %p405 = scmp.eq.s32.totalorder %s168, 1
      %p406 = scmp.ne.s32.totalorder %s401, %s403
      %p407 = scmp.eq.s32.totalorder %s168, 0
      %p408 = por %p406, %p407
      %p409 = scmp.ne.s32.totalorder %s401, %s403
      %p410 = scmp.eq.s32.totalorder %s173, 1
      %p411 = por %p409, %p410
      %p412 = scmp.ne.s32.totalorder %s403, %s404
      %p413 = scmp.eq.s32.totalorder %s173, 0
      %p414 = por %p412, %p413
      %p415 = scmp.ne.s32.totalorder %s403, %s404
      %p416 = scmp.eq.s32.totalorder %s174, 1
      %p417 = por %p415, %p416
      %p419 = scmp.ne.s32.totalorder %s404, %s418
      %p420 = scmp.eq.s32.totalorder %s174, 0
      %p421 = por %p419, %p420
      %s423 = sadd.s32 %s422, 1
      %p426 = scmp.eq.s32.totalorder %s168, 1
      %p427 = scmp.ne.s32.totalorder %s422, %s424
      %p428 = scmp.eq.s32.totalorder %s168, 0
      %p429 = por %p427, %p428
      %p430 = scmp.ne.s32.totalorder %s422, %s424
      %p431 = scmp.eq.s32.totalorder %s173, 1
      %p432 = por %p430, %p431
      %p433 = scmp.ne.s32.totalorder %s424, %s425
      %p434 = scmp.eq.s32.totalorder %s173, 0
      %p435 = por %p433, %p434
      %p436 = scmp.ne.s32.totalorder %s424, %s425
      %p437 = scmp.eq.s32.totalorder %s174, 1
      %p438 = por %p436, %p437
      %p440 = scmp.ne.s32.totalorder %s425, %s439
      %p441 = scmp.eq.s32.totalorder %s174, 0
      %p442 = por %p440, %p441
      %s444 = sadd.s32 %s443, 1
      %p447 = scmp.eq.s32.totalorder %s168, 1
      %p448 = scmp.ne.s32.totalorder %s443, %s445
      %p449 = scmp.eq.s32.totalorder %s168, 0
      %p450 = por %p448, %p449
      %p451 = scmp.ne.s32.totalorder %s443, %s445
      %p452 = scmp.eq.s32.totalorder %s173, 1
      %p453 = por %p451, %p452
      %p454 = scmp.ne.s32.totalorder %s445, %s446
      %p455 = scmp.eq.s32.totalorder %s173, 0
      %p456 = por %p454, %p455
      %p457 = scmp.ne.s32.totalorder %s445, %s446
      %p458 = scmp.eq.s32.totalorder %s174, 1
      %p459 = por %p457, %p458
      %p461 = scmp.ne.s32.totalorder %s446, %s460
      %p462 = scmp.eq.s32.totalorder %s174, 0
      %p463 = por %p461, %p462
      %s465 = sadd.s32 %s464, 1
      %p468 = scmp.eq.s32.totalorder %s168, 1
      %p469 = scmp.ne.s32.totalorder %s464, %s466
      %p470 = scmp.eq.s32.totalorder %s168, 0
      %p471 = por %p469, %p470
      %p472 = scmp.ne.s32.totalorder %s464, %s466
      %p473 = scmp.eq.s32.totalorder %s173, 1
      %p474 = por %p472, %p473
      %p475 = scmp.ne.s32.totalorder %s466, %s467
      %p476 = scmp.eq.s32.totalorder %s173, 0
      %p477 = por %p475, %p476
      %p478 = scmp.ne.s32.totalorder %s466, %s467
      %p479 = scmp.eq.s32.totalorder %s174, 1
      %p480 = por %p478, %p479
      %p482 = scmp.ne.s32.totalorder %s467, %s481
      %p483 = scmp.eq.s32.totalorder %s174, 0
      %p484 = por %p482, %p483
      %s486 = sadd.s32 %s485, 1
      %p489 = scmp.eq.s32.totalorder %s168, 1
      %p490 = scmp.ne.s32.totalorder %s485, %s487
      %p491 = scmp.eq.s32.totalorder %s168, 0
      %p492 = por %p490, %p491
      %p493 = scmp.ne.s32.totalorder %s485, %s487
      %p494 = scmp.eq.s32.totalorder %s173, 1
      %p495 = por %p493, %p494
      %p496 = scmp.ne.s32.totalorder %s487, %s488
      %p497 = scmp.eq.s32.totalorder %s173, 0
      %p498 = por %p496, %p497
      %p499 = scmp.ne.s32.totalorder %s487, %s488
      %p500 = scmp.eq.s32.totalorder %s174, 1
      %p501 = por %p499, %p500
      %p503 = scmp.ne.s32.totalorder %s488, %s502
      %p504 = scmp.eq.s32.totalorder %s174, 0
      %p505 = por %p503, %p504
      %s507 = sadd.s32 %s506, 1
      %p510 = scmp.eq.s32.totalorder %s168, 1
      %p511 = scmp.ne.s32.totalorder %s506, %s508
      %p512 = scmp.eq.s32.totalorder %s168, 0
      %p513 = por %p511, %p512
      %p514 = scmp.ne.s32.totalorder %s506, %s508
      %p515 = scmp.eq.s32.totalorder %s173, 1
      %p516 = por %p514, %p515
      %p517 = scmp.ne.s32.totalorder %s508, %s509
      %p518 = scmp.eq.s32.totalorder %s173, 0
      %p519 = por %p517, %p518
      %p520 = scmp.ne.s32.totalorder %s508, %s509
      %p521 = scmp.eq.s32.totalorder %s174, 1
      %p522 = por %p520, %p521
      %p524 = scmp.ne.s32.totalorder %s509, %s523
      %p525 = scmp.eq.s32.totalorder %s174, 0
      %p526 = por %p524, %p525
      %s528 = sadd.s32 %s527, 1
      %p531 = scmp.eq.s32.totalorder %s168, 1
      %p532 = scmp.ne.s32.totalorder %s527, %s529
      %p533 = scmp.eq.s32.totalorder %s168, 0
      %p534 = por %p532, %p533
      %p535 = scmp.ne.s32.totalorder %s527, %s529
      %p536 = scmp.eq.s32.totalorder %s173, 1
      %p537 = por %p535, %p536
      %p538 = scmp.ne.s32.totalorder %s529, %s530
      %p539 = scmp.eq.s32.totalorder %s173, 0
      %p540 = por %p538, %p539
      %p541 = scmp.ne.s32.totalorder %s529, %s530
      %p542 = scmp.eq.s32.totalorder %s174, 1
      %p543 = por %p541, %p542
      %p545 = scmp.ne.s32.totalorder %s530, %s544
      %p546 = scmp.eq.s32.totalorder %s174, 0
      %p547 = por %p545, %p546
      %s549 = sadd.s32 %s548, 1
      %p552 = scmp.eq.s32.totalorder %s168, 1
      %p553 = scmp.ne.s32.totalorder %s548, %s550
      %p554 = scmp.eq.s32.totalorder %s168, 0
      %p555 = por %p553, %p554
      %p556 = scmp.ne.s32.totalorder %s548, %s550
      %p557 = scmp.eq.s32.totalorder %s173, 1
      %p558 = por %p556, %p557
      %p559 = scmp.ne.s32.totalorder %s550, %s551
      %p560 = scmp.eq.s32.totalorder %s173, 0
      %p561 = por %p559, %p560
      %p562 = scmp.ne.s32.totalorder %s550, %s551
      %p563 = scmp.eq.s32.totalorder %s174, 1
      %p564 = por %p562, %p563
      %p566 = scmp.ne.s32.totalorder %s551, %s565
      %p567 = scmp.eq.s32.totalorder %s174, 0
      %p568 = por %p566, %p567
      %s570 = sadd.s32 %s569, 1
      %p573 = scmp.eq.s32.totalorder %s168, 1
      %p574 = scmp.ne.s32.totalorder %s569, %s571
      %p575 = scmp.eq.s32.totalorder %s168, 0
      %p576 = por %p574, %p575
      %p577 = scmp.ne.s32.totalorder %s569, %s571
      %p578 = scmp.eq.s32.totalorder %s173, 1
      %p579 = por %p577, %p578
      %p580 = scmp.ne.s32.totalorder %s571, %s572
      %p581 = scmp.eq.s32.totalorder %s173, 0
      %p582 = por %p580, %p581
      %p583 = scmp.ne.s32.totalorder %s571, %s572
      %p584 = scmp.eq.s32.totalorder %s174, 1
      %p585 = por %p583, %p584
      %p587 = scmp.ne.s32.totalorder %s572, %s586
      %p588 = scmp.eq.s32.totalorder %s174, 0
      %p589 = por %p587, %p588
      %s591 = sadd.s32 %s590, 1
      %p594 = scmp.eq.s32.totalorder %s168, 1
      %p595 = scmp.ne.s32.totalorder %s590, %s592
      %p596 = scmp.eq.s32.totalorder %s168, 0
      %p597 = por %p595, %p596
      %p598 = scmp.ne.s32.totalorder %s590, %s592
      %p599 = scmp.eq.s32.totalorder %s173, 1
      %p600 = por %p598, %p599
      %p601 = scmp.ne.s32.totalorder %s592, %s593
      %p602 = scmp.eq.s32.totalorder %s173, 0
      %p603 = por %p601, %p602
      %p604 = scmp.ne.s32.totalorder %s592, %s593
      %p605 = scmp.eq.s32.totalorder %s174, 1
      %p606 = por %p604, %p605
      %p608 = scmp.ne.s32.totalorder %s593, %s607
      %p609 = scmp.eq.s32.totalorder %s174, 0
      %p610 = por %p608, %p609
      %s612 = sadd.s32 %s611, 1
      %p615 = scmp.eq.s32.totalorder %s168, 1
      %p616 = scmp.ne.s32.totalorder %s611, %s613
      %p617 = scmp.eq.s32.totalorder %s168, 0
      %p618 = por %p616, %p617
      %p619 = scmp.ne.s32.totalorder %s611, %s613
      %p620 = scmp.eq.s32.totalorder %s173, 1
      %p621 = por %p619, %p620
      %p622 = scmp.ne.s32.totalorder %s613, %s614
      %p623 = scmp.eq.s32.totalorder %s173, 0
      %p624 = por %p622, %p623
      %p625 = scmp.ne.s32.totalorder %s613, %s614
      %p626 = scmp.eq.s32.totalorder %s174, 1
      %p627 = por %p625, %p626
      %p629 = scmp.ne.s32.totalorder %s614, %s628
      %p630 = scmp.eq.s32.totalorder %s174, 0
      %p631 = por %p629, %p630
      %s633 = sadd.s32 %s632, 1
      %p636 = scmp.eq.s32.totalorder %s168, 1
      %p637 = scmp.ne.s32.totalorder %s632, %s634
      %p638 = scmp.eq.s32.totalorder %s168, 0
      %p639 = por %p637, %p638
      %p640 = scmp.ne.s32.totalorder %s632, %s634
      %p641 = scmp.eq.s32.totalorder %s173, 1
      %p642 = por %p640, %p641
      %p643 = scmp.ne.s32.totalorder %s634, %s635
      %p644 = scmp.eq.s32.totalorder %s173, 0
      %p645 = por %p643, %p644
      %p646 = scmp.ne.s32.totalorder %s634, %s635
      %p647 = scmp.eq.s32.totalorder %s174, 1
      %p648 = por %p646, %p647
      %p650 = scmp.ne.s32.totalorder %s635, %s649
      %p651 = scmp.eq.s32.totalorder %s174, 0
      %p652 = por %p650, %p651
      %s654 = sadd.s32 %s653, 1
      %p657 = scmp.eq.s32.totalorder %s168, 1
      %p658 = scmp.ne.s32.totalorder %s653, %s655
      %p659 = scmp.eq.s32.totalorder %s168, 0
      %p660 = por %p658, %p659
      %p661 = scmp.ne.s32.totalorder %s653, %s655
      %p662 = scmp.eq.s32.totalorder %s173, 1
      %p663 = por %p661, %p662
      %p664 = scmp.ne.s32.totalorder %s655, %s656
      %p665 = scmp.eq.s32.totalorder %s173, 0
      %p666 = por %p664, %p665
      %p667 = scmp.ne.s32.totalorder %s655, %s656
      %p668 = scmp.eq.s32.totalorder %s174, 1
      %p669 = por %p667, %p668
      %p671 = scmp.ne.s32.totalorder %s656, %s670
      %p672 = scmp.eq.s32.totalorder %s174, 0
      %p673 = por %p671, %p672
      %s675 = sadd.s32 %s674, 1
      %p678 = scmp.eq.s32.totalorder %s168, 1
      %p679 = scmp.ne.s32.totalorder %s674, %s676
      %p680 = scmp.eq.s32.totalorder %s168, 0
      %p681 = por %p679, %p680
      %p682 = scmp.ne.s32.totalorder %s674, %s676
      %p683 = scmp.eq.s32.totalorder %s173, 1
      %p684 = por %p682, %p683
      %p685 = scmp.ne.s32.totalorder %s676, %s677
      %p686 = scmp.eq.s32.totalorder %s173, 0
      %p687 = por %p685, %p686
      %p688 = scmp.ne.s32.totalorder %s676, %s677
      %p689 = scmp.eq.s32.totalorder %s174, 1
      %p690 = por %p688, %p689
      %p692 = scmp.ne.s32.totalorder %s677, %s691
      %p693 = scmp.eq.s32.totalorder %s174, 0
      %p694 = por %p692, %p693
      %s696 = sadd.s32 %s695, 1
      %p699 = scmp.eq.s32.totalorder %s168, 1
      %p700 = scmp.ne.s32.totalorder %s695, %s697
      %p701 = scmp.eq.s32.totalorder %s168, 0
      %p702 = por %p700, %p701
      %p703 = scmp.ne.s32.totalorder %s695, %s697
      %p704 = scmp.eq.s32.totalorder %s173, 1
      %p705 = por %p703, %p704
      %p706 = scmp.ne.s32.totalorder %s697, %s698
      %p707 = scmp.eq.s32.totalorder %s173, 0
      %p708 = por %p706, %p707
      %p709 = scmp.ne.s32.totalorder %s697, %s698
      %p710 = scmp.eq.s32.totalorder %s174, 1
      %p711 = por %p709, %p710
      %p713 = scmp.ne.s32.totalorder %s698, %s712
      %p714 = scmp.eq.s32.totalorder %s174, 0
      %p715 = por %p713, %p714
      %s717 = sadd.s32 %s716, 1
      %p720 = scmp.eq.s32.totalorder %s168, 1
      %p721 = scmp.ne.s32.totalorder %s716, %s718
      %p722 = scmp.eq.s32.totalorder %s168, 0
      %p723 = por %p721, %p722
      %p724 = scmp.ne.s32.totalorder %s716, %s718
      %p725 = scmp.eq.s32.totalorder %s173, 1
      %p726 = por %p724, %p725
      %p727 = scmp.ne.s32.totalorder %s718, %s719
      %p728 = scmp.eq.s32.totalorder %s173, 0
      %p729 = por %p727, %p728
      %p730 = scmp.ne.s32.totalorder %s718, %s719
      %p731 = scmp.eq.s32.totalorder %s174, 1
      %p732 = por %p730, %p731
      %p734 = scmp.ne.s32.totalorder %s719, %s733
      %p735 = scmp.eq.s32.totalorder %s174, 0
      %p736 = por %p734, %p735
      %s738 = sadd.s32 %s737, 1
      %p741 = scmp.eq.s32.totalorder %s168, 1
      %p742 = scmp.ne.s32.totalorder %s737, %s739
      %p743 = scmp.eq.s32.totalorder %s168, 0
      %p744 = por %p742, %p743
      %p745 = scmp.ne.s32.totalorder %s737, %s739
      %p746 = scmp.eq.s32.totalorder %s173, 1
      %p747 = por %p745, %p746
      %p748 = scmp.ne.s32.totalorder %s739, %s740
      %p749 = scmp.eq.s32.totalorder %s173, 0
      %p750 = por %p748, %p749
      %p751 = scmp.ne.s32.totalorder %s739, %s740
      %p752 = scmp.eq.s32.totalorder %s174, 1
      %p753 = por %p751, %p752
      %p755 = scmp.ne.s32.totalorder %s740, %s754
      %p756 = scmp.eq.s32.totalorder %s174, 0
      %p757 = por %p755, %p756
      %s759 = sadd.s32 %s758, 1
      %p762 = scmp.eq.s32.totalorder %s168, 1
      %p763 = scmp.ne.s32.totalorder %s758, %s760
      %p764 = scmp.eq.s32.totalorder %s168, 0
      %p765 = por %p763, %p764
      %p766 = scmp.ne.s32.totalorder %s758, %s760
      %p767 = scmp.eq.s32.totalorder %s173, 1
      %p768 = por %p766, %p767
      %p769 = scmp.ne.s32.totalorder %s760, %s761
      %p770 = scmp.eq.s32.totalorder %s173, 0
      %p771 = por %p769, %p770
      %p772 = scmp.ne.s32.totalorder %s760, %s761
      %p773 = scmp.eq.s32.totalorder %s174, 1
      %p774 = por %p772, %p773
      %p776 = scmp.ne.s32.totalorder %s761, %s775
      %p777 = scmp.eq.s32.totalorder %s174, 0
      %p778 = por %p776, %p777
      %s780 = sadd.s32 %s779, 1
      %p783 = scmp.eq.s32.totalorder %s168, 1
      %p784 = scmp.ne.s32.totalorder %s779, %s781
      %p785 = scmp.eq.s32.totalorder %s168, 0
      %p786 = por %p784, %p785
      %p787 = scmp.ne.s32.totalorder %s779, %s781
      %p788 = scmp.eq.s32.totalorder %s173, 1
      %p789 = por %p787, %p788
      %p790 = scmp.ne.s32.totalorder %s781, %s782
      %p791 = scmp.eq.s32.totalorder %s173, 0
      %p792 = por %p790, %p791
      %p793 = scmp.ne.s32.totalorder %s781, %s782
      %p794 = scmp.eq.s32.totalorder %s174, 1
      %p795 = por %p793, %p794
      %p797 = scmp.ne.s32.totalorder %s782, %s796
      %p798 = scmp.eq.s32.totalorder %s174, 0
      %p799 = por %p797, %p798
      %s801 = sadd.s32 %s800, 1
      %p804 = scmp.eq.s32.totalorder %s168, 1
      %p805 = scmp.ne.s32.totalorder %s800, %s802
      %p806 = scmp.eq.s32.totalorder %s168, 0
      %p807 = por %p805, %p806
      %p808 = scmp.ne.s32.totalorder %s800, %s802
      %p809 = scmp.eq.s32.totalorder %s173, 1
      %p810 = por %p808, %p809
      %p811 = scmp.ne.s32.totalorder %s802, %s803
      %p812 = scmp.eq.s32.totalorder %s173, 0
      %p813 = por %p811, %p812
      %p814 = scmp.ne.s32.totalorder %s802, %s803
      %p815 = scmp.eq.s32.totalorder %s174, 1
      %p816 = por %p814, %p815
      %p818 = scmp.ne.s32.totalorder %s803, %s817
      %p819 = scmp.eq.s32.totalorder %s174, 0
      %p820 = por %p818, %p819
      %s822 = sadd.s32 %s821, 1
      %p825 = scmp.eq.s32.totalorder %s168, 1
      %p826 = scmp.ne.s32.totalorder %s821, %s823
      %p827 = scmp.eq.s32.totalorder %s168, 0
      %p828 = por %p826, %p827
      %p829 = scmp.ne.s32.totalorder %s821, %s823
      %p830 = scmp.eq.s32.totalorder %s173, 1
      %p831 = por %p829, %p830
      %p832 = scmp.ne.s32.totalorder %s823, %s824
      %p833 = scmp.eq.s32.totalorder %s173, 0
      %p834 = por %p832, %p833
      %p835 = scmp.ne.s32.totalorder %s823, %s824
      %p836 = scmp.eq.s32.totalorder %s174, 1
      %p837 = por %p835, %p836
      %p839 = scmp.ne.s32.totalorder %s824, %s838
      %p840 = scmp.eq.s32.totalorder %s174, 0
      %p841 = por %p839, %p840
      %s843 = sadd.s32 %s842, 1
      %p846 = scmp.eq.s32.totalorder %s168, 1
      %p847 = scmp.ne.s32.totalorder %s842, %s844
      %p848 = scmp.eq.s32.totalorder %s168, 0
      %p849 = por %p847, %p848
      %p850 = scmp.ne.s32.totalorder %s842, %s844
      %p851 = scmp.eq.s32.totalorder %s173, 1
      %p852 = por %p850, %p851
      %p853 = scmp.ne.s32.totalorder %s844, %s845
      %p854 = scmp.eq.s32.totalorder %s173, 0
      %p855 = por %p853, %p854
      %p856 = scmp.ne.s32.totalorder %s844, %s845
      %p857 = scmp.eq.s32.totalorder %s174, 1
      %p858 = por %p856, %p857
      %p860 = scmp.ne.s32.totalorder %s845, %s859
      %p861 = scmp.eq.s32.totalorder %s174, 0
      %p862 = por %p860, %p861
      %s864 = sadd.s32 %s863, 1
      %p867 = scmp.eq.s32.totalorder %s168, 1
      %p868 = scmp.ne.s32.totalorder %s863, %s865
      %p869 = scmp.eq.s32.totalorder %s168, 0
      %p870 = por %p868, %p869
      %p871 = scmp.ne.s32.totalorder %s863, %s865
      %p872 = scmp.eq.s32.totalorder %s173, 1
      %p873 = por %p871, %p872
      %p874 = scmp.ne.s32.totalorder %s865, %s866
      %p875 = scmp.eq.s32.totalorder %s173, 0
      %p876 = por %p874, %p875
      %p877 = scmp.ne.s32.totalorder %s865, %s866
      %p878 = scmp.eq.s32.totalorder %s174, 1
      %p879 = por %p877, %p878
      %p881 = scmp.ne.s32.totalorder %s866, %s880
      %p882 = scmp.eq.s32.totalorder %s174, 0
      %p883 = por %p881, %p882
      %s885 = sadd.s32 %s884, 1
      %p888 = scmp.eq.s32.totalorder %s168, 1
      %p889 = scmp.ne.s32.totalorder %s884, %s886
      %p890 = scmp.eq.s32.totalorder %s168, 0
      %p891 = por %p889, %p890
      %p892 = scmp.ne.s32.totalorder %s884, %s886
      %p893 = scmp.eq.s32.totalorder %s173, 1
      %p894 = por %p892, %p893
      %p895 = scmp.ne.s32.totalorder %s886, %s887
      %p896 = scmp.eq.s32.totalorder %s173, 0
      %p897 = por %p895, %p896
      %p898 = scmp.ne.s32.totalorder %s886, %s887
      %p899 = scmp.eq.s32.totalorder %s174, 1
      %p900 = por %p898, %p899
      %p902 = scmp.ne.s32.totalorder %s887, %s901
      %p903 = scmp.eq.s32.totalorder %s174, 0
      %p904 = por %p902, %p903
      %s906 = sadd.s32 %s905, 1
      %p909 = scmp.eq.s32.totalorder %s168, 1
      %p910 = scmp.ne.s32.totalorder %s905, %s907
      %p911 = scmp.eq.s32.totalorder %s168, 0
      %p912 = por %p910, %p911
      %p913 = scmp.ne.s32.totalorder %s905, %s907
      %p914 = scmp.eq.s32.totalorder %s173, 1
      %p915 = por %p913, %p914
      %p916 = scmp.ne.s32.totalorder %s907, %s908
      %p917 = scmp.eq.s32.totalorder %s173, 0
      %p918 = por %p916, %p917
      %p919 = scmp.ne.s32.totalorder %s907, %s908
      %p920 = scmp.eq.s32.totalorder %s174, 1
      %p921 = por %p919, %p920
      %p923 = scmp.ne.s32.totalorder %s908, %s922
      %p924 = scmp.eq.s32.totalorder %s174, 0
      %p925 = por %p923, %p924
      %s927 = sadd.s32 %s926, 1
      %p930 = scmp.eq.s32.totalorder %s168, 1
      %p931 = scmp.ne.s32.totalorder %s926, %s928
      %p932 = scmp.eq.s32.totalorder %s168, 0
      %p933 = por %p931, %p932
      %p934 = scmp.ne.s32.totalorder %s926, %s928
      %p935 = scmp.eq.s32.totalorder %s173, 1
      %p936 = por %p934, %p935
      %p937 = scmp.ne.s32.totalorder %s928, %s929
      %p938 = scmp.eq.s32.totalorder %s173, 0
      %p939 = por %p937, %p938
      %p940 = scmp.ne.s32.totalorder %s928, %s929
      %p941 = scmp.eq.s32.totalorder %s174, 1
      %p942 = por %p940, %p941
      %p944 = scmp.ne.s32.totalorder %s929, %s943
      %p945 = scmp.eq.s32.totalorder %s174, 0
      %p946 = por %p944, %p945
      %s948 = sadd.s32 %s947, 1
      %p951 = scmp.eq.s32.totalorder %s168, 1
      %p952 = scmp.ne.s32.totalorder %s947, %s949
      %p953 = scmp.eq.s32.totalorder %s168, 0
      %p954 = por %p952, %p953
      %p955 = scmp.ne.s32.totalorder %s947, %s949
      %p956 = scmp.eq.s32.totalorder %s173, 1
      %p957 = por %p955, %p956
      %p958 = scmp.ne.s32.totalorder %s949, %s950
      %p959 = scmp.eq.s32.totalorder %s173, 0
      %p960 = por %p958, %p959
      %p961 = scmp.ne.s32.totalorder %s949, %s950
      %p962 = scmp.eq.s32.totalorder %s174, 1
      %p963 = por %p961, %p962
      %p965 = scmp.ne.s32.totalorder %s950, %s964
      %p966 = scmp.eq.s32.totalorder %s174, 0
      %p967 = por %p965, %p966
      %s969 = sadd.s32 %s968, 1
      %p972 = scmp.eq.s32.totalorder %s168, 1
      %p973 = scmp.ne.s32.totalorder %s968, %s970
      %p974 = scmp.eq.s32.totalorder %s168, 0
      %p975 = por %p973, %p974
      %p976 = scmp.ne.s32.totalorder %s968, %s970
      %p977 = scmp.eq.s32.totalorder %s173, 1
      %p978 = por %p976, %p977
      %p979 = scmp.ne.s32.totalorder %s970, %s971
      %p980 = scmp.eq.s32.totalorder %s173, 0
      %p981 = por %p979, %p980
      %p982 = scmp.ne.s32.totalorder %s970, %s971
      %p983 = scmp.eq.s32.totalorder %s174, 1
      %p984 = por %p982, %p983
      %p986 = scmp.ne.s32.totalorder %s971, %s985
      %p987 = scmp.eq.s32.totalorder %s174, 0
      %p988 = por %p986, %p987
      %s990 = sadd.s32 %s989, 1
      %p993 = scmp.eq.s32.totalorder %s168, 1
      %p994 = scmp.ne.s32.totalorder %s989, %s991
      %p995 = scmp.eq.s32.totalorder %s168, 0
      %p996 = por %p994, %p995
      %p997 = scmp.ne.s32.totalorder %s989, %s991
      %p998 = scmp.eq.s32.totalorder %s173, 1
      %p999 = por %p997, %p998
      %p1000 = scmp.ne.s32.totalorder %s991, %s992
      %p1001 = scmp.eq.s32.totalorder %s173, 0
      %p1002 = por %p1000, %p1001
      %p1003 = scmp.ne.s32.totalorder %s991, %s992
      %p1004 = scmp.eq.s32.totalorder %s174, 1
      %p1005 = por %p1003, %p1004
      %p1007 = scmp.ne.s32.totalorder %s992, %s1006
      %p1008 = scmp.eq.s32.totalorder %s174, 0
      %p1009 = por %p1007, %p1008
      %s1011 = sadd.s32 %s1010, 1
      %p1014 = scmp.eq.s32.totalorder %s168, 1
      %p1015 = scmp.ne.s32.totalorder %s1010, %s1012
      %p1016 = scmp.eq.s32.totalorder %s168, 0
      %p1017 = por %p1015, %p1016
      %p1018 = scmp.ne.s32.totalorder %s1010, %s1012
      %p1019 = scmp.eq.s32.totalorder %s173, 1
      %p1020 = por %p1018, %p1019
      %p1021 = scmp.ne.s32.totalorder %s1012, %s1013
      %p1022 = scmp.eq.s32.totalorder %s173, 0
      %p1023 = por %p1021, %p1022
      %p1024 = scmp.ne.s32.totalorder %s1012, %s1013
      %p1025 = scmp.eq.s32.totalorder %s174, 1
      %p1026 = por %p1024, %p1025
      %p1028 = scmp.ne.s32.totalorder %s1013, %s1027
      %p1029 = scmp.eq.s32.totalorder %s174, 0
      %p1030 = por %p1028, %p1029
      %s1032 = sadd.s32 %s1031, 1
      %p1035 = scmp.eq.s32.totalorder %s168, 1
      %p1036 = scmp.ne.s32.totalorder %s1031, %s1033
      %p1037 = scmp.eq.s32.totalorder %s168, 0
      %p1038 = por %p1036, %p1037
      %p1039 = scmp.ne.s32.totalorder %s1031, %s1033
      %p1040 = scmp.eq.s32.totalorder %s173, 1
      %p1041 = por %p1039, %p1040
      %p1042 = scmp.ne.s32.totalorder %s1033, %s1034
      %p1043 = scmp.eq.s32.totalorder %s173, 0
      %p1044 = por %p1042, %p1043
      %p1045 = scmp.ne.s32.totalorder %s1033, %s1034
      %p1046 = scmp.eq.s32.totalorder %s174, 1
      %p1047 = por %p1045, %p1046
      %p1049 = scmp.ne.s32.totalorder %s1034, %s1048
      %p1050 = scmp.eq.s32.totalorder %s174, 0
      %p1051 = por %p1049, %p1050
      %s1053 = sadd.s32 %s1052, 1
      %p1056 = scmp.eq.s32.totalorder %s168, 1
      %p1057 = scmp.ne.s32.totalorder %s1052, %s1054
      %p1058 = scmp.eq.s32.totalorder %s168, 0
      %p1059 = por %p1057, %p1058
      %p1060 = scmp.ne.s32.totalorder %s1052, %s1054
      %p1061 = scmp.eq.s32.totalorder %s173, 1
      %p1062 = por %p1060, %p1061
      %p1063 = scmp.ne.s32.totalorder %s1054, %s1055
      %p1064 = scmp.eq.s32.totalorder %s173, 0
      %p1065 = por %p1063, %p1064
      %p1066 = scmp.ne.s32.totalorder %s1054, %s1055
      %p1067 = scmp.eq.s32.totalorder %s174, 1
      %p1068 = por %p1066, %p1067
      %p1070 = scmp.ne.s32.totalorder %s1055, %s1069
      %p1071 = scmp.eq.s32.totalorder %s174, 0
      %p1072 = por %p1070, %p1071
      %s1074 = sadd.s32 %s1073, 1
      %p1077 = scmp.eq.s32.totalorder %s168, 1
      %p1078 = scmp.ne.s32.totalorder %s1073, %s1075
      %p1079 = scmp.eq.s32.totalorder %s168, 0
      %p1080 = por %p1078, %p1079
      %p1081 = scmp.ne.s32.totalorder %s1073, %s1075
      %p1082 = scmp.eq.s32.totalorder %s173, 1
      %p1083 = por %p1081, %p1082
      %p1084 = scmp.ne.s32.totalorder %s1075, %s1076
      %p1085 = scmp.eq.s32.totalorder %s173, 0
      %p1086 = por %p1084, %p1085
      %p1087 = scmp.ne.s32.totalorder %s1075, %s1076
      %p1088 = scmp.eq.s32.totalorder %s174, 1
      %p1089 = por %p1087, %p1088
      %p1091 = scmp.ne.s32.totalorder %s1076, %s1090
      %p1092 = scmp.eq.s32.totalorder %s174, 0
      %p1093 = por %p1091, %p1092
      %s1095 = sadd.s32 %s1094, 1
      %p1098 = scmp.eq.s32.totalorder %s168, 1
      %p1099 = scmp.ne.s32.totalorder %s1094, %s1096
      %p1100 = scmp.eq.s32.totalorder %s168, 0
      %p1101 = por %p1099, %p1100
      %p1102 = scmp.ne.s32.totalorder %s1094, %s1096
      %p1103 = scmp.eq.s32.totalorder %s173, 1
      %p1104 = por %p1102, %p1103
      %p1105 = scmp.ne.s32.totalorder %s1096, %s1097
      %p1106 = scmp.eq.s32.totalorder %s173, 0
      %p1107 = por %p1105, %p1106
      %p1108 = scmp.ne.s32.totalorder %s1096, %s1097
      %p1109 = scmp.eq.s32.totalorder %s174, 1
      %p1110 = por %p1108, %p1109
      %p1112 = scmp.ne.s32.totalorder %s1097, %s1111
      %p1113 = scmp.eq.s32.totalorder %s174, 0
      %p1114 = por %p1112, %p1113
      %s1116 = sadd.s32 %s1115, 1
      %p1119 = scmp.eq.s32.totalorder %s168, 1
      %p1120 = scmp.ne.s32.totalorder %s1115, %s1117
      %p1121 = scmp.eq.s32.totalorder %s168, 0
      %p1122 = por %p1120, %p1121
      %p1123 = scmp.ne.s32.totalorder %s1115, %s1117
      %p1124 = scmp.eq.s32.totalorder %s173, 1
      %p1125 = por %p1123, %p1124
      %p1126 = scmp.ne.s32.totalorder %s1117, %s1118
      %p1127 = scmp.eq.s32.totalorder %s173, 0
      %p1128 = por %p1126, %p1127
      %p1129 = scmp.ne.s32.totalorder %s1117, %s1118
      %p1130 = scmp.eq.s32.totalorder %s174, 1
      %p1131 = por %p1129, %p1130
      %p1133 = scmp.ne.s32.totalorder %s1118, %s1132
      %p1134 = scmp.eq.s32.totalorder %s174, 0
      %p1135 = por %p1133, %p1134
      %s1137 = sadd.s32 %s1136, 1
      %p1140 = scmp.eq.s32.totalorder %s168, 1
      %p1141 = scmp.ne.s32.totalorder %s1136, %s1138
      %p1142 = scmp.eq.s32.totalorder %s168, 0
      %p1143 = por %p1141, %p1142
      %p1144 = scmp.ne.s32.totalorder %s1136, %s1138
      %p1145 = scmp.eq.s32.totalorder %s173, 1
      %p1146 = por %p1144, %p1145
      %p1147 = scmp.ne.s32.totalorder %s1138, %s1139
      %p1148 = scmp.eq.s32.totalorder %s173, 0
      %p1149 = por %p1147, %p1148
      %p1150 = scmp.ne.s32.totalorder %s1138, %s1139
      %p1151 = scmp.eq.s32.totalorder %s174, 1
      %p1152 = por %p1150, %p1151
      %p1154 = scmp.ne.s32.totalorder %s1139, %s1153
      %p1155 = scmp.eq.s32.totalorder %s174, 0
      %p1156 = por %p1154, %p1155
      %s1158 = sadd.s32 %s1157, 1
      %p1161 = scmp.eq.s32.totalorder %s168, 1
      %p1162 = scmp.ne.s32.totalorder %s1157, %s1159
      %p1163 = scmp.eq.s32.totalorder %s168, 0
      %p1164 = por %p1162, %p1163
      %p1165 = scmp.ne.s32.totalorder %s1157, %s1159
      %p1166 = scmp.eq.s32.totalorder %s173, 1
      %p1167 = por %p1165, %p1166
      %p1168 = scmp.ne.s32.totalorder %s1159, %s1160
      %p1169 = scmp.eq.s32.totalorder %s173, 0
      %p1170 = por %p1168, %p1169
      %p1171 = scmp.ne.s32.totalorder %s1159, %s1160
      %p1172 = scmp.eq.s32.totalorder %s174, 1
      %p1173 = por %p1171, %p1172
      %p1175 = scmp.ne.s32.totalorder %s1160, %s1174
      %p1176 = scmp.eq.s32.totalorder %s174, 0
      %p1177 = por %p1175, %p1176
      %s1179 = sadd.s32 %s1178, 1
      %p1182 = scmp.eq.s32.totalorder %s168, 1
      %p1183 = scmp.ne.s32.totalorder %s1178, %s1180
      %p1184 = scmp.eq.s32.totalorder %s168, 0
      %p1185 = por %p1183, %p1184
      %p1186 = scmp.ne.s32.totalorder %s1178, %s1180
      %p1187 = scmp.eq.s32.totalorder %s173, 1
      %p1188 = por %p1186, %p1187
      %p1189 = scmp.ne.s32.totalorder %s1180, %s1181
      %p1190 = scmp.eq.s32.totalorder %s173, 0
      %p1191 = por %p1189, %p1190
      %p1192 = scmp.ne.s32.totalorder %s1180, %s1181
      %p1193 = scmp.eq.s32.totalorder %s174, 1
      %p1194 = por %p1192, %p1193
      %p1196 = scmp.ne.s32.totalorder %s1181, %s1195
      %p1197 = scmp.eq.s32.totalorder %s174, 0
      %p1198 = por %p1196, %p1197
      %s1200 = sadd.s32 %s1199, 1
      %p1203 = scmp.eq.s32.totalorder %s168, 1
      %p1204 = scmp.ne.s32.totalorder %s1199, %s1201
      %p1205 = scmp.eq.s32.totalorder %s168, 0
      %p1206 = por %p1204, %p1205
      %p1207 = scmp.ne.s32.totalorder %s1199, %s1201
      %p1208 = scmp.eq.s32.totalorder %s173, 1
      %p1209 = por %p1207, %p1208
      %p1210 = scmp.ne.s32.totalorder %s1201, %s1202
      %p1211 = scmp.eq.s32.totalorder %s173, 0
      %p1212 = por %p1210, %p1211
      %p1213 = scmp.ne.s32.totalorder %s1201, %s1202
      %p1214 = scmp.eq.s32.totalorder %s174, 1
      %p1215 = por %p1213, %p1214
      %p1217 = scmp.ne.s32.totalorder %s1202, %s1216
      %p1218 = scmp.eq.s32.totalorder %s174, 0
      %p1219 = por %p1217, %p1218
      %s1221 = sadd.s32 %s1220, 1
      %p1224 = scmp.eq.s32.totalorder %s168, 1
      %p1225 = scmp.ne.s32.totalorder %s1220, %s1222
      %p1226 = scmp.eq.s32.totalorder %s168, 0
      %p1227 = por %p1225, %p1226
      %p1228 = scmp.ne.s32.totalorder %s1220, %s1222
      %p1229 = scmp.eq.s32.totalorder %s173, 1
      %p1230 = por %p1228, %p1229
      %p1231 = scmp.ne.s32.totalorder %s1222, %s1223
      %p1232 = scmp.eq.s32.totalorder %s173, 0
      %p1233 = por %p1231, %p1232
      %p1234 = scmp.ne.s32.totalorder %s1222, %s1223
      %p1235 = scmp.eq.s32.totalorder %s174, 1
      %p1236 = por %p1234, %p1235
      %p1238 = scmp.ne.s32.totalorder %s1223, %s1237
      %p1239 = scmp.eq.s32.totalorder %s174, 0
      %p1240 = por %p1238, %p1239
      %s1242 = sadd.s32 %s1241, 1
      %p1245 = scmp.eq.s32.totalorder %s168, 1
      %p1246 = scmp.ne.s32.totalorder %s1241, %s1243
      %p1247 = scmp.eq.s32.totalorder %s168, 0
      %p1248 = por %p1246, %p1247
      %p1249 = scmp.ne.s32.totalorder %s1241, %s1243
      %p1250 = scmp.eq.s32.totalorder %s173, 1
      %p1251 = por %p1249, %p1250
      %p1252 = scmp.ne.s32.totalorder %s1243, %s1244
      %p1253 = scmp.eq.s32.totalorder %s173, 0
      %p1254 = por %p1252, %p1253
      %p1255 = scmp.ne.s32.totalorder %s1243, %s1244
      %p1256 = scmp.eq.s32.totalorder %s174, 1
      %p1257 = por %p1255, %p1256
      %p1259 = scmp.ne.s32.totalorder %s1244, %s1258
      %p1260 = scmp.eq.s32.totalorder %s174, 0
      %p1261 = por %p1259, %p1260
      %s1263 = sadd.s32 %s1262, 1
      %p1266 = scmp.eq.s32.totalorder %s168, 1
      %p1267 = scmp.ne.s32.totalorder %s1262, %s1264
      %p1268 = scmp.eq.s32.totalorder %s168, 0
      %p1269 = por %p1267, %p1268
      %p1270 = scmp.ne.s32.totalorder %s1262, %s1264
      %p1271 = scmp.eq.s32.totalorder %s173, 1
      %p1272 = por %p1270, %p1271
      %p1273 = scmp.ne.s32.totalorder %s1264, %s1265
      %p1274 = scmp.eq.s32.totalorder %s173, 0
      %p1275 = por %p1273, %p1274
      %p1276 = scmp.ne.s32.totalorder %s1264, %s1265
      %p1277 = scmp.eq.s32.totalorder %s174, 1
      %p1278 = por %p1276, %p1277
      %p1280 = scmp.ne.s32.totalorder %s1265, %s1279
      %p1281 = scmp.eq.s32.totalorder %s174, 0
      %p1282 = por %p1280, %p1281
      %s1284 = sadd.s32 %s1283, 1
      %p1287 = scmp.eq.s32.totalorder %s168, 1
      %p1288 = scmp.ne.s32.totalorder %s1283, %s1285
      %p1289 = scmp.eq.s32.totalorder %s168, 0
      %p1290 = por %p1288, %p1289
      %p1291 = scmp.ne.s32.totalorder %s1283, %s1285
      %p1292 = scmp.eq.s32.totalorder %s173, 1
      %p1293 = por %p1291, %p1292
      %p1294 = scmp.ne.s32.totalorder %s1285, %s1286
      %p1295 = scmp.eq.s32.totalorder %s173, 0
      %p1296 = por %p1294, %p1295
      %p1297 = scmp.ne.s32.totalorder %s1285, %s1286
      %p1298 = scmp.eq.s32.totalorder %s174, 1
      %p1299 = por %p1297, %p1298
      %p1301 = scmp.ne.s32.totalorder %s1286, %s1300
      %p1302 = scmp.eq.s32.totalorder %s174, 0
      %p1303 = por %p1301, %p1302
      %s1305 = sadd.s32 %s1304, 1
      %p1308 = scmp.eq.s32.totalorder %s168, 1
      %p1309 = scmp.ne.s32.totalorder %s1304, %s1306
      %p1310 = scmp.eq.s32.totalorder %s168, 0
      %p1311 = por %p1309, %p1310
      %p1312 = scmp.ne.s32.totalorder %s1304, %s1306
      %p1313 = scmp.eq.s32.totalorder %s173, 1
      %p1314 = por %p1312, %p1313
      %p1315 = scmp.ne.s32.totalorder %s1306, %s1307
      %p1316 = scmp.eq.s32.totalorder %s173, 0
      %p1317 = por %p1315, %p1316
      %p1318 = scmp.ne.s32.totalorder %s1306, %s1307
      %p1319 = scmp.eq.s32.totalorder %s174, 1
      %p1320 = por %p1318, %p1319
      %p1322 = scmp.ne.s32.totalorder %s1307, %s1321
      %p1323 = scmp.eq.s32.totalorder %s174, 0
      %p1324 = por %p1322, %p1323
      %s1326 = sadd.s32 %s1325, 1
      %p1329 = scmp.eq.s32.totalorder %s168, 1
      %p1330 = scmp.ne.s32.totalorder %s1325, %s1327
      %p1331 = scmp.eq.s32.totalorder %s168, 0
      %p1332 = por %p1330, %p1331
      %p1333 = scmp.ne.s32.totalorder %s1325, %s1327
      %p1334 = scmp.eq.s32.totalorder %s173, 1
      %p1335 = por %p1333, %p1334
      %p1336 = scmp.ne.s32.totalorder %s1327, %s1328
      %p1337 = scmp.eq.s32.totalorder %s173, 0
      %p1338 = por %p1336, %p1337
      %p1339 = scmp.ne.s32.totalorder %s1327, %s1328
      %p1340 = scmp.eq.s32.totalorder %s174, 1
      %p1341 = por %p1339, %p1340
      %p1343 = scmp.ne.s32.totalorder %s1328, %s1342
      %p1344 = scmp.eq.s32.totalorder %s174, 0
      %p1345 = por %p1343, %p1344
      %s1347 = sadd.s32 %s1346, 1
      %p1350 = scmp.eq.s32.totalorder %s168, 1
      %p1351 = scmp.ne.s32.totalorder %s1346, %s1348
      %p1352 = scmp.eq.s32.totalorder %s168, 0
      %p1353 = por %p1351, %p1352
      %p1354 = scmp.ne.s32.totalorder %s1346, %s1348
      %p1355 = scmp.eq.s32.totalorder %s173, 1
      %p1356 = por %p1354, %p1355
      %p1357 = scmp.ne.s32.totalorder %s1348, %s1349
      %p1358 = scmp.eq.s32.totalorder %s173, 0
      %p1359 = por %p1357, %p1358
      %p1360 = scmp.ne.s32.totalorder %s1348, %s1349
      %p1361 = scmp.eq.s32.totalorder %s174, 1
      %p1362 = por %p1360, %p1361
      %p1364 = scmp.ne.s32.totalorder %s1349, %s1363
      %p1365 = scmp.eq.s32.totalorder %s174, 0
      %p1366 = por %p1364, %p1365
      %s1368 = sadd.s32 %s1367, 1
      %p1371 = scmp.eq.s32.totalorder %s168, 1
      %p1372 = scmp.ne.s32.totalorder %s1367, %s1369
      %p1373 = scmp.eq.s32.totalorder %s168, 0
      %p1374 = por %p1372, %p1373
      %p1375 = scmp.ne.s32.totalorder %s1367, %s1369
      %p1376 = scmp.eq.s32.totalorder %s173, 1
      %p1377 = por %p1375, %p1376
      %p1378 = scmp.ne.s32.totalorder %s1369, %s1370
      %p1379 = scmp.eq.s32.totalorder %s173, 0
      %p1380 = por %p1378, %p1379
      %p1381 = scmp.ne.s32.totalorder %s1369, %s1370
      %p1382 = scmp.eq.s32.totalorder %s174, 1
      %p1383 = por %p1381, %p1382
      %p1385 = scmp.ne.s32.totalorder %s1370, %s1384
      %p1386 = scmp.eq.s32.totalorder %s174, 0
      %p1387 = por %p1385, %p1386
      %s1389 = sadd.s32 %s1388, 1
      %p1392 = scmp.eq.s32.totalorder %s168, 1
      %p1393 = scmp.ne.s32.totalorder %s1388, %s1390
      %p1394 = scmp.eq.s32.totalorder %s168, 0
      %p1395 = por %p1393, %p1394
      %p1396 = scmp.ne.s32.totalorder %s1388, %s1390
      %p1397 = scmp.eq.s32.totalorder %s173, 1
      %p1398 = por %p1396, %p1397
      %p1399 = scmp.ne.s32.totalorder %s1390, %s1391
      %p1400 = scmp.eq.s32.totalorder %s173, 0
      %p1401 = por %p1399, %p1400
      %p1402 = scmp.ne.s32.totalorder %s1390, %s1391
      %p1403 = scmp.eq.s32.totalorder %s174, 1
      %p1404 = por %p1402, %p1403
      %p1406 = scmp.ne.s32.totalorder %s1391, %s1405
      %p1407 = scmp.eq.s32.totalorder %s174, 0
      %p1408 = por %p1406, %p1407
      %s1410 = sadd.s32 %s1409, 1
      %p1413 = scmp.eq.s32.totalorder %s168, 1
      %p1414 = scmp.ne.s32.totalorder %s1409, %s1411
      %p1415 = scmp.eq.s32.totalorder %s168, 0
      %p1416 = por %p1414, %p1415
      %p1417 = scmp.ne.s32.totalorder %s1409, %s1411
      %p1418 = scmp.eq.s32.totalorder %s173, 1
      %p1419 = por %p1417, %p1418
      %p1420 = scmp.ne.s32.totalorder %s1411, %s1412
      %p1421 = scmp.eq.s32.totalorder %s173, 0
      %p1422 = por %p1420, %p1421
      %p1423 = scmp.ne.s32.totalorder %s1411, %s1412
      %p1424 = scmp.eq.s32.totalorder %s174, 1
      %p1425 = por %p1423, %p1424
      %p1427 = scmp.ne.s32.totalorder %s1412, %s1426
      %p1428 = scmp.eq.s32.totalorder %s174, 0
      %p1429 = por %p1427, %p1428
      %s1431 = sadd.s32 %s1430, 1
      %p1434 = scmp.eq.s32.totalorder %s168, 1
      %p1435 = scmp.ne.s32.totalorder %s1430, %s1432
      %p1436 = scmp.eq.s32.totalorder %s168, 0
      %p1437 = por %p1435, %p1436
      %p1438 = scmp.ne.s32.totalorder %s1430, %s1432
      %p1439 = scmp.eq.s32.totalorder %s173, 1
      %p1440 = por %p1438, %p1439
      %p1441 = scmp.ne.s32.totalorder %s1432, %s1433
      %p1442 = scmp.eq.s32.totalorder %s173, 0
      %p1443 = por %p1441, %p1442
      %p1444 = scmp.ne.s32.totalorder %s1432, %s1433
      %p1445 = scmp.eq.s32.totalorder %s174, 1
      %p1446 = por %p1444, %p1445
      %p1448 = scmp.ne.s32.totalorder %s1433, %s1447
      %p1449 = scmp.eq.s32.totalorder %s174, 0
      %p1450 = por %p1448, %p1449
      %s1452 = sadd.s32 %s1451, 1
      %p1455 = scmp.eq.s32.totalorder %s168, 1
      %p1456 = scmp.ne.s32.totalorder %s1451, %s1453
      %p1457 = scmp.eq.s32.totalorder %s168, 0
      %p1458 = por %p1456, %p1457
      %p1459 = scmp.ne.s32.totalorder %s1451, %s1453
      %p1460 = scmp.eq.s32.totalorder %s173, 1
      %p1461 = por %p1459, %p1460
      %p1462 = scmp.ne.s32.totalorder %s1453, %s1454
      %p1463 = scmp.eq.s32.totalorder %s173, 0
      %p1464 = por %p1462, %p1463
      %p1465 = scmp.ne.s32.totalorder %s1453, %s1454
      %p1466 = scmp.eq.s32.totalorder %s174, 1
      %p1467 = por %p1465, %p1466
      %p1469 = scmp.ne.s32.totalorder %s1454, %s1468
      %p1470 = scmp.eq.s32.totalorder %s174, 0
      %p1471 = por %p1469, %p1470
      %s1473 = sadd.s32 %s1472, 1
      %p1476 = scmp.eq.s32.totalorder %s168, 1
      %p1477 = scmp.ne.s32.totalorder %s1472, %s1474
      %p1478 = scmp.eq.s32.totalorder %s168, 0
      %p1479 = por %p1477, %p1478
      %p1480 = scmp.ne.s32.totalorder %s1472, %s1474
      %p1481 = scmp.eq.s32.totalorder %s173, 1
      %p1482 = por %p1480, %p1481
      %p1483 = scmp.ne.s32.totalorder %s1474, %s1475
      %p1484 = scmp.eq.s32.totalorder %s173, 0
      %p1485 = por %p1483, %p1484
      %p1486 = scmp.ne.s32.totalorder %s1474, %s1475
      %p1487 = scmp.eq.s32.totalorder %s174, 1
      %p1488 = por %p1486, %p1487
      %p1490 = scmp.ne.s32.totalorder %s1475, %s1489
      %p1491 = scmp.eq.s32.totalorder %s174, 0
      %p1492 = por %p1490, %p1491
      %s1494 = sadd.s32 %s1493, 1
      %p1497 = scmp.eq.s32.totalorder %s168, 1
      %p1498 = scmp.ne.s32.totalorder %s1493, %s1495
      %p1499 = scmp.eq.s32.totalorder %s168, 0
      %p1500 = por %p1498, %p1499
      %p1501 = scmp.ne.s32.totalorder %s1493, %s1495
      %p1502 = scmp.eq.s32.totalorder %s173, 1
      %p1503 = por %p1501, %p1502
      %p1504 = scmp.ne.s32.totalorder %s1495, %s1496
      %p1505 = scmp.eq.s32.totalorder %s173, 0
      %p1506 = por %p1504, %p1505
      %p1507 = scmp.ne.s32.totalorder %s1495, %s1496
      %p1508 = scmp.eq.s32.totalorder %s174, 1
      %p1509 = por %p1507, %p1508
      %p1511 = scmp.ne.s32.totalorder %s1496, %s1510
      %p1512 = scmp.eq.s32.totalorder %s174, 0
      %p1513 = por %p1511, %p1512
      %s1515 = sadd.s32 %s1514, 1
      %p1518 = scmp.eq.s32.totalorder %s168, 1
      %p1519 = scmp.ne.s32.totalorder %s1514, %s1516
      %p1520 = scmp.eq.s32.totalorder %s168, 0
      %p1521 = por %p1519, %p1520
      %p1522 = scmp.ne.s32.totalorder %s1514, %s1516
      %p1523 = scmp.eq.s32.totalorder %s173, 1
      %p1524 = por %p1522, %p1523
      %p1525 = scmp.ne.s32.totalorder %s1516, %s1517
      %p1526 = scmp.eq.s32.totalorder %s173, 0
      %p1527 = por %p1525, %p1526
      %p1528 = scmp.ne.s32.totalorder %s1516, %s1517
      %p1529 = scmp.eq.s32.totalorder %s174, 1
      %p1530 = por %p1528, %p1529
      %p1532 = scmp.ne.s32.totalorder %s1517, %s1531
      %p1533 = scmp.eq.s32.totalorder %s174, 0
      %p1534 = por %p1532, %p1533
      %s1536 = sadd.s32 %s1535, 1
      %p1539 = scmp.eq.s32.totalorder %s168, 1
      %p1540 = scmp.ne.s32.totalorder %s1535, %s1537
      %p1541 = scmp.eq.s32.totalorder %s168, 0
      %p1542 = por %p1540, %p1541
      %p1543 = scmp.ne.s32.totalorder %s1535, %s1537
      %p1544 = scmp.eq.s32.totalorder %s173, 1
      %p1545 = por %p1543, %p1544
      %p1546 = scmp.ne.s32.totalorder %s1537, %s1538
      %p1547 = scmp.eq.s32.totalorder %s173, 0
      %p1548 = por %p1546, %p1547
      %p1549 = scmp.ne.s32.totalorder %s1537, %s1538
      %p1550 = scmp.eq.s32.totalorder %s174, 1
      %p1551 = por %p1549, %p1550
      %p1553 = scmp.ne.s32.totalorder %s1538, %s1552
      %p1554 = scmp.eq.s32.totalorder %s174, 0
      %p1555 = por %p1553, %p1554
      %s1557 = sadd.s32 %s1556, 1
      %p1560 = scmp.eq.s32.totalorder %s168, 1
      %p1561 = scmp.ne.s32.totalorder %s1556, %s1558
      %p1562 = scmp.eq.s32.totalorder %s168, 0
      %p1563 = por %p1561, %p1562
      %p1564 = scmp.ne.s32.totalorder %s1556, %s1558
      %p1565 = scmp.eq.s32.totalorder %s173, 1
      %p1566 = por %p1564, %p1565
      %p1567 = scmp.ne.s32.totalorder %s1558, %s1559
      %p1568 = scmp.eq.s32.totalorder %s173, 0
      %p1569 = por %p1567, %p1568
      %p1570 = scmp.ne.s32.totalorder %s1558, %s1559
      %p1571 = scmp.eq.s32.totalorder %s174, 1
      %p1572 = por %p1570, %p1571
      %p1574 = scmp.ne.s32.totalorder %s1559, %s1573
      %p1575 = scmp.eq.s32.totalorder %s174, 0
      %p1576 = por %p1574, %p1575
      %s1578 = sadd.s32 %s1577, 1
      %p1581 = scmp.eq.s32.totalorder %s168, 1
      %p1582 = scmp.ne.s32.totalorder %s1577, %s1579
      %p1583 = scmp.eq.s32.totalorder %s168, 0
      %p1584 = por %p1582, %p1583
      %p1585 = scmp.ne.s32.totalorder %s1577, %s1579
      %p1586 = scmp.eq.s32.totalorder %s173, 1
      %p1587 = por %p1585, %p1586
      %p1588 = scmp.ne.s32.totalorder %s1579, %s1580
      %p1589 = scmp.eq.s32.totalorder %s173, 0
      %p1590 = por %p1588, %p1589
      %p1591 = scmp.ne.s32.totalorder %s1579, %s1580
      %p1592 = scmp.eq.s32.totalorder %s174, 1
      %p1593 = por %p1591, %p1592
      %p1595 = scmp.ne.s32.totalorder %s1580, %s1594
      %p1596 = scmp.eq.s32.totalorder %s174, 0
      %p1597 = por %p1595, %p1596
      %s1599 = sadd.s32 %s1598, 1
      %p1602 = scmp.eq.s32.totalorder %s168, 1
      %p1603 = scmp.ne.s32.totalorder %s1598, %s1600
      %p1604 = scmp.eq.s32.totalorder %s168, 0
      %p1605 = por %p1603, %p1604
      %p1606 = scmp.ne.s32.totalorder %s1598, %s1600
      %p1607 = scmp.eq.s32.totalorder %s173, 1
      %p1608 = por %p1606, %p1607
      %p1609 = scmp.ne.s32.totalorder %s1600, %s1601
      %p1610 = scmp.eq.s32.totalorder %s173, 0
      %p1611 = por %p1609, %p1610
      %p1612 = scmp.ne.s32.totalorder %s1600, %s1601
      %p1613 = scmp.eq.s32.totalorder %s174, 1
      %p1614 = por %p1612, %p1613
      %p1616 = scmp.ne.s32.totalorder %s1601, %s1615
      %p1617 = scmp.eq.s32.totalorder %s174, 0
      %p1618 = por %p1616, %p1617
      %s1620 = sadd.s32 %s1619, 1
      %p1623 = scmp.eq.s32.totalorder %s168, 1
      %p1624 = scmp.ne.s32.totalorder %s1619, %s1621
      %p1625 = scmp.eq.s32.totalorder %s168, 0
      %p1626 = por %p1624, %p1625
      %p1627 = scmp.ne.s32.totalorder %s1619, %s1621
      %p1628 = scmp.eq.s32.totalorder %s173, 1
      %p1629 = por %p1627, %p1628
      %p1630 = scmp.ne.s32.totalorder %s1621, %s1622
      %p1631 = scmp.eq.s32.totalorder %s173, 0
      %p1632 = por %p1630, %p1631
      %p1633 = scmp.ne.s32.totalorder %s1621, %s1622
      %p1634 = scmp.eq.s32.totalorder %s174, 1
      %p1635 = por %p1633, %p1634
      %p1637 = scmp.ne.s32.totalorder %s1622, %s1636
      %p1638 = scmp.eq.s32.totalorder %s174, 0
      %p1639 = por %p1637, %p1638
      %s1641 = sadd.s32 %s1640, 1
      %p1644 = scmp.eq.s32.totalorder %s168, 1
      %p1645 = scmp.ne.s32.totalorder %s1640, %s1642
      %p1646 = scmp.eq.s32.totalorder %s168, 0
      %p1647 = por %p1645, %p1646
      %p1648 = scmp.ne.s32.totalorder %s1640, %s1642
      %p1649 = scmp.eq.s32.totalorder %s173, 1
      %p1650 = por %p1648, %p1649
      %p1651 = scmp.ne.s32.totalorder %s1642, %s1643
      %p1652 = scmp.eq.s32.totalorder %s173, 0
      %p1653 = por %p1651, %p1652
      %p1654 = scmp.ne.s32.totalorder %s1642, %s1643
      %p1655 = scmp.eq.s32.totalorder %s174, 1
      %p1656 = por %p1654, %p1655
      %p1658 = scmp.ne.s32.totalorder %s1643, %s1657
      %p1659 = scmp.eq.s32.totalorder %s174, 0
      %p1660 = por %p1658, %p1659
      %s1661 = ssub.s32 %s168, %s175
      %p1662 = scmp.eq.s32.totalorder %s1661, 0
      %s1664 = sadd.s32 %s1663, 1
      %s1665 = scalar_select %p1662, %s1663, %s1664
      %p1668 = pneg %p1662
      %p1669 = scmp.eq.s32.totalorder %s168, 1
      %p1670 = por %p1668, %p1669
      %p1671 = scmp.ne.s32.totalorder %s1663, %s1666
      %p1672 = scmp.eq.s32.totalorder %s168, 0
      %p1673 = por %p1671, %p1672
      %p1674 = scmp.ne.s32.totalorder %s1663, %s1666
      %p1675 = scmp.eq.s32.totalorder %s173, 1
      %p1676 = por %p1674, %p1675
      %p1677 = scmp.ne.s32.totalorder %s1666, %s1667
      %p1678 = scmp.eq.s32.totalorder %s173, 0
      %p1679 = por %p1677, %p1678
      %p1680 = scmp.ne.s32.totalorder %s1666, %s1667
      %p1681 = scmp.eq.s32.totalorder %s174, 1
      %p1682 = por %p1680, %p1681
      %p1684 = scmp.ne.s32.totalorder %s1667, %s1683
      %p1685 = scmp.eq.s32.totalorder %s174, 0
      %p1686 = por %p1684, %p1685
      %s1687 = ssub.s32 %s168, %s175
      %p1688 = scmp.eq.s32.totalorder %s1687, 0
      %s1690 = sadd.s32 %s1689, 1
      %s1691 = scalar_select %p1688, %s1689, %s1690
      %p1694 = pneg %p1688
      %p1695 = scmp.eq.s32.totalorder %s168, 1
      %p1696 = por %p1694, %p1695
      %p1697 = scmp.ne.s32.totalorder %s1689, %s1692
      %p1698 = scmp.eq.s32.totalorder %s168, 0
      %p1699 = por %p1697, %p1698
      %p1700 = scmp.ne.s32.totalorder %s1689, %s1692
      %p1701 = scmp.eq.s32.totalorder %s173, 1
      %p1702 = por %p1700, %p1701
      %p1703 = scmp.ne.s32.totalorder %s1692, %s1693
      %p1704 = scmp.eq.s32.totalorder %s173, 0
      %p1705 = por %p1703, %p1704
      %p1706 = scmp.ne.s32.totalorder %s1692, %s1693
      %p1707 = scmp.eq.s32.totalorder %s174, 1
      %p1708 = por %p1706, %p1707
      %p1710 = scmp.ne.s32.totalorder %s1693, %s1709
      %p1711 = scmp.eq.s32.totalorder %s174, 0
      %p1712 = por %p1710, %p1711
      %s1713 = ssub.s32 %s168, %s175
      %p1714 = scmp.eq.s32.totalorder %s1713, 0
      %s1716 = sadd.s32 %s1715, 1
      %s1717 = scalar_select %p1714, %s1715, %s1716
      %p1720 = pneg %p1714
      %p1721 = scmp.eq.s32.totalorder %s168, 1
      %p1722 = por %p1720, %p1721
      %p1723 = scmp.ne.s32.totalorder %s1715, %s1718
      %p1724 = scmp.eq.s32.totalorder %s168, 0
      %p1725 = por %p1723, %p1724
      %p1726 = scmp.ne.s32.totalorder %s1715, %s1718
      %p1727 = scmp.eq.s32.totalorder %s173, 1
      %p1728 = por %p1726, %p1727
      %p1729 = scmp.ne.s32.totalorder %s1718, %s1719
      %p1730 = scmp.eq.s32.totalorder %s173, 0
      %p1731 = por %p1729, %p1730
      %p1732 = scmp.ne.s32.totalorder %s1718, %s1719
      %p1733 = scmp.eq.s32.totalorder %s174, 1
      %p1734 = por %p1732, %p1733
      %p1736 = scmp.ne.s32.totalorder %s1719, %s1735
      %p1737 = scmp.eq.s32.totalorder %s174, 0
      %p1738 = por %p1736, %p1737
      %p1739 = scmp.le.s32.totalorder 1, %s168
      %p1740 = scmp.lt.s32.totalorder %s168, 3
      %p1741 = pnand %p1739, %p1740
      %p1742 = pneg %p1741
      // Predicated region
      $region9: #{decoder_forward.1} parent=5 // pred_check
        _
      $region10: #{decoder_forward.1} parent=5 // pred_check_branch
        %1744 = sbr.rel (%p1741) target = $region12
      $region11: #{decoder_forward.1} parent=5 // pred_region
        %s1745 = ssub.s32 %s168, 1
        // Predicated region
        $region13: #{decoder_forward.1} parent=11 // pred_check
          %p1746 = pneg %p267
        $region14: #{decoder_forward.1} parent=11 // pred_check_branch
          %1748 = sbr.rel (%p1746) target = $region16
        $region15: #{decoder_forward.1} parent=11 // pred_region
          _
        $region16: #{decoder_forward.1} parent=11 // pred_fallthru
          _
        // Predicated region
        $region17: #{decoder_forward.1} parent=11 // pred_check
          %p1749 = pneg %p288
        $region18: #{decoder_forward.1} parent=11 // pred_check_branch
          %1751 = sbr.rel (%p1749) target = $region20
        $region19: #{decoder_forward.1} parent=11 // pred_region
          _
        $region20: #{decoder_forward.1} parent=11 // pred_fallthru
          _
        // Predicated region
        $region21: #{decoder_forward.1} parent=11 // pred_check
          %p1752 = pneg %p309
        $region22: #{decoder_forward.1} parent=11 // pred_check_branch
          %1754 = sbr.rel (%p1752) target = $region24
        $region23: #{decoder_forward.1} parent=11 // pred_region
          _
        $region24: #{decoder_forward.1} parent=11 // pred_fallthru
          _
        // Predicated region
        $region25: #{decoder_forward.1} parent=11 // pred_check
          %p1755 = pneg %p330
        $region26: #{decoder_forward.1} parent=11 // pred_check_branch
          %1757 = sbr.rel (%p1755) target = $region28
        $region27: #{decoder_forward.1} parent=11 // pred_region
          _
        $region28: #{decoder_forward.1} parent=11 // pred_fallthru
          _
        // Predicated region
        $region29: #{decoder_forward.1} parent=11 // pred_check
          %p1758 = pneg %p351
        $region30: #{decoder_forward.1} parent=11 // pred_check_branch
          %1760 = sbr.rel (%p1758) target = $region32
        $region31: #{decoder_forward.1} parent=11 // pred_region
          _
        $region32: #{decoder_forward.1} parent=11 // pred_fallthru
          _
        // Predicated region
        $region33: #{decoder_forward.1} parent=11 // pred_check
          %p1761 = pneg %p372
        $region34: #{decoder_forward.1} parent=11 // pred_check_branch
          %1763 = sbr.rel (%p1761) target = $region36
        $region35: #{decoder_forward.1} parent=11 // pred_region
          _
        $region36: #{decoder_forward.1} parent=11 // pred_fallthru
          _
        // Predicated region
        $region37: #{decoder_forward.1} parent=11 // pred_check
          %p1764 = pneg %p393
        $region38: #{decoder_forward.1} parent=11 // pred_check_branch
          %1766 = sbr.rel (%p1764) target = $region40
        $region39: #{decoder_forward.1} parent=11 // pred_region
          _
        $region40: #{decoder_forward.1} parent=11 // pred_fallthru
          _
        // Predicated region
        $region41: #{decoder_forward.1} parent=11 // pred_check
          %p1767 = pneg %p414
        $region42: #{decoder_forward.1} parent=11 // pred_check_branch
          %1769 = sbr.rel (%p1767) target = $region44
        $region43: #{decoder_forward.1} parent=11 // pred_region
          _
        $region44: #{decoder_forward.1} parent=11 // pred_fallthru
          _
        // Predicated region
        $region45: #{decoder_forward.1} parent=11 // pred_check
          %p1770 = pneg %p435
        $region46: #{decoder_forward.1} parent=11 // pred_check_branch
          %1772 = sbr.rel (%p1770) target = $region48
        $region47: #{decoder_forward.1} parent=11 // pred_region
          _
        $region48: #{decoder_forward.1} parent=11 // pred_fallthru
          _
        // Predicated region
        $region49: #{decoder_forward.1} parent=11 // pred_check
          %p1773 = pneg %p456
        $region50: #{decoder_forward.1} parent=11 // pred_check_branch
          %1775 = sbr.rel (%p1773) target = $region52
        $region51: #{decoder_forward.1} parent=11 // pred_region
          _
        $region52: #{decoder_forward.1} parent=11 // pred_fallthru
          _
        // Predicated region
        $region53: #{decoder_forward.1} parent=11 // pred_check
          %p1776 = pneg %p477
        $region54: #{decoder_forward.1} parent=11 // pred_check_branch
          %1778 = sbr.rel (%p1776) target = $region56
        $region55: #{decoder_forward.1} parent=11 // pred_region
          _
        $region56: #{decoder_forward.1} parent=11 // pred_fallthru
          _
        // Predicated region
        $region57: #{decoder_forward.1} parent=11 // pred_check
          %p1779 = pneg %p498
        $region58: #{decoder_forward.1} parent=11 // pred_check_branch
          %1781 = sbr.rel (%p1779) target = $region60
        $region59: #{decoder_forward.1} parent=11 // pred_region
          _
        $region60: #{decoder_forward.1} parent=11 // pred_fallthru
          _
        // Predicated region
        $region61: #{decoder_forward.1} parent=11 // pred_check
          %p1782 = pneg %p519
        $region62: #{decoder_forward.1} parent=11 // pred_check_branch
          %1784 = sbr.rel (%p1782) target = $region64
        $region63: #{decoder_forward.1} parent=11 // pred_region
          _
        $region64: #{decoder_forward.1} parent=11 // pred_fallthru
          _
        // Predicated region
        $region65: #{decoder_forward.1} parent=11 // pred_check
          %p1785 = pneg %p540
        $region66: #{decoder_forward.1} parent=11 // pred_check_branch
          %1787 = sbr.rel (%p1785) target = $region68
        $region67: #{decoder_forward.1} parent=11 // pred_region
          _
        $region68: #{decoder_forward.1} parent=11 // pred_fallthru
          _
        // Predicated region
        $region69: #{decoder_forward.1} parent=11 // pred_check
          %p1788 = pneg %p561
        $region70: #{decoder_forward.1} parent=11 // pred_check_branch
          %1790 = sbr.rel (%p1788) target = $region72
        $region71: #{decoder_forward.1} parent=11 // pred_region
          _
        $region72: #{decoder_forward.1} parent=11 // pred_fallthru
          _
        // Predicated region
        $region73: #{decoder_forward.1} parent=11 // pred_check
          %p1791 = pneg %p582
        $region74: #{decoder_forward.1} parent=11 // pred_check_branch
          %1793 = sbr.rel (%p1791) target = $region76
        $region75: #{decoder_forward.1} parent=11 // pred_region
          _
        $region76: #{decoder_forward.1} parent=11 // pred_fallthru
          _
        // Predicated region
        $region77: #{decoder_forward.1} parent=11 // pred_check
          %p1794 = pneg %p603
        $region78: #{decoder_forward.1} parent=11 // pred_check_branch
          %1796 = sbr.rel (%p1794) target = $region80
        $region79: #{decoder_forward.1} parent=11 // pred_region
          _
        $region80: #{decoder_forward.1} parent=11 // pred_fallthru
          _
        // Predicated region
        $region81: #{decoder_forward.1} parent=11 // pred_check
          %p1797 = pneg %p624
        $region82: #{decoder_forward.1} parent=11 // pred_check_branch
          %1799 = sbr.rel (%p1797) target = $region84
        $region83: #{decoder_forward.1} parent=11 // pred_region
          _
        $region84: #{decoder_forward.1} parent=11 // pred_fallthru
          _
        // Predicated region
        $region85: #{decoder_forward.1} parent=11 // pred_check
          %p1800 = pneg %p645
        $region86: #{decoder_forward.1} parent=11 // pred_check_branch
          %1802 = sbr.rel (%p1800) target = $region88
        $region87: #{decoder_forward.1} parent=11 // pred_region
          _
        $region88: #{decoder_forward.1} parent=11 // pred_fallthru
          _
        // Predicated region
        $region89: #{decoder_forward.1} parent=11 // pred_check
          %p1803 = pneg %p666
        $region90: #{decoder_forward.1} parent=11 // pred_check_branch
          %1805 = sbr.rel (%p1803) target = $region92
        $region91: #{decoder_forward.1} parent=11 // pred_region
          _
        $region92: #{decoder_forward.1} parent=11 // pred_fallthru
          _
        // Predicated region
        $region93: #{decoder_forward.1} parent=11 // pred_check
          %p1806 = pneg %p687
        $region94: #{decoder_forward.1} parent=11 // pred_check_branch
          %1808 = sbr.rel (%p1806) target = $region96
        $region95: #{decoder_forward.1} parent=11 // pred_region
          _
        $region96: #{decoder_forward.1} parent=11 // pred_fallthru
          _
        // Predicated region
        $region97: #{decoder_forward.1} parent=11 // pred_check
          %p1809 = pneg %p708
        $region98: #{decoder_forward.1} parent=11 // pred_check_branch
          %1811 = sbr.rel (%p1809) target = $region100
        $region99: #{decoder_forward.1} parent=11 // pred_region
          _
        $region100: #{decoder_forward.1} parent=11 // pred_fallthru
          _
        // Predicated region
        $region101: #{decoder_forward.1} parent=11 // pred_check
          %p1812 = pneg %p729
        $region102: #{decoder_forward.1} parent=11 // pred_check_branch
          %1814 = sbr.rel (%p1812) target = $region104
        $region103: #{decoder_forward.1} parent=11 // pred_region
          _
        $region104: #{decoder_forward.1} parent=11 // pred_fallthru
          _
        // Predicated region
        $region105: #{decoder_forward.1} parent=11 // pred_check
          %p1815 = pneg %p750
        $region106: #{decoder_forward.1} parent=11 // pred_check_branch
          %1817 = sbr.rel (%p1815) target = $region108
        $region107: #{decoder_forward.1} parent=11 // pred_region
          _
        $region108: #{decoder_forward.1} parent=11 // pred_fallthru
          _
        // Predicated region
        $region109: #{decoder_forward.1} parent=11 // pred_check
          %p1818 = pneg %p771
        $region110: #{decoder_forward.1} parent=11 // pred_check_branch
          %1820 = sbr.rel (%p1818) target = $region112
        $region111: #{decoder_forward.1} parent=11 // pred_region
          _
        $region112: #{decoder_forward.1} parent=11 // pred_fallthru
          _
        // Predicated region
        $region113: #{decoder_forward.1} parent=11 // pred_check
          %p1821 = pneg %p792
        $region114: #{decoder_forward.1} parent=11 // pred_check_branch
          %1823 = sbr.rel (%p1821) target = $region116
        $region115: #{decoder_forward.1} parent=11 // pred_region
          _
        $region116: #{decoder_forward.1} parent=11 // pred_fallthru
          _
        // Predicated region
        $region117: #{decoder_forward.1} parent=11 // pred_check
          %p1824 = pneg %p813
        $region118: #{decoder_forward.1} parent=11 // pred_check_branch
          %1826 = sbr.rel (%p1824) target = $region120
        $region119: #{decoder_forward.1} parent=11 // pred_region
          _
        $region120: #{decoder_forward.1} parent=11 // pred_fallthru
          _
        // Predicated region
        $region121: #{decoder_forward.1} parent=11 // pred_check
          %p1827 = pneg %p834
        $region122: #{decoder_forward.1} parent=11 // pred_check_branch
          %1829 = sbr.rel (%p1827) target = $region124
        $region123: #{decoder_forward.1} parent=11 // pred_region
          _
        $region124: #{decoder_forward.1} parent=11 // pred_fallthru
          _
        // Predicated region
        $region125: #{decoder_forward.1} parent=11 // pred_check
          %p1830 = pneg %p855
        $region126: #{decoder_forward.1} parent=11 // pred_check_branch
          %1832 = sbr.rel (%p1830) target = $region128
        $region127: #{decoder_forward.1} parent=11 // pred_region
          _
        $region128: #{decoder_forward.1} parent=11 // pred_fallthru
          _
        // Predicated region
        $region129: #{decoder_forward.1} parent=11 // pred_check
          %p1833 = pneg %p876
        $region130: #{decoder_forward.1} parent=11 // pred_check_branch
          %1835 = sbr.rel (%p1833) target = $region132
        $region131: #{decoder_forward.1} parent=11 // pred_region
          _
        $region132: #{decoder_forward.1} parent=11 // pred_fallthru
          _
        // Predicated region
        $region133: #{decoder_forward.1} parent=11 // pred_check
          %p1836 = pneg %p897
        $region134: #{decoder_forward.1} parent=11 // pred_check_branch
          %1838 = sbr.rel (%p1836) target = $region136
        $region135: #{decoder_forward.1} parent=11 // pred_region
          _
        $region136: #{decoder_forward.1} parent=11 // pred_fallthru
          _
        // Predicated region
        $region137: #{decoder_forward.1} parent=11 // pred_check
          %p1839 = pneg %p918
        $region138: #{decoder_forward.1} parent=11 // pred_check_branch
          %1841 = sbr.rel (%p1839) target = $region140
        $region139: #{decoder_forward.1} parent=11 // pred_region
          _
        $region140: #{decoder_forward.1} parent=11 // pred_fallthru
          _
        // Predicated region
        $region141: #{decoder_forward.1} parent=11 // pred_check
          %p1842 = pneg %p939
        $region142: #{decoder_forward.1} parent=11 // pred_check_branch
          %1844 = sbr.rel (%p1842) target = $region144
        $region143: #{decoder_forward.1} parent=11 // pred_region
          _
        $region144: #{decoder_forward.1} parent=11 // pred_fallthru
          _
        // Predicated region
        $region145: #{decoder_forward.1} parent=11 // pred_check
          %p1845 = pneg %p960
        $region146: #{decoder_forward.1} parent=11 // pred_check_branch
          %1847 = sbr.rel (%p1845) target = $region148
        $region147: #{decoder_forward.1} parent=11 // pred_region
          %1849 = vsyncadd [#allocation3], 0
          %s1851 = sshll.u32 %s73, 4
          %s1852 = int_to_ptr.hbm [resolvable:$true] %s1851
          %s1853 = sshll.u32 [#allocation2], 4
          %s1854 = int_to_ptr.vmem [resolvable:$true] %s1853
          %1856 = dma.hbm_to_vmem [thread:$0]  %s1852, 16, %s1854, [#allocation3]
        $region148: #{decoder_forward.1} parent=11 // pred_fallthru
          _
        // Predicated region
        $region149: #{decoder_forward.1} parent=11 // pred_check
          %p1857 = pneg %p981
        $region150: #{decoder_forward.1} parent=11 // pred_check_branch
          %1859 = sbr.rel (%p1857) target = $region152
        $region151: #{decoder_forward.1} parent=11 // pred_region
          _
        $region152: #{decoder_forward.1} parent=11 // pred_fallthru
          _
        // Predicated region
        $region153: #{decoder_forward.1} parent=11 // pred_check
          %p1860 = pneg %p1002
        $region154: #{decoder_forward.1} parent=11 // pred_check_branch
          %1862 = sbr.rel (%p1860) target = $region156
        $region155: #{decoder_forward.1} parent=11 // pred_region
          %1864 = vsyncadd [#allocation6], 0
          %s1866 = sshll.u32 %s77, 4
          %s1867 = int_to_ptr.hbm [resolvable:$true] %s1866
          %s1868 = sshll.u32 [#allocation5], 4
          %s1869 = int_to_ptr.vmem [resolvable:$true] %s1868
          %1871 = dma.hbm_to_vmem [thread:$0]  %s1867, 16, %s1869, [#allocation6]
        $region156: #{decoder_forward.1} parent=11 // pred_fallthru
          _
        // Predicated region
        $region157: #{decoder_forward.1} parent=11 // pred_check
          %p1872 = pneg %p1023
        $region158: #{decoder_forward.1} parent=11 // pred_check_branch
          %1874 = sbr.rel (%p1872) target = $region160
        $region159: #{decoder_forward.1} parent=11 // pred_region
          _
        $region160: #{decoder_forward.1} parent=11 // pred_fallthru
          _
        // Predicated region
        $region161: #{decoder_forward.1} parent=11 // pred_check
          %p1875 = pneg %p1044
        $region162: #{decoder_forward.1} parent=11 // pred_check_branch
          %1877 = sbr.rel (%p1875) target = $region164
        $region163: #{decoder_forward.1} parent=11 // pred_region
          %1879 = vsyncadd [#allocation6], 0
          %s1881 = sshll.u32 %s81, 4
          %s1882 = int_to_ptr.hbm [resolvable:$true] %s1881
          %s1883 = sshll.u32 [#allocation7], 4
          %s1884 = int_to_ptr.vmem [resolvable:$true] %s1883
          %1886 = dma.hbm_to_vmem [thread:$0]  %s1882, 16, %s1884, [#allocation6]
        $region164: #{decoder_forward.1} parent=11 // pred_fallthru
          _
        // Predicated region
        $region165: #{decoder_forward.1} parent=11 // pred_check
          %p1887 = pneg %p1065
        $region166: #{decoder_forward.1} parent=11 // pred_check_branch
          %1889 = sbr.rel (%p1887) target = $region168
        $region167: #{decoder_forward.1} parent=11 // pred_region
          %1891 = vsyncadd [#allocation9], 0
          %s1893 = sshll.u32 %s83, 4
          %s1894 = int_to_ptr.hbm [resolvable:$true] %s1893
          %s1895 = sshll.u32 [#allocation8], 4
          %s1896 = int_to_ptr.vmem [resolvable:$true] %s1895
          %1898 = dma.hbm_to_vmem [thread:$0]  %s1894, 16, %s1896, [#allocation9]
        $region168: #{decoder_forward.1} parent=11 // pred_fallthru
          _
        // Predicated region
        $region169: #{decoder_forward.1} parent=11 // pred_check
          %p1899 = pneg %p1086
        $region170: #{decoder_forward.1} parent=11 // pred_check_branch
          %1901 = sbr.rel (%p1899) target = $region172
        $region171: #{decoder_forward.1} parent=11 // pred_region
          %1903 = vsyncadd [#allocation9], 0
          %s1905 = sshll.u32 %s85, 4
          %s1906 = int_to_ptr.hbm [resolvable:$true] %s1905
          %s1907 = sshll.u32 [#allocation10], 4
          %s1908 = int_to_ptr.vmem [resolvable:$true] %s1907
          %1910 = dma.hbm_to_vmem [thread:$0]  %s1906, 16, %s1908, [#allocation9]
        $region172: #{decoder_forward.1} parent=11 // pred_fallthru
          _
        // Predicated region
        $region173: #{decoder_forward.1} parent=11 // pred_check
          %p1911 = pneg %p1107
        $region174: #{decoder_forward.1} parent=11 // pred_check_branch
          %1913 = sbr.rel (%p1911) target = $region176
        $region175: #{decoder_forward.1} parent=11 // pred_region
          %1915 = vsyncadd [#allocation12], 0
          %s1917 = sshll.u32 %s87, 4
          %s1918 = int_to_ptr.hbm [resolvable:$true] %s1917
          %s1919 = sshll.u32 [#allocation11], 4
          %s1920 = int_to_ptr.vmem [resolvable:$true] %s1919
          %1922 = dma.hbm_to_vmem [thread:$0]  %s1918, 16, %s1920, [#allocation12]
        $region176: #{decoder_forward.1} parent=11 // pred_fallthru
          _
        // Predicated region
        $region177: #{decoder_forward.1} parent=11 // pred_check
          %p1923 = pneg %p1128
        $region178: #{decoder_forward.1} parent=11 // pred_check_branch
          %1925 = sbr.rel (%p1923) target = $region180
        $region179: #{decoder_forward.1} parent=11 // pred_region
          _
        $region180: #{decoder_forward.1} parent=11 // pred_fallthru
          _
        // Predicated region
        $region181: #{decoder_forward.1} parent=11 // pred_check
          %p1926 = pneg %p1149
        $region182: #{decoder_forward.1} parent=11 // pred_check_branch
          %1928 = sbr.rel (%p1926) target = $region184
        $region183: #{decoder_forward.1} parent=11 // pred_region
          _
        $region184: #{decoder_forward.1} parent=11 // pred_fallthru
          _
        // Predicated region
        $region185: #{decoder_forward.1} parent=11 // pred_check
          %p1929 = pneg %p1170
        $region186: #{decoder_forward.1} parent=11 // pred_check_branch
          %1931 = sbr.rel (%p1929) target = $region188
        $region187: #{decoder_forward.1} parent=11 // pred_region
          %1933 = vsyncadd [#allocation12], 0
          %s1935 = sshll.u32 %s93, 4
          %s1936 = int_to_ptr.hbm [resolvable:$true] %s1935
          %s1937 = sshll.u32 [#allocation13], 4
          %s1938 = int_to_ptr.vmem [resolvable:$true] %s1937
          %1940 = dma.hbm_to_vmem [thread:$0]  %s1936, 16, %s1938, [#allocation12]
        $region188: #{decoder_forward.1} parent=11 // pred_fallthru
          _
        // Predicated region
        $region189: #{decoder_forward.1} parent=11 // pred_check
          %p1941 = pneg %p1191
        $region190: #{decoder_forward.1} parent=11 // pred_check_branch
          %1943 = sbr.rel (%p1941) target = $region192
        $region191: #{decoder_forward.1} parent=11 // pred_region
          %1945 = vsyncadd [#allocation15], 0
          %s1947 = sshll.u32 %s95, 4
          %s1948 = int_to_ptr.hbm [resolvable:$true] %s1947
          %s1949 = sshll.u32 [#allocation14], 4
          %s1950 = int_to_ptr.vmem [resolvable:$true] %s1949
          %1952 = dma.hbm_to_vmem [thread:$0]  %s1948, 16, %s1950, [#allocation15]
        $region192: #{decoder_forward.1} parent=11 // pred_fallthru
          _
        // Predicated region
        $region193: #{decoder_forward.1} parent=11 // pred_check
          %p1953 = pneg %p1212
        $region194: #{decoder_forward.1} parent=11 // pred_check_branch
          %1955 = sbr.rel (%p1953) target = $region196
        $region195: #{decoder_forward.1} parent=11 // pred_region
          %1957 = vsyncadd [#allocation15], 0
          %s1959 = sshll.u32 %s97, 4
          %s1960 = int_to_ptr.hbm [resolvable:$true] %s1959
          %s1961 = sshll.u32 [#allocation16], 4
          %s1962 = int_to_ptr.vmem [resolvable:$true] %s1961
          %1964 = dma.hbm_to_vmem [thread:$0]  %s1960, 16, %s1962, [#allocation15]
        $region196: #{decoder_forward.1} parent=11 // pred_fallthru
          _
        // Predicated region
        $region197: #{decoder_forward.1} parent=11 // pred_check
          %p1965 = pneg %p1233
        $region198: #{decoder_forward.1} parent=11 // pred_check_branch
          %1967 = sbr.rel (%p1965) target = $region200
        $region199: #{decoder_forward.1} parent=11 // pred_region
          %1969 = vsyncadd [#allocation18], 0
          %s1971 = sshll.u32 %s99, 4
          %s1972 = int_to_ptr.hbm [resolvable:$true] %s1971
          %s1973 = sshll.u32 [#allocation17], 4
          %s1974 = int_to_ptr.vmem [resolvable:$true] %s1973
          %1976 = dma.hbm_to_vmem [thread:$0]  %s1972, 16, %s1974, [#allocation18]
        $region200: #{decoder_forward.1} parent=11 // pred_fallthru
          _
        // Predicated region
        $region201: #{decoder_forward.1} parent=11 // pred_check
          %p1977 = pneg %p1254
        $region202: #{decoder_forward.1} parent=11 // pred_check_branch
          %1979 = sbr.rel (%p1977) target = $region204
        $region203: #{decoder_forward.1} parent=11 // pred_region
          _
        $region204: #{decoder_forward.1} parent=11 // pred_fallthru
          _
        // Predicated region
        $region205: #{decoder_forward.1} parent=11 // pred_check
          %p1980 = pneg %p1275
        $region206: #{decoder_forward.1} parent=11 // pred_check_branch
          %1982 = sbr.rel (%p1980) target = $region208
        $region207: #{decoder_forward.1} parent=11 // pred_region
          _
        $region208: #{decoder_forward.1} parent=11 // pred_fallthru
          _
        // Predicated region
        $region209: #{decoder_forward.1} parent=11 // pred_check
          %p1983 = pneg %p1296
        $region210: #{decoder_forward.1} parent=11 // pred_check_branch
          %1985 = sbr.rel (%p1983) target = $region212
        $region211: #{decoder_forward.1} parent=11 // pred_region
          %1987 = vsyncadd [#allocation18], 0
          %s1989 = sshll.u32 %s105, 4
          %s1990 = int_to_ptr.hbm [resolvable:$true] %s1989
          %s1991 = sshll.u32 [#allocation19], 4
          %s1992 = int_to_ptr.vmem [resolvable:$true] %s1991
          %1994 = dma.hbm_to_vmem [thread:$0]  %s1990, 16, %s1992, [#allocation18]
        $region212: #{decoder_forward.1} parent=11 // pred_fallthru
          _
        // Predicated region
        $region213: #{decoder_forward.1} parent=11 // pred_check
          %p1995 = pneg %p1317
        $region214: #{decoder_forward.1} parent=11 // pred_check_branch
          %1997 = sbr.rel (%p1995) target = $region216
        $region215: #{decoder_forward.1} parent=11 // pred_region
          _
        $region216: #{decoder_forward.1} parent=11 // pred_fallthru
          _
        // Predicated region
        $region217: #{decoder_forward.1} parent=11 // pred_check
          %p1998 = pneg %p1338
        $region218: #{decoder_forward.1} parent=11 // pred_check_branch
          %2000 = sbr.rel (%p1998) target = $region220
        $region219: #{decoder_forward.1} parent=11 // pred_region
          %2002 = vsyncadd [#allocation21], 0
          %s2004 = sshll.u32 %s109, 4
          %s2005 = int_to_ptr.hbm [resolvable:$true] %s2004
          %s2006 = sshll.u32 [#allocation20], 4
          %s2007 = int_to_ptr.vmem [resolvable:$true] %s2006
          %2009 = dma.hbm_to_vmem [thread:$0]  %s2005, 16, %s2007, [#allocation21]
        $region220: #{decoder_forward.1} parent=11 // pred_fallthru
          _
        // Predicated region
        $region221: #{decoder_forward.1} parent=11 // pred_check
          %p2010 = pneg %p1359
        $region222: #{decoder_forward.1} parent=11 // pred_check_branch
          %2012 = sbr.rel (%p2010) target = $region224
        $region223: #{decoder_forward.1} parent=11 // pred_region
          _
        $region224: #{decoder_forward.1} parent=11 // pred_fallthru
          _
        // Predicated region
        $region225: #{decoder_forward.1} parent=11 // pred_check
          %p2013 = pneg %p1380
        $region226: #{decoder_forward.1} parent=11 // pred_check_branch
          %2015 = sbr.rel (%p2013) target = $region228
        $region227: #{decoder_forward.1} parent=11 // pred_region
          %2017 = vsyncadd [#allocation21], 0
          %s2019 = sshll.u32 %s113, 4
          %s2020 = int_to_ptr.hbm [resolvable:$true] %s2019
          %s2021 = sshll.u32 [#allocation22], 4
          %s2022 = int_to_ptr.vmem [resolvable:$true] %s2021
          %2024 = dma.hbm_to_vmem [thread:$0]  %s2020, 16, %s2022, [#allocation21]
        $region228: #{decoder_forward.1} parent=11 // pred_fallthru
          _
        // Predicated region
        $region229: #{decoder_forward.1} parent=11 // pred_check
          %p2025 = pneg %p1401
        $region230: #{decoder_forward.1} parent=11 // pred_check_branch
          %2027 = sbr.rel (%p2025) target = $region232
        $region231: #{decoder_forward.1} parent=11 // pred_region
          _
        $region232: #{decoder_forward.1} parent=11 // pred_fallthru
          _
        // Predicated region
        $region233: #{decoder_forward.1} parent=11 // pred_check
          %p2028 = pneg %p1422
        $region234: #{decoder_forward.1} parent=11 // pred_check_branch
          %2030 = sbr.rel (%p2028) target = $region236
        $region235: #{decoder_forward.1} parent=11 // pred_region
          %2032 = vsyncadd [#allocation24], 0
          %s2034 = sshll.u32 %s117, 4
          %s2035 = int_to_ptr.hbm [resolvable:$true] %s2034
          %s2036 = sshll.u32 [#allocation23], 4
          %s2037 = int_to_ptr.vmem [resolvable:$true] %s2036
          %2039 = dma.hbm_to_vmem [thread:$0]  %s2035, 16, %s2037, [#allocation24]
        $region236: #{decoder_forward.1} parent=11 // pred_fallthru
          _
        // Predicated region
        $region237: #{decoder_forward.1} parent=11 // pred_check
          %p2040 = pneg %p1443
        $region238: #{decoder_forward.1} parent=11 // pred_check_branch
          %2042 = sbr.rel (%p2040) target = $region240
        $region239: #{decoder_forward.1} parent=11 // pred_region
          _
        $region240: #{decoder_forward.1} parent=11 // pred_fallthru
          _
        // Predicated region
        $region241: #{decoder_forward.1} parent=11 // pred_check
          %p2043 = pneg %p1464
        $region242: #{decoder_forward.1} parent=11 // pred_check_branch
          %2045 = sbr.rel (%p2043) target = $region244
        $region243: #{decoder_forward.1} parent=11 // pred_region
          %2047 = vsyncadd [#allocation24], 0
          %s2049 = sshll.u32 %s121, 4
          %s2050 = int_to_ptr.hbm [resolvable:$true] %s2049
          %s2051 = sshll.u32 [#allocation25], 4
          %s2052 = int_to_ptr.vmem [resolvable:$true] %s2051
          %2054 = dma.hbm_to_vmem [thread:$0]  %s2050, 16, %s2052, [#allocation24]
        $region244: #{decoder_forward.1} parent=11 // pred_fallthru
          _
        // Predicated region
        $region245: #{decoder_forward.1} parent=11 // pred_check
          %p2055 = pneg %p1485
        $region246: #{decoder_forward.1} parent=11 // pred_check_branch
          %2057 = sbr.rel (%p2055) target = $region248
        $region247: #{decoder_forward.1} parent=11 // pred_region
          _
        $region248: #{decoder_forward.1} parent=11 // pred_fallthru
          _
        // Predicated region
        $region249: #{decoder_forward.1} parent=11 // pred_check
          %p2058 = pneg %p1506
        $region250: #{decoder_forward.1} parent=11 // pred_check_branch
          %2060 = sbr.rel (%p2058) target = $region252
        $region251: #{decoder_forward.1} parent=11 // pred_region
          %2062 = vsyncadd [#allocation27], 0
          %s2064 = sshll.u32 %s125, 4
          %s2065 = int_to_ptr.hbm [resolvable:$true] %s2064
          %s2066 = sshll.u32 [#allocation26], 4
          %s2067 = int_to_ptr.vmem [resolvable:$true] %s2066
          %2069 = dma.hbm_to_vmem [thread:$0]  %s2065, 16, %s2067, [#allocation27]
        $region252: #{decoder_forward.1} parent=11 // pred_fallthru
          _
        // Predicated region
        $region253: #{decoder_forward.1} parent=11 // pred_check
          %p2070 = pneg %p1527
        $region254: #{decoder_forward.1} parent=11 // pred_check_branch
          %2072 = sbr.rel (%p2070) target = $region256
        $region255: #{decoder_forward.1} parent=11 // pred_region
          _
        $region256: #{decoder_forward.1} parent=11 // pred_fallthru
          _
        // Predicated region
        $region257: #{decoder_forward.1} parent=11 // pred_check
          %p2073 = pneg %p1548
        $region258: #{decoder_forward.1} parent=11 // pred_check_branch
          %2075 = sbr.rel (%p2073) target = $region260
        $region259: #{decoder_forward.1} parent=11 // pred_region
          %2077 = vsyncadd [#allocation27], 0
          %s2079 = sshll.u32 %s129, 4
          %s2080 = int_to_ptr.hbm [resolvable:$true] %s2079
          %s2081 = sshll.u32 [#allocation28], 4
          %s2082 = int_to_ptr.vmem [resolvable:$true] %s2081
          %2084 = dma.hbm_to_vmem [thread:$0]  %s2080, 16, %s2082, [#allocation27]
        $region260: #{decoder_forward.1} parent=11 // pred_fallthru
          _
        // Predicated region
        $region261: #{decoder_forward.1} parent=11 // pred_check
          %p2085 = pneg %p1569
        $region262: #{decoder_forward.1} parent=11 // pred_check_branch
          %2087 = sbr.rel (%p2085) target = $region264
        $region263: #{decoder_forward.1} parent=11 // pred_region
          _
        $region264: #{decoder_forward.1} parent=11 // pred_fallthru
          _
        // Predicated region
        $region265: #{decoder_forward.1} parent=11 // pred_check
          %p2088 = pneg %p1590
        $region266: #{decoder_forward.1} parent=11 // pred_check_branch
          %2090 = sbr.rel (%p2088) target = $region268
        $region267: #{decoder_forward.1} parent=11 // pred_region
          %2092 = vsyncadd [#allocation30], 0
          %s2094 = sshll.u32 %s133, 4
          %s2095 = int_to_ptr.hbm [resolvable:$true] %s2094
          %s2096 = sshll.u32 [#allocation29], 4
          %s2097 = int_to_ptr.vmem [resolvable:$true] %s2096
          %2099 = dma.hbm_to_vmem [thread:$0]  %s2095, 16, %s2097, [#allocation30]
        $region268: #{decoder_forward.1} parent=11 // pred_fallthru
          _
        // Predicated region
        $region269: #{decoder_forward.1} parent=11 // pred_check
          %p2100 = pneg %p1611
        $region270: #{decoder_forward.1} parent=11 // pred_check_branch
          %2102 = sbr.rel (%p2100) target = $region272
        $region271: #{decoder_forward.1} parent=11 // pred_region
          _
        $region272: #{decoder_forward.1} parent=11 // pred_fallthru
          _
        // Predicated region
        $region273: #{decoder_forward.1} parent=11 // pred_check
          %p2103 = pneg %p1632
        $region274: #{decoder_forward.1} parent=11 // pred_check_branch
          %2105 = sbr.rel (%p2103) target = $region276
        $region275: #{decoder_forward.1} parent=11 // pred_region
          %2107 = vsyncadd [#allocation30], 0
          %s2109 = sshll.u32 %s137, 4
          %s2110 = int_to_ptr.hbm [resolvable:$true] %s2109
          %s2111 = sshll.u32 [#allocation31], 4
          %s2112 = int_to_ptr.vmem [resolvable:$true] %s2111
          %2114 = dma.hbm_to_vmem [thread:$0]  %s2110, 16, %s2112, [#allocation30]
        $region276: #{decoder_forward.1} parent=11 // pred_fallthru
          _
        // Predicated region
        $region277: #{decoder_forward.1} parent=11 // pred_check
          %p2115 = pneg %p1653
        $region278: #{decoder_forward.1} parent=11 // pred_check_branch
          %2117 = sbr.rel (%p2115) target = $region280
        $region279: #{decoder_forward.1} parent=11 // pred_region
          _
        $region280: #{decoder_forward.1} parent=11 // pred_fallthru
          _
      $region12: #{decoder_forward.1} parent=5 // pred_fallthru
        _
      %p2118 = scmp.lt.s32.totalorder %s168, 2
      // Predicated region
      $region281: #{decoder_forward.1} parent=5 // pred_check
        %p2119 = pneg %p2118
      $region282: #{decoder_forward.1} parent=5 // pred_check_branch
        %2121 = sbr.rel (%p2119) target = $region284
      $region283: #{decoder_forward.1} parent=5 // pred_region
        // Predicated region
        $region285: #{decoder_forward.1} parent=283 // pred_check
          %p2122 = pneg %p188
        $region286: #{decoder_forward.1} parent=283 // pred_check_branch
          %2124 = sbr.rel (%p2122) target = $region288
        $region287: #{decoder_forward.1} parent=283 // pred_region
          %p2125 = scmp.lt.s32.totalorder %s168, 1
          %s2126 = scalar_select %p2125, %s168, 1
          %s2127 = smul.addr %s2126, 2
          %s2128 = smul.addr %s2127, 8
          %s2129 = scalar_lea.vmem %s1, %s2128
        $region288: #{decoder_forward.1} parent=283 // pred_fallthru
          _
        // Predicated region
        $region289: #{decoder_forward.1} parent=283 // pred_check
          %p2130 = pneg %p214
        $region290: #{decoder_forward.1} parent=283 // pred_check_branch
          %2132 = sbr.rel (%p2130) target = $region292
        $region291: #{decoder_forward.1} parent=283 // pred_region
          %p2133 = scmp.lt.s32.totalorder %s168, 1
          %s2134 = scalar_select %p2133, %s168, 1
          %s2135 = smul.addr %s2134, 2
          %s2136 = smul.addr %s2135, 8
          %s2137 = scalar_lea.vmem %s3, %s2136
        $region292: #{decoder_forward.1} parent=283 // pred_fallthru
          _
        // Predicated region
        $region293: #{decoder_forward.1} parent=283 // pred_check
          %p2138 = pneg %p240
        $region294: #{decoder_forward.1} parent=283 // pred_check_branch
          %2140 = sbr.rel (%p2138) target = $region296
        $region295: #{decoder_forward.1} parent=283 // pred_region
          %p2141 = scmp.lt.s32.totalorder %s168, 1
          %s2142 = scalar_select %p2141, %s168, 1
          %s2143 = smul.addr %s2142, 2
          %s2144 = smul.addr %s2143, 8
          %s2145 = scalar_lea.vmem %s5, %s2144
        $region296: #{decoder_forward.1} parent=283 // pred_fallthru
          _
      $region284: #{decoder_forward.1} parent=5 // pred_fallthru
        _
      %p2146 = scmp.le.s32.totalorder 1, %s168
      %p2147 = scmp.lt.s32.totalorder %s168, 3
      %p2148 = pnand %p2146, %p2147
      %p2149 = pneg %p2148
      // Predicated region
      $region297: #{decoder_forward.1} parent=5 // pred_check
        _
      $region298: #{decoder_forward.1} parent=5 // pred_check_branch
        %2151 = sbr.rel (%p2148) target = $region300
      $region299: #{decoder_forward.1} parent=5 // pred_region
        %s2152 = ssub.s32 %s168, 1
        // Predicated region
        $region301: #{decoder_forward.1} parent=299 // pred_check
          %p2153 = pneg %p960
        $region302: #{decoder_forward.1} parent=299 // pred_check_branch
          %2155 = sbr.rel (%p2153) target = $region304
        $region303: #{decoder_forward.1} parent=299 // pred_region
          %2157 = dma.done [#allocation3], 16
        $region304: #{decoder_forward.1} parent=299 // pred_fallthru
          _
        // Predicated region
        $region305: #{decoder_forward.1} parent=299 // pred_check
          %p2158 = pneg %p1002
        $region306: #{decoder_forward.1} parent=299 // pred_check_branch
          %2160 = sbr.rel (%p2158) target = $region308
        $region307: #{decoder_forward.1} parent=299 // pred_region
          %2162 = dma.done [#allocation6], 16
        $region308: #{decoder_forward.1} parent=299 // pred_fallthru
          _
        // Predicated region
        $region309: #{decoder_forward.1} parent=299 // pred_check
          %p2163 = pneg %p1044
        $region310: #{decoder_forward.1} parent=299 // pred_check_branch
          %2165 = sbr.rel (%p2163) target = $region312
        $region311: #{decoder_forward.1} parent=299 // pred_region
          %2167 = dma.done [#allocation6], 16
        $region312: #{decoder_forward.1} parent=299 // pred_fallthru
          _
        // Predicated region
        $region313: #{decoder_forward.1} parent=299 // pred_check
          %p2168 = pneg %p1065
        $region314: #{decoder_forward.1} parent=299 // pred_check_branch
          %2170 = sbr.rel (%p2168) target = $region316
        $region315: #{decoder_forward.1} parent=299 // pred_region
          %2172 = dma.done [#allocation9], 16
        $region316: #{decoder_forward.1} parent=299 // pred_fallthru
          _
        // Predicated region
        $region317: #{decoder_forward.1} parent=299 // pred_check
          %p2173 = pneg %p1086
        $region318: #{decoder_forward.1} parent=299 // pred_check_branch
          %2175 = sbr.rel (%p2173) target = $region320
        $region319: #{decoder_forward.1} parent=299 // pred_region
          %2177 = dma.done [#allocation9], 16
        $region320: #{decoder_forward.1} parent=299 // pred_fallthru
          _
        // Predicated region
        $region321: #{decoder_forward.1} parent=299 // pred_check
          %p2178 = pneg %p1107
        $region322: #{decoder_forward.1} parent=299 // pred_check_branch
          %2180 = sbr.rel (%p2178) target = $region324
        $region323: #{decoder_forward.1} parent=299 // pred_region
          %2182 = dma.done [#allocation12], 16
        $region324: #{decoder_forward.1} parent=299 // pred_fallthru
          _
        // Predicated region
        $region325: #{decoder_forward.1} parent=299 // pred_check
          %p2183 = pneg %p1170
        $region326: #{decoder_forward.1} parent=299 // pred_check_branch
          %2185 = sbr.rel (%p2183) target = $region328
        $region327: #{decoder_forward.1} parent=299 // pred_region
          %2187 = dma.done [#allocation12], 16
        $region328: #{decoder_forward.1} parent=299 // pred_fallthru
          _
        // Predicated region
        $region329: #{decoder_forward.1} parent=299 // pred_check
          %p2188 = pneg %p1191
        $region330: #{decoder_forward.1} parent=299 // pred_check_branch
          %2190 = sbr.rel (%p2188) target = $region332
        $region331: #{decoder_forward.1} parent=299 // pred_region
          %2192 = dma.done [#allocation15], 16
        $region332: #{decoder_forward.1} parent=299 // pred_fallthru
          _
        // Predicated region
        $region333: #{decoder_forward.1} parent=299 // pred_check
          %p2193 = pneg %p1212
        $region334: #{decoder_forward.1} parent=299 // pred_check_branch
          %2195 = sbr.rel (%p2193) target = $region336
        $region335: #{decoder_forward.1} parent=299 // pred_region
          %2197 = dma.done [#allocation15], 16
        $region336: #{decoder_forward.1} parent=299 // pred_fallthru
          _
        // Predicated region
        $region337: #{decoder_forward.1} parent=299 // pred_check
          %p2198 = pneg %p1233
        $region338: #{decoder_forward.1} parent=299 // pred_check_branch
          %2200 = sbr.rel (%p2198) target = $region340
        $region339: #{decoder_forward.1} parent=299 // pred_region
          %2202 = dma.done [#allocation18], 16
        $region340: #{decoder_forward.1} parent=299 // pred_fallthru
          _
        // Predicated region
        $region341: #{decoder_forward.1} parent=299 // pred_check
          %p2203 = pneg %p1296
        $region342: #{decoder_forward.1} parent=299 // pred_check_branch
          %2205 = sbr.rel (%p2203) target = $region344
        $region343: #{decoder_forward.1} parent=299 // pred_region
          %2207 = dma.done [#allocation18], 16
        $region344: #{decoder_forward.1} parent=299 // pred_fallthru
          _
        // Predicated region
        $region345: #{decoder_forward.1} parent=299 // pred_check
          %p2208 = pneg %p1338
        $region346: #{decoder_forward.1} parent=299 // pred_check_branch
          %2210 = sbr.rel (%p2208) target = $region348
        $region347: #{decoder_forward.1} parent=299 // pred_region
          %2212 = dma.done [#allocation21], 16
        $region348: #{decoder_forward.1} parent=299 // pred_fallthru
          _
        // Predicated region
        $region349: #{decoder_forward.1} parent=299 // pred_check
          %p2213 = pneg %p1380
        $region350: #{decoder_forward.1} parent=299 // pred_check_branch
          %2215 = sbr.rel (%p2213) target = $region352
        $region351: #{decoder_forward.1} parent=299 // pred_region
          %2217 = dma.done [#allocation21], 16
        $region352: #{decoder_forward.1} parent=299 // pred_fallthru
          _
        // Predicated region
        $region353: #{decoder_forward.1} parent=299 // pred_check
          %p2218 = pneg %p1422
        $region354: #{decoder_forward.1} parent=299 // pred_check_branch
          %2220 = sbr.rel (%p2218) target = $region356
        $region355: #{decoder_forward.1} parent=299 // pred_region
          %2222 = dma.done [#allocation24], 16
        $region356: #{decoder_forward.1} parent=299 // pred_fallthru
          _
        // Predicated region
        $region357: #{decoder_forward.1} parent=299 // pred_check
          %p2223 = pneg %p1464
        $region358: #{decoder_forward.1} parent=299 // pred_check_branch
          %2225 = sbr.rel (%p2223) target = $region360
        $region359: #{decoder_forward.1} parent=299 // pred_region
          %2227 = dma.done [#allocation24], 16
        $region360: #{decoder_forward.1} parent=299 // pred_fallthru
          _
        // Predicated region
        $region361: #{decoder_forward.1} parent=299 // pred_check
          %p2228 = pneg %p1506
        $region362: #{decoder_forward.1} parent=299 // pred_check_branch
          %2230 = sbr.rel (%p2228) target = $region364
        $region363: #{decoder_forward.1} parent=299 // pred_region
          %2232 = dma.done [#allocation27], 16
        $region364: #{decoder_forward.1} parent=299 // pred_fallthru
          _
        // Predicated region
        $region365: #{decoder_forward.1} parent=299 // pred_check
          %p2233 = pneg %p1548
        $region366: #{decoder_forward.1} parent=299 // pred_check_branch
          %2235 = sbr.rel (%p2233) target = $region368
        $region367: #{decoder_forward.1} parent=299 // pred_region
          %2237 = dma.done [#allocation27], 16
        $region368: #{decoder_forward.1} parent=299 // pred_fallthru
          _
        // Predicated region
        $region369: #{decoder_forward.1} parent=299 // pred_check
          %p2238 = pneg %p1590
        $region370: #{decoder_forward.1} parent=299 // pred_check_branch
          %2240 = sbr.rel (%p2238) target = $region372
        $region371: #{decoder_forward.1} parent=299 // pred_region
          %2242 = dma.done [#allocation30], 16
        $region372: #{decoder_forward.1} parent=299 // pred_fallthru
          _
        // Predicated region
        $region373: #{decoder_forward.1} parent=299 // pred_check
          %p2243 = pneg %p1632
        $region374: #{decoder_forward.1} parent=299 // pred_check_branch
          %2245 = sbr.rel (%p2243) target = $region376
        $region375: #{decoder_forward.1} parent=299 // pred_region
          %2247 = dma.done [#allocation30], 16
        $region376: #{decoder_forward.1} parent=299 // pred_fallthru
          _
        %p2248 = scmp.lt.s32.totalorder %s173, 1
        %s2249 = scalar_select %p2248, %s173, 1
        %s2250 = smul.addr %s2249, 2
        %s2251 = smul.addr %s2250, 8
        %s2252 = scalar_lea.vmem %s1, %s2251
        %p2253 = pneg %p194
        %p2254 = pneg %p191
        %p2255 = scmp.lt.s32.totalorder %s173, 1
        %s2256 = scalar_select %p2255, %s173, 1
        %s2257 = smul.addr %s2256, 2
        %s2258 = smul.addr %s2257, 8
        %s2259 = scalar_lea.vmem %s3, %s2258
        %p2260 = pneg %p220
        %p2261 = pneg %p217
        %p2262 = scmp.lt.s32.totalorder %s173, 1
        %s2263 = scalar_select %p2262, %s173, 1
        %s2264 = smul.addr %s2263, 2
        %s2265 = smul.addr %s2264, 8
        %s2266 = scalar_lea.vmem %s5, %s2265
        %p2267 = pneg %p246
        %p2268 = pneg %p243
        %p2269 = pneg %p267
        %p2270 = pneg %p264
        %p2271 = pneg %p288
        %p2272 = pneg %p285
        %p2273 = pneg %p309
        %p2274 = pneg %p306
        %p2275 = pneg %p330
        %p2276 = pneg %p327
        %p2277 = pneg %p351
        %p2278 = pneg %p348
        %p2279 = pneg %p372
        %p2280 = pneg %p369
        %p2281 = pneg %p393
        %p2282 = pneg %p390
        %p2283 = pneg %p414
        %p2284 = pneg %p411
        %p2285 = pneg %p435
        %p2286 = pneg %p432
        %p2287 = pneg %p456
        %p2288 = pneg %p453
        %p2289 = pneg %p477
        %p2290 = pneg %p474
        %p2291 = pneg %p498
        %p2292 = pneg %p495
        %p2293 = pneg %p519
        %p2294 = pneg %p516
        %p2295 = pneg %p540
        %p2296 = pneg %p537
        %p2297 = pneg %p561
        %p2298 = pneg %p558
        %p2299 = pneg %p582
        %p2300 = pneg %p579
        %p2301 = pneg %p603
        %p2302 = pneg %p600
        %p2303 = pneg %p624
        %p2304 = pneg %p621
        %p2305 = pneg %p645
        %p2306 = pneg %p642
        %p2307 = pneg %p666
        %p2308 = pneg %p663
        %p2309 = pneg %p687
        %p2310 = pneg %p684
        %p2311 = pneg %p708
        %p2312 = pneg %p705
        %p2313 = pneg %p729
        %p2314 = pneg %p726
        %p2315 = pneg %p750
        %p2316 = pneg %p747
        %p2317 = pneg %p771
        %p2318 = pneg %p768
        %p2319 = pneg %p792
        %p2320 = pneg %p789
        %p2321 = pneg %p813
        %p2322 = pneg %p810
        %p2323 = pneg %p834
        %p2324 = pneg %p831
        %p2325 = pneg %p855
        %p2326 = pneg %p852
        %p2327 = pneg %p876
        %p2328 = pneg %p873
        %p2329 = pneg %p897
        %p2330 = pneg %p894
        %p2331 = pneg %p918
        %p2332 = pneg %p915
        %p2333 = pneg %p939
        %p2334 = pneg %p936
        %p2335 = pneg %p960
        %p2336 = pneg %p957
        %p2337 = pneg %p981
        %p2338 = pneg %p978
        %p2339 = pneg %p1002
        %p2340 = pneg %p999
        %p2341 = pneg %p1023
        %p2342 = pneg %p1020
        %p2343 = pneg %p1044
        %p2344 = pneg %p1041
        %p2345 = pneg %p1065
        %p2346 = pneg %p1062
        %p2347 = pneg %p1086
        %p2348 = pneg %p1083
        %p2349 = pneg %p1107
        %p2350 = pneg %p1104
        %p2351 = pneg %p1128
        %p2352 = pneg %p1125
        %p2353 = pneg %p1149
        %p2354 = pneg %p1146
        %p2355 = pneg %p1170
        %p2356 = pneg %p1167
        %p2357 = pneg %p1191
        %p2358 = pneg %p1188
        %p2359 = pneg %p1212
        %p2360 = pneg %p1209
        %p2361 = pneg %p1233
        %p2362 = pneg %p1230
        %p2363 = pneg %p1254
        %p2364 = pneg %p1251
        %p2365 = pneg %p1275
        %p2366 = pneg %p1272
        %p2367 = pneg %p1296
        %p2368 = pneg %p1293
        %p2369 = pneg %p1317
        %p2370 = pneg %p1314
        %p2371 = pneg %p1338
        %p2372 = pneg %p1335
        %p2373 = pneg %p1359
        %p2374 = pneg %p1356
        %p2375 = pneg %p1380
        %p2376 = pneg %p1377
        %p2377 = pneg %p1401
        %p2378 = pneg %p1398
        %p2379 = pneg %p1422
        %p2380 = pneg %p1419
        %p2381 = pneg %p1443
        %p2382 = pneg %p1440
        %p2383 = pneg %p1464
        %p2384 = pneg %p1461
        %p2385 = pneg %p1485
        %p2386 = pneg %p1482
        %p2387 = pneg %p1506
        %p2388 = pneg %p1503
        %p2389 = pneg %p1527
        %p2390 = pneg %p1524
        %p2391 = pneg %p1548
        %p2392 = pneg %p1545
        %p2393 = pneg %p1569
        %p2394 = pneg %p1566
        %p2395 = pneg %p1590
        %p2396 = pneg %p1587
        %p2397 = pneg %p1611
        %p2398 = pneg %p1608
        %p2399 = pneg %p1632
        %p2400 = pneg %p1629
        %p2401 = pneg %p1653
        %p2402 = pneg %p1650
        %p2403 = pneg %p1679
        %p2404 = pneg %p1676
        %s2405 = sand.u32 %s1666, 1
        %s2406 = scalar_lea.sflag [#allocation4], %s2405
        %s2407 = sand.u32 %s1666, 1
        %s2408 = smul.addr %s2407, 16
        %s2409 = scalar_lea.vmem [#allocation32], %s2408
        %p2410 = pneg %p1705
        %p2411 = pneg %p1702
        %s2412 = sand.u32 %s173, 1
        %s2413 = scalar_lea.sflag [#allocation34], %s2412
        %s2414 = sand.u32 %s1692, 1
        %s2415 = smul.addr %s2414, 16
        %s2416 = scalar_lea.vmem [#allocation33], %s2415
        %p2417 = pneg %p1731
        %p2418 = pneg %p1728
        %s2419 = sand.u32 %s173, 1
        %s2420 = scalar_lea.sflag [#allocation34], %s2419
        %s2421 = sand.u32 %s1718, 1
        %s2422 = smul.addr %s2421, 16
        %s2423 = scalar_lea.vmem [#allocation35], %s2422
        %p2424 = scmp.lt.s32.totalorder %s173, 1
        %s2425 = scalar_select %p2424, %s173, 1
        %s2426 = smul.addr %s2425, 2
        %s2427 = smul.addr %s2426, 8
        %s2428 = scalar_lea.vmem %s1, %s2427
        %p2429 = scmp.lt.s32.totalorder %s173, 1
        %s2430 = scalar_select %p2429, %s173, 1
        %s2431 = smul.addr %s2430, 2
        %s2432 = smul.addr %s2431, 8
        %s2433 = scalar_lea.vmem %s3, %s2432
        %p2434 = scmp.lt.s32.totalorder %s173, 1
        %s2435 = scalar_select %p2434, %s173, 1
        %s2436 = smul.addr %s2435, 2
        %s2437 = smul.addr %s2436, 8
        %s2438 = scalar_lea.vmem %s5, %s2437
        %v2440 = vld [vmem:[%s2428] sm:$0xff]
        %v2441 = vld [vmem:[%s2428 + $0x8] sm:$0xff]
        %v2442 = vld [vmem:[%s2433] sm:$0xff]
        %v2443 = vld [vmem:[%s2433 + $0x8] sm:$0xff]
        %v2444 = vld [vmem:[%s2438] sm:$0xff]
        %v2445 = vld [vmem:[%s2438 + $0x8] sm:$0xff]
        %v2446 = vld [vmem:[%s115] sm:$0xf]
        %v2447 = vld [vmem:[#allocation22] sm:$0x1]
        %v2448 = vpack.c.bf16 %v2441, %v2440
        %v2450 = vperm.slane %v2447, 0
        %vm2452 = vcmask 64512
        %v2454 = vsel %vm2452, %v2448, 0
        %vm2456 = vcmask 1043456
        %v2458 = vsel %vm2456, %v2446, 0
        %2460 = vmatpush.bf16.msra.mxu0 0
        %2461 = vmatpush.bf16.msra.mxu0 0
        %2462 = vmatpush.bf16.msra.mxu0 0
        %2463 = vmatpush.bf16.msra.mxu0 0
        %2464 = vmatpush.bf16.msra.mxu0 0
        %2465 = vmatpush.bf16.msra.mxu0 0
        %2466 = vmatpush.bf16.msra.mxu0 0
        %2467 = vmatpush.bf16.msra.mxu0 %v2458
        %2468 = vmatmul.bf16.gmra.mxu0 %v2454
        %v2469 = vpop.f32.mrf.mxu0
        %v2470 = vadd.f32 %v2450, %v2469
        %v2471 = vpop.f32.mrf.mxu0
        %v2472 = vadd.f32 %v2450, %v2471
        %2473 = vdwg.mxu0
        %v2474 = vld [vmem:[%s107] sm:$0xf]
        %v2475 = vld [vmem:[%s107 + $0x4] sm:$0xf]
        %v2476 = vld [vmem:[#allocation19] sm:$0x1]
        %v2477 = vpack.c.bf16 %v2443, %v2442
        %v2479 = vperm.slane %v2476, 0
        %v2483 = vunpack.c.l.b16 %v2474
        %v2484 = vunpack.c.l.b16 %v2475
        %v2485 = vpack.c.b16 %v2484, %v2483
        %vm2487 = vcmask 130048
        %v2489 = vsel %vm2487, %v2477, 0
        %2491 = vmatpush.bf16.msra.mxu0 0
        %2492 = vmatpush.bf16.msra.mxu0 0
        %2493 = vmatpush.bf16.msra.mxu0 0
        %2494 = vmatpush.bf16.msra.mxu0 0
        %2495 = vmatpush.bf16.msra.mxu0 0
        %2496 = vmatpush.bf16.msra.mxu0 0
        %2497 = vmatpush.bf16.msra.mxu0 0
        %2498 = vmatpush.bf16.msra.mxu0 %v2485
        %2499 = vmatmul.bf16.gmra.mxu0 %v2489
        %v2500 = vpop.f32.mrf.mxu0
        %v2501 = vadd.f32 %v2479, %v2500
        %v2502 = vpop.f32.mrf.mxu0
        %v2503 = vadd.f32 %v2479, %v2502
        %2504 = vdwg.mxu0
        %v2505 = vadd.f32 %v2470, %v2501
        %v2506 = vadd.f32 %v2472, %v2503
        %v2507 = vmul.f32 %v2505, 5.656854
        %v2508 = vmul.f32 %v2506, 5.656854
        %vm2509 = vcmp.ge.f32.partialorder %v2507, 0.0
        %vm2510 = vcmp.ge.f32.partialorder %v2508, 0.0
        %v2511 = vmul.f32 %v2507, 0.01
        %v2512 = vmul.f32 %v2508, 0.01
        %v2513 = vsel %vm2509, %v2507, %v2511
        %v2514 = vsel %vm2510, %v2508, %v2512
        %v2515 = vld [vmem:[%s119] sm:$0xf]
        %v2516 = vld [vmem:[%s119 + $0x4] sm:$0xf]
        %v2517 = vld [vmem:[%s119 + $0x8] sm:$0xf]
        %v2518 = vld [vmem:[%s119 + $0xc] sm:$0xf]
        %v2519 = vld [vmem:[#allocation23] sm:$0x1]
        %v2520 = vpack.c.bf16 %v2514, %v2513
        %v2522 = vperm.slane %v2519, 0
        %v2528 = vunpack.c.l.b16 %v2515
        %v2529 = vunpack.c.l.b16 %v2516
        %v2530 = vunpack.c.l.b16 %v2517
        %v2531 = vunpack.c.l.b16 %v2518
        %v2532 = vpack.c.b16 %v2529, %v2528
        %v2533 = vpack.c.b16 %v2531, %v2530
        %vm2536 = vcmask 261120
        %v2538 = vsel %vm2536, %v2520, 0
        %2540 = vmatpush.bf16.msra.mxu0 0
        %2541 = vmatpush.bf16.msra.mxu0 0
        %2542 = vmatpush.bf16.msra.mxu0 0
        %2543 = vmatpush.bf16.msra.mxu0 0
        %2544 = vmatpush.bf16.msra.mxu0 0
        %2545 = vmatpush.bf16.msra.mxu0 0
        %2546 = vmatpush.bf16.msra.mxu0 %v2533
        %2547 = vmatpush.bf16.msra.mxu0 %v2532
        %2548 = vmatmul.bf16.gmra.mxu0 %v2538
        %v2549 = vpop.f32.mrf.mxu0
        %v2550 = vadd.f32 %v2522, %v2549
        %v2551 = vpop.f32.mrf.mxu0
        %v2552 = vadd.f32 %v2522, %v2551
        %2553 = vdwg.mxu0
        %v2554 = vld [vmem:[%s123] sm:$0xf]
        %v2555 = vld [vmem:[%s123 + $0x4] sm:$0xf]
        %v2556 = vld [vmem:[%s123 + $0x8] sm:$0xf]
        %v2557 = vld [vmem:[%s123 + $0xc] sm:$0xf]
        %v2558 = vld [vmem:[#allocation25] sm:$0x1]
        %v2559 = vpack.c.bf16 %v2552, %v2550
        %v2561 = vperm.slane %v2558, 0
        %v2567 = vunpack.c.l.b16 %v2554
        %v2568 = vunpack.c.l.b16 %v2555
        %v2569 = vunpack.c.l.b16 %v2556
        %v2570 = vunpack.c.l.b16 %v2557
        %v2571 = vpack.c.b16 %v2568, %v2567
        %v2572 = vpack.c.b16 %v2570, %v2569
        %v2576 = vsel %vm2536, %v2559, 0
        %2578 = vmatpush.bf16.msra.mxu0 0
        %2579 = vmatpush.bf16.msra.mxu0 0
        %2580 = vmatpush.bf16.msra.mxu0 0
        %2581 = vmatpush.bf16.msra.mxu0 0
        %2582 = vmatpush.bf16.msra.mxu0 0
        %2583 = vmatpush.bf16.msra.mxu0 0
        %2584 = vmatpush.bf16.msra.mxu0 %v2572
        %2585 = vmatpush.bf16.msra.mxu0 %v2571
        %2586 = vmatmul.bf16.gmra.mxu0 %v2576
        %v2587 = vpop.f32.mrf.mxu0
        %v2588 = vadd.f32 %v2561, %v2587
        %v2589 = vpop.f32.mrf.mxu0
        %v2590 = vadd.f32 %v2561, %v2589
        %2591 = vdwg.mxu0
        %vm2592 = vcmp.ge.f32.partialorder %v2588, 0.0
        %vm2593 = vcmp.ge.f32.partialorder %v2590, 0.0
        %v2594 = vmul.f32 %v2588, 0.01
        %v2595 = vmul.f32 %v2590, 0.01
        %v2596 = vsel %vm2592, %v2588, %v2594
        %v2597 = vsel %vm2593, %v2590, %v2595
        %v2598 = vld [vmem:[%s127] sm:$0xf]
        %v2599 = vld [vmem:[%s127 + $0x4] sm:$0xf]
        %v2600 = vld [vmem:[%s127 + $0x8] sm:$0xf]
        %v2601 = vld [vmem:[%s127 + $0xc] sm:$0xf]
        %v2602 = vld [vmem:[#allocation26] sm:$0x1]
        %v2603 = vpack.c.bf16 %v2597, %v2596
        %v2605 = vperm.slane %v2602, 0
        %v2611 = vunpack.c.l.b16 %v2598
        %v2612 = vunpack.c.l.b16 %v2599
        %v2613 = vunpack.c.l.b16 %v2600
        %v2614 = vunpack.c.l.b16 %v2601
        %v2615 = vpack.c.b16 %v2612, %v2611
        %v2616 = vpack.c.b16 %v2614, %v2613
        %v2620 = vsel %vm2536, %v2603, 0
        %2622 = vmatpush.bf16.msra.mxu0 0
        %2623 = vmatpush.bf16.msra.mxu0 0
        %2624 = vmatpush.bf16.msra.mxu0 0
        %2625 = vmatpush.bf16.msra.mxu0 0
        %2626 = vmatpush.bf16.msra.mxu0 0
        %2627 = vmatpush.bf16.msra.mxu0 0
        %2628 = vmatpush.bf16.msra.mxu0 %v2616
        %2629 = vmatpush.bf16.msra.mxu0 %v2615
        %2630 = vmatmul.bf16.gmra.mxu0 %v2620
        %v2631 = vpop.f32.mrf.mxu0
        %v2632 = vadd.f32 %v2605, %v2631
        %v2633 = vpop.f32.mrf.mxu0
        %v2634 = vadd.f32 %v2605, %v2633
        %2635 = vdwg.mxu0
        %vm2636 = vcmp.ge.f32.partialorder %v2632, 0.0
        %vm2637 = vcmp.ge.f32.partialorder %v2634, 0.0
        %v2638 = vmul.f32 %v2632, 0.01
        %v2639 = vmul.f32 %v2634, 0.01
        %v2640 = vsel %vm2636, %v2632, %v2638
        %v2641 = vsel %vm2637, %v2634, %v2639
        %v2642 = vld [vmem:[%s131] sm:$0xf]
        %v2643 = vld [vmem:[%s131 + $0x4] sm:$0xf]
        %v2644 = vld [vmem:[%s131 + $0x8] sm:$0xf]
        %v2645 = vld [vmem:[%s131 + $0xc] sm:$0xf]
        %v2646 = vld [vmem:[#allocation28] sm:$0x1]
        %v2647 = vpack.c.bf16 %v2641, %v2640
        %v2649 = vperm.slane %v2646, 0
        %v2655 = vunpack.c.l.b16 %v2642
        %v2656 = vunpack.c.l.b16 %v2643
        %v2657 = vunpack.c.l.b16 %v2644
        %v2658 = vunpack.c.l.b16 %v2645
        %v2659 = vpack.c.b16 %v2656, %v2655
        %v2660 = vpack.c.b16 %v2658, %v2657
        %v2664 = vsel %vm2536, %v2647, 0
        %2666 = vmatpush.bf16.msra.mxu0 0
        %2667 = vmatpush.bf16.msra.mxu0 0
        %2668 = vmatpush.bf16.msra.mxu0 0
        %2669 = vmatpush.bf16.msra.mxu0 0
        %2670 = vmatpush.bf16.msra.mxu0 0
        %2671 = vmatpush.bf16.msra.mxu0 0
        %2672 = vmatpush.bf16.msra.mxu0 %v2660
        %2673 = vmatpush.bf16.msra.mxu0 %v2659
        %2674 = vmatmul.bf16.gmra.mxu0 %v2664
        %v2675 = vpop.f32.mrf.mxu0
        %v2676 = vadd.f32 %v2649, %v2675
        %v2677 = vpop.f32.mrf.mxu0
        %v2678 = vadd.f32 %v2649, %v2677
        %2679 = vdwg.mxu0
        %vm2680 = vcmp.ge.f32.partialorder %v2676, 0.0
        %vm2681 = vcmp.ge.f32.partialorder %v2678, 0.0
        %v2682 = vmul.f32 %v2676, 0.01
        %v2683 = vmul.f32 %v2678, 0.01
        %v2684 = vsel %vm2680, %v2676, %v2682
        %v2685 = vsel %vm2681, %v2678, %v2683
        %v2686 = vld [vmem:[%s111] sm:$0xf]
        %v2687 = vld [vmem:[%s111 + $0x4] sm:$0x3]
        %v2688 = vld [vmem:[#allocation20] sm:$0x1]
        %v2689 = vpack.c.bf16 %v2445, %v2444
        %v2691 = vperm.slane %v2688, 0
        %v2695 = vunpack.c.l.b16 %v2686
        %v2696 = vunpack.c.l.b16 %v2687
        %v2697 = vpack.c.b16 %v2696, %v2695
        %vm2698 = vcmask 97280
        %v2700 = vsel %vm2698, %v2689, 0
        %vm2702 = vcmask 1045504
        %v2704 = vsel %vm2702, %v2697, 0
        %2706 = vmatpush.bf16.msra.mxu0 0
        %2707 = vmatpush.bf16.msra.mxu0 0
        %2708 = vmatpush.bf16.msra.mxu0 0
        %2709 = vmatpush.bf16.msra.mxu0 0
        %2710 = vmatpush.bf16.msra.mxu0 0
        %2711 = vmatpush.bf16.msra.mxu0 0
        %2712 = vmatpush.bf16.msra.mxu0 0
        %2713 = vmatpush.bf16.msra.mxu0 %v2704
        %2714 = vmatmul.bf16.gmra.mxu0 %v2700
        %v2715 = vpop.f32.mrf.mxu0
        %v2716 = vadd.f32 %v2691, %v2715
        %v2717 = vpop.f32.mrf.mxu0
        %v2718 = vadd.f32 %v2691, %v2717
        %2719 = vdwg.mxu0
        %v2720 = vld [vmem:[%s7] sm:$0xff]
        %v2721 = vld [vmem:[%s7 + $0x8] sm:$0xff]
        %v2722 = vadd.f32 %v2513, %v2720
        %v2723 = vadd.f32 %v2514, %v2721
        %v2724 = vld [vmem:[%s21] sm:$0xf]
        %v2725 = vld [vmem:[%s21 + $0x4] sm:$0xf]
        %v2726 = vld [vmem:[%s21 + $0x8] sm:$0xf]
        %v2727 = vld [vmem:[%s21 + $0xc] sm:$0xf]
        %v2728 = vld [vmem:[%s13] sm:$0x1]
        %v2729 = vpack.c.bf16 %v2723, %v2722
        %v2731 = vperm.slane %v2728, 0
        %v2737 = vunpack.c.l.b16 %v2724
        %v2738 = vunpack.c.l.b16 %v2725
        %v2739 = vunpack.c.l.b16 %v2726
        %v2740 = vunpack.c.l.b16 %v2727
        %v2741 = vpack.c.b16 %v2738, %v2737
        %v2742 = vpack.c.b16 %v2740, %v2739
        %v2746 = vsel %vm2536, %v2729, 0
        %2748 = vmatpush.bf16.msra.mxu0 0
        %2749 = vmatpush.bf16.msra.mxu0 0
        %2750 = vmatpush.bf16.msra.mxu0 0
        %2751 = vmatpush.bf16.msra.mxu0 0
        %2752 = vmatpush.bf16.msra.mxu0 0
        %2753 = vmatpush.bf16.msra.mxu0 0
        %2754 = vmatpush.bf16.msra.mxu0 %v2742
        %2755 = vmatpush.bf16.msra.mxu0 %v2741
        %2756 = vmatmul.bf16.gmra.mxu0 %v2746
        %v2757 = vpop.f32.mrf.mxu0
        %v2758 = vadd.f32 %v2731, %v2757
        %v2759 = vpop.f32.mrf.mxu0
        %v2760 = vadd.f32 %v2731, %v2759
        %2761 = vdwg.mxu0
        %v2762 = vld [vmem:[%s17] sm:$0xf]
        %v2763 = vld [vmem:[%s17 + $0x4] sm:$0xf]
        %v2764 = vld [vmem:[%s17 + $0x8] sm:$0xf]
        %v2765 = vld [vmem:[%s17 + $0xc] sm:$0xf]
        %v2766 = vld [vmem:[%s9] sm:$0x1]
        %v2768 = vperm.slane %v2766, 0
        %v2774 = vunpack.c.l.b16 %v2762
        %v2775 = vunpack.c.l.b16 %v2763
        %v2776 = vunpack.c.l.b16 %v2764
        %v2777 = vunpack.c.l.b16 %v2765
        %v2778 = vpack.c.b16 %v2775, %v2774
        %v2779 = vpack.c.b16 %v2777, %v2776
        %2782 = vmatpush.bf16.msra.mxu0 0
        %2783 = vmatpush.bf16.msra.mxu0 0
        %2784 = vmatpush.bf16.msra.mxu0 0
        %2785 = vmatpush.bf16.msra.mxu0 0
        %2786 = vmatpush.bf16.msra.mxu0 0
        %2787 = vmatpush.bf16.msra.mxu0 0
        %2788 = vmatpush.bf16.msra.mxu0 %v2779
        %2789 = vmatpush.bf16.msra.mxu0 %v2778
        %2790 = vmatmul.bf16.gmra.mxu0 %v2746
        %v2791 = vpop.f32.mrf.mxu0
        %v2792 = vadd.f32 %v2768, %v2791
        %v2793 = vpop.f32.mrf.mxu0
        %v2794 = vadd.f32 %v2768, %v2793
        %2795 = vdwg.mxu0
        %v2796 = vld [vmem:[%s23] sm:$0xf]
        %v2797 = vld [vmem:[%s23 + $0x4] sm:$0xf]
        %v2798 = vld [vmem:[%s23 + $0x8] sm:$0xf]
        %v2799 = vld [vmem:[%s23 + $0xc] sm:$0xf]
        %v2800 = vld [vmem:[%s15] sm:$0x1]
        %v2802 = vperm.slane %v2800, 0
        %v2808 = vunpack.c.l.b16 %v2796
        %v2809 = vunpack.c.l.b16 %v2797
        %v2810 = vunpack.c.l.b16 %v2798
        %v2811 = vunpack.c.l.b16 %v2799
        %v2812 = vpack.c.b16 %v2809, %v2808
        %v2813 = vpack.c.b16 %v2811, %v2810
        %2816 = vmatpush.bf16.msra.mxu0 0
        %2817 = vmatpush.bf16.msra.mxu0 0
        %2818 = vmatpush.bf16.msra.mxu0 0
        %2819 = vmatpush.bf16.msra.mxu0 0
        %2820 = vmatpush.bf16.msra.mxu0 0
        %2821 = vmatpush.bf16.msra.mxu0 0
        %2822 = vmatpush.bf16.msra.mxu0 %v2813
        %2823 = vmatpush.bf16.msra.mxu0 %v2812
        %2824 = vmatmul.bf16.gmra.mxu0 %v2746
        %v2825 = vpop.f32.mrf.mxu0
        %v2826 = vadd.f32 %v2802, %v2825
        %v2827 = vpop.f32.mrf.mxu0
        %v2828 = vadd.f32 %v2802, %v2827
        %2829 = vdwg.mxu0
        %v2830 = vpack.c.bf16 %v2760, %v2758
        %v2831 = vpack.c.bf16 %v2794, %v2792
        %v2833 = vsel %vm2452, %v2830, 0
        %v2836 = vsel %vm2452, %v2831, 0
        %2838 = vmatpush.bf16.xpose.msra.mxu0 0
        %2839 = vmatpush.bf16.xpose.msra.mxu0 0
        %2840 = vmatpush.bf16.xpose.msra.mxu0 0
        %2841 = vmatpush.bf16.xpose.msra.mxu0 0
        %2842 = vmatpush.bf16.xpose.msra.mxu0 0
        %2843 = vmatpush.bf16.xpose.msra.mxu0 0
        %2844 = vmatpush.bf16.xpose.msra.mxu0 0
        %2845 = vmatpush.bf16.xpose.msra.mxu0 %v2836
        %2846 = vmatmul.bf16.gmra.mxu0 %v2833
        %v2847 = vpop.f32.mrf.mxu0
        %v2848 = vadd.f32 0.0, %v2847
        %v2849 = vpop.f32.mrf.mxu0
        %v2850 = vadd.f32 0.0, %v2849
        %2851 = vdwg.mxu0
        %v2852 = vmul.f32 %v2848, 0.35355338
        %v2853 = vmul.f32 %v2850, 0.35355338
        %v2854 = vsel %vm2487, %v2852, -inf
        %2855 = vmax.xlane.f32.xlu0 %v2854
        %v2856 = vpop.xlane.xlu0 %2855
        %v2857 = vsel %vm2487, %v2853, -inf
        %2858 = vmax.xlane.f32.xlu0 %v2857
        %v2859 = vpop.xlane.xlu0 %2858
        %v2860 = vsub.f32 %v2852, %v2856
        %v2861 = vsub.f32 %v2853, %v2859
        %v2862 = vmul.f32 %v2860, 1.442695
        %v2863 = vpow.pop %v2862
        %v2864 = vmul.f32 %v2861, 1.442695
        %v2865 = vpow.pop %v2864
        %v2866 = vsel %vm2487, %v2863, 0.0
        %2867 = vadd.xlane.f32.xlu0 %v2866
        %v2868 = vpop.xlane.xlu0 %2867
        %v2869 = vsel %vm2487, %v2865, 0.0
        %2870 = vadd.xlane.f32.xlu0 %v2869
        %v2871 = vpop.xlane.xlu0 %2870
        %v2872 = vrcp.pop %v2868
        %v2873 = vrcp.pop %v2871
        %v2874 = vmul.f32 %v2863, %v2872
        %v2875 = vmul.f32 %v2865, %v2873
        %v2876 = vpack.c.bf16 %v2875, %v2874
        %v2877 = vpack.c.bf16 %v2828, %v2826
        %v2879 = vsel %vm2487, %v2876, 0
        %2881 = vmatpush.bf16.msra.mxu0 0
        %2882 = vmatpush.bf16.msra.mxu0 0
        %2883 = vmatpush.bf16.msra.mxu0 0
        %2884 = vmatpush.bf16.msra.mxu0 0
        %2885 = vmatpush.bf16.msra.mxu0 0
        %2886 = vmatpush.bf16.msra.mxu0 0
        %2887 = vmatpush.bf16.msra.mxu0 0
        %2888 = vmatpush.bf16.msra.mxu0 %v2877
        %2889 = vmatmul.bf16.gmra.mxu0 %v2879
        %v2890 = vpop.f32.mrf.mxu0
        %v2891 = vadd.f32 0.0, %v2890
        %v2892 = vpop.f32.mrf.mxu0
        %v2893 = vadd.f32 0.0, %v2892
        %2894 = vdwg.mxu0
        %v2895 = vpack.c.bf16 %v2893, %v2891
        %v2896 = vld [vmem:[%s19] sm:$0xf]
        %s2897 = scalar_lea.vmem %s21, 16
        %v2898 = vld [vmem:[%s2897] sm:$0xf]
        %v2899 = vld [vmem:[%s2897 + $0x4] sm:$0xf]
        %v2900 = vld [vmem:[%s2897 + $0x8] sm:$0xf]
        %v2901 = vld [vmem:[%s2897 + $0xc] sm:$0xf]
        %s2902 = scalar_lea.vmem %s13, 1
        %v2903 = vld [vmem:[%s2902] sm:$0x1]
        %v2905 = vperm.slane %v2903, 0
        %v2911 = vunpack.c.l.b16 %v2898
        %v2912 = vunpack.c.l.b16 %v2899
        %v2913 = vunpack.c.l.b16 %v2900
        %v2914 = vunpack.c.l.b16 %v2901
        %v2915 = vpack.c.b16 %v2912, %v2911
        %v2916 = vpack.c.b16 %v2914, %v2913
        %2919 = vmatpush.bf16.msra.mxu0 0
        %2920 = vmatpush.bf16.msra.mxu0 0
        %2921 = vmatpush.bf16.msra.mxu0 0
        %2922 = vmatpush.bf16.msra.mxu0 0
        %2923 = vmatpush.bf16.msra.mxu0 0
        %2924 = vmatpush.bf16.msra.mxu0 0
        %2925 = vmatpush.bf16.msra.mxu0 %v2916
        %2926 = vmatpush.bf16.msra.mxu0 %v2915
        %2927 = vmatmul.bf16.gmra.mxu0 %v2746
        %v2928 = vpop.f32.mrf.mxu0
        %v2929 = vadd.f32 %v2905, %v2928
        %v2930 = vpop.f32.mrf.mxu0
        %v2931 = vadd.f32 %v2905, %v2930
        %2932 = vdwg.mxu0
        %s2933 = scalar_lea.vmem %s17, 16
        %v2934 = vld [vmem:[%s2933] sm:$0xf]
        %v2935 = vld [vmem:[%s2933 + $0x4] sm:$0xf]
        %v2936 = vld [vmem:[%s2933 + $0x8] sm:$0xf]
        %v2937 = vld [vmem:[%s2933 + $0xc] sm:$0xf]
        %s2938 = scalar_lea.vmem %s9, 1
        %v2939 = vld [vmem:[%s2938] sm:$0x1]
        %v2941 = vperm.slane %v2939, 0
        %v2947 = vunpack.c.l.b16 %v2934
        %v2948 = vunpack.c.l.b16 %v2935
        %v2949 = vunpack.c.l.b16 %v2936
        %v2950 = vunpack.c.l.b16 %v2937
        %v2951 = vpack.c.b16 %v2948, %v2947
        %v2952 = vpack.c.b16 %v2950, %v2949
        %2955 = vmatpush.bf16.msra.mxu0 0
        %2956 = vmatpush.bf16.msra.mxu0 0
        %2957 = vmatpush.bf16.msra.mxu0 0
        %2958 = vmatpush.bf16.msra.mxu0 0
        %2959 = vmatpush.bf16.msra.mxu0 0
        %2960 = vmatpush.bf16.msra.mxu0 0
        %2961 = vmatpush.bf16.msra.mxu0 %v2952
        %2962 = vmatpush.bf16.msra.mxu0 %v2951
        %2963 = vmatmul.bf16.gmra.mxu0 %v2746
        %v2964 = vpop.f32.mrf.mxu0
        %v2965 = vadd.f32 %v2941, %v2964
        %v2966 = vpop.f32.mrf.mxu0
        %v2967 = vadd.f32 %v2941, %v2966
        %2968 = vdwg.mxu0
        %s2969 = scalar_lea.vmem %s23, 16
        %v2970 = vld [vmem:[%s2969] sm:$0xf]
        %v2971 = vld [vmem:[%s2969 + $0x4] sm:$0xf]
        %v2972 = vld [vmem:[%s2969 + $0x8] sm:$0xf]
        %v2973 = vld [vmem:[%s2969 + $0xc] sm:$0xf]
        %s2974 = scalar_lea.vmem %s15, 1
        %v2975 = vld [vmem:[%s2974] sm:$0x1]
        %v2977 = vperm.slane %v2975, 0
        %v2983 = vunpack.c.l.b16 %v2970
        %v2984 = vunpack.c.l.b16 %v2971
        %v2985 = vunpack.c.l.b16 %v2972
        %v2986 = vunpack.c.l.b16 %v2973
        %v2987 = vpack.c.b16 %v2984, %v2983
        %v2988 = vpack.c.b16 %v2986, %v2985
        %2991 = vmatpush.bf16.msra.mxu0 0
        %2992 = vmatpush.bf16.msra.mxu0 0
        %2993 = vmatpush.bf16.msra.mxu0 0
        %2994 = vmatpush.bf16.msra.mxu0 0
        %2995 = vmatpush.bf16.msra.mxu0 0
        %2996 = vmatpush.bf16.msra.mxu0 0
        %2997 = vmatpush.bf16.msra.mxu0 %v2988
        %2998 = vmatpush.bf16.msra.mxu0 %v2987
        %2999 = vmatmul.bf16.gmra.mxu0 %v2746
        %v3000 = vpop.f32.mrf.mxu0
        %v3001 = vadd.f32 %v2977, %v3000
        %v3002 = vpop.f32.mrf.mxu0
        %v3003 = vadd.f32 %v2977, %v3002
        %3004 = vdwg.mxu0
        %v3005 = vpack.c.bf16 %v2931, %v2929
        %v3006 = vpack.c.bf16 %v2967, %v2965
        %v3008 = vsel %vm2452, %v3005, 0
        %v3011 = vsel %vm2452, %v3006, 0
        %3013 = vmatpush.bf16.xpose.msra.mxu0 0
        %3014 = vmatpush.bf16.xpose.msra.mxu0 0
        %3015 = vmatpush.bf16.xpose.msra.mxu0 0
        %3016 = vmatpush.bf16.xpose.msra.mxu0 0
        %3017 = vmatpush.bf16.xpose.msra.mxu0 0
        %3018 = vmatpush.bf16.xpose.msra.mxu0 0
        %3019 = vmatpush.bf16.xpose.msra.mxu0 0
        %3020 = vmatpush.bf16.xpose.msra.mxu0 %v3011
        %3021 = vmatmul.bf16.gmra.mxu0 %v3008
        %v3022 = vpop.f32.mrf.mxu0
        %v3023 = vadd.f32 0.0, %v3022
        %v3024 = vpop.f32.mrf.mxu0
        %v3025 = vadd.f32 0.0, %v3024
        %3026 = vdwg.mxu0
        %v3027 = vmul.f32 %v3023, 0.35355338
        %v3028 = vmul.f32 %v3025, 0.35355338
        %v3029 = vsel %vm2487, %v3027, -inf
        %3030 = vmax.xlane.f32.xlu0 %v3029
        %v3031 = vpop.xlane.xlu0 %3030
        %v3032 = vsel %vm2487, %v3028, -inf
        %3033 = vmax.xlane.f32.xlu0 %v3032
        %v3034 = vpop.xlane.xlu0 %3033
        %v3035 = vsub.f32 %v3027, %v3031
        %v3036 = vsub.f32 %v3028, %v3034
        %v3037 = vmul.f32 %v3035, 1.442695
        %v3038 = vpow.pop %v3037
        %v3039 = vmul.f32 %v3036, 1.442695
        %v3040 = vpow.pop %v3039
        %v3041 = vsel %vm2487, %v3038, 0.0
        %3042 = vadd.xlane.f32.xlu0 %v3041
        %v3043 = vpop.xlane.xlu0 %3042
        %v3044 = vsel %vm2487, %v3040, 0.0
        %3045 = vadd.xlane.f32.xlu0 %v3044
        %v3046 = vpop.xlane.xlu0 %3045
        %v3047 = vrcp.pop %v3043
        %v3048 = vrcp.pop %v3046
        %v3049 = vmul.f32 %v3038, %v3047
        %v3050 = vmul.f32 %v3040, %v3048
        %v3051 = vpack.c.bf16 %v3050, %v3049
        %v3052 = vpack.c.bf16 %v3003, %v3001
        %v3054 = vsel %vm2487, %v3051, 0
        %3056 = vmatpush.bf16.msra.mxu0 0
        %3057 = vmatpush.bf16.msra.mxu0 0
        %3058 = vmatpush.bf16.msra.mxu0 0
        %3059 = vmatpush.bf16.msra.mxu0 0
        %3060 = vmatpush.bf16.msra.mxu0 0
        %3061 = vmatpush.bf16.msra.mxu0 0
        %3062 = vmatpush.bf16.msra.mxu0 0
        %3063 = vmatpush.bf16.msra.mxu0 %v3052
        %3064 = vmatmul.bf16.gmra.mxu0 %v3054
        %v3065 = vpop.f32.mrf.mxu0
        %v3066 = vadd.f32 0.0, %v3065
        %v3067 = vpop.f32.mrf.mxu0
        %v3068 = vadd.f32 0.0, %v3067
        %3069 = vdwg.mxu0
        %v3070 = vpack.c.bf16 %v3068, %v3066
        %s3071 = scalar_lea.vmem %s19, 4
        %v3072 = vld [vmem:[%s3071] sm:$0xf]
        %v3074 = vsel %vm2452, %v3070, 0
        %v3077 = vsel %vm2456, %v3072, 0
        %3079 = vmatpush.bf16.msra.mxu0 0
        %3080 = vmatpush.bf16.msra.mxu0 0
        %3081 = vmatpush.bf16.msra.mxu0 0
        %3082 = vmatpush.bf16.msra.mxu0 0
        %3083 = vmatpush.bf16.msra.mxu0 0
        %3084 = vmatpush.bf16.msra.mxu0 0
        %3085 = vmatpush.bf16.msra.mxu0 0
        %3086 = vmatpush.bf16.msra.mxu0 %v3077
        %3087 = vmatmul.bf16.gmra.mxu0 %v3074
        %v3088 = vpop.f32.mrf.mxu0
        %v3089 = vadd.f32 0.0, %v3088
        %v3090 = vpop.f32.mrf.mxu0
        %v3091 = vadd.f32 0.0, %v3090
        %3092 = vdwg.mxu0
        %v3094 = vsel %vm2452, %v2895, 0
        %v3097 = vsel %vm2456, %v2896, 0
        %3099 = vmatpush.bf16.msra.mxu0 0
        %3100 = vmatpush.bf16.msra.mxu0 0
        %3101 = vmatpush.bf16.msra.mxu0 0
        %3102 = vmatpush.bf16.msra.mxu0 0
        %3103 = vmatpush.bf16.msra.mxu0 0
        %3104 = vmatpush.bf16.msra.mxu0 0
        %3105 = vmatpush.bf16.msra.mxu0 0
        %3106 = vmatpush.bf16.msra.mxu0 %v3097
        %3107 = vmatmul.bf16.gmra.mxu0 %v3094
        %v3108 = vpop.f32.mrf.mxu0
        %v3109 = vadd.f32 %v3089, %v3108
        %v3110 = vpop.f32.mrf.mxu0
        %v3111 = vadd.f32 %v3091, %v3110
        %3112 = vdwg.mxu0
        %s3113 = scalar_lea.vmem %s21, 32
        %v3114 = vld [vmem:[%s3113] sm:$0xf]
        %v3115 = vld [vmem:[%s3113 + $0x4] sm:$0xf]
        %v3116 = vld [vmem:[%s3113 + $0x8] sm:$0xf]
        %v3117 = vld [vmem:[%s3113 + $0xc] sm:$0xf]
        %s3118 = scalar_lea.vmem %s13, 2
        %v3119 = vld [vmem:[%s3118] sm:$0x1]
        %v3121 = vperm.slane %v3119, 0
        %v3127 = vunpack.c.l.b16 %v3114
        %v3128 = vunpack.c.l.b16 %v3115
        %v3129 = vunpack.c.l.b16 %v3116
        %v3130 = vunpack.c.l.b16 %v3117
        %v3131 = vpack.c.b16 %v3128, %v3127
        %v3132 = vpack.c.b16 %v3130, %v3129
        %3135 = vmatpush.bf16.msra.mxu0 0
        %3136 = vmatpush.bf16.msra.mxu0 0
        %3137 = vmatpush.bf16.msra.mxu0 0
        %3138 = vmatpush.bf16.msra.mxu0 0
        %3139 = vmatpush.bf16.msra.mxu0 0
        %3140 = vmatpush.bf16.msra.mxu0 0
        %3141 = vmatpush.bf16.msra.mxu0 %v3132
        %3142 = vmatpush.bf16.msra.mxu0 %v3131
        %3143 = vmatmul.bf16.gmra.mxu0 %v2746
        %v3144 = vpop.f32.mrf.mxu0
        %v3145 = vadd.f32 %v3121, %v3144
        %v3146 = vpop.f32.mrf.mxu0
        %v3147 = vadd.f32 %v3121, %v3146
        %3148 = vdwg.mxu0
        %s3149 = scalar_lea.vmem %s17, 32
        %v3150 = vld [vmem:[%s3149] sm:$0xf]
        %v3151 = vld [vmem:[%s3149 + $0x4] sm:$0xf]
        %v3152 = vld [vmem:[%s3149 + $0x8] sm:$0xf]
        %v3153 = vld [vmem:[%s3149 + $0xc] sm:$0xf]
        %s3154 = scalar_lea.vmem %s9, 2
        %v3155 = vld [vmem:[%s3154] sm:$0x1]
        %v3157 = vperm.slane %v3155, 0
        %v3163 = vunpack.c.l.b16 %v3150
        %v3164 = vunpack.c.l.b16 %v3151
        %v3165 = vunpack.c.l.b16 %v3152
        %v3166 = vunpack.c.l.b16 %v3153
        %v3167 = vpack.c.b16 %v3164, %v3163
        %v3168 = vpack.c.b16 %v3166, %v3165
        %3171 = vmatpush.bf16.msra.mxu0 0
        %3172 = vmatpush.bf16.msra.mxu0 0
        %3173 = vmatpush.bf16.msra.mxu0 0
        %3174 = vmatpush.bf16.msra.mxu0 0
        %3175 = vmatpush.bf16.msra.mxu0 0
        %3176 = vmatpush.bf16.msra.mxu0 0
        %3177 = vmatpush.bf16.msra.mxu0 %v3168
        %3178 = vmatpush.bf16.msra.mxu0 %v3167
        %3179 = vmatmul.bf16.gmra.mxu0 %v2746
        %v3180 = vpop.f32.mrf.mxu0
        %v3181 = vadd.f32 %v3157, %v3180
        %v3182 = vpop.f32.mrf.mxu0
        %v3183 = vadd.f32 %v3157, %v3182
        %3184 = vdwg.mxu0
        %s3185 = scalar_lea.vmem %s23, 32
        %v3186 = vld [vmem:[%s3185] sm:$0xf]
        %v3187 = vld [vmem:[%s3185 + $0x4] sm:$0xf]
        %v3188 = vld [vmem:[%s3185 + $0x8] sm:$0xf]
        %v3189 = vld [vmem:[%s3185 + $0xc] sm:$0xf]
        %s3190 = scalar_lea.vmem %s15, 2
        %v3191 = vld [vmem:[%s3190] sm:$0x1]
        %v3193 = vperm.slane %v3191, 0
        %v3199 = vunpack.c.l.b16 %v3186
        %v3200 = vunpack.c.l.b16 %v3187
        %v3201 = vunpack.c.l.b16 %v3188
        %v3202 = vunpack.c.l.b16 %v3189
        %v3203 = vpack.c.b16 %v3200, %v3199
        %v3204 = vpack.c.b16 %v3202, %v3201
        %3207 = vmatpush.bf16.msra.mxu0 0
        %3208 = vmatpush.bf16.msra.mxu0 0
        %3209 = vmatpush.bf16.msra.mxu0 0
        %3210 = vmatpush.bf16.msra.mxu0 0
        %3211 = vmatpush.bf16.msra.mxu0 0
        %3212 = vmatpush.bf16.msra.mxu0 0
        %3213 = vmatpush.bf16.msra.mxu0 %v3204
        %3214 = vmatpush.bf16.msra.mxu0 %v3203
        %3215 = vmatmul.bf16.gmra.mxu0 %v2746
        %v3216 = vpop.f32.mrf.mxu0
        %v3217 = vadd.f32 %v3193, %v3216
        %v3218 = vpop.f32.mrf.mxu0
        %v3219 = vadd.f32 %v3193, %v3218
        %3220 = vdwg.mxu0
        %v3221 = vpack.c.bf16 %v3147, %v3145
        %v3222 = vpack.c.bf16 %v3183, %v3181
        %v3224 = vsel %vm2452, %v3221, 0
        %v3227 = vsel %vm2452, %v3222, 0
        %3229 = vmatpush.bf16.xpose.msra.mxu0 0
        %3230 = vmatpush.bf16.xpose.msra.mxu0 0
        %3231 = vmatpush.bf16.xpose.msra.mxu0 0
        %3232 = vmatpush.bf16.xpose.msra.mxu0 0
        %3233 = vmatpush.bf16.xpose.msra.mxu0 0
        %3234 = vmatpush.bf16.xpose.msra.mxu0 0
        %3235 = vmatpush.bf16.xpose.msra.mxu0 0
        %3236 = vmatpush.bf16.xpose.msra.mxu0 %v3227
        %3237 = vmatmul.bf16.gmra.mxu0 %v3224
        %v3238 = vpop.f32.mrf.mxu0
        %v3239 = vadd.f32 0.0, %v3238
        %v3240 = vpop.f32.mrf.mxu0
        %v3241 = vadd.f32 0.0, %v3240
        %3242 = vdwg.mxu0
        %v3243 = vmul.f32 %v3239, 0.35355338
        %v3244 = vmul.f32 %v3241, 0.35355338
        %v3245 = vsel %vm2487, %v3243, -inf
        %3246 = vmax.xlane.f32.xlu0 %v3245
        %v3247 = vpop.xlane.xlu0 %3246
        %v3248 = vsel %vm2487, %v3244, -inf
        %3249 = vmax.xlane.f32.xlu0 %v3248
        %v3250 = vpop.xlane.xlu0 %3249
        %v3251 = vsub.f32 %v3243, %v3247
        %v3252 = vsub.f32 %v3244, %v3250
        %v3253 = vmul.f32 %v3251, 1.442695
        %v3254 = vpow.pop %v3253
        %v3255 = vmul.f32 %v3252, 1.442695
        %v3256 = vpow.pop %v3255
        %v3257 = vsel %vm2487, %v3254, 0.0
        %3258 = vadd.xlane.f32.xlu0 %v3257
        %v3259 = vpop.xlane.xlu0 %3258
        %v3260 = vsel %vm2487, %v3256, 0.0
        %3261 = vadd.xlane.f32.xlu0 %v3260
        %v3262 = vpop.xlane.xlu0 %3261
        %v3263 = vrcp.pop %v3259
        %v3264 = vrcp.pop %v3262
        %v3265 = vmul.f32 %v3254, %v3263
        %v3266 = vmul.f32 %v3256, %v3264
        %v3267 = vpack.c.bf16 %v3266, %v3265
        %v3268 = vpack.c.bf16 %v3219, %v3217
        %v3270 = vsel %vm2487, %v3267, 0
        %3272 = vmatpush.bf16.msra.mxu0 0
        %3273 = vmatpush.bf16.msra.mxu0 0
        %3274 = vmatpush.bf16.msra.mxu0 0
        %3275 = vmatpush.bf16.msra.mxu0 0
        %3276 = vmatpush.bf16.msra.mxu0 0
        %3277 = vmatpush.bf16.msra.mxu0 0
        %3278 = vmatpush.bf16.msra.mxu0 0
        %3279 = vmatpush.bf16.msra.mxu0 %v3268
        %3280 = vmatmul.bf16.gmra.mxu0 %v3270
        %v3281 = vpop.f32.mrf.mxu0
        %v3282 = vadd.f32 0.0, %v3281
        %v3283 = vpop.f32.mrf.mxu0
        %v3284 = vadd.f32 0.0, %v3283
        %3285 = vdwg.mxu0
        %v3286 = vpack.c.bf16 %v3284, %v3282
        %s3287 = scalar_lea.vmem %s19, 8
        %v3288 = vld [vmem:[%s3287] sm:$0xf]
        %v3290 = vsel %vm2452, %v3286, 0
        %v3293 = vsel %vm2456, %v3288, 0
        %3295 = vmatpush.bf16.msra.mxu0 0
        %3296 = vmatpush.bf16.msra.mxu0 0
        %3297 = vmatpush.bf16.msra.mxu0 0
        %3298 = vmatpush.bf16.msra.mxu0 0
        %3299 = vmatpush.bf16.msra.mxu0 0
        %3300 = vmatpush.bf16.msra.mxu0 0
        %3301 = vmatpush.bf16.msra.mxu0 0
        %3302 = vmatpush.bf16.msra.mxu0 %v3293
        %3303 = vmatmul.bf16.gmra.mxu0 %v3290
        %v3304 = vpop.f32.mrf.mxu0
        %v3305 = vadd.f32 0.0, %v3304
        %v3306 = vpop.f32.mrf.mxu0
        %v3307 = vadd.f32 0.0, %v3306
        %3308 = vdwg.mxu0
        %v3309 = vadd.f32 %v3109, %v3305
        %v3310 = vadd.f32 %v3111, %v3307
        %s3311 = scalar_lea.vmem %s21, 48
        %v3312 = vld [vmem:[%s3311] sm:$0xf]
        %v3313 = vld [vmem:[%s3311 + $0x4] sm:$0xf]
        %v3314 = vld [vmem:[%s3311 + $0x8] sm:$0xf]
        %v3315 = vld [vmem:[%s3311 + $0xc] sm:$0xf]
        %s3316 = scalar_lea.vmem %s13, 3
        %v3317 = vld [vmem:[%s3316] sm:$0x1]
        %v3319 = vperm.slane %v3317, 0
        %v3325 = vunpack.c.l.b16 %v3312
        %v3326 = vunpack.c.l.b16 %v3313
        %v3327 = vunpack.c.l.b16 %v3314
        %v3328 = vunpack.c.l.b16 %v3315
        %v3329 = vpack.c.b16 %v3326, %v3325
        %v3330 = vpack.c.b16 %v3328, %v3327
        %3333 = vmatpush.bf16.msra.mxu0 0
        %3334 = vmatpush.bf16.msra.mxu0 0
        %3335 = vmatpush.bf16.msra.mxu0 0
        %3336 = vmatpush.bf16.msra.mxu0 0
        %3337 = vmatpush.bf16.msra.mxu0 0
        %3338 = vmatpush.bf16.msra.mxu0 0
        %3339 = vmatpush.bf16.msra.mxu0 %v3330
        %3340 = vmatpush.bf16.msra.mxu0 %v3329
        %3341 = vmatmul.bf16.gmra.mxu0 %v2746
        %v3342 = vpop.f32.mrf.mxu0
        %v3343 = vadd.f32 %v3319, %v3342
        %v3344 = vpop.f32.mrf.mxu0
        %v3345 = vadd.f32 %v3319, %v3344
        %3346 = vdwg.mxu0
        %s3347 = scalar_lea.vmem %s17, 48
        %v3348 = vld [vmem:[%s3347] sm:$0xf]
        %v3349 = vld [vmem:[%s3347 + $0x4] sm:$0xf]
        %v3350 = vld [vmem:[%s3347 + $0x8] sm:$0xf]
        %v3351 = vld [vmem:[%s3347 + $0xc] sm:$0xf]
        %s3352 = scalar_lea.vmem %s9, 3
        %v3353 = vld [vmem:[%s3352] sm:$0x1]
        %v3355 = vperm.slane %v3353, 0
        %v3361 = vunpack.c.l.b16 %v3348
        %v3362 = vunpack.c.l.b16 %v3349
        %v3363 = vunpack.c.l.b16 %v3350
        %v3364 = vunpack.c.l.b16 %v3351
        %v3365 = vpack.c.b16 %v3362, %v3361
        %v3366 = vpack.c.b16 %v3364, %v3363
        %3369 = vmatpush.bf16.msra.mxu0 0
        %3370 = vmatpush.bf16.msra.mxu0 0
        %3371 = vmatpush.bf16.msra.mxu0 0
        %3372 = vmatpush.bf16.msra.mxu0 0
        %3373 = vmatpush.bf16.msra.mxu0 0
        %3374 = vmatpush.bf16.msra.mxu0 0
        %3375 = vmatpush.bf16.msra.mxu0 %v3366
        %3376 = vmatpush.bf16.msra.mxu0 %v3365
        %3377 = vmatmul.bf16.gmra.mxu0 %v2746
        %v3378 = vpop.f32.mrf.mxu0
        %v3379 = vadd.f32 %v3355, %v3378
        %v3380 = vpop.f32.mrf.mxu0
        %v3381 = vadd.f32 %v3355, %v3380
        %3382 = vdwg.mxu0
        %s3383 = scalar_lea.vmem %s23, 48
        %v3384 = vld [vmem:[%s3383] sm:$0xf]
        %v3385 = vld [vmem:[%s3383 + $0x4] sm:$0xf]
        %v3386 = vld [vmem:[%s3383 + $0x8] sm:$0xf]
        %v3387 = vld [vmem:[%s3383 + $0xc] sm:$0xf]
        %s3388 = scalar_lea.vmem %s15, 3
        %v3389 = vld [vmem:[%s3388] sm:$0x1]
        %v3391 = vperm.slane %v3389, 0
        %v3397 = vunpack.c.l.b16 %v3384
        %v3398 = vunpack.c.l.b16 %v3385
        %v3399 = vunpack.c.l.b16 %v3386
        %v3400 = vunpack.c.l.b16 %v3387
        %v3401 = vpack.c.b16 %v3398, %v3397
        %v3402 = vpack.c.b16 %v3400, %v3399
        %3405 = vmatpush.bf16.msra.mxu0 0
        %3406 = vmatpush.bf16.msra.mxu0 0
        %3407 = vmatpush.bf16.msra.mxu0 0
        %3408 = vmatpush.bf16.msra.mxu0 0
        %3409 = vmatpush.bf16.msra.mxu0 0
        %3410 = vmatpush.bf16.msra.mxu0 0
        %3411 = vmatpush.bf16.msra.mxu0 %v3402
        %3412 = vmatpush.bf16.msra.mxu0 %v3401
        %3413 = vmatmul.bf16.gmra.mxu0 %v2746
        %v3414 = vpop.f32.mrf.mxu0
        %v3415 = vadd.f32 %v3391, %v3414
        %v3416 = vpop.f32.mrf.mxu0
        %v3417 = vadd.f32 %v3391, %v3416
        %3418 = vdwg.mxu0
        %v3419 = vpack.c.bf16 %v3345, %v3343
        %v3420 = vpack.c.bf16 %v3381, %v3379
        %v3422 = vsel %vm2452, %v3419, 0
        %v3425 = vsel %vm2452, %v3420, 0
        %3427 = vmatpush.bf16.xpose.msra.mxu0 0
        %3428 = vmatpush.bf16.xpose.msra.mxu0 0
        %3429 = vmatpush.bf16.xpose.msra.mxu0 0
        %3430 = vmatpush.bf16.xpose.msra.mxu0 0
        %3431 = vmatpush.bf16.xpose.msra.mxu0 0
        %3432 = vmatpush.bf16.xpose.msra.mxu0 0
        %3433 = vmatpush.bf16.xpose.msra.mxu0 0
        %3434 = vmatpush.bf16.xpose.msra.mxu0 %v3425
        %3435 = vmatmul.bf16.gmra.mxu0 %v3422
        %v3436 = vpop.f32.mrf.mxu0
        %v3437 = vadd.f32 0.0, %v3436
        %v3438 = vpop.f32.mrf.mxu0
        %v3439 = vadd.f32 0.0, %v3438
        %3440 = vdwg.mxu0
        %v3441 = vmul.f32 %v3437, 0.35355338
        %v3442 = vmul.f32 %v3439, 0.35355338
        %v3443 = vsel %vm2487, %v3441, -inf
        %3444 = vmax.xlane.f32.xlu0 %v3443
        %v3445 = vpop.xlane.xlu0 %3444
        %v3446 = vsel %vm2487, %v3442, -inf
        %3447 = vmax.xlane.f32.xlu0 %v3446
        %v3448 = vpop.xlane.xlu0 %3447
        %v3449 = vsub.f32 %v3441, %v3445
        %v3450 = vsub.f32 %v3442, %v3448
        %v3451 = vmul.f32 %v3449, 1.442695
        %v3452 = vpow.pop %v3451
        %v3453 = vmul.f32 %v3450, 1.442695
        %v3454 = vpow.pop %v3453
        %v3455 = vsel %vm2487, %v3452, 0.0
        %3456 = vadd.xlane.f32.xlu0 %v3455
        %v3457 = vpop.xlane.xlu0 %3456
        %v3458 = vsel %vm2487, %v3454, 0.0
        %3459 = vadd.xlane.f32.xlu0 %v3458
        %v3460 = vpop.xlane.xlu0 %3459
        %v3461 = vrcp.pop %v3457
        %v3462 = vrcp.pop %v3460
        %v3463 = vmul.f32 %v3452, %v3461
        %v3464 = vmul.f32 %v3454, %v3462
        %v3465 = vpack.c.bf16 %v3464, %v3463
        %v3466 = vpack.c.bf16 %v3417, %v3415
        %v3468 = vsel %vm2487, %v3465, 0
        %3470 = vmatpush.bf16.msra.mxu0 0
        %3471 = vmatpush.bf16.msra.mxu0 0
        %3472 = vmatpush.bf16.msra.mxu0 0
        %3473 = vmatpush.bf16.msra.mxu0 0
        %3474 = vmatpush.bf16.msra.mxu0 0
        %3475 = vmatpush.bf16.msra.mxu0 0
        %3476 = vmatpush.bf16.msra.mxu0 0
        %3477 = vmatpush.bf16.msra.mxu0 %v3466
        %3478 = vmatmul.bf16.gmra.mxu0 %v3468
        %v3479 = vpop.f32.mrf.mxu0
        %v3480 = vadd.f32 0.0, %v3479
        %v3481 = vpop.f32.mrf.mxu0
        %v3482 = vadd.f32 0.0, %v3481
        %3483 = vdwg.mxu0
        %v3484 = vpack.c.bf16 %v3482, %v3480
        %s3485 = scalar_lea.vmem %s19, 12
        %v3486 = vld [vmem:[%s3485] sm:$0xf]
        %v3488 = vsel %vm2452, %v3484, 0
        %v3491 = vsel %vm2456, %v3486, 0
        %3493 = vmatpush.bf16.msra.mxu0 0
        %3494 = vmatpush.bf16.msra.mxu0 0
        %3495 = vmatpush.bf16.msra.mxu0 0
        %3496 = vmatpush.bf16.msra.mxu0 0
        %3497 = vmatpush.bf16.msra.mxu0 0
        %3498 = vmatpush.bf16.msra.mxu0 0
        %3499 = vmatpush.bf16.msra.mxu0 0
        %3500 = vmatpush.bf16.msra.mxu0 %v3491
        %3501 = vmatmul.bf16.gmra.mxu0 %v3488
        %v3502 = vpop.f32.mrf.mxu0
        %v3503 = vadd.f32 0.0, %v3502
        %v3504 = vpop.f32.mrf.mxu0
        %v3505 = vadd.f32 0.0, %v3504
        %3506 = vdwg.mxu0
        %v3507 = vadd.f32 %v3309, %v3503
        %v3508 = vadd.f32 %v3310, %v3505
        %v3509 = vld [vmem:[%s11] sm:$0x1]
        %v3511 = vperm.slane %v3509, 0
        %v3513 = vadd.f32 %v3507, %v3511
        %v3514 = vadd.f32 %v3508, %v3511
        %v3515 = vld [vmem:[%s53] sm:$0xf]
        %v3516 = vld [vmem:[%s53 + $0x4] sm:$0xf]
        %v3517 = vld [vmem:[%s53 + $0x8] sm:$0xf]
        %v3518 = vld [vmem:[%s53 + $0xc] sm:$0xf]
        %v3519 = vld [vmem:[%s45] sm:$0x1]
        %v3520 = vpack.c.bf16 %v3514, %v3513
        %v3522 = vperm.slane %v3519, 0
        %v3528 = vunpack.c.l.b16 %v3515
        %v3529 = vunpack.c.l.b16 %v3516
        %v3530 = vunpack.c.l.b16 %v3517
        %v3531 = vunpack.c.l.b16 %v3518
        %v3532 = vpack.c.b16 %v3529, %v3528
        %v3533 = vpack.c.b16 %v3531, %v3530
        %v3537 = vsel %vm2536, %v3520, 0
        %3539 = vmatpush.bf16.msra.mxu0 0
        %3540 = vmatpush.bf16.msra.mxu0 0
        %3541 = vmatpush.bf16.msra.mxu0 0
        %3542 = vmatpush.bf16.msra.mxu0 0
        %3543 = vmatpush.bf16.msra.mxu0 0
        %3544 = vmatpush.bf16.msra.mxu0 0
        %3545 = vmatpush.bf16.msra.mxu0 %v3533
        %3546 = vmatpush.bf16.msra.mxu0 %v3532
        %3547 = vmatmul.bf16.gmra.mxu0 %v3537
        %v3548 = vpop.f32.mrf.mxu0
        %v3549 = vadd.f32 %v3522, %v3548
        %v3550 = vpop.f32.mrf.mxu0
        %v3551 = vadd.f32 %v3522, %v3550
        %3552 = vdwg.mxu0
        %v3553 = vld [vmem:[%s49] sm:$0xf]
        %v3554 = vld [vmem:[%s49 + $0x4] sm:$0xf]
        %v3555 = vld [vmem:[%s49 + $0x8] sm:$0xf]
        %v3556 = vld [vmem:[%s49 + $0xc] sm:$0xf]
        %v3557 = vld [vmem:[%s41] sm:$0x1]
        %v3558 = vpack.c.bf16 %v2718, %v2716
        %v3560 = vperm.slane %v3557, 0
        %v3566 = vunpack.c.l.b16 %v3553
        %v3567 = vunpack.c.l.b16 %v3554
        %v3568 = vunpack.c.l.b16 %v3555
        %v3569 = vunpack.c.l.b16 %v3556
        %v3570 = vpack.c.b16 %v3567, %v3566
        %v3571 = vpack.c.b16 %v3569, %v3568
        %v3575 = vsel %vm2536, %v3558, 0
        %3577 = vmatpush.bf16.msra.mxu0 0
        %3578 = vmatpush.bf16.msra.mxu0 0
        %3579 = vmatpush.bf16.msra.mxu0 0
        %3580 = vmatpush.bf16.msra.mxu0 0
        %3581 = vmatpush.bf16.msra.mxu0 0
        %3582 = vmatpush.bf16.msra.mxu0 0
        %3583 = vmatpush.bf16.msra.mxu0 %v3571
        %3584 = vmatpush.bf16.msra.mxu0 %v3570
        %3585 = vmatmul.bf16.gmra.mxu0 %v3575
        %v3586 = vpop.f32.mrf.mxu0
        %v3587 = vadd.f32 %v3560, %v3586
        %v3588 = vpop.f32.mrf.mxu0
        %v3589 = vadd.f32 %v3560, %v3588
        %3590 = vdwg.mxu0
        %v3591 = vld [vmem:[%s55] sm:$0xf]
        %v3592 = vld [vmem:[%s55 + $0x4] sm:$0xf]
        %v3593 = vld [vmem:[%s55 + $0x8] sm:$0xf]
        %v3594 = vld [vmem:[%s55 + $0xc] sm:$0xf]
        %v3595 = vld [vmem:[%s47] sm:$0x1]
        %v3597 = vperm.slane %v3595, 0
        %v3603 = vunpack.c.l.b16 %v3591
        %v3604 = vunpack.c.l.b16 %v3592
        %v3605 = vunpack.c.l.b16 %v3593
        %v3606 = vunpack.c.l.b16 %v3594
        %v3607 = vpack.c.b16 %v3604, %v3603
        %v3608 = vpack.c.b16 %v3606, %v3605
        %3611 = vmatpush.bf16.msra.mxu0 0
        %3612 = vmatpush.bf16.msra.mxu0 0
        %3613 = vmatpush.bf16.msra.mxu0 0
        %3614 = vmatpush.bf16.msra.mxu0 0
        %3615 = vmatpush.bf16.msra.mxu0 0
        %3616 = vmatpush.bf16.msra.mxu0 0
        %3617 = vmatpush.bf16.msra.mxu0 %v3608
        %3618 = vmatpush.bf16.msra.mxu0 %v3607
        %3619 = vmatmul.bf16.gmra.mxu0 %v3575
        %v3620 = vpop.f32.mrf.mxu0
        %v3621 = vadd.f32 %v3597, %v3620
        %v3622 = vpop.f32.mrf.mxu0
        %v3623 = vadd.f32 %v3597, %v3622
        %3624 = vdwg.mxu0
        %v3625 = vpack.c.bf16 %v3551, %v3549
        %v3626 = vpack.c.bf16 %v3589, %v3587
        %v3628 = vsel %vm2452, %v3625, 0
        %v3631 = vsel %vm2452, %v3626, 0
        %3633 = vmatpush.bf16.xpose.msra.mxu0 0
        %3634 = vmatpush.bf16.xpose.msra.mxu0 0
        %3635 = vmatpush.bf16.xpose.msra.mxu0 0
        %3636 = vmatpush.bf16.xpose.msra.mxu0 0
        %3637 = vmatpush.bf16.xpose.msra.mxu0 0
        %3638 = vmatpush.bf16.xpose.msra.mxu0 0
        %3639 = vmatpush.bf16.xpose.msra.mxu0 0
        %3640 = vmatpush.bf16.xpose.msra.mxu0 %v3631
        %3641 = vmatmul.bf16.gmra.mxu0 %v3628
        %v3642 = vpop.f32.mrf.mxu0
        %v3643 = vadd.f32 0.0, %v3642
        %v3644 = vpop.f32.mrf.mxu0
        %v3645 = vadd.f32 0.0, %v3644
        %3646 = vdwg.mxu0
        %v3647 = vmul.f32 %v3643, 0.35355338
        %v3648 = vmul.f32 %v3645, 0.35355338
        %v3649 = vsel %vm2487, %v3647, -inf
        %3650 = vmax.xlane.f32.xlu0 %v3649
        %v3651 = vpop.xlane.xlu0 %3650
        %v3652 = vsel %vm2487, %v3648, -inf
        %3653 = vmax.xlane.f32.xlu0 %v3652
        %v3654 = vpop.xlane.xlu0 %3653
        %v3655 = vsub.f32 %v3647, %v3651
        %v3656 = vsub.f32 %v3648, %v3654
        %v3657 = vmul.f32 %v3655, 1.442695
        %v3658 = vpow.pop %v3657
        %v3659 = vmul.f32 %v3656, 1.442695
        %v3660 = vpow.pop %v3659
        %v3661 = vsel %vm2487, %v3658, 0.0
        %3662 = vadd.xlane.f32.xlu0 %v3661
        %v3663 = vpop.xlane.xlu0 %3662
        %v3664 = vsel %vm2487, %v3660, 0.0
        %3665 = vadd.xlane.f32.xlu0 %v3664
        %v3666 = vpop.xlane.xlu0 %3665
        %v3667 = vrcp.pop %v3663
        %v3668 = vrcp.pop %v3666
        %v3669 = vmul.f32 %v3658, %v3667
        %v3670 = vmul.f32 %v3660, %v3668
        %v3671 = vpack.c.bf16 %v3670, %v3669
        %v3672 = vpack.c.bf16 %v3623, %v3621
        %v3674 = vsel %vm2487, %v3671, 0
        %3676 = vmatpush.bf16.msra.mxu0 0
        %3677 = vmatpush.bf16.msra.mxu0 0
        %3678 = vmatpush.bf16.msra.mxu0 0
        %3679 = vmatpush.bf16.msra.mxu0 0
        %3680 = vmatpush.bf16.msra.mxu0 0
        %3681 = vmatpush.bf16.msra.mxu0 0
        %3682 = vmatpush.bf16.msra.mxu0 0
        %3683 = vmatpush.bf16.msra.mxu0 %v3672
        %3684 = vmatmul.bf16.gmra.mxu0 %v3674
        %v3685 = vpop.f32.mrf.mxu0
        %v3686 = vadd.f32 0.0, %v3685
        %v3687 = vpop.f32.mrf.mxu0
        %v3688 = vadd.f32 0.0, %v3687
        %3689 = vdwg.mxu0
        %v3690 = vpack.c.bf16 %v3688, %v3686
        %v3691 = vld [vmem:[%s51] sm:$0xf]
        %s3692 = scalar_lea.vmem %s53, 16
        %v3693 = vld [vmem:[%s3692] sm:$0xf]
        %v3694 = vld [vmem:[%s3692 + $0x4] sm:$0xf]
        %v3695 = vld [vmem:[%s3692 + $0x8] sm:$0xf]
        %v3696 = vld [vmem:[%s3692 + $0xc] sm:$0xf]
        %s3697 = scalar_lea.vmem %s45, 1
        %v3698 = vld [vmem:[%s3697] sm:$0x1]
        %v3700 = vperm.slane %v3698, 0
        %v3706 = vunpack.c.l.b16 %v3693
        %v3707 = vunpack.c.l.b16 %v3694
        %v3708 = vunpack.c.l.b16 %v3695
        %v3709 = vunpack.c.l.b16 %v3696
        %v3710 = vpack.c.b16 %v3707, %v3706
        %v3711 = vpack.c.b16 %v3709, %v3708
        %3714 = vmatpush.bf16.msra.mxu0 0
        %3715 = vmatpush.bf16.msra.mxu0 0
        %3716 = vmatpush.bf16.msra.mxu0 0
        %3717 = vmatpush.bf16.msra.mxu0 0
        %3718 = vmatpush.bf16.msra.mxu0 0
        %3719 = vmatpush.bf16.msra.mxu0 0
        %3720 = vmatpush.bf16.msra.mxu0 %v3711
        %3721 = vmatpush.bf16.msra.mxu0 %v3710
        %3722 = vmatmul.bf16.gmra.mxu0 %v3537
        %v3723 = vpop.f32.mrf.mxu0
        %v3724 = vadd.f32 %v3700, %v3723
        %v3725 = vpop.f32.mrf.mxu0
        %v3726 = vadd.f32 %v3700, %v3725
        %3727 = vdwg.mxu0
        %s3728 = scalar_lea.vmem %s49, 16
        %v3729 = vld [vmem:[%s3728] sm:$0xf]
        %v3730 = vld [vmem:[%s3728 + $0x4] sm:$0xf]
        %v3731 = vld [vmem:[%s3728 + $0x8] sm:$0xf]
        %v3732 = vld [vmem:[%s3728 + $0xc] sm:$0xf]
        %s3733 = scalar_lea.vmem %s41, 1
        %v3734 = vld [vmem:[%s3733] sm:$0x1]
        %v3736 = vperm.slane %v3734, 0
        %v3742 = vunpack.c.l.b16 %v3729
        %v3743 = vunpack.c.l.b16 %v3730
        %v3744 = vunpack.c.l.b16 %v3731
        %v3745 = vunpack.c.l.b16 %v3732
        %v3746 = vpack.c.b16 %v3743, %v3742
        %v3747 = vpack.c.b16 %v3745, %v3744
        %3750 = vmatpush.bf16.msra.mxu0 0
        %3751 = vmatpush.bf16.msra.mxu0 0
        %3752 = vmatpush.bf16.msra.mxu0 0
        %3753 = vmatpush.bf16.msra.mxu0 0
        %3754 = vmatpush.bf16.msra.mxu0 0
        %3755 = vmatpush.bf16.msra.mxu0 0
        %3756 = vmatpush.bf16.msra.mxu0 %v3747
        %3757 = vmatpush.bf16.msra.mxu0 %v3746
        %3758 = vmatmul.bf16.gmra.mxu0 %v3575
        %v3759 = vpop.f32.mrf.mxu0
        %v3760 = vadd.f32 %v3736, %v3759
        %v3761 = vpop.f32.mrf.mxu0
        %v3762 = vadd.f32 %v3736, %v3761
        %3763 = vdwg.mxu0
        %s3764 = scalar_lea.vmem %s55, 16
        %v3765 = vld [vmem:[%s3764] sm:$0xf]
        %v3766 = vld [vmem:[%s3764 + $0x4] sm:$0xf]
        %v3767 = vld [vmem:[%s3764 + $0x8] sm:$0xf]
        %v3768 = vld [vmem:[%s3764 + $0xc] sm:$0xf]
        %s3769 = scalar_lea.vmem %s47, 1
        %v3770 = vld [vmem:[%s3769] sm:$0x1]
        %v3772 = vperm.slane %v3770, 0
        %v3778 = vunpack.c.l.b16 %v3765
        %v3779 = vunpack.c.l.b16 %v3766
        %v3780 = vunpack.c.l.b16 %v3767
        %v3781 = vunpack.c.l.b16 %v3768
        %v3782 = vpack.c.b16 %v3779, %v3778
        %v3783 = vpack.c.b16 %v3781, %v3780
        %3786 = vmatpush.bf16.msra.mxu0 0
        %3787 = vmatpush.bf16.msra.mxu0 0
        %3788 = vmatpush.bf16.msra.mxu0 0
        %3789 = vmatpush.bf16.msra.mxu0 0
        %3790 = vmatpush.bf16.msra.mxu0 0
        %3791 = vmatpush.bf16.msra.mxu0 0
        %3792 = vmatpush.bf16.msra.mxu0 %v3783
        %3793 = vmatpush.bf16.msra.mxu0 %v3782
        %3794 = vmatmul.bf16.gmra.mxu0 %v3575
        %v3795 = vpop.f32.mrf.mxu0
        %v3796 = vadd.f32 %v3772, %v3795
        %v3797 = vpop.f32.mrf.mxu0
        %v3798 = vadd.f32 %v3772, %v3797
        %3799 = vdwg.mxu0
        %v3800 = vpack.c.bf16 %v3726, %v3724
        %v3801 = vpack.c.bf16 %v3762, %v3760
        %v3803 = vsel %vm2452, %v3800, 0
        %v3806 = vsel %vm2452, %v3801, 0
        %3808 = vmatpush.bf16.xpose.msra.mxu0 0
        %3809 = vmatpush.bf16.xpose.msra.mxu0 0
        %3810 = vmatpush.bf16.xpose.msra.mxu0 0
        %3811 = vmatpush.bf16.xpose.msra.mxu0 0
        %3812 = vmatpush.bf16.xpose.msra.mxu0 0
        %3813 = vmatpush.bf16.xpose.msra.mxu0 0
        %3814 = vmatpush.bf16.xpose.msra.mxu0 0
        %3815 = vmatpush.bf16.xpose.msra.mxu0 %v3806
        %3816 = vmatmul.bf16.gmra.mxu0 %v3803
        %v3817 = vpop.f32.mrf.mxu0
        %v3818 = vadd.f32 0.0, %v3817
        %v3819 = vpop.f32.mrf.mxu0
        %v3820 = vadd.f32 0.0, %v3819
        %3821 = vdwg.mxu0
        %v3822 = vmul.f32 %v3818, 0.35355338
        %v3823 = vmul.f32 %v3820, 0.35355338
        %v3824 = vsel %vm2487, %v3822, -inf
        %3825 = vmax.xlane.f32.xlu0 %v3824
        %v3826 = vpop.xlane.xlu0 %3825
        %v3827 = vsel %vm2487, %v3823, -inf
        %3828 = vmax.xlane.f32.xlu0 %v3827
        %v3829 = vpop.xlane.xlu0 %3828
        %v3830 = vsub.f32 %v3822, %v3826
        %v3831 = vsub.f32 %v3823, %v3829
        %v3832 = vmul.f32 %v3830, 1.442695
        %v3833 = vpow.pop %v3832
        %v3834 = vmul.f32 %v3831, 1.442695
        %v3835 = vpow.pop %v3834
        %v3836 = vsel %vm2487, %v3833, 0.0
        %3837 = vadd.xlane.f32.xlu0 %v3836
        %v3838 = vpop.xlane.xlu0 %3837
        %v3839 = vsel %vm2487, %v3835, 0.0
        %3840 = vadd.xlane.f32.xlu0 %v3839
        %v3841 = vpop.xlane.xlu0 %3840
        %v3842 = vrcp.pop %v3838
        %v3843 = vrcp.pop %v3841
        %v3844 = vmul.f32 %v3833, %v3842
        %v3845 = vmul.f32 %v3835, %v3843
        %v3846 = vpack.c.bf16 %v3845, %v3844
        %v3847 = vpack.c.bf16 %v3798, %v3796
        %v3849 = vsel %vm2487, %v3846, 0
        %3851 = vmatpush.bf16.msra.mxu0 0
        %3852 = vmatpush.bf16.msra.mxu0 0
        %3853 = vmatpush.bf16.msra.mxu0 0
        %3854 = vmatpush.bf16.msra.mxu0 0
        %3855 = vmatpush.bf16.msra.mxu0 0
        %3856 = vmatpush.bf16.msra.mxu0 0
        %3857 = vmatpush.bf16.msra.mxu0 0
        %3858 = vmatpush.bf16.msra.mxu0 %v3847
        %3859 = vmatmul.bf16.gmra.mxu0 %v3849
        %v3860 = vpop.f32.mrf.mxu0
        %v3861 = vadd.f32 0.0, %v3860
        %v3862 = vpop.f32.mrf.mxu0
        %v3863 = vadd.f32 0.0, %v3862
        %3864 = vdwg.mxu0
        %v3865 = vpack.c.bf16 %v3863, %v3861
        %s3866 = scalar_lea.vmem %s51, 4
        %v3867 = vld [vmem:[%s3866] sm:$0xf]
        %v3869 = vsel %vm2452, %v3865, 0
        %v3872 = vsel %vm2456, %v3867, 0
        %3874 = vmatpush.bf16.msra.mxu0 0
        %3875 = vmatpush.bf16.msra.mxu0 0
        %3876 = vmatpush.bf16.msra.mxu0 0
        %3877 = vmatpush.bf16.msra.mxu0 0
        %3878 = vmatpush.bf16.msra.mxu0 0
        %3879 = vmatpush.bf16.msra.mxu0 0
        %3880 = vmatpush.bf16.msra.mxu0 0
        %3881 = vmatpush.bf16.msra.mxu0 %v3872
        %3882 = vmatmul.bf16.gmra.mxu0 %v3869
        %v3883 = vpop.f32.mrf.mxu0
        %v3884 = vadd.f32 0.0, %v3883
        %v3885 = vpop.f32.mrf.mxu0
        %v3886 = vadd.f32 0.0, %v3885
        %3887 = vdwg.mxu0
        %v3889 = vsel %vm2452, %v3690, 0
        %v3892 = vsel %vm2456, %v3691, 0
        %3894 = vmatpush.bf16.msra.mxu0 0
        %3895 = vmatpush.bf16.msra.mxu0 0
        %3896 = vmatpush.bf16.msra.mxu0 0
        %3897 = vmatpush.bf16.msra.mxu0 0
        %3898 = vmatpush.bf16.msra.mxu0 0
        %3899 = vmatpush.bf16.msra.mxu0 0
        %3900 = vmatpush.bf16.msra.mxu0 0
        %3901 = vmatpush.bf16.msra.mxu0 %v3892
        %3902 = vmatmul.bf16.gmra.mxu0 %v3889
        %v3903 = vpop.f32.mrf.mxu0
        %v3904 = vadd.f32 %v3884, %v3903
        %v3905 = vpop.f32.mrf.mxu0
        %v3906 = vadd.f32 %v3886, %v3905
        %3907 = vdwg.mxu0
        %s3908 = scalar_lea.vmem %s53, 32
        %v3909 = vld [vmem:[%s3908] sm:$0xf]
        %v3910 = vld [vmem:[%s3908 + $0x4] sm:$0xf]
        %v3911 = vld [vmem:[%s3908 + $0x8] sm:$0xf]
        %v3912 = vld [vmem:[%s3908 + $0xc] sm:$0xf]
        %s3913 = scalar_lea.vmem %s45, 2
        %v3914 = vld [vmem:[%s3913] sm:$0x1]
        %v3916 = vperm.slane %v3914, 0
        %v3922 = vunpack.c.l.b16 %v3909
        %v3923 = vunpack.c.l.b16 %v3910
        %v3924 = vunpack.c.l.b16 %v3911
        %v3925 = vunpack.c.l.b16 %v3912
        %v3926 = vpack.c.b16 %v3923, %v3922
        %v3927 = vpack.c.b16 %v3925, %v3924
        %3930 = vmatpush.bf16.msra.mxu0 0
        %3931 = vmatpush.bf16.msra.mxu0 0
        %3932 = vmatpush.bf16.msra.mxu0 0
        %3933 = vmatpush.bf16.msra.mxu0 0
        %3934 = vmatpush.bf16.msra.mxu0 0
        %3935 = vmatpush.bf16.msra.mxu0 0
        %3936 = vmatpush.bf16.msra.mxu0 %v3927
        %3937 = vmatpush.bf16.msra.mxu0 %v3926
        %3938 = vmatmul.bf16.gmra.mxu0 %v3537
        %v3939 = vpop.f32.mrf.mxu0
        %v3940 = vadd.f32 %v3916, %v3939
        %v3941 = vpop.f32.mrf.mxu0
        %v3942 = vadd.f32 %v3916, %v3941
        %3943 = vdwg.mxu0
        %s3944 = scalar_lea.vmem %s49, 32
        %v3945 = vld [vmem:[%s3944] sm:$0xf]
        %v3946 = vld [vmem:[%s3944 + $0x4] sm:$0xf]
        %v3947 = vld [vmem:[%s3944 + $0x8] sm:$0xf]
        %v3948 = vld [vmem:[%s3944 + $0xc] sm:$0xf]
        %s3949 = scalar_lea.vmem %s41, 2
        %v3950 = vld [vmem:[%s3949] sm:$0x1]
        %v3952 = vperm.slane %v3950, 0
        %v3958 = vunpack.c.l.b16 %v3945
        %v3959 = vunpack.c.l.b16 %v3946
        %v3960 = vunpack.c.l.b16 %v3947
        %v3961 = vunpack.c.l.b16 %v3948
        %v3962 = vpack.c.b16 %v3959, %v3958
        %v3963 = vpack.c.b16 %v3961, %v3960
        %3966 = vmatpush.bf16.msra.mxu0 0
        %3967 = vmatpush.bf16.msra.mxu0 0
        %3968 = vmatpush.bf16.msra.mxu0 0
        %3969 = vmatpush.bf16.msra.mxu0 0
        %3970 = vmatpush.bf16.msra.mxu0 0
        %3971 = vmatpush.bf16.msra.mxu0 0
        %3972 = vmatpush.bf16.msra.mxu0 %v3963
        %3973 = vmatpush.bf16.msra.mxu0 %v3962
        %3974 = vmatmul.bf16.gmra.mxu0 %v3575
        %v3975 = vpop.f32.mrf.mxu0
        %v3976 = vadd.f32 %v3952, %v3975
        %v3977 = vpop.f32.mrf.mxu0
        %v3978 = vadd.f32 %v3952, %v3977
        %3979 = vdwg.mxu0
        %s3980 = scalar_lea.vmem %s55, 32
        %v3981 = vld [vmem:[%s3980] sm:$0xf]
        %v3982 = vld [vmem:[%s3980 + $0x4] sm:$0xf]
        %v3983 = vld [vmem:[%s3980 + $0x8] sm:$0xf]
        %v3984 = vld [vmem:[%s3980 + $0xc] sm:$0xf]
        %s3985 = scalar_lea.vmem %s47, 2
        %v3986 = vld [vmem:[%s3985] sm:$0x1]
        %v3988 = vperm.slane %v3986, 0
        %v3994 = vunpack.c.l.b16 %v3981
        %v3995 = vunpack.c.l.b16 %v3982
        %v3996 = vunpack.c.l.b16 %v3983
        %v3997 = vunpack.c.l.b16 %v3984
        %v3998 = vpack.c.b16 %v3995, %v3994
        %v3999 = vpack.c.b16 %v3997, %v3996
        %4002 = vmatpush.bf16.msra.mxu0 0
        %4003 = vmatpush.bf16.msra.mxu0 0
        %4004 = vmatpush.bf16.msra.mxu0 0
        %4005 = vmatpush.bf16.msra.mxu0 0
        %4006 = vmatpush.bf16.msra.mxu0 0
        %4007 = vmatpush.bf16.msra.mxu0 0
        %4008 = vmatpush.bf16.msra.mxu0 %v3999
        %4009 = vmatpush.bf16.msra.mxu0 %v3998
        %4010 = vmatmul.bf16.gmra.mxu0 %v3575
        %v4011 = vpop.f32.mrf.mxu0
        %v4012 = vadd.f32 %v3988, %v4011
        %v4013 = vpop.f32.mrf.mxu0
        %v4014 = vadd.f32 %v3988, %v4013
        %4015 = vdwg.mxu0
        %v4016 = vpack.c.bf16 %v3942, %v3940
        %v4017 = vpack.c.bf16 %v3978, %v3976
        %v4019 = vsel %vm2452, %v4016, 0
        %v4022 = vsel %vm2452, %v4017, 0
        %4024 = vmatpush.bf16.xpose.msra.mxu0 0
        %4025 = vmatpush.bf16.xpose.msra.mxu0 0
        %4026 = vmatpush.bf16.xpose.msra.mxu0 0
        %4027 = vmatpush.bf16.xpose.msra.mxu0 0
        %4028 = vmatpush.bf16.xpose.msra.mxu0 0
        %4029 = vmatpush.bf16.xpose.msra.mxu0 0
        %4030 = vmatpush.bf16.xpose.msra.mxu0 0
        %4031 = vmatpush.bf16.xpose.msra.mxu0 %v4022
        %4032 = vmatmul.bf16.gmra.mxu0 %v4019
        %v4033 = vpop.f32.mrf.mxu0
        %v4034 = vadd.f32 0.0, %v4033
        %v4035 = vpop.f32.mrf.mxu0
        %v4036 = vadd.f32 0.0, %v4035
        %4037 = vdwg.mxu0
        %v4038 = vmul.f32 %v4034, 0.35355338
        %v4039 = vmul.f32 %v4036, 0.35355338
        %v4040 = vsel %vm2487, %v4038, -inf
        %4041 = vmax.xlane.f32.xlu0 %v4040
        %v4042 = vpop.xlane.xlu0 %4041
        %v4043 = vsel %vm2487, %v4039, -inf
        %4044 = vmax.xlane.f32.xlu0 %v4043
        %v4045 = vpop.xlane.xlu0 %4044
        %v4046 = vsub.f32 %v4038, %v4042
        %v4047 = vsub.f32 %v4039, %v4045
        %v4048 = vmul.f32 %v4046, 1.442695
        %v4049 = vpow.pop %v4048
        %v4050 = vmul.f32 %v4047, 1.442695
        %v4051 = vpow.pop %v4050
        %v4052 = vsel %vm2487, %v4049, 0.0
        %4053 = vadd.xlane.f32.xlu0 %v4052
        %v4054 = vpop.xlane.xlu0 %4053
        %v4055 = vsel %vm2487, %v4051, 0.0
        %4056 = vadd.xlane.f32.xlu0 %v4055
        %v4057 = vpop.xlane.xlu0 %4056
        %v4058 = vrcp.pop %v4054
        %v4059 = vrcp.pop %v4057
        %v4060 = vmul.f32 %v4049, %v4058
        %v4061 = vmul.f32 %v4051, %v4059
        %v4062 = vpack.c.bf16 %v4061, %v4060
        %v4063 = vpack.c.bf16 %v4014, %v4012
        %v4065 = vsel %vm2487, %v4062, 0
        %4067 = vmatpush.bf16.msra.mxu0 0
        %4068 = vmatpush.bf16.msra.mxu0 0
        %4069 = vmatpush.bf16.msra.mxu0 0
        %4070 = vmatpush.bf16.msra.mxu0 0
        %4071 = vmatpush.bf16.msra.mxu0 0
        %4072 = vmatpush.bf16.msra.mxu0 0
        %4073 = vmatpush.bf16.msra.mxu0 0
        %4074 = vmatpush.bf16.msra.mxu0 %v4063
        %4075 = vmatmul.bf16.gmra.mxu0 %v4065
        %v4076 = vpop.f32.mrf.mxu0
        %v4077 = vadd.f32 0.0, %v4076
        %v4078 = vpop.f32.mrf.mxu0
        %v4079 = vadd.f32 0.0, %v4078
        %4080 = vdwg.mxu0
        %v4081 = vpack.c.bf16 %v4079, %v4077
        %s4082 = scalar_lea.vmem %s51, 8
        %v4083 = vld [vmem:[%s4082] sm:$0xf]
        %v4085 = vsel %vm2452, %v4081, 0
        %v4088 = vsel %vm2456, %v4083, 0
        %4090 = vmatpush.bf16.msra.mxu0 0
        %4091 = vmatpush.bf16.msra.mxu0 0
        %4092 = vmatpush.bf16.msra.mxu0 0
        %4093 = vmatpush.bf16.msra.mxu0 0
        %4094 = vmatpush.bf16.msra.mxu0 0
        %4095 = vmatpush.bf16.msra.mxu0 0
        %4096 = vmatpush.bf16.msra.mxu0 0
        %4097 = vmatpush.bf16.msra.mxu0 %v4088
        %4098 = vmatmul.bf16.gmra.mxu0 %v4085
        %v4099 = vpop.f32.mrf.mxu0
        %v4100 = vadd.f32 0.0, %v4099
        %v4101 = vpop.f32.mrf.mxu0
        %v4102 = vadd.f32 0.0, %v4101
        %4103 = vdwg.mxu0
        %v4104 = vadd.f32 %v3904, %v4100
        %v4105 = vadd.f32 %v3906, %v4102
        %s4106 = scalar_lea.vmem %s53, 48
        %v4107 = vld [vmem:[%s4106] sm:$0xf]
        %v4108 = vld [vmem:[%s4106 + $0x4] sm:$0xf]
        %v4109 = vld [vmem:[%s4106 + $0x8] sm:$0xf]
        %v4110 = vld [vmem:[%s4106 + $0xc] sm:$0xf]
        %s4111 = scalar_lea.vmem %s45, 3
        %v4112 = vld [vmem:[%s4111] sm:$0x1]
        %v4114 = vperm.slane %v4112, 0
        %v4120 = vunpack.c.l.b16 %v4107
        %v4121 = vunpack.c.l.b16 %v4108
        %v4122 = vunpack.c.l.b16 %v4109
        %v4123 = vunpack.c.l.b16 %v4110
        %v4124 = vpack.c.b16 %v4121, %v4120
        %v4125 = vpack.c.b16 %v4123, %v4122
        %4128 = vmatpush.bf16.msra.mxu0 0
        %4129 = vmatpush.bf16.msra.mxu0 0
        %4130 = vmatpush.bf16.msra.mxu0 0
        %4131 = vmatpush.bf16.msra.mxu0 0
        %4132 = vmatpush.bf16.msra.mxu0 0
        %4133 = vmatpush.bf16.msra.mxu0 0
        %4134 = vmatpush.bf16.msra.mxu0 %v4125
        %4135 = vmatpush.bf16.msra.mxu0 %v4124
        %4136 = vmatmul.bf16.gmra.mxu0 %v3537
        %v4137 = vpop.f32.mrf.mxu0
        %v4138 = vadd.f32 %v4114, %v4137
        %v4139 = vpop.f32.mrf.mxu0
        %v4140 = vadd.f32 %v4114, %v4139
        %4141 = vdwg.mxu0
        %s4142 = scalar_lea.vmem %s49, 48
        %v4143 = vld [vmem:[%s4142] sm:$0xf]
        %v4144 = vld [vmem:[%s4142 + $0x4] sm:$0xf]
        %v4145 = vld [vmem:[%s4142 + $0x8] sm:$0xf]
        %v4146 = vld [vmem:[%s4142 + $0xc] sm:$0xf]
        %s4147 = scalar_lea.vmem %s41, 3
        %v4148 = vld [vmem:[%s4147] sm:$0x1]
        %v4150 = vperm.slane %v4148, 0
        %v4156 = vunpack.c.l.b16 %v4143
        %v4157 = vunpack.c.l.b16 %v4144
        %v4158 = vunpack.c.l.b16 %v4145
        %v4159 = vunpack.c.l.b16 %v4146
        %v4160 = vpack.c.b16 %v4157, %v4156
        %v4161 = vpack.c.b16 %v4159, %v4158
        %4164 = vmatpush.bf16.msra.mxu0 0
        %4165 = vmatpush.bf16.msra.mxu0 0
        %4166 = vmatpush.bf16.msra.mxu0 0
        %4167 = vmatpush.bf16.msra.mxu0 0
        %4168 = vmatpush.bf16.msra.mxu0 0
        %4169 = vmatpush.bf16.msra.mxu0 0
        %4170 = vmatpush.bf16.msra.mxu0 %v4161
        %4171 = vmatpush.bf16.msra.mxu0 %v4160
        %4172 = vmatmul.bf16.gmra.mxu0 %v3575
        %v4173 = vpop.f32.mrf.mxu0
        %v4174 = vadd.f32 %v4150, %v4173
        %v4175 = vpop.f32.mrf.mxu0
        %v4176 = vadd.f32 %v4150, %v4175
        %4177 = vdwg.mxu0
        %s4178 = scalar_lea.vmem %s55, 48
        %v4179 = vld [vmem:[%s4178] sm:$0xf]
        %v4180 = vld [vmem:[%s4178 + $0x4] sm:$0xf]
        %v4181 = vld [vmem:[%s4178 + $0x8] sm:$0xf]
        %v4182 = vld [vmem:[%s4178 + $0xc] sm:$0xf]
        %s4183 = scalar_lea.vmem %s47, 3
        %v4184 = vld [vmem:[%s4183] sm:$0x1]
        %v4186 = vperm.slane %v4184, 0
        %v4192 = vunpack.c.l.b16 %v4179
        %v4193 = vunpack.c.l.b16 %v4180
        %v4194 = vunpack.c.l.b16 %v4181
        %v4195 = vunpack.c.l.b16 %v4182
        %v4196 = vpack.c.b16 %v4193, %v4192
        %v4197 = vpack.c.b16 %v4195, %v4194
        %4200 = vmatpush.bf16.msra.mxu0 0
        %4201 = vmatpush.bf16.msra.mxu0 0
        %4202 = vmatpush.bf16.msra.mxu0 0
        %4203 = vmatpush.bf16.msra.mxu0 0
        %4204 = vmatpush.bf16.msra.mxu0 0
        %4205 = vmatpush.bf16.msra.mxu0 0
        %4206 = vmatpush.bf16.msra.mxu0 %v4197
        %4207 = vmatpush.bf16.msra.mxu0 %v4196
        %4208 = vmatmul.bf16.gmra.mxu0 %v3575
        %v4209 = vpop.f32.mrf.mxu0
        %v4210 = vadd.f32 %v4186, %v4209
        %v4211 = vpop.f32.mrf.mxu0
        %v4212 = vadd.f32 %v4186, %v4211
        %4213 = vdwg.mxu0
        %v4214 = vpack.c.bf16 %v4140, %v4138
        %v4215 = vpack.c.bf16 %v4176, %v4174
        %v4217 = vsel %vm2452, %v4214, 0
        %v4220 = vsel %vm2452, %v4215, 0
        %4222 = vmatpush.bf16.xpose.msra.mxu0 0
        %4223 = vmatpush.bf16.xpose.msra.mxu0 0
        %4224 = vmatpush.bf16.xpose.msra.mxu0 0
        %4225 = vmatpush.bf16.xpose.msra.mxu0 0
        %4226 = vmatpush.bf16.xpose.msra.mxu0 0
        %4227 = vmatpush.bf16.xpose.msra.mxu0 0
        %4228 = vmatpush.bf16.xpose.msra.mxu0 0
        %4229 = vmatpush.bf16.xpose.msra.mxu0 %v4220
        %4230 = vmatmul.bf16.gmra.mxu0 %v4217
        %v4231 = vpop.f32.mrf.mxu0
        %v4232 = vadd.f32 0.0, %v4231
        %v4233 = vpop.f32.mrf.mxu0
        %v4234 = vadd.f32 0.0, %v4233
        %4235 = vdwg.mxu0
        %v4236 = vmul.f32 %v4232, 0.35355338
        %v4237 = vmul.f32 %v4234, 0.35355338
        %v4238 = vsel %vm2487, %v4236, -inf
        %4239 = vmax.xlane.f32.xlu0 %v4238
        %v4240 = vpop.xlane.xlu0 %4239
        %v4241 = vsel %vm2487, %v4237, -inf
        %4242 = vmax.xlane.f32.xlu0 %v4241
        %v4243 = vpop.xlane.xlu0 %4242
        %v4244 = vsub.f32 %v4236, %v4240
        %v4245 = vsub.f32 %v4237, %v4243
        %v4246 = vmul.f32 %v4244, 1.442695
        %v4247 = vpow.pop %v4246
        %v4248 = vmul.f32 %v4245, 1.442695
        %v4249 = vpow.pop %v4248
        %v4250 = vsel %vm2487, %v4247, 0.0
        %4251 = vadd.xlane.f32.xlu0 %v4250
        %v4252 = vpop.xlane.xlu0 %4251
        %v4253 = vsel %vm2487, %v4249, 0.0
        %4254 = vadd.xlane.f32.xlu0 %v4253
        %v4255 = vpop.xlane.xlu0 %4254
        %v4256 = vrcp.pop %v4252
        %v4257 = vrcp.pop %v4255
        %v4258 = vmul.f32 %v4247, %v4256
        %v4259 = vmul.f32 %v4249, %v4257
        %v4260 = vpack.c.bf16 %v4259, %v4258
        %v4261 = vpack.c.bf16 %v4212, %v4210
        %v4263 = vsel %vm2487, %v4260, 0
        %4265 = vmatpush.bf16.msra.mxu0 0
        %4266 = vmatpush.bf16.msra.mxu0 0
        %4267 = vmatpush.bf16.msra.mxu0 0
        %4268 = vmatpush.bf16.msra.mxu0 0
        %4269 = vmatpush.bf16.msra.mxu0 0
        %4270 = vmatpush.bf16.msra.mxu0 0
        %4271 = vmatpush.bf16.msra.mxu0 0
        %4272 = vmatpush.bf16.msra.mxu0 %v4261
        %4273 = vmatmul.bf16.gmra.mxu0 %v4263
        %v4274 = vpop.f32.mrf.mxu0
        %v4275 = vadd.f32 0.0, %v4274
        %v4276 = vpop.f32.mrf.mxu0
        %v4277 = vadd.f32 0.0, %v4276
        %4278 = vdwg.mxu0
        %v4279 = vpack.c.bf16 %v4277, %v4275
        %s4280 = scalar_lea.vmem %s51, 12
        %v4281 = vld [vmem:[%s4280] sm:$0xf]
        %v4283 = vsel %vm2452, %v4279, 0
        %v4286 = vsel %vm2456, %v4281, 0
        %4288 = vmatpush.bf16.msra.mxu0 0
        %4289 = vmatpush.bf16.msra.mxu0 0
        %4290 = vmatpush.bf16.msra.mxu0 0
        %4291 = vmatpush.bf16.msra.mxu0 0
        %4292 = vmatpush.bf16.msra.mxu0 0
        %4293 = vmatpush.bf16.msra.mxu0 0
        %4294 = vmatpush.bf16.msra.mxu0 0
        %4295 = vmatpush.bf16.msra.mxu0 %v4286
        %4296 = vmatmul.bf16.gmra.mxu0 %v4283
        %v4297 = vpop.f32.mrf.mxu0
        %v4298 = vadd.f32 0.0, %v4297
        %v4299 = vpop.f32.mrf.mxu0
        %v4300 = vadd.f32 0.0, %v4299
        %4301 = vdwg.mxu0
        %v4302 = vadd.f32 %v4104, %v4298
        %v4303 = vadd.f32 %v4105, %v4300
        %v4304 = vld [vmem:[%s43] sm:$0x1]
        %v4306 = vperm.slane %v4304, 0
        %v4308 = vadd.f32 %v4302, %v4306
        %v4309 = vadd.f32 %v4303, %v4306
        %v4310 = vld [vmem:[%s89] sm:$0xf]
        %v4311 = vld [vmem:[%s89 + $0x4] sm:$0xf]
        %v4312 = vld [vmem:[%s89 + $0x8] sm:$0xf]
        %v4313 = vld [vmem:[%s89 + $0xc] sm:$0xf]
        %v4314 = vld [vmem:[#allocation7] sm:$0x1]
        %v4315 = vpack.c.bf16 %v4309, %v4308
        %v4317 = vperm.slane %v4314, 0
        %v4323 = vunpack.c.l.b16 %v4310
        %v4324 = vunpack.c.l.b16 %v4311
        %v4325 = vunpack.c.l.b16 %v4312
        %v4326 = vunpack.c.l.b16 %v4313
        %v4327 = vpack.c.b16 %v4324, %v4323
        %v4328 = vpack.c.b16 %v4326, %v4325
        %v4332 = vsel %vm2536, %v4315, 0
        %4334 = vmatpush.bf16.msra.mxu0 0
        %4335 = vmatpush.bf16.msra.mxu0 0
        %4336 = vmatpush.bf16.msra.mxu0 0
        %4337 = vmatpush.bf16.msra.mxu0 0
        %4338 = vmatpush.bf16.msra.mxu0 0
        %4339 = vmatpush.bf16.msra.mxu0 0
        %4340 = vmatpush.bf16.msra.mxu0 %v4328
        %4341 = vmatpush.bf16.msra.mxu0 %v4327
        %4342 = vmatmul.bf16.gmra.mxu0 %v4332
        %v4343 = vpop.f32.mrf.mxu0
        %v4344 = vadd.f32 %v4317, %v4343
        %v4345 = vpop.f32.mrf.mxu0
        %v4346 = vadd.f32 %v4317, %v4345
        %4347 = vdwg.mxu0
        %v4348 = vmax.f32 %v4344, 0.0
        %v4349 = vmax.f32 %v4346, 0.0
        %v4350 = vld [vmem:[%s91] sm:$0xf]
        %v4351 = vld [vmem:[%s91 + $0x4] sm:$0xf]
        %v4352 = vld [vmem:[%s91 + $0x8] sm:$0xf]
        %v4353 = vld [vmem:[%s91 + $0xc] sm:$0xf]
        %v4354 = vld [vmem:[%s91 + $0x10] sm:$0xf]
        %v4355 = vld [vmem:[%s91 + $0x14] sm:$0xf]
        %v4356 = vld [vmem:[%s91 + $0x18] sm:$0xf]
        %v4357 = vld [vmem:[%s91 + $0x1c] sm:$0xf]
        %v4358 = vld [vmem:[#allocation8] sm:$0x1]
        %v4359 = vpack.c.bf16 %v4349, %v4348
        %v4361 = vperm.slane %v4358, 0
        %v4371 = vunpack.c.l.b16 %v4350
        %v4372 = vunpack.c.l.b16 %v4351
        %v4373 = vunpack.c.l.b16 %v4352
        %v4374 = vunpack.c.l.b16 %v4353
        %v4375 = vunpack.c.l.b16 %v4354
        %v4376 = vunpack.c.l.b16 %v4355
        %v4377 = vunpack.c.l.b16 %v4356
        %v4378 = vunpack.c.l.b16 %v4357
        %v4379 = vpack.c.b16 %v4372, %v4371
        %v4380 = vpack.c.b16 %v4374, %v4373
        %v4381 = vpack.c.b16 %v4376, %v4375
        %v4382 = vpack.c.b16 %v4378, %v4377
        %vm4387 = vcmask 523264
        %v4389 = vsel %vm4387, %v4359, 0
        %4391 = vmatpush.bf16.msra.mxu0 0
        %4392 = vmatpush.bf16.msra.mxu0 0
        %4393 = vmatpush.bf16.msra.mxu0 0
        %4394 = vmatpush.bf16.msra.mxu0 0
        %4395 = vmatpush.bf16.msra.mxu0 %v4382
        %4396 = vmatpush.bf16.msra.mxu0 %v4381
        %4397 = vmatpush.bf16.msra.mxu0 %v4380
        %4398 = vmatpush.bf16.msra.mxu0 %v4379
        %4399 = vmatmul.bf16.gmra.mxu0 %v4389
        %v4400 = vpop.f32.mrf.mxu0
        %v4401 = vadd.f32 %v4361, %v4400
        %v4402 = vpop.f32.mrf.mxu0
        %v4403 = vadd.f32 %v4361, %v4402
        %4404 = vdwg.mxu0
        %v4405 = vld [vmem:[#allocation11] sm:$0x1]
        %v4406 = vld [vmem:[#allocation10] sm:$0x1]
        %v4407 = vsel %vm2536, %v4401, 0.0
        %4408 = vadd.xlane.f32.xlu0 %v4407
        %v4409 = vpop.xlane.xlu0 %4408
        %v4410 = vsel %vm2536, %v4403, 0.0
        %4411 = vadd.xlane.f32.xlu0 %v4410
        %v4412 = vpop.xlane.xlu0 %4411
        %v4413 = vrcp.pop 32.0
        %v4414 = vmul.f32 32.0, %v4413
        %v4415 = vsub.f32 1.0, %v4414
        %v4416 = vmul.f32 %v4413, %v4415
        %v4417 = vadd.f32 %v4413, %v4416
        %vm4418 = vweird.f32 %v4413
        %v4419 = vsel %vm4418, %v4413, %v4417
        %v4420 = vmul.f32 %v4409, %v4419
        %v4421 = vmul.f32 %v4412, %v4419
        %v4422 = vsub.f32 %v4401, %v4420
        %v4423 = vsub.f32 %v4403, %v4421
        %v4424 = vmul.f32 %v4422, %v4422
        %v4425 = vmul.f32 %v4423, %v4423
        %v4426 = vsel %vm2536, %v4424, 0.0
        %4427 = vadd.xlane.f32.xlu0 %v4426
        %v4428 = vpop.xlane.xlu0 %4427
        %v4429 = vsel %vm2536, %v4425, 0.0
        %4430 = vadd.xlane.f32.xlu0 %v4429
        %v4431 = vpop.xlane.xlu0 %4430
        %v4432 = vmul.f32 %v4428, %v4419
        %v4433 = vmul.f32 %v4431, %v4419
        %v4434 = vadd.f32 %v4432, 1e-05
        %v4435 = vadd.f32 %v4433, 1e-05
        %v4436 = vrsqrt.pop %v4434
        %v4437 = vmul.f32 %v4436, %v4434
        %v4438 = vmul.f32 %v4437, %v4436
        %v4439 = vmul.f32 0.5, %v4438
        %v4440 = vsub.f32 1.5, %v4439
        %v4441 = vmul.f32 %v4436, %v4440
        %vm4442 = vweird.f32 %v4434
        %vm4443 = vweird.f32 %v4436
        %vm4444 = vmor %vm4442, %vm4443
        %v4445 = vsel %vm4444, %v4436, %v4441
        %v4446 = vrsqrt.pop %v4435
        %v4447 = vmul.f32 %v4446, %v4435
        %v4448 = vmul.f32 %v4447, %v4446
        %v4449 = vmul.f32 0.5, %v4448
        %v4450 = vsub.f32 1.5, %v4449
        %v4451 = vmul.f32 %v4446, %v4450
        %vm4452 = vweird.f32 %v4435
        %vm4453 = vweird.f32 %v4446
        %vm4454 = vmor %vm4452, %vm4453
        %v4455 = vsel %vm4454, %v4446, %v4451
        %v4456 = vmul.f32 %v4422, %v4445
        %v4457 = vmul.f32 %v4423, %v4455
        %v4459 = vperm.slane %v4405, 0
        %v4461 = vmul.f32 %v4456, %v4459
        %v4462 = vmul.f32 %v4457, %v4459
        %v4464 = vperm.slane %v4406, 0
        %v4466 = vadd.f32 %v4461, %v4464
        %v4467 = vadd.f32 %v4462, %v4464
        %v4468 = vld [vmem:[%s37] sm:$0xf]
        %v4469 = vld [vmem:[%s37 + $0x4] sm:$0xf]
        %v4470 = vld [vmem:[%s37 + $0x8] sm:$0xf]
        %v4471 = vld [vmem:[%s37 + $0xc] sm:$0xf]
        %v4472 = vld [vmem:[%s29] sm:$0x1]
        %v4473 = vpack.c.bf16 %v4467, %v4466
        %v4475 = vperm.slane %v4472, 0
        %v4481 = vunpack.c.l.b16 %v4468
        %v4482 = vunpack.c.l.b16 %v4469
        %v4483 = vunpack.c.l.b16 %v4470
        %v4484 = vunpack.c.l.b16 %v4471
        %v4485 = vpack.c.b16 %v4482, %v4481
        %v4486 = vpack.c.b16 %v4484, %v4483
        %v4490 = vsel %vm2536, %v4473, 0
        %4492 = vmatpush.bf16.msra.mxu0 0
        %4493 = vmatpush.bf16.msra.mxu0 0
        %4494 = vmatpush.bf16.msra.mxu0 0
        %4495 = vmatpush.bf16.msra.mxu0 0
        %4496 = vmatpush.bf16.msra.mxu0 0
        %4497 = vmatpush.bf16.msra.mxu0 0
        %4498 = vmatpush.bf16.msra.mxu0 %v4486
        %4499 = vmatpush.bf16.msra.mxu0 %v4485
        %4500 = vmatmul.bf16.gmra.mxu0 %v4490
        %v4501 = vpop.f32.mrf.mxu0
        %v4502 = vadd.f32 %v4475, %v4501
        %v4503 = vpop.f32.mrf.mxu0
        %v4504 = vadd.f32 %v4475, %v4503
        %4505 = vdwg.mxu0
        %v4506 = vld [vmem:[%s33] sm:$0xf]
        %v4507 = vld [vmem:[%s33 + $0x4] sm:$0xf]
        %v4508 = vld [vmem:[%s33 + $0x8] sm:$0xf]
        %v4509 = vld [vmem:[%s33 + $0xc] sm:$0xf]
        %v4510 = vld [vmem:[%s25] sm:$0x1]
        %v4512 = vperm.slane %v4510, 0
        %v4518 = vunpack.c.l.b16 %v4506
        %v4519 = vunpack.c.l.b16 %v4507
        %v4520 = vunpack.c.l.b16 %v4508
        %v4521 = vunpack.c.l.b16 %v4509
        %v4522 = vpack.c.b16 %v4519, %v4518
        %v4523 = vpack.c.b16 %v4521, %v4520
        %4526 = vmatpush.bf16.msra.mxu0 0
        %4527 = vmatpush.bf16.msra.mxu0 0
        %4528 = vmatpush.bf16.msra.mxu0 0
        %4529 = vmatpush.bf16.msra.mxu0 0
        %4530 = vmatpush.bf16.msra.mxu0 0
        %4531 = vmatpush.bf16.msra.mxu0 0
        %4532 = vmatpush.bf16.msra.mxu0 %v4523
        %4533 = vmatpush.bf16.msra.mxu0 %v4522
        %4534 = vmatmul.bf16.gmra.mxu0 %v4490
        %v4535 = vpop.f32.mrf.mxu0
        %v4536 = vadd.f32 %v4512, %v4535
        %v4537 = vpop.f32.mrf.mxu0
        %v4538 = vadd.f32 %v4512, %v4537
        %4539 = vdwg.mxu0
        %v4540 = vld [vmem:[%s39] sm:$0xf]
        %v4541 = vld [vmem:[%s39 + $0x4] sm:$0xf]
        %v4542 = vld [vmem:[%s39 + $0x8] sm:$0xf]
        %v4543 = vld [vmem:[%s39 + $0xc] sm:$0xf]
        %v4544 = vld [vmem:[%s31] sm:$0x1]
        %v4546 = vperm.slane %v4544, 0
        %v4552 = vunpack.c.l.b16 %v4540
        %v4553 = vunpack.c.l.b16 %v4541
        %v4554 = vunpack.c.l.b16 %v4542
        %v4555 = vunpack.c.l.b16 %v4543
        %v4556 = vpack.c.b16 %v4553, %v4552
        %v4557 = vpack.c.b16 %v4555, %v4554
        %4560 = vmatpush.bf16.msra.mxu0 0
        %4561 = vmatpush.bf16.msra.mxu0 0
        %4562 = vmatpush.bf16.msra.mxu0 0
        %4563 = vmatpush.bf16.msra.mxu0 0
        %4564 = vmatpush.bf16.msra.mxu0 0
        %4565 = vmatpush.bf16.msra.mxu0 0
        %4566 = vmatpush.bf16.msra.mxu0 %v4557
        %4567 = vmatpush.bf16.msra.mxu0 %v4556
        %4568 = vmatmul.bf16.gmra.mxu0 %v4490
        %v4569 = vpop.f32.mrf.mxu0
        %v4570 = vadd.f32 %v4546, %v4569
        %v4571 = vpop.f32.mrf.mxu0
        %v4572 = vadd.f32 %v4546, %v4571
        %4573 = vdwg.mxu0
        %v4574 = vpack.c.bf16 %v4504, %v4502
        %v4575 = vpack.c.bf16 %v4538, %v4536
        %v4577 = vsel %vm2452, %v4574, 0
        %v4580 = vsel %vm2452, %v4575, 0
        %4582 = vmatpush.bf16.xpose.msra.mxu0 0
        %4583 = vmatpush.bf16.xpose.msra.mxu0 0
        %4584 = vmatpush.bf16.xpose.msra.mxu0 0
        %4585 = vmatpush.bf16.xpose.msra.mxu0 0
        %4586 = vmatpush.bf16.xpose.msra.mxu0 0
        %4587 = vmatpush.bf16.xpose.msra.mxu0 0
        %4588 = vmatpush.bf16.xpose.msra.mxu0 0
        %4589 = vmatpush.bf16.xpose.msra.mxu0 %v4580
        %4590 = vmatmul.bf16.gmra.mxu0 %v4577
        %v4591 = vpop.f32.mrf.mxu0
        %v4592 = vadd.f32 0.0, %v4591
        %v4593 = vpop.f32.mrf.mxu0
        %v4594 = vadd.f32 0.0, %v4593
        %4595 = vdwg.mxu0
        %v4596 = vmul.f32 %v4592, 0.35355338
        %v4597 = vmul.f32 %v4594, 0.35355338
        %v4598 = vsel %vm2487, %v4596, -inf
        %4599 = vmax.xlane.f32.xlu0 %v4598
        %v4600 = vpop.xlane.xlu0 %4599
        %v4601 = vsel %vm2487, %v4597, -inf
        %4602 = vmax.xlane.f32.xlu0 %v4601
        %v4603 = vpop.xlane.xlu0 %4602
        %v4604 = vsub.f32 %v4596, %v4600
        %v4605 = vsub.f32 %v4597, %v4603
        %v4606 = vmul.f32 %v4604, 1.442695
        %v4607 = vpow.pop %v4606
        %v4608 = vmul.f32 %v4605, 1.442695
        %v4609 = vpow.pop %v4608
        %v4610 = vsel %vm2487, %v4607, 0.0
        %4611 = vadd.xlane.f32.xlu0 %v4610
        %v4612 = vpop.xlane.xlu0 %4611
        %v4613 = vsel %vm2487, %v4609, 0.0
        %4614 = vadd.xlane.f32.xlu0 %v4613
        %v4615 = vpop.xlane.xlu0 %4614
        %v4616 = vrcp.pop %v4612
        %v4617 = vrcp.pop %v4615
        %v4618 = vmul.f32 %v4607, %v4616
        %v4619 = vmul.f32 %v4609, %v4617
        %v4620 = vpack.c.bf16 %v4619, %v4618
        %v4621 = vpack.c.bf16 %v4572, %v4570
        %v4623 = vsel %vm2487, %v4620, 0
        %4625 = vmatpush.bf16.msra.mxu0 0
        %4626 = vmatpush.bf16.msra.mxu0 0
        %4627 = vmatpush.bf16.msra.mxu0 0
        %4628 = vmatpush.bf16.msra.mxu0 0
        %4629 = vmatpush.bf16.msra.mxu0 0
        %4630 = vmatpush.bf16.msra.mxu0 0
        %4631 = vmatpush.bf16.msra.mxu0 0
        %4632 = vmatpush.bf16.msra.mxu0 %v4621
        %4633 = vmatmul.bf16.gmra.mxu0 %v4623
        %v4634 = vpop.f32.mrf.mxu0
        %v4635 = vadd.f32 0.0, %v4634
        %v4636 = vpop.f32.mrf.mxu0
        %v4637 = vadd.f32 0.0, %v4636
        %4638 = vdwg.mxu0
        %v4639 = vpack.c.bf16 %v4637, %v4635
        %v4640 = vld [vmem:[%s35] sm:$0xf]
        %s4641 = scalar_lea.vmem %s37, 16
        %v4642 = vld [vmem:[%s4641] sm:$0xf]
        %v4643 = vld [vmem:[%s4641 + $0x4] sm:$0xf]
        %v4644 = vld [vmem:[%s4641 + $0x8] sm:$0xf]
        %v4645 = vld [vmem:[%s4641 + $0xc] sm:$0xf]
        %s4646 = scalar_lea.vmem %s29, 1
        %v4647 = vld [vmem:[%s4646] sm:$0x1]
        %v4649 = vperm.slane %v4647, 0
        %v4655 = vunpack.c.l.b16 %v4642
        %v4656 = vunpack.c.l.b16 %v4643
        %v4657 = vunpack.c.l.b16 %v4644
        %v4658 = vunpack.c.l.b16 %v4645
        %v4659 = vpack.c.b16 %v4656, %v4655
        %v4660 = vpack.c.b16 %v4658, %v4657
        %4663 = vmatpush.bf16.msra.mxu0 0
        %4664 = vmatpush.bf16.msra.mxu0 0
        %4665 = vmatpush.bf16.msra.mxu0 0
        %4666 = vmatpush.bf16.msra.mxu0 0
        %4667 = vmatpush.bf16.msra.mxu0 0
        %4668 = vmatpush.bf16.msra.mxu0 0
        %4669 = vmatpush.bf16.msra.mxu0 %v4660
        %4670 = vmatpush.bf16.msra.mxu0 %v4659
        %4671 = vmatmul.bf16.gmra.mxu0 %v4490
        %v4672 = vpop.f32.mrf.mxu0
        %v4673 = vadd.f32 %v4649, %v4672
        %v4674 = vpop.f32.mrf.mxu0
        %v4675 = vadd.f32 %v4649, %v4674
        %4676 = vdwg.mxu0
        %s4677 = scalar_lea.vmem %s33, 16
        %v4678 = vld [vmem:[%s4677] sm:$0xf]
        %v4679 = vld [vmem:[%s4677 + $0x4] sm:$0xf]
        %v4680 = vld [vmem:[%s4677 + $0x8] sm:$0xf]
        %v4681 = vld [vmem:[%s4677 + $0xc] sm:$0xf]
        %s4682 = scalar_lea.vmem %s25, 1
        %v4683 = vld [vmem:[%s4682] sm:$0x1]
        %v4685 = vperm.slane %v4683, 0
        %v4691 = vunpack.c.l.b16 %v4678
        %v4692 = vunpack.c.l.b16 %v4679
        %v4693 = vunpack.c.l.b16 %v4680
        %v4694 = vunpack.c.l.b16 %v4681
        %v4695 = vpack.c.b16 %v4692, %v4691
        %v4696 = vpack.c.b16 %v4694, %v4693
        %4699 = vmatpush.bf16.msra.mxu0 0
        %4700 = vmatpush.bf16.msra.mxu0 0
        %4701 = vmatpush.bf16.msra.mxu0 0
        %4702 = vmatpush.bf16.msra.mxu0 0
        %4703 = vmatpush.bf16.msra.mxu0 0
        %4704 = vmatpush.bf16.msra.mxu0 0
        %4705 = vmatpush.bf16.msra.mxu0 %v4696
        %4706 = vmatpush.bf16.msra.mxu0 %v4695
        %4707 = vmatmul.bf16.gmra.mxu0 %v4490
        %v4708 = vpop.f32.mrf.mxu0
        %v4709 = vadd.f32 %v4685, %v4708
        %v4710 = vpop.f32.mrf.mxu0
        %v4711 = vadd.f32 %v4685, %v4710
        %4712 = vdwg.mxu0
        %s4713 = scalar_lea.vmem %s39, 16
        %v4714 = vld [vmem:[%s4713] sm:$0xf]
        %v4715 = vld [vmem:[%s4713 + $0x4] sm:$0xf]
        %v4716 = vld [vmem:[%s4713 + $0x8] sm:$0xf]
        %v4717 = vld [vmem:[%s4713 + $0xc] sm:$0xf]
        %s4718 = scalar_lea.vmem %s31, 1
        %v4719 = vld [vmem:[%s4718] sm:$0x1]
        %v4721 = vperm.slane %v4719, 0
        %v4727 = vunpack.c.l.b16 %v4714
        %v4728 = vunpack.c.l.b16 %v4715
        %v4729 = vunpack.c.l.b16 %v4716
        %v4730 = vunpack.c.l.b16 %v4717
        %v4731 = vpack.c.b16 %v4728, %v4727
        %v4732 = vpack.c.b16 %v4730, %v4729
        %4735 = vmatpush.bf16.msra.mxu0 0
        %4736 = vmatpush.bf16.msra.mxu0 0
        %4737 = vmatpush.bf16.msra.mxu0 0
        %4738 = vmatpush.bf16.msra.mxu0 0
        %4739 = vmatpush.bf16.msra.mxu0 0
        %4740 = vmatpush.bf16.msra.mxu0 0
        %4741 = vmatpush.bf16.msra.mxu0 %v4732
        %4742 = vmatpush.bf16.msra.mxu0 %v4731
        %4743 = vmatmul.bf16.gmra.mxu0 %v4490
        %v4744 = vpop.f32.mrf.mxu0
        %v4745 = vadd.f32 %v4721, %v4744
        %v4746 = vpop.f32.mrf.mxu0
        %v4747 = vadd.f32 %v4721, %v4746
        %4748 = vdwg.mxu0
        %v4749 = vpack.c.bf16 %v4675, %v4673
        %v4750 = vpack.c.bf16 %v4711, %v4709
        %v4752 = vsel %vm2452, %v4749, 0
        %v4755 = vsel %vm2452, %v4750, 0
        %4757 = vmatpush.bf16.xpose.msra.mxu0 0
        %4758 = vmatpush.bf16.xpose.msra.mxu0 0
        %4759 = vmatpush.bf16.xpose.msra.mxu0 0
        %4760 = vmatpush.bf16.xpose.msra.mxu0 0
        %4761 = vmatpush.bf16.xpose.msra.mxu0 0
        %4762 = vmatpush.bf16.xpose.msra.mxu0 0
        %4763 = vmatpush.bf16.xpose.msra.mxu0 0
        %4764 = vmatpush.bf16.xpose.msra.mxu0 %v4755
        %4765 = vmatmul.bf16.gmra.mxu0 %v4752
        %v4766 = vpop.f32.mrf.mxu0
        %v4767 = vadd.f32 0.0, %v4766
        %v4768 = vpop.f32.mrf.mxu0
        %v4769 = vadd.f32 0.0, %v4768
        %4770 = vdwg.mxu0
        %v4771 = vmul.f32 %v4767, 0.35355338
        %v4772 = vmul.f32 %v4769, 0.35355338
        %v4773 = vsel %vm2487, %v4771, -inf
        %4774 = vmax.xlane.f32.xlu0 %v4773
        %v4775 = vpop.xlane.xlu0 %4774
        %v4776 = vsel %vm2487, %v4772, -inf
        %4777 = vmax.xlane.f32.xlu0 %v4776
        %v4778 = vpop.xlane.xlu0 %4777
        %v4779 = vsub.f32 %v4771, %v4775
        %v4780 = vsub.f32 %v4772, %v4778
        %v4781 = vmul.f32 %v4779, 1.442695
        %v4782 = vpow.pop %v4781
        %v4783 = vmul.f32 %v4780, 1.442695
        %v4784 = vpow.pop %v4783
        %v4785 = vsel %vm2487, %v4782, 0.0
        %4786 = vadd.xlane.f32.xlu0 %v4785
        %v4787 = vpop.xlane.xlu0 %4786
        %v4788 = vsel %vm2487, %v4784, 0.0
        %4789 = vadd.xlane.f32.xlu0 %v4788
        %v4790 = vpop.xlane.xlu0 %4789
        %v4791 = vrcp.pop %v4787
        %v4792 = vrcp.pop %v4790
        %v4793 = vmul.f32 %v4782, %v4791
        %v4794 = vmul.f32 %v4784, %v4792
        %v4795 = vpack.c.bf16 %v4794, %v4793
        %v4796 = vpack.c.bf16 %v4747, %v4745
        %v4798 = vsel %vm2487, %v4795, 0
        %4800 = vmatpush.bf16.msra.mxu0 0
        %4801 = vmatpush.bf16.msra.mxu0 0
        %4802 = vmatpush.bf16.msra.mxu0 0
        %4803 = vmatpush.bf16.msra.mxu0 0
        %4804 = vmatpush.bf16.msra.mxu0 0
        %4805 = vmatpush.bf16.msra.mxu0 0
        %4806 = vmatpush.bf16.msra.mxu0 0
        %4807 = vmatpush.bf16.msra.mxu0 %v4796
        %4808 = vmatmul.bf16.gmra.mxu0 %v4798
        %v4809 = vpop.f32.mrf.mxu0
        %v4810 = vadd.f32 0.0, %v4809
        %v4811 = vpop.f32.mrf.mxu0
        %v4812 = vadd.f32 0.0, %v4811
        %4813 = vdwg.mxu0
        %v4814 = vpack.c.bf16 %v4812, %v4810
        %s4815 = scalar_lea.vmem %s35, 4
        %v4816 = vld [vmem:[%s4815] sm:$0xf]
        %v4818 = vsel %vm2452, %v4814, 0
        %v4821 = vsel %vm2456, %v4816, 0
        %4823 = vmatpush.bf16.msra.mxu0 0
        %4824 = vmatpush.bf16.msra.mxu0 0
        %4825 = vmatpush.bf16.msra.mxu0 0
        %4826 = vmatpush.bf16.msra.mxu0 0
        %4827 = vmatpush.bf16.msra.mxu0 0
        %4828 = vmatpush.bf16.msra.mxu0 0
        %4829 = vmatpush.bf16.msra.mxu0 0
        %4830 = vmatpush.bf16.msra.mxu0 %v4821
        %4831 = vmatmul.bf16.gmra.mxu0 %v4818
        %v4832 = vpop.f32.mrf.mxu0
        %v4833 = vadd.f32 0.0, %v4832
        %v4834 = vpop.f32.mrf.mxu0
        %v4835 = vadd.f32 0.0, %v4834
        %4836 = vdwg.mxu0
        %v4838 = vsel %vm2452, %v4639, 0
        %v4841 = vsel %vm2456, %v4640, 0
        %4843 = vmatpush.bf16.msra.mxu0 0
        %4844 = vmatpush.bf16.msra.mxu0 0
        %4845 = vmatpush.bf16.msra.mxu0 0
        %4846 = vmatpush.bf16.msra.mxu0 0
        %4847 = vmatpush.bf16.msra.mxu0 0
        %4848 = vmatpush.bf16.msra.mxu0 0
        %4849 = vmatpush.bf16.msra.mxu0 0
        %4850 = vmatpush.bf16.msra.mxu0 %v4841
        %4851 = vmatmul.bf16.gmra.mxu0 %v4838
        %v4852 = vpop.f32.mrf.mxu0
        %v4853 = vadd.f32 %v4833, %v4852
        %v4854 = vpop.f32.mrf.mxu0
        %v4855 = vadd.f32 %v4835, %v4854
        %4856 = vdwg.mxu0
        %s4857 = scalar_lea.vmem %s37, 32
        %v4858 = vld [vmem:[%s4857] sm:$0xf]
        %v4859 = vld [vmem:[%s4857 + $0x4] sm:$0xf]
        %v4860 = vld [vmem:[%s4857 + $0x8] sm:$0xf]
        %v4861 = vld [vmem:[%s4857 + $0xc] sm:$0xf]
        %s4862 = scalar_lea.vmem %s29, 2
        %v4863 = vld [vmem:[%s4862] sm:$0x1]
        %v4865 = vperm.slane %v4863, 0
        %v4871 = vunpack.c.l.b16 %v4858
        %v4872 = vunpack.c.l.b16 %v4859
        %v4873 = vunpack.c.l.b16 %v4860
        %v4874 = vunpack.c.l.b16 %v4861
        %v4875 = vpack.c.b16 %v4872, %v4871
        %v4876 = vpack.c.b16 %v4874, %v4873
        %4879 = vmatpush.bf16.msra.mxu0 0
        %4880 = vmatpush.bf16.msra.mxu0 0
        %4881 = vmatpush.bf16.msra.mxu0 0
        %4882 = vmatpush.bf16.msra.mxu0 0
        %4883 = vmatpush.bf16.msra.mxu0 0
        %4884 = vmatpush.bf16.msra.mxu0 0
        %4885 = vmatpush.bf16.msra.mxu0 %v4876
        %4886 = vmatpush.bf16.msra.mxu0 %v4875
        %4887 = vmatmul.bf16.gmra.mxu0 %v4490
        %v4888 = vpop.f32.mrf.mxu0
        %v4889 = vadd.f32 %v4865, %v4888
        %v4890 = vpop.f32.mrf.mxu0
        %v4891 = vadd.f32 %v4865, %v4890
        %4892 = vdwg.mxu0
        %s4893 = scalar_lea.vmem %s33, 32
        %v4894 = vld [vmem:[%s4893] sm:$0xf]
        %v4895 = vld [vmem:[%s4893 + $0x4] sm:$0xf]
        %v4896 = vld [vmem:[%s4893 + $0x8] sm:$0xf]
        %v4897 = vld [vmem:[%s4893 + $0xc] sm:$0xf]
        %s4898 = scalar_lea.vmem %s25, 2
        %v4899 = vld [vmem:[%s4898] sm:$0x1]
        %v4901 = vperm.slane %v4899, 0
        %v4907 = vunpack.c.l.b16 %v4894
        %v4908 = vunpack.c.l.b16 %v4895
        %v4909 = vunpack.c.l.b16 %v4896
        %v4910 = vunpack.c.l.b16 %v4897
        %v4911 = vpack.c.b16 %v4908, %v4907
        %v4912 = vpack.c.b16 %v4910, %v4909
        %4915 = vmatpush.bf16.msra.mxu0 0
        %4916 = vmatpush.bf16.msra.mxu0 0
        %4917 = vmatpush.bf16.msra.mxu0 0
        %4918 = vmatpush.bf16.msra.mxu0 0
        %4919 = vmatpush.bf16.msra.mxu0 0
        %4920 = vmatpush.bf16.msra.mxu0 0
        %4921 = vmatpush.bf16.msra.mxu0 %v4912
        %4922 = vmatpush.bf16.msra.mxu0 %v4911
        %4923 = vmatmul.bf16.gmra.mxu0 %v4490
        %v4924 = vpop.f32.mrf.mxu0
        %v4925 = vadd.f32 %v4901, %v4924
        %v4926 = vpop.f32.mrf.mxu0
        %v4927 = vadd.f32 %v4901, %v4926
        %4928 = vdwg.mxu0
        %s4929 = scalar_lea.vmem %s39, 32
        %v4930 = vld [vmem:[%s4929] sm:$0xf]
        %v4931 = vld [vmem:[%s4929 + $0x4] sm:$0xf]
        %v4932 = vld [vmem:[%s4929 + $0x8] sm:$0xf]
        %v4933 = vld [vmem:[%s4929 + $0xc] sm:$0xf]
        %s4934 = scalar_lea.vmem %s31, 2
        %v4935 = vld [vmem:[%s4934] sm:$0x1]
        %v4937 = vperm.slane %v4935, 0
        %v4943 = vunpack.c.l.b16 %v4930
        %v4944 = vunpack.c.l.b16 %v4931
        %v4945 = vunpack.c.l.b16 %v4932
        %v4946 = vunpack.c.l.b16 %v4933
        %v4947 = vpack.c.b16 %v4944, %v4943
        %v4948 = vpack.c.b16 %v4946, %v4945
        %4951 = vmatpush.bf16.msra.mxu0 0
        %4952 = vmatpush.bf16.msra.mxu0 0
        %4953 = vmatpush.bf16.msra.mxu0 0
        %4954 = vmatpush.bf16.msra.mxu0 0
        %4955 = vmatpush.bf16.msra.mxu0 0
        %4956 = vmatpush.bf16.msra.mxu0 0
        %4957 = vmatpush.bf16.msra.mxu0 %v4948
        %4958 = vmatpush.bf16.msra.mxu0 %v4947
        %4959 = vmatmul.bf16.gmra.mxu0 %v4490
        %v4960 = vpop.f32.mrf.mxu0
        %v4961 = vadd.f32 %v4937, %v4960
        %v4962 = vpop.f32.mrf.mxu0
        %v4963 = vadd.f32 %v4937, %v4962
        %4964 = vdwg.mxu0
        %v4965 = vpack.c.bf16 %v4891, %v4889
        %v4966 = vpack.c.bf16 %v4927, %v4925
        %v4968 = vsel %vm2452, %v4965, 0
        %v4971 = vsel %vm2452, %v4966, 0
        %4973 = vmatpush.bf16.xpose.msra.mxu0 0
        %4974 = vmatpush.bf16.xpose.msra.mxu0 0
        %4975 = vmatpush.bf16.xpose.msra.mxu0 0
        %4976 = vmatpush.bf16.xpose.msra.mxu0 0
        %4977 = vmatpush.bf16.xpose.msra.mxu0 0
        %4978 = vmatpush.bf16.xpose.msra.mxu0 0
        %4979 = vmatpush.bf16.xpose.msra.mxu0 0
        %4980 = vmatpush.bf16.xpose.msra.mxu0 %v4971
        %4981 = vmatmul.bf16.gmra.mxu0 %v4968
        %v4982 = vpop.f32.mrf.mxu0
        %v4983 = vadd.f32 0.0, %v4982
        %v4984 = vpop.f32.mrf.mxu0
        %v4985 = vadd.f32 0.0, %v4984
        %4986 = vdwg.mxu0
        %v4987 = vmul.f32 %v4983, 0.35355338
        %v4988 = vmul.f32 %v4985, 0.35355338
        %v4989 = vsel %vm2487, %v4987, -inf
        %4990 = vmax.xlane.f32.xlu0 %v4989
        %v4991 = vpop.xlane.xlu0 %4990
        %v4992 = vsel %vm2487, %v4988, -inf
        %4993 = vmax.xlane.f32.xlu0 %v4992
        %v4994 = vpop.xlane.xlu0 %4993
        %v4995 = vsub.f32 %v4987, %v4991
        %v4996 = vsub.f32 %v4988, %v4994
        %v4997 = vmul.f32 %v4995, 1.442695
        %v4998 = vpow.pop %v4997
        %v4999 = vmul.f32 %v4996, 1.442695
        %v5000 = vpow.pop %v4999
        %v5001 = vsel %vm2487, %v4998, 0.0
        %5002 = vadd.xlane.f32.xlu0 %v5001
        %v5003 = vpop.xlane.xlu0 %5002
        %v5004 = vsel %vm2487, %v5000, 0.0
        %5005 = vadd.xlane.f32.xlu0 %v5004
        %v5006 = vpop.xlane.xlu0 %5005
        %v5007 = vrcp.pop %v5003
        %v5008 = vrcp.pop %v5006
        %v5009 = vmul.f32 %v4998, %v5007
        %v5010 = vmul.f32 %v5000, %v5008
        %v5011 = vpack.c.bf16 %v5010, %v5009
        %v5012 = vpack.c.bf16 %v4963, %v4961
        %v5014 = vsel %vm2487, %v5011, 0
        %5016 = vmatpush.bf16.msra.mxu0 0
        %5017 = vmatpush.bf16.msra.mxu0 0
        %5018 = vmatpush.bf16.msra.mxu0 0
        %5019 = vmatpush.bf16.msra.mxu0 0
        %5020 = vmatpush.bf16.msra.mxu0 0
        %5021 = vmatpush.bf16.msra.mxu0 0
        %5022 = vmatpush.bf16.msra.mxu0 0
        %5023 = vmatpush.bf16.msra.mxu0 %v5012
        %5024 = vmatmul.bf16.gmra.mxu0 %v5014
        %v5025 = vpop.f32.mrf.mxu0
        %v5026 = vadd.f32 0.0, %v5025
        %v5027 = vpop.f32.mrf.mxu0
        %v5028 = vadd.f32 0.0, %v5027
        %5029 = vdwg.mxu0
        %v5030 = vpack.c.bf16 %v5028, %v5026
        %s5031 = scalar_lea.vmem %s35, 8
        %v5032 = vld [vmem:[%s5031] sm:$0xf]
        %v5034 = vsel %vm2452, %v5030, 0
        %v5037 = vsel %vm2456, %v5032, 0
        %5039 = vmatpush.bf16.msra.mxu0 0
        %5040 = vmatpush.bf16.msra.mxu0 0
        %5041 = vmatpush.bf16.msra.mxu0 0
        %5042 = vmatpush.bf16.msra.mxu0 0
        %5043 = vmatpush.bf16.msra.mxu0 0
        %5044 = vmatpush.bf16.msra.mxu0 0
        %5045 = vmatpush.bf16.msra.mxu0 0
        %5046 = vmatpush.bf16.msra.mxu0 %v5037
        %5047 = vmatmul.bf16.gmra.mxu0 %v5034
        %v5048 = vpop.f32.mrf.mxu0
        %v5049 = vadd.f32 0.0, %v5048
        %v5050 = vpop.f32.mrf.mxu0
        %v5051 = vadd.f32 0.0, %v5050
        %5052 = vdwg.mxu0
        %v5053 = vadd.f32 %v4853, %v5049
        %v5054 = vadd.f32 %v4855, %v5051
        %s5055 = scalar_lea.vmem %s37, 48
        %v5056 = vld [vmem:[%s5055] sm:$0xf]
        %v5057 = vld [vmem:[%s5055 + $0x4] sm:$0xf]
        %v5058 = vld [vmem:[%s5055 + $0x8] sm:$0xf]
        %v5059 = vld [vmem:[%s5055 + $0xc] sm:$0xf]
        %s5060 = scalar_lea.vmem %s29, 3
        %v5061 = vld [vmem:[%s5060] sm:$0x1]
        %v5063 = vperm.slane %v5061, 0
        %v5069 = vunpack.c.l.b16 %v5056
        %v5070 = vunpack.c.l.b16 %v5057
        %v5071 = vunpack.c.l.b16 %v5058
        %v5072 = vunpack.c.l.b16 %v5059
        %v5073 = vpack.c.b16 %v5070, %v5069
        %v5074 = vpack.c.b16 %v5072, %v5071
        %5077 = vmatpush.bf16.msra.mxu0 0
        %5078 = vmatpush.bf16.msra.mxu0 0
        %5079 = vmatpush.bf16.msra.mxu0 0
        %5080 = vmatpush.bf16.msra.mxu0 0
        %5081 = vmatpush.bf16.msra.mxu0 0
        %5082 = vmatpush.bf16.msra.mxu0 0
        %5083 = vmatpush.bf16.msra.mxu0 %v5074
        %5084 = vmatpush.bf16.msra.mxu0 %v5073
        %5085 = vmatmul.bf16.gmra.mxu0 %v4490
        %v5086 = vpop.f32.mrf.mxu0
        %v5087 = vadd.f32 %v5063, %v5086
        %v5088 = vpop.f32.mrf.mxu0
        %v5089 = vadd.f32 %v5063, %v5088
        %5090 = vdwg.mxu0
        %s5091 = scalar_lea.vmem %s33, 48
        %v5092 = vld [vmem:[%s5091] sm:$0xf]
        %v5093 = vld [vmem:[%s5091 + $0x4] sm:$0xf]
        %v5094 = vld [vmem:[%s5091 + $0x8] sm:$0xf]
        %v5095 = vld [vmem:[%s5091 + $0xc] sm:$0xf]
        %s5096 = scalar_lea.vmem %s25, 3
        %v5097 = vld [vmem:[%s5096] sm:$0x1]
        %v5099 = vperm.slane %v5097, 0
        %v5105 = vunpack.c.l.b16 %v5092
        %v5106 = vunpack.c.l.b16 %v5093
        %v5107 = vunpack.c.l.b16 %v5094
        %v5108 = vunpack.c.l.b16 %v5095
        %v5109 = vpack.c.b16 %v5106, %v5105
        %v5110 = vpack.c.b16 %v5108, %v5107
        %5113 = vmatpush.bf16.msra.mxu0 0
        %5114 = vmatpush.bf16.msra.mxu0 0
        %5115 = vmatpush.bf16.msra.mxu0 0
        %5116 = vmatpush.bf16.msra.mxu0 0
        %5117 = vmatpush.bf16.msra.mxu0 0
        %5118 = vmatpush.bf16.msra.mxu0 0
        %5119 = vmatpush.bf16.msra.mxu0 %v5110
        %5120 = vmatpush.bf16.msra.mxu0 %v5109
        %5121 = vmatmul.bf16.gmra.mxu0 %v4490
        %v5122 = vpop.f32.mrf.mxu0
        %v5123 = vadd.f32 %v5099, %v5122
        %v5124 = vpop.f32.mrf.mxu0
        %v5125 = vadd.f32 %v5099, %v5124
        %5126 = vdwg.mxu0
        %s5127 = scalar_lea.vmem %s39, 48
        %v5128 = vld [vmem:[%s5127] sm:$0xf]
        %v5129 = vld [vmem:[%s5127 + $0x4] sm:$0xf]
        %v5130 = vld [vmem:[%s5127 + $0x8] sm:$0xf]
        %v5131 = vld [vmem:[%s5127 + $0xc] sm:$0xf]
        %s5132 = scalar_lea.vmem %s31, 3
        %v5133 = vld [vmem:[%s5132] sm:$0x1]
        %v5135 = vperm.slane %v5133, 0
        %v5141 = vunpack.c.l.b16 %v5128
        %v5142 = vunpack.c.l.b16 %v5129
        %v5143 = vunpack.c.l.b16 %v5130
        %v5144 = vunpack.c.l.b16 %v5131
        %v5145 = vpack.c.b16 %v5142, %v5141
        %v5146 = vpack.c.b16 %v5144, %v5143
        %5149 = vmatpush.bf16.msra.mxu0 0
        %5150 = vmatpush.bf16.msra.mxu0 0
        %5151 = vmatpush.bf16.msra.mxu0 0
        %5152 = vmatpush.bf16.msra.mxu0 0
        %5153 = vmatpush.bf16.msra.mxu0 0
        %5154 = vmatpush.bf16.msra.mxu0 0
        %5155 = vmatpush.bf16.msra.mxu0 %v5146
        %5156 = vmatpush.bf16.msra.mxu0 %v5145
        %5157 = vmatmul.bf16.gmra.mxu0 %v4490
        %v5158 = vpop.f32.mrf.mxu0
        %v5159 = vadd.f32 %v5135, %v5158
        %v5160 = vpop.f32.mrf.mxu0
        %v5161 = vadd.f32 %v5135, %v5160
        %5162 = vdwg.mxu0
        %v5163 = vpack.c.bf16 %v5089, %v5087
        %v5164 = vpack.c.bf16 %v5125, %v5123
        %v5166 = vsel %vm2452, %v5163, 0
        %v5169 = vsel %vm2452, %v5164, 0
        %5171 = vmatpush.bf16.xpose.msra.mxu0 0
        %5172 = vmatpush.bf16.xpose.msra.mxu0 0
        %5173 = vmatpush.bf16.xpose.msra.mxu0 0
        %5174 = vmatpush.bf16.xpose.msra.mxu0 0
        %5175 = vmatpush.bf16.xpose.msra.mxu0 0
        %5176 = vmatpush.bf16.xpose.msra.mxu0 0
        %5177 = vmatpush.bf16.xpose.msra.mxu0 0
        %5178 = vmatpush.bf16.xpose.msra.mxu0 %v5169
        %5179 = vmatmul.bf16.gmra.mxu0 %v5166
        %v5180 = vpop.f32.mrf.mxu0
        %v5181 = vadd.f32 0.0, %v5180
        %v5182 = vpop.f32.mrf.mxu0
        %v5183 = vadd.f32 0.0, %v5182
        %5184 = vdwg.mxu0
        %v5185 = vmul.f32 %v5181, 0.35355338
        %v5186 = vmul.f32 %v5183, 0.35355338
        %v5187 = vsel %vm2487, %v5185, -inf
        %5188 = vmax.xlane.f32.xlu0 %v5187
        %v5189 = vpop.xlane.xlu0 %5188
        %v5190 = vsel %vm2487, %v5186, -inf
        %5191 = vmax.xlane.f32.xlu0 %v5190
        %v5192 = vpop.xlane.xlu0 %5191
        %v5193 = vsub.f32 %v5185, %v5189
        %v5194 = vsub.f32 %v5186, %v5192
        %v5195 = vmul.f32 %v5193, 1.442695
        %v5196 = vpow.pop %v5195
        %v5197 = vmul.f32 %v5194, 1.442695
        %v5198 = vpow.pop %v5197
        %v5199 = vsel %vm2487, %v5196, 0.0
        %5200 = vadd.xlane.f32.xlu0 %v5199
        %v5201 = vpop.xlane.xlu0 %5200
        %v5202 = vsel %vm2487, %v5198, 0.0
        %5203 = vadd.xlane.f32.xlu0 %v5202
        %v5204 = vpop.xlane.xlu0 %5203
        %v5205 = vrcp.pop %v5201
        %v5206 = vrcp.pop %v5204
        %v5207 = vmul.f32 %v5196, %v5205
        %v5208 = vmul.f32 %v5198, %v5206
        %v5209 = vpack.c.bf16 %v5208, %v5207
        %v5210 = vpack.c.bf16 %v5161, %v5159
        %v5212 = vsel %vm2487, %v5209, 0
        %5214 = vmatpush.bf16.msra.mxu0 0
        %5215 = vmatpush.bf16.msra.mxu0 0
        %5216 = vmatpush.bf16.msra.mxu0 0
        %5217 = vmatpush.bf16.msra.mxu0 0
        %5218 = vmatpush.bf16.msra.mxu0 0
        %5219 = vmatpush.bf16.msra.mxu0 0
        %5220 = vmatpush.bf16.msra.mxu0 0
        %5221 = vmatpush.bf16.msra.mxu0 %v5210
        %5222 = vmatmul.bf16.gmra.mxu0 %v5212
        %v5223 = vpop.f32.mrf.mxu0
        %v5224 = vadd.f32 0.0, %v5223
        %v5225 = vpop.f32.mrf.mxu0
        %v5226 = vadd.f32 0.0, %v5225
        %5227 = vdwg.mxu0
        %v5228 = vpack.c.bf16 %v5226, %v5224
        %s5229 = scalar_lea.vmem %s35, 12
        %v5230 = vld [vmem:[%s5229] sm:$0xf]
        %v5232 = vsel %vm2452, %v5228, 0
        %v5235 = vsel %vm2456, %v5230, 0
        %5237 = vmatpush.bf16.msra.mxu0 0
        %5238 = vmatpush.bf16.msra.mxu0 0
        %5239 = vmatpush.bf16.msra.mxu0 0
        %5240 = vmatpush.bf16.msra.mxu0 0
        %5241 = vmatpush.bf16.msra.mxu0 0
        %5242 = vmatpush.bf16.msra.mxu0 0
        %5243 = vmatpush.bf16.msra.mxu0 0
        %5244 = vmatpush.bf16.msra.mxu0 %v5235
        %5245 = vmatmul.bf16.gmra.mxu0 %v5232
        %v5246 = vpop.f32.mrf.mxu0
        %v5247 = vadd.f32 0.0, %v5246
        %v5248 = vpop.f32.mrf.mxu0
        %v5249 = vadd.f32 0.0, %v5248
        %5250 = vdwg.mxu0
        %v5251 = vadd.f32 %v5053, %v5247
        %v5252 = vadd.f32 %v5054, %v5249
        %v5253 = vld [vmem:[%s27] sm:$0x1]
        %v5255 = vperm.slane %v5253, 0
        %v5257 = vadd.f32 %v5251, %v5255
        %v5258 = vadd.f32 %v5252, %v5255
        %v5259 = vld [vmem:[%s69] sm:$0xf]
        %v5260 = vld [vmem:[%s69 + $0x4] sm:$0xf]
        %v5261 = vld [vmem:[%s69 + $0x8] sm:$0xf]
        %v5262 = vld [vmem:[%s69 + $0xc] sm:$0xf]
        %v5263 = vld [vmem:[%s61] sm:$0x1]
        %v5264 = vpack.c.bf16 %v5258, %v5257
        %v5266 = vperm.slane %v5263, 0
        %v5272 = vunpack.c.l.b16 %v5259
        %v5273 = vunpack.c.l.b16 %v5260
        %v5274 = vunpack.c.l.b16 %v5261
        %v5275 = vunpack.c.l.b16 %v5262
        %v5276 = vpack.c.b16 %v5273, %v5272
        %v5277 = vpack.c.b16 %v5275, %v5274
        %v5281 = vsel %vm2536, %v5264, 0
        %5283 = vmatpush.bf16.msra.mxu0 0
        %5284 = vmatpush.bf16.msra.mxu0 0
        %5285 = vmatpush.bf16.msra.mxu0 0
        %5286 = vmatpush.bf16.msra.mxu0 0
        %5287 = vmatpush.bf16.msra.mxu0 0
        %5288 = vmatpush.bf16.msra.mxu0 0
        %5289 = vmatpush.bf16.msra.mxu0 %v5277
        %5290 = vmatpush.bf16.msra.mxu0 %v5276
        %5291 = vmatmul.bf16.gmra.mxu0 %v5281
        %v5292 = vpop.f32.mrf.mxu0
        %v5293 = vadd.f32 %v5266, %v5292
        %v5294 = vpop.f32.mrf.mxu0
        %v5295 = vadd.f32 %v5266, %v5294
        %5296 = vdwg.mxu0
        %v5297 = vld [vmem:[%s65] sm:$0xf]
        %v5298 = vld [vmem:[%s65 + $0x4] sm:$0xf]
        %v5299 = vld [vmem:[%s65 + $0x8] sm:$0xf]
        %v5300 = vld [vmem:[%s65 + $0xc] sm:$0xf]
        %v5301 = vld [vmem:[%s57] sm:$0x1]
        %v5303 = vperm.slane %v5301, 0
        %v5309 = vunpack.c.l.b16 %v5297
        %v5310 = vunpack.c.l.b16 %v5298
        %v5311 = vunpack.c.l.b16 %v5299
        %v5312 = vunpack.c.l.b16 %v5300
        %v5313 = vpack.c.b16 %v5310, %v5309
        %v5314 = vpack.c.b16 %v5312, %v5311
        %5317 = vmatpush.bf16.msra.mxu0 0
        %5318 = vmatpush.bf16.msra.mxu0 0
        %5319 = vmatpush.bf16.msra.mxu0 0
        %5320 = vmatpush.bf16.msra.mxu0 0
        %5321 = vmatpush.bf16.msra.mxu0 0
        %5322 = vmatpush.bf16.msra.mxu0 0
        %5323 = vmatpush.bf16.msra.mxu0 %v5314
        %5324 = vmatpush.bf16.msra.mxu0 %v5313
        %5325 = vmatmul.bf16.gmra.mxu0 %v3575
        %v5326 = vpop.f32.mrf.mxu0
        %v5327 = vadd.f32 %v5303, %v5326
        %v5328 = vpop.f32.mrf.mxu0
        %v5329 = vadd.f32 %v5303, %v5328
        %5330 = vdwg.mxu0
        %v5331 = vld [vmem:[%s71] sm:$0xf]
        %v5332 = vld [vmem:[%s71 + $0x4] sm:$0xf]
        %v5333 = vld [vmem:[%s71 + $0x8] sm:$0xf]
        %v5334 = vld [vmem:[%s71 + $0xc] sm:$0xf]
        %v5335 = vld [vmem:[%s63] sm:$0x1]
        %v5337 = vperm.slane %v5335, 0
        %v5343 = vunpack.c.l.b16 %v5331
        %v5344 = vunpack.c.l.b16 %v5332
        %v5345 = vunpack.c.l.b16 %v5333
        %v5346 = vunpack.c.l.b16 %v5334
        %v5347 = vpack.c.b16 %v5344, %v5343
        %v5348 = vpack.c.b16 %v5346, %v5345
        %5351 = vmatpush.bf16.msra.mxu0 0
        %5352 = vmatpush.bf16.msra.mxu0 0
        %5353 = vmatpush.bf16.msra.mxu0 0
        %5354 = vmatpush.bf16.msra.mxu0 0
        %5355 = vmatpush.bf16.msra.mxu0 0
        %5356 = vmatpush.bf16.msra.mxu0 0
        %5357 = vmatpush.bf16.msra.mxu0 %v5348
        %5358 = vmatpush.bf16.msra.mxu0 %v5347
        %5359 = vmatmul.bf16.gmra.mxu0 %v3575
        %v5360 = vpop.f32.mrf.mxu0
        %v5361 = vadd.f32 %v5337, %v5360
        %v5362 = vpop.f32.mrf.mxu0
        %v5363 = vadd.f32 %v5337, %v5362
        %5364 = vdwg.mxu0
        %v5365 = vpack.c.bf16 %v5295, %v5293
        %v5366 = vpack.c.bf16 %v5329, %v5327
        %v5368 = vsel %vm2452, %v5365, 0
        %v5371 = vsel %vm2452, %v5366, 0
        %5373 = vmatpush.bf16.xpose.msra.mxu0 0
        %5374 = vmatpush.bf16.xpose.msra.mxu0 0
        %5375 = vmatpush.bf16.xpose.msra.mxu0 0
        %5376 = vmatpush.bf16.xpose.msra.mxu0 0
        %5377 = vmatpush.bf16.xpose.msra.mxu0 0
        %5378 = vmatpush.bf16.xpose.msra.mxu0 0
        %5379 = vmatpush.bf16.xpose.msra.mxu0 0
        %5380 = vmatpush.bf16.xpose.msra.mxu0 %v5371
        %5381 = vmatmul.bf16.gmra.mxu0 %v5368
        %v5382 = vpop.f32.mrf.mxu0
        %v5383 = vadd.f32 0.0, %v5382
        %v5384 = vpop.f32.mrf.mxu0
        %v5385 = vadd.f32 0.0, %v5384
        %5386 = vdwg.mxu0
        %v5387 = vmul.f32 %v5383, 0.35355338
        %v5388 = vmul.f32 %v5385, 0.35355338
        %v5389 = vsel %vm2487, %v5387, -inf
        %5390 = vmax.xlane.f32.xlu0 %v5389
        %v5391 = vpop.xlane.xlu0 %5390
        %v5392 = vsel %vm2487, %v5388, -inf
        %5393 = vmax.xlane.f32.xlu0 %v5392
        %v5394 = vpop.xlane.xlu0 %5393
        %v5395 = vsub.f32 %v5387, %v5391
        %v5396 = vsub.f32 %v5388, %v5394
        %v5397 = vmul.f32 %v5395, 1.442695
        %v5398 = vpow.pop %v5397
        %v5399 = vmul.f32 %v5396, 1.442695
        %v5400 = vpow.pop %v5399
        %v5401 = vsel %vm2487, %v5398, 0.0
        %5402 = vadd.xlane.f32.xlu0 %v5401
        %v5403 = vpop.xlane.xlu0 %5402
        %v5404 = vsel %vm2487, %v5400, 0.0
        %5405 = vadd.xlane.f32.xlu0 %v5404
        %v5406 = vpop.xlane.xlu0 %5405
        %v5407 = vrcp.pop %v5403
        %v5408 = vrcp.pop %v5406
        %v5409 = vmul.f32 %v5398, %v5407
        %v5410 = vmul.f32 %v5400, %v5408
        %v5411 = vpack.c.bf16 %v5410, %v5409
        %v5412 = vpack.c.bf16 %v5363, %v5361
        %v5414 = vsel %vm2487, %v5411, 0
        %5416 = vmatpush.bf16.msra.mxu0 0
        %5417 = vmatpush.bf16.msra.mxu0 0
        %5418 = vmatpush.bf16.msra.mxu0 0
        %5419 = vmatpush.bf16.msra.mxu0 0
        %5420 = vmatpush.bf16.msra.mxu0 0
        %5421 = vmatpush.bf16.msra.mxu0 0
        %5422 = vmatpush.bf16.msra.mxu0 0
        %5423 = vmatpush.bf16.msra.mxu0 %v5412
        %5424 = vmatmul.bf16.gmra.mxu0 %v5414
        %v5425 = vpop.f32.mrf.mxu0
        %v5426 = vadd.f32 0.0, %v5425
        %v5427 = vpop.f32.mrf.mxu0
        %v5428 = vadd.f32 0.0, %v5427
        %5429 = vdwg.mxu0
        %v5430 = vpack.c.bf16 %v5428, %v5426
        %v5431 = vld [vmem:[%s67] sm:$0xf]
        %s5432 = scalar_lea.vmem %s69, 16
        %v5433 = vld [vmem:[%s5432] sm:$0xf]
        %v5434 = vld [vmem:[%s5432 + $0x4] sm:$0xf]
        %v5435 = vld [vmem:[%s5432 + $0x8] sm:$0xf]
        %v5436 = vld [vmem:[%s5432 + $0xc] sm:$0xf]
        %s5437 = scalar_lea.vmem %s61, 1
        %v5438 = vld [vmem:[%s5437] sm:$0x1]
        %v5440 = vperm.slane %v5438, 0
        %v5446 = vunpack.c.l.b16 %v5433
        %v5447 = vunpack.c.l.b16 %v5434
        %v5448 = vunpack.c.l.b16 %v5435
        %v5449 = vunpack.c.l.b16 %v5436
        %v5450 = vpack.c.b16 %v5447, %v5446
        %v5451 = vpack.c.b16 %v5449, %v5448
        %5454 = vmatpush.bf16.msra.mxu0 0
        %5455 = vmatpush.bf16.msra.mxu0 0
        %5456 = vmatpush.bf16.msra.mxu0 0
        %5457 = vmatpush.bf16.msra.mxu0 0
        %5458 = vmatpush.bf16.msra.mxu0 0
        %5459 = vmatpush.bf16.msra.mxu0 0
        %5460 = vmatpush.bf16.msra.mxu0 %v5451
        %5461 = vmatpush.bf16.msra.mxu0 %v5450
        %5462 = vmatmul.bf16.gmra.mxu0 %v5281
        %v5463 = vpop.f32.mrf.mxu0
        %v5464 = vadd.f32 %v5440, %v5463
        %v5465 = vpop.f32.mrf.mxu0
        %v5466 = vadd.f32 %v5440, %v5465
        %5467 = vdwg.mxu0
        %s5468 = scalar_lea.vmem %s65, 16
        %v5469 = vld [vmem:[%s5468] sm:$0xf]
        %v5470 = vld [vmem:[%s5468 + $0x4] sm:$0xf]
        %v5471 = vld [vmem:[%s5468 + $0x8] sm:$0xf]
        %v5472 = vld [vmem:[%s5468 + $0xc] sm:$0xf]
        %s5473 = scalar_lea.vmem %s57, 1
        %v5474 = vld [vmem:[%s5473] sm:$0x1]
        %v5476 = vperm.slane %v5474, 0
        %v5482 = vunpack.c.l.b16 %v5469
        %v5483 = vunpack.c.l.b16 %v5470
        %v5484 = vunpack.c.l.b16 %v5471
        %v5485 = vunpack.c.l.b16 %v5472
        %v5486 = vpack.c.b16 %v5483, %v5482
        %v5487 = vpack.c.b16 %v5485, %v5484
        %5490 = vmatpush.bf16.msra.mxu0 0
        %5491 = vmatpush.bf16.msra.mxu0 0
        %5492 = vmatpush.bf16.msra.mxu0 0
        %5493 = vmatpush.bf16.msra.mxu0 0
        %5494 = vmatpush.bf16.msra.mxu0 0
        %5495 = vmatpush.bf16.msra.mxu0 0
        %5496 = vmatpush.bf16.msra.mxu0 %v5487
        %5497 = vmatpush.bf16.msra.mxu0 %v5486
        %5498 = vmatmul.bf16.gmra.mxu0 %v3575
        %v5499 = vpop.f32.mrf.mxu0
        %v5500 = vadd.f32 %v5476, %v5499
        %v5501 = vpop.f32.mrf.mxu0
        %v5502 = vadd.f32 %v5476, %v5501
        %5503 = vdwg.mxu0
        %s5504 = scalar_lea.vmem %s71, 16
        %v5505 = vld [vmem:[%s5504] sm:$0xf]
        %v5506 = vld [vmem:[%s5504 + $0x4] sm:$0xf]
        %v5507 = vld [vmem:[%s5504 + $0x8] sm:$0xf]
        %v5508 = vld [vmem:[%s5504 + $0xc] sm:$0xf]
        %s5509 = scalar_lea.vmem %s63, 1
        %v5510 = vld [vmem:[%s5509] sm:$0x1]
        %v5512 = vperm.slane %v5510, 0
        %v5518 = vunpack.c.l.b16 %v5505
        %v5519 = vunpack.c.l.b16 %v5506
        %v5520 = vunpack.c.l.b16 %v5507
        %v5521 = vunpack.c.l.b16 %v5508
        %v5522 = vpack.c.b16 %v5519, %v5518
        %v5523 = vpack.c.b16 %v5521, %v5520
        %5526 = vmatpush.bf16.msra.mxu0 0
        %5527 = vmatpush.bf16.msra.mxu0 0
        %5528 = vmatpush.bf16.msra.mxu0 0
        %5529 = vmatpush.bf16.msra.mxu0 0
        %5530 = vmatpush.bf16.msra.mxu0 0
        %5531 = vmatpush.bf16.msra.mxu0 0
        %5532 = vmatpush.bf16.msra.mxu0 %v5523
        %5533 = vmatpush.bf16.msra.mxu0 %v5522
        %5534 = vmatmul.bf16.gmra.mxu0 %v3575
        %v5535 = vpop.f32.mrf.mxu0
        %v5536 = vadd.f32 %v5512, %v5535
        %v5537 = vpop.f32.mrf.mxu0
        %v5538 = vadd.f32 %v5512, %v5537
        %5539 = vdwg.mxu0
        %v5540 = vpack.c.bf16 %v5466, %v5464
        %v5541 = vpack.c.bf16 %v5502, %v5500
        %v5543 = vsel %vm2452, %v5540, 0
        %v5546 = vsel %vm2452, %v5541, 0
        %5548 = vmatpush.bf16.xpose.msra.mxu0 0
        %5549 = vmatpush.bf16.xpose.msra.mxu0 0
        %5550 = vmatpush.bf16.xpose.msra.mxu0 0
        %5551 = vmatpush.bf16.xpose.msra.mxu0 0
        %5552 = vmatpush.bf16.xpose.msra.mxu0 0
        %5553 = vmatpush.bf16.xpose.msra.mxu0 0
        %5554 = vmatpush.bf16.xpose.msra.mxu0 0
        %5555 = vmatpush.bf16.xpose.msra.mxu0 %v5546
        %5556 = vmatmul.bf16.gmra.mxu0 %v5543
        %v5557 = vpop.f32.mrf.mxu0
        %v5558 = vadd.f32 0.0, %v5557
        %v5559 = vpop.f32.mrf.mxu0
        %v5560 = vadd.f32 0.0, %v5559
        %5561 = vdwg.mxu0
        %v5562 = vmul.f32 %v5558, 0.35355338
        %v5563 = vmul.f32 %v5560, 0.35355338
        %v5564 = vsel %vm2487, %v5562, -inf
        %5565 = vmax.xlane.f32.xlu0 %v5564
        %v5566 = vpop.xlane.xlu0 %5565
        %v5567 = vsel %vm2487, %v5563, -inf
        %5568 = vmax.xlane.f32.xlu0 %v5567
        %v5569 = vpop.xlane.xlu0 %5568
        %v5570 = vsub.f32 %v5562, %v5566
        %v5571 = vsub.f32 %v5563, %v5569
        %v5572 = vmul.f32 %v5570, 1.442695
        %v5573 = vpow.pop %v5572
        %v5574 = vmul.f32 %v5571, 1.442695
        %v5575 = vpow.pop %v5574
        %v5576 = vsel %vm2487, %v5573, 0.0
        %5577 = vadd.xlane.f32.xlu0 %v5576
        %v5578 = vpop.xlane.xlu0 %5577
        %v5579 = vsel %vm2487, %v5575, 0.0
        %5580 = vadd.xlane.f32.xlu0 %v5579
        %v5581 = vpop.xlane.xlu0 %5580
        %v5582 = vrcp.pop %v5578
        %v5583 = vrcp.pop %v5581
        %v5584 = vmul.f32 %v5573, %v5582
        %v5585 = vmul.f32 %v5575, %v5583
        %v5586 = vpack.c.bf16 %v5585, %v5584
        %v5587 = vpack.c.bf16 %v5538, %v5536
        %v5589 = vsel %vm2487, %v5586, 0
        %5591 = vmatpush.bf16.msra.mxu0 0
        %5592 = vmatpush.bf16.msra.mxu0 0
        %5593 = vmatpush.bf16.msra.mxu0 0
        %5594 = vmatpush.bf16.msra.mxu0 0
        %5595 = vmatpush.bf16.msra.mxu0 0
        %5596 = vmatpush.bf16.msra.mxu0 0
        %5597 = vmatpush.bf16.msra.mxu0 0
        %5598 = vmatpush.bf16.msra.mxu0 %v5587
        %5599 = vmatmul.bf16.gmra.mxu0 %v5589
        %v5600 = vpop.f32.mrf.mxu0
        %v5601 = vadd.f32 0.0, %v5600
        %v5602 = vpop.f32.mrf.mxu0
        %v5603 = vadd.f32 0.0, %v5602
        %5604 = vdwg.mxu0
        %v5605 = vpack.c.bf16 %v5603, %v5601
        %s5606 = scalar_lea.vmem %s67, 4
        %v5607 = vld [vmem:[%s5606] sm:$0xf]
        %v5609 = vsel %vm2452, %v5605, 0
        %v5612 = vsel %vm2456, %v5607, 0
        %5614 = vmatpush.bf16.msra.mxu0 0
        %5615 = vmatpush.bf16.msra.mxu0 0
        %5616 = vmatpush.bf16.msra.mxu0 0
        %5617 = vmatpush.bf16.msra.mxu0 0
        %5618 = vmatpush.bf16.msra.mxu0 0
        %5619 = vmatpush.bf16.msra.mxu0 0
        %5620 = vmatpush.bf16.msra.mxu0 0
        %5621 = vmatpush.bf16.msra.mxu0 %v5612
        %5622 = vmatmul.bf16.gmra.mxu0 %v5609
        %v5623 = vpop.f32.mrf.mxu0
        %v5624 = vadd.f32 0.0, %v5623
        %v5625 = vpop.f32.mrf.mxu0
        %v5626 = vadd.f32 0.0, %v5625
        %5627 = vdwg.mxu0
        %v5629 = vsel %vm2452, %v5430, 0
        %v5632 = vsel %vm2456, %v5431, 0
        %5634 = vmatpush.bf16.msra.mxu0 0
        %5635 = vmatpush.bf16.msra.mxu0 0
        %5636 = vmatpush.bf16.msra.mxu0 0
        %5637 = vmatpush.bf16.msra.mxu0 0
        %5638 = vmatpush.bf16.msra.mxu0 0
        %5639 = vmatpush.bf16.msra.mxu0 0
        %5640 = vmatpush.bf16.msra.mxu0 0
        %5641 = vmatpush.bf16.msra.mxu0 %v5632
        %5642 = vmatmul.bf16.gmra.mxu0 %v5629
        %v5643 = vpop.f32.mrf.mxu0
        %v5644 = vadd.f32 %v5624, %v5643
        %v5645 = vpop.f32.mrf.mxu0
        %v5646 = vadd.f32 %v5626, %v5645
        %5647 = vdwg.mxu0
        %s5648 = scalar_lea.vmem %s69, 32
        %v5649 = vld [vmem:[%s5648] sm:$0xf]
        %v5650 = vld [vmem:[%s5648 + $0x4] sm:$0xf]
        %v5651 = vld [vmem:[%s5648 + $0x8] sm:$0xf]
        %v5652 = vld [vmem:[%s5648 + $0xc] sm:$0xf]
        %s5653 = scalar_lea.vmem %s61, 2
        %v5654 = vld [vmem:[%s5653] sm:$0x1]
        %v5656 = vperm.slane %v5654, 0
        %v5662 = vunpack.c.l.b16 %v5649
        %v5663 = vunpack.c.l.b16 %v5650
        %v5664 = vunpack.c.l.b16 %v5651
        %v5665 = vunpack.c.l.b16 %v5652
        %v5666 = vpack.c.b16 %v5663, %v5662
        %v5667 = vpack.c.b16 %v5665, %v5664
        %5670 = vmatpush.bf16.msra.mxu0 0
        %5671 = vmatpush.bf16.msra.mxu0 0
        %5672 = vmatpush.bf16.msra.mxu0 0
        %5673 = vmatpush.bf16.msra.mxu0 0
        %5674 = vmatpush.bf16.msra.mxu0 0
        %5675 = vmatpush.bf16.msra.mxu0 0
        %5676 = vmatpush.bf16.msra.mxu0 %v5667
        %5677 = vmatpush.bf16.msra.mxu0 %v5666
        %5678 = vmatmul.bf16.gmra.mxu0 %v5281
        %v5679 = vpop.f32.mrf.mxu0
        %v5680 = vadd.f32 %v5656, %v5679
        %v5681 = vpop.f32.mrf.mxu0
        %v5682 = vadd.f32 %v5656, %v5681
        %5683 = vdwg.mxu0
        %s5684 = scalar_lea.vmem %s65, 32
        %v5685 = vld [vmem:[%s5684] sm:$0xf]
        %v5686 = vld [vmem:[%s5684 + $0x4] sm:$0xf]
        %v5687 = vld [vmem:[%s5684 + $0x8] sm:$0xf]
        %v5688 = vld [vmem:[%s5684 + $0xc] sm:$0xf]
        %s5689 = scalar_lea.vmem %s57, 2
        %v5690 = vld [vmem:[%s5689] sm:$0x1]
        %v5692 = vperm.slane %v5690, 0
        %v5698 = vunpack.c.l.b16 %v5685
        %v5699 = vunpack.c.l.b16 %v5686
        %v5700 = vunpack.c.l.b16 %v5687
        %v5701 = vunpack.c.l.b16 %v5688
        %v5702 = vpack.c.b16 %v5699, %v5698
        %v5703 = vpack.c.b16 %v5701, %v5700
        %5706 = vmatpush.bf16.msra.mxu0 0
        %5707 = vmatpush.bf16.msra.mxu0 0
        %5708 = vmatpush.bf16.msra.mxu0 0
        %5709 = vmatpush.bf16.msra.mxu0 0
        %5710 = vmatpush.bf16.msra.mxu0 0
        %5711 = vmatpush.bf16.msra.mxu0 0
        %5712 = vmatpush.bf16.msra.mxu0 %v5703
        %5713 = vmatpush.bf16.msra.mxu0 %v5702
        %5714 = vmatmul.bf16.gmra.mxu0 %v3575
        %v5715 = vpop.f32.mrf.mxu0
        %v5716 = vadd.f32 %v5692, %v5715
        %v5717 = vpop.f32.mrf.mxu0
        %v5718 = vadd.f32 %v5692, %v5717
        %5719 = vdwg.mxu0
        %s5720 = scalar_lea.vmem %s71, 32
        %v5721 = vld [vmem:[%s5720] sm:$0xf]
        %v5722 = vld [vmem:[%s5720 + $0x4] sm:$0xf]
        %v5723 = vld [vmem:[%s5720 + $0x8] sm:$0xf]
        %v5724 = vld [vmem:[%s5720 + $0xc] sm:$0xf]
        %s5725 = scalar_lea.vmem %s63, 2
        %v5726 = vld [vmem:[%s5725] sm:$0x1]
        %v5728 = vperm.slane %v5726, 0
        %v5734 = vunpack.c.l.b16 %v5721
        %v5735 = vunpack.c.l.b16 %v5722
        %v5736 = vunpack.c.l.b16 %v5723
        %v5737 = vunpack.c.l.b16 %v5724
        %v5738 = vpack.c.b16 %v5735, %v5734
        %v5739 = vpack.c.b16 %v5737, %v5736
        %5742 = vmatpush.bf16.msra.mxu0 0
        %5743 = vmatpush.bf16.msra.mxu0 0
        %5744 = vmatpush.bf16.msra.mxu0 0
        %5745 = vmatpush.bf16.msra.mxu0 0
        %5746 = vmatpush.bf16.msra.mxu0 0
        %5747 = vmatpush.bf16.msra.mxu0 0
        %5748 = vmatpush.bf16.msra.mxu0 %v5739
        %5749 = vmatpush.bf16.msra.mxu0 %v5738
        %5750 = vmatmul.bf16.gmra.mxu0 %v3575
        %v5751 = vpop.f32.mrf.mxu0
        %v5752 = vadd.f32 %v5728, %v5751
        %v5753 = vpop.f32.mrf.mxu0
        %v5754 = vadd.f32 %v5728, %v5753
        %5755 = vdwg.mxu0
        %v5756 = vpack.c.bf16 %v5682, %v5680
        %v5757 = vpack.c.bf16 %v5718, %v5716
        %v5759 = vsel %vm2452, %v5756, 0
        %v5762 = vsel %vm2452, %v5757, 0
        %5764 = vmatpush.bf16.xpose.msra.mxu0 0
        %5765 = vmatpush.bf16.xpose.msra.mxu0 0
        %5766 = vmatpush.bf16.xpose.msra.mxu0 0
        %5767 = vmatpush.bf16.xpose.msra.mxu0 0
        %5768 = vmatpush.bf16.xpose.msra.mxu0 0
        %5769 = vmatpush.bf16.xpose.msra.mxu0 0
        %5770 = vmatpush.bf16.xpose.msra.mxu0 0
        %5771 = vmatpush.bf16.xpose.msra.mxu0 %v5762
        %5772 = vmatmul.bf16.gmra.mxu0 %v5759
        %v5773 = vpop.f32.mrf.mxu0
        %v5774 = vadd.f32 0.0, %v5773
        %v5775 = vpop.f32.mrf.mxu0
        %v5776 = vadd.f32 0.0, %v5775
        %5777 = vdwg.mxu0
        %v5778 = vmul.f32 %v5774, 0.35355338
        %v5779 = vmul.f32 %v5776, 0.35355338
        %v5780 = vsel %vm2487, %v5778, -inf
        %5781 = vmax.xlane.f32.xlu0 %v5780
        %v5782 = vpop.xlane.xlu0 %5781
        %v5783 = vsel %vm2487, %v5779, -inf
        %5784 = vmax.xlane.f32.xlu0 %v5783
        %v5785 = vpop.xlane.xlu0 %5784
        %v5786 = vsub.f32 %v5778, %v5782
        %v5787 = vsub.f32 %v5779, %v5785
        %v5788 = vmul.f32 %v5786, 1.442695
        %v5789 = vpow.pop %v5788
        %v5790 = vmul.f32 %v5787, 1.442695
        %v5791 = vpow.pop %v5790
        %v5792 = vsel %vm2487, %v5789, 0.0
        %5793 = vadd.xlane.f32.xlu0 %v5792
        %v5794 = vpop.xlane.xlu0 %5793
        %v5795 = vsel %vm2487, %v5791, 0.0
        %5796 = vadd.xlane.f32.xlu0 %v5795
        %v5797 = vpop.xlane.xlu0 %5796
        %v5798 = vrcp.pop %v5794
        %v5799 = vrcp.pop %v5797
        %v5800 = vmul.f32 %v5789, %v5798
        %v5801 = vmul.f32 %v5791, %v5799
        %v5802 = vpack.c.bf16 %v5801, %v5800
        %v5803 = vpack.c.bf16 %v5754, %v5752
        %v5805 = vsel %vm2487, %v5802, 0
        %5807 = vmatpush.bf16.msra.mxu0 0
        %5808 = vmatpush.bf16.msra.mxu0 0
        %5809 = vmatpush.bf16.msra.mxu0 0
        %5810 = vmatpush.bf16.msra.mxu0 0
        %5811 = vmatpush.bf16.msra.mxu0 0
        %5812 = vmatpush.bf16.msra.mxu0 0
        %5813 = vmatpush.bf16.msra.mxu0 0
        %5814 = vmatpush.bf16.msra.mxu0 %v5803
        %5815 = vmatmul.bf16.gmra.mxu0 %v5805
        %v5816 = vpop.f32.mrf.mxu0
        %v5817 = vadd.f32 0.0, %v5816
        %v5818 = vpop.f32.mrf.mxu0
        %v5819 = vadd.f32 0.0, %v5818
        %5820 = vdwg.mxu0
        %v5821 = vpack.c.bf16 %v5819, %v5817
        %s5822 = scalar_lea.vmem %s67, 8
        %v5823 = vld [vmem:[%s5822] sm:$0xf]
        %v5825 = vsel %vm2452, %v5821, 0
        %v5828 = vsel %vm2456, %v5823, 0
        %5830 = vmatpush.bf16.msra.mxu0 0
        %5831 = vmatpush.bf16.msra.mxu0 0
        %5832 = vmatpush.bf16.msra.mxu0 0
        %5833 = vmatpush.bf16.msra.mxu0 0
        %5834 = vmatpush.bf16.msra.mxu0 0
        %5835 = vmatpush.bf16.msra.mxu0 0
        %5836 = vmatpush.bf16.msra.mxu0 0
        %5837 = vmatpush.bf16.msra.mxu0 %v5828
        %5838 = vmatmul.bf16.gmra.mxu0 %v5825
        %v5839 = vpop.f32.mrf.mxu0
        %v5840 = vadd.f32 0.0, %v5839
        %v5841 = vpop.f32.mrf.mxu0
        %v5842 = vadd.f32 0.0, %v5841
        %5843 = vdwg.mxu0
        %v5844 = vadd.f32 %v5644, %v5840
        %v5845 = vadd.f32 %v5646, %v5842
        %s5846 = scalar_lea.vmem %s69, 48
        %v5847 = vld [vmem:[%s5846] sm:$0xf]
        %v5848 = vld [vmem:[%s5846 + $0x4] sm:$0xf]
        %v5849 = vld [vmem:[%s5846 + $0x8] sm:$0xf]
        %v5850 = vld [vmem:[%s5846 + $0xc] sm:$0xf]
        %s5851 = scalar_lea.vmem %s61, 3
        %v5852 = vld [vmem:[%s5851] sm:$0x1]
        %v5854 = vperm.slane %v5852, 0
        %v5860 = vunpack.c.l.b16 %v5847
        %v5861 = vunpack.c.l.b16 %v5848
        %v5862 = vunpack.c.l.b16 %v5849
        %v5863 = vunpack.c.l.b16 %v5850
        %v5864 = vpack.c.b16 %v5861, %v5860
        %v5865 = vpack.c.b16 %v5863, %v5862
        %5868 = vmatpush.bf16.msra.mxu0 0
        %5869 = vmatpush.bf16.msra.mxu0 0
        %5870 = vmatpush.bf16.msra.mxu0 0
        %5871 = vmatpush.bf16.msra.mxu0 0
        %5872 = vmatpush.bf16.msra.mxu0 0
        %5873 = vmatpush.bf16.msra.mxu0 0
        %5874 = vmatpush.bf16.msra.mxu0 %v5865
        %5875 = vmatpush.bf16.msra.mxu0 %v5864
        %5876 = vmatmul.bf16.gmra.mxu0 %v5281
        %v5877 = vpop.f32.mrf.mxu0
        %v5878 = vadd.f32 %v5854, %v5877
        %v5879 = vpop.f32.mrf.mxu0
        %v5880 = vadd.f32 %v5854, %v5879
        %5881 = vdwg.mxu0
        %s5882 = scalar_lea.vmem %s65, 48
        %v5883 = vld [vmem:[%s5882] sm:$0xf]
        %v5884 = vld [vmem:[%s5882 + $0x4] sm:$0xf]
        %v5885 = vld [vmem:[%s5882 + $0x8] sm:$0xf]
        %v5886 = vld [vmem:[%s5882 + $0xc] sm:$0xf]
        %s5887 = scalar_lea.vmem %s57, 3
        %v5888 = vld [vmem:[%s5887] sm:$0x1]
        %v5890 = vperm.slane %v5888, 0
        %v5896 = vunpack.c.l.b16 %v5883
        %v5897 = vunpack.c.l.b16 %v5884
        %v5898 = vunpack.c.l.b16 %v5885
        %v5899 = vunpack.c.l.b16 %v5886
        %v5900 = vpack.c.b16 %v5897, %v5896
        %v5901 = vpack.c.b16 %v5899, %v5898
        %5904 = vmatpush.bf16.msra.mxu0 0
        %5905 = vmatpush.bf16.msra.mxu0 0
        %5906 = vmatpush.bf16.msra.mxu0 0
        %5907 = vmatpush.bf16.msra.mxu0 0
        %5908 = vmatpush.bf16.msra.mxu0 0
        %5909 = vmatpush.bf16.msra.mxu0 0
        %5910 = vmatpush.bf16.msra.mxu0 %v5901
        %5911 = vmatpush.bf16.msra.mxu0 %v5900
        %5912 = vmatmul.bf16.gmra.mxu0 %v3575
        %v5913 = vpop.f32.mrf.mxu0
        %v5914 = vadd.f32 %v5890, %v5913
        %v5915 = vpop.f32.mrf.mxu0
        %v5916 = vadd.f32 %v5890, %v5915
        %5917 = vdwg.mxu0
        %s5918 = scalar_lea.vmem %s71, 48
        %v5919 = vld [vmem:[%s5918] sm:$0xf]
        %v5920 = vld [vmem:[%s5918 + $0x4] sm:$0xf]
        %v5921 = vld [vmem:[%s5918 + $0x8] sm:$0xf]
        %v5922 = vld [vmem:[%s5918 + $0xc] sm:$0xf]
        %s5923 = scalar_lea.vmem %s63, 3
        %v5924 = vld [vmem:[%s5923] sm:$0x1]
        %v5926 = vperm.slane %v5924, 0
        %v5932 = vunpack.c.l.b16 %v5919
        %v5933 = vunpack.c.l.b16 %v5920
        %v5934 = vunpack.c.l.b16 %v5921
        %v5935 = vunpack.c.l.b16 %v5922
        %v5936 = vpack.c.b16 %v5933, %v5932
        %v5937 = vpack.c.b16 %v5935, %v5934
        %5940 = vmatpush.bf16.msra.mxu0 0
        %5941 = vmatpush.bf16.msra.mxu0 0
        %5942 = vmatpush.bf16.msra.mxu0 0
        %5943 = vmatpush.bf16.msra.mxu0 0
        %5944 = vmatpush.bf16.msra.mxu0 0
        %5945 = vmatpush.bf16.msra.mxu0 0
        %5946 = vmatpush.bf16.msra.mxu0 %v5937
        %5947 = vmatpush.bf16.msra.mxu0 %v5936
        %5948 = vmatmul.bf16.gmra.mxu0 %v3575
        %v5949 = vpop.f32.mrf.mxu0
        %v5950 = vadd.f32 %v5926, %v5949
        %v5951 = vpop.f32.mrf.mxu0
        %v5952 = vadd.f32 %v5926, %v5951
        %5953 = vdwg.mxu0
        %v5954 = vpack.c.bf16 %v5880, %v5878
        %v5955 = vpack.c.bf16 %v5916, %v5914
        %v5957 = vsel %vm2452, %v5954, 0
        %v5960 = vsel %vm2452, %v5955, 0
        %5962 = vmatpush.bf16.xpose.msra.mxu0 0
        %5963 = vmatpush.bf16.xpose.msra.mxu0 0
        %5964 = vmatpush.bf16.xpose.msra.mxu0 0
        %5965 = vmatpush.bf16.xpose.msra.mxu0 0
        %5966 = vmatpush.bf16.xpose.msra.mxu0 0
        %5967 = vmatpush.bf16.xpose.msra.mxu0 0
        %5968 = vmatpush.bf16.xpose.msra.mxu0 0
        %5969 = vmatpush.bf16.xpose.msra.mxu0 %v5960
        %5970 = vmatmul.bf16.gmra.mxu0 %v5957
        %v5971 = vpop.f32.mrf.mxu0
        %v5972 = vadd.f32 0.0, %v5971
        %v5973 = vpop.f32.mrf.mxu0
        %v5974 = vadd.f32 0.0, %v5973
        %5975 = vdwg.mxu0
        %v5976 = vmul.f32 %v5972, 0.35355338
        %v5977 = vmul.f32 %v5974, 0.35355338
        %v5978 = vsel %vm2487, %v5976, -inf
        %5979 = vmax.xlane.f32.xlu0 %v5978
        %v5980 = vpop.xlane.xlu0 %5979
        %v5981 = vsel %vm2487, %v5977, -inf
        %5982 = vmax.xlane.f32.xlu0 %v5981
        %v5983 = vpop.xlane.xlu0 %5982
        %v5984 = vsub.f32 %v5976, %v5980
        %v5985 = vsub.f32 %v5977, %v5983
        %v5986 = vmul.f32 %v5984, 1.442695
        %v5987 = vpow.pop %v5986
        %v5988 = vmul.f32 %v5985, 1.442695
        %v5989 = vpow.pop %v5988
        %v5990 = vsel %vm2487, %v5987, 0.0
        %5991 = vadd.xlane.f32.xlu0 %v5990
        %v5992 = vpop.xlane.xlu0 %5991
        %v5993 = vsel %vm2487, %v5989, 0.0
        %5994 = vadd.xlane.f32.xlu0 %v5993
        %v5995 = vpop.xlane.xlu0 %5994
        %v5996 = vrcp.pop %v5992
        %v5997 = vrcp.pop %v5995
        %v5998 = vmul.f32 %v5987, %v5996
        %v5999 = vmul.f32 %v5989, %v5997
        %v6000 = vpack.c.bf16 %v5999, %v5998
        %v6001 = vpack.c.bf16 %v5952, %v5950
        %v6003 = vsel %vm2487, %v6000, 0
        %6005 = vmatpush.bf16.msra.mxu0 0
        %6006 = vmatpush.bf16.msra.mxu0 0
        %6007 = vmatpush.bf16.msra.mxu0 0
        %6008 = vmatpush.bf16.msra.mxu0 0
        %6009 = vmatpush.bf16.msra.mxu0 0
        %6010 = vmatpush.bf16.msra.mxu0 0
        %6011 = vmatpush.bf16.msra.mxu0 0
        %6012 = vmatpush.bf16.msra.mxu0 %v6001
        %6013 = vmatmul.bf16.gmra.mxu0 %v6003
        %v6014 = vpop.f32.mrf.mxu0
        %v6015 = vadd.f32 0.0, %v6014
        %v6016 = vpop.f32.mrf.mxu0
        %v6017 = vadd.f32 0.0, %v6016
        %6018 = vdwg.mxu0
        %v6019 = vpack.c.bf16 %v6017, %v6015
        %s6020 = scalar_lea.vmem %s67, 12
        %v6021 = vld [vmem:[%s6020] sm:$0xf]
        %v6023 = vsel %vm2452, %v6019, 0
        %v6026 = vsel %vm2456, %v6021, 0
        %6028 = vmatpush.bf16.msra.mxu0 0
        %6029 = vmatpush.bf16.msra.mxu0 0
        %6030 = vmatpush.bf16.msra.mxu0 0
        %6031 = vmatpush.bf16.msra.mxu0 0
        %6032 = vmatpush.bf16.msra.mxu0 0
        %6033 = vmatpush.bf16.msra.mxu0 0
        %6034 = vmatpush.bf16.msra.mxu0 0
        %6035 = vmatpush.bf16.msra.mxu0 %v6026
        %6036 = vmatmul.bf16.gmra.mxu0 %v6023
        %v6037 = vpop.f32.mrf.mxu0
        %v6038 = vadd.f32 0.0, %v6037
        %v6039 = vpop.f32.mrf.mxu0
        %v6040 = vadd.f32 0.0, %v6039
        %6041 = vdwg.mxu0
        %v6042 = vadd.f32 %v5844, %v6038
        %v6043 = vadd.f32 %v5845, %v6040
        %v6044 = vld [vmem:[%s59] sm:$0x1]
        %v6046 = vperm.slane %v6044, 0
        %v6048 = vadd.f32 %v6042, %v6046
        %v6049 = vadd.f32 %v6043, %v6046
        %v6050 = vld [vmem:[%s101] sm:$0xf]
        %v6051 = vld [vmem:[%s101 + $0x4] sm:$0xf]
        %v6052 = vld [vmem:[%s101 + $0x8] sm:$0xf]
        %v6053 = vld [vmem:[%s101 + $0xc] sm:$0xf]
        %v6054 = vld [vmem:[#allocation13] sm:$0x1]
        %v6055 = vpack.c.bf16 %v6049, %v6048
        %v6057 = vperm.slane %v6054, 0
        %v6063 = vunpack.c.l.b16 %v6050
        %v6064 = vunpack.c.l.b16 %v6051
        %v6065 = vunpack.c.l.b16 %v6052
        %v6066 = vunpack.c.l.b16 %v6053
        %v6067 = vpack.c.b16 %v6064, %v6063
        %v6068 = vpack.c.b16 %v6066, %v6065
        %v6072 = vsel %vm2536, %v6055, 0
        %6074 = vmatpush.bf16.msra.mxu0 0
        %6075 = vmatpush.bf16.msra.mxu0 0
        %6076 = vmatpush.bf16.msra.mxu0 0
        %6077 = vmatpush.bf16.msra.mxu0 0
        %6078 = vmatpush.bf16.msra.mxu0 0
        %6079 = vmatpush.bf16.msra.mxu0 0
        %6080 = vmatpush.bf16.msra.mxu0 %v6068
        %6081 = vmatpush.bf16.msra.mxu0 %v6067
        %6082 = vmatmul.bf16.gmra.mxu0 %v6072
        %v6083 = vpop.f32.mrf.mxu0
        %v6084 = vadd.f32 %v6057, %v6083
        %v6085 = vpop.f32.mrf.mxu0
        %v6086 = vadd.f32 %v6057, %v6085
        %6087 = vdwg.mxu0
        %v6088 = vmax.f32 %v6084, 0.0
        %v6089 = vmax.f32 %v6086, 0.0
        %v6090 = vld [vmem:[%s103] sm:$0xf]
        %v6091 = vld [vmem:[%s103 + $0x4] sm:$0xf]
        %v6092 = vld [vmem:[%s103 + $0x8] sm:$0xf]
        %v6093 = vld [vmem:[%s103 + $0xc] sm:$0xf]
        %v6094 = vld [vmem:[%s103 + $0x10] sm:$0xf]
        %v6095 = vld [vmem:[%s103 + $0x14] sm:$0xf]
        %v6096 = vld [vmem:[%s103 + $0x18] sm:$0xf]
        %v6097 = vld [vmem:[%s103 + $0x1c] sm:$0xf]
        %v6098 = vld [vmem:[#allocation14] sm:$0x1]
        %v6099 = vpack.c.bf16 %v6089, %v6088
        %v6101 = vperm.slane %v6098, 0
        %v6111 = vunpack.c.l.b16 %v6090
        %v6112 = vunpack.c.l.b16 %v6091
        %v6113 = vunpack.c.l.b16 %v6092
        %v6114 = vunpack.c.l.b16 %v6093
        %v6115 = vunpack.c.l.b16 %v6094
        %v6116 = vunpack.c.l.b16 %v6095
        %v6117 = vunpack.c.l.b16 %v6096
        %v6118 = vunpack.c.l.b16 %v6097
        %v6119 = vpack.c.b16 %v6112, %v6111
        %v6120 = vpack.c.b16 %v6114, %v6113
        %v6121 = vpack.c.b16 %v6116, %v6115
        %v6122 = vpack.c.b16 %v6118, %v6117
        %v6128 = vsel %vm4387, %v6099, 0
        %6130 = vmatpush.bf16.msra.mxu0 0
        %6131 = vmatpush.bf16.msra.mxu0 0
        %6132 = vmatpush.bf16.msra.mxu0 0
        %6133 = vmatpush.bf16.msra.mxu0 0
        %6134 = vmatpush.bf16.msra.mxu0 %v6122
        %6135 = vmatpush.bf16.msra.mxu0 %v6121
        %6136 = vmatpush.bf16.msra.mxu0 %v6120
        %6137 = vmatpush.bf16.msra.mxu0 %v6119
        %6138 = vmatmul.bf16.gmra.mxu0 %v6128
        %v6139 = vpop.f32.mrf.mxu0
        %v6140 = vadd.f32 %v6101, %v6139
        %v6141 = vpop.f32.mrf.mxu0
        %v6142 = vadd.f32 %v6101, %v6141
        %6143 = vdwg.mxu0
        %v6144 = vld [vmem:[#allocation17] sm:$0x1]
        %v6145 = vld [vmem:[#allocation16] sm:$0x1]
        %v6146 = vsel %vm2536, %v6140, 0.0
        %6147 = vadd.xlane.f32.xlu0 %v6146
        %v6148 = vpop.xlane.xlu0 %6147
        %v6149 = vsel %vm2536, %v6142, 0.0
        %6150 = vadd.xlane.f32.xlu0 %v6149
        %v6151 = vpop.xlane.xlu0 %6150
        %v6152 = vmul.f32 %v6148, %v4419
        %v6153 = vmul.f32 %v6151, %v4419
        %v6154 = vsub.f32 %v6140, %v6152
        %v6155 = vsub.f32 %v6142, %v6153
        %v6156 = vmul.f32 %v6154, %v6154
        %v6157 = vmul.f32 %v6155, %v6155
        %v6158 = vsel %vm2536, %v6156, 0.0
        %6159 = vadd.xlane.f32.xlu0 %v6158
        %v6160 = vpop.xlane.xlu0 %6159
        %v6161 = vsel %vm2536, %v6157, 0.0
        %6162 = vadd.xlane.f32.xlu0 %v6161
        %v6163 = vpop.xlane.xlu0 %6162
        %v6164 = vmul.f32 %v6160, %v4419
        %v6165 = vmul.f32 %v6163, %v4419
        %v6166 = vadd.f32 %v6164, 1e-05
        %v6167 = vadd.f32 %v6165, 1e-05
        %v6168 = vrsqrt.pop %v6166
        %v6169 = vmul.f32 %v6168, %v6166
        %v6170 = vmul.f32 %v6169, %v6168
        %v6171 = vmul.f32 0.5, %v6170
        %v6172 = vsub.f32 1.5, %v6171
        %v6173 = vmul.f32 %v6168, %v6172
        %vm6174 = vweird.f32 %v6166
        %vm6175 = vweird.f32 %v6168
        %vm6176 = vmor %vm6174, %vm6175
        %v6177 = vsel %vm6176, %v6168, %v6173
        %v6178 = vrsqrt.pop %v6167
        %v6179 = vmul.f32 %v6178, %v6167
        %v6180 = vmul.f32 %v6179, %v6178
        %v6181 = vmul.f32 0.5, %v6180
        %v6182 = vsub.f32 1.5, %v6181
        %v6183 = vmul.f32 %v6178, %v6182
        %vm6184 = vweird.f32 %v6167
        %vm6185 = vweird.f32 %v6178
        %vm6186 = vmor %vm6184, %vm6185
        %v6187 = vsel %vm6186, %v6178, %v6183
        %v6188 = vmul.f32 %v6154, %v6177
        %v6189 = vmul.f32 %v6155, %v6187
        %v6191 = vperm.slane %v6144, 0
        %v6193 = vmul.f32 %v6188, %v6191
        %v6194 = vmul.f32 %v6189, %v6191
        %v6196 = vperm.slane %v6145, 0
        %v6198 = vadd.f32 %v6193, %v6196
        %v6199 = vadd.f32 %v6194, %v6196
        %v6200 = vld [vmem:[%s75] sm:$0xf]
        %v6201 = vld [vmem:[%s75 + $0x4] sm:$0xf]
        %v6202 = vld [vmem:[%s75 + $0x8] sm:$0xf]
        %v6203 = vld [vmem:[%s75 + $0xc] sm:$0xf]
        %v6204 = vld [vmem:[#allocation2] sm:$0x1]
        %v6205 = vpack.c.bf16 %v6199, %v6198
        %v6207 = vperm.slane %v6204, 0
        %v6213 = vunpack.c.l.b16 %v6200
        %v6214 = vunpack.c.l.b16 %v6201
        %v6215 = vunpack.c.l.b16 %v6202
        %v6216 = vunpack.c.l.b16 %v6203
        %v6217 = vpack.c.b16 %v6214, %v6213
        %v6218 = vpack.c.b16 %v6216, %v6215
        %v6222 = vsel %vm2536, %v6205, 0
        %6224 = vmatpush.bf16.msra.mxu0 0
        %6225 = vmatpush.bf16.msra.mxu0 0
        %6226 = vmatpush.bf16.msra.mxu0 0
        %6227 = vmatpush.bf16.msra.mxu0 0
        %6228 = vmatpush.bf16.msra.mxu0 0
        %6229 = vmatpush.bf16.msra.mxu0 0
        %6230 = vmatpush.bf16.msra.mxu0 %v6218
        %6231 = vmatpush.bf16.msra.mxu0 %v6217
        %6232 = vmatmul.bf16.gmra.mxu0 %v6222
        %v6233 = vpop.f32.mrf.mxu0
        %v6234 = vadd.f32 %v6207, %v6233
        %v6235 = vpop.f32.mrf.mxu0
        %v6236 = vadd.f32 %v6207, %v6235
        %6237 = vdwg.mxu0
        %vm6238 = vcmp.ge.f32.partialorder %v6234, 0.0
        %vm6239 = vcmp.ge.f32.partialorder %v6236, 0.0
        %v6240 = vmul.f32 %v6234, 0.01
        %v6241 = vmul.f32 %v6236, 0.01
        %v6242 = vsel %vm6238, %v6234, %v6240
        %v6243 = vsel %vm6239, %v6236, %v6241
        %v6244 = vld [vmem:[%s79] sm:$0xf]
        %v6245 = vld [vmem:[%s79 + $0x4] sm:$0xf]
        %v6246 = vld [vmem:[%s79 + $0x8] sm:$0xf]
        %v6247 = vld [vmem:[%s79 + $0xc] sm:$0xf]
        %v6248 = vld [vmem:[#allocation5] sm:$0x1]
        %v6249 = vpack.c.bf16 %v6243, %v6242
        %v6251 = vperm.slane %v6248, 0
        %v6257 = vunpack.c.l.b16 %v6244
        %v6258 = vunpack.c.l.b16 %v6245
        %v6259 = vunpack.c.l.b16 %v6246
        %v6260 = vunpack.c.l.b16 %v6247
        %v6261 = vpack.c.b16 %v6258, %v6257
        %v6262 = vpack.c.b16 %v6260, %v6259
        %v6266 = vsel %vm2536, %v6249, 0
        %6268 = vmatpush.bf16.msra.mxu0 0
        %6269 = vmatpush.bf16.msra.mxu0 0
        %6270 = vmatpush.bf16.msra.mxu0 0
        %6271 = vmatpush.bf16.msra.mxu0 0
        %6272 = vmatpush.bf16.msra.mxu0 0
        %6273 = vmatpush.bf16.msra.mxu0 0
        %6274 = vmatpush.bf16.msra.mxu0 %v6262
        %6275 = vmatpush.bf16.msra.mxu0 %v6261
        %6276 = vmatmul.bf16.gmra.mxu0 %v6266
        %v6277 = vpop.f32.mrf.mxu0
        %v6278 = vadd.f32 %v6251, %v6277
        %v6279 = vpop.f32.mrf.mxu0
        %v6280 = vadd.f32 %v6251, %v6279
        %6281 = vdwg.mxu0
        %v6282 = vmul.f32 %v2684, %v6278
        %v6283 = vmul.f32 %v2685, %v6280
        %v6284 = vld [vmem:[%s135] sm:$0xf]
        %v6285 = vld [vmem:[%s135 + $0x4] sm:$0xf]
        %v6286 = vld [vmem:[%s135 + $0x8] sm:$0xf]
        %v6287 = vld [vmem:[%s135 + $0xc] sm:$0xf]
        %v6288 = vld [vmem:[#allocation29] sm:$0x1]
        %v6289 = vpack.c.bf16 %v6283, %v6282
        %v6291 = vperm.slane %v6288, 0
        %v6297 = vunpack.c.l.b16 %v6284
        %v6298 = vunpack.c.l.b16 %v6285
        %v6299 = vunpack.c.l.b16 %v6286
        %v6300 = vunpack.c.l.b16 %v6287
        %v6301 = vpack.c.b16 %v6298, %v6297
        %v6302 = vpack.c.b16 %v6300, %v6299
        %v6306 = vsel %vm2536, %v6289, 0
        %6308 = vmatpush.bf16.msra.mxu0 0
        %6309 = vmatpush.bf16.msra.mxu0 0
        %6310 = vmatpush.bf16.msra.mxu0 0
        %6311 = vmatpush.bf16.msra.mxu0 0
        %6312 = vmatpush.bf16.msra.mxu0 0
        %6313 = vmatpush.bf16.msra.mxu0 0
        %6314 = vmatpush.bf16.msra.mxu0 %v6302
        %6315 = vmatpush.bf16.msra.mxu0 %v6301
        %6316 = vmatmul.bf16.gmra.mxu0 %v6306
        %v6317 = vpop.f32.mrf.mxu0
        %v6318 = vadd.f32 %v6291, %v6317
        %v6319 = vpop.f32.mrf.mxu0
        %v6320 = vadd.f32 %v6291, %v6319
        %6321 = vdwg.mxu0
        %vm6322 = vcmp.ge.f32.partialorder %v6318, 0.0
        %vm6323 = vcmp.ge.f32.partialorder %v6320, 0.0
        %v6324 = vmul.f32 %v6318, 0.01
        %v6325 = vmul.f32 %v6320, 0.01
        %v6326 = vsel %vm6322, %v6318, %v6324
        %v6327 = vsel %vm6323, %v6320, %v6325
        %v6328 = vld [vmem:[%s139] sm:$0xf]
        %v6329 = vld [vmem:[%s139 + $0x4] sm:$0xf]
        %v6330 = vld [vmem:[%s139 + $0x8] sm:$0xf]
        %v6331 = vld [vmem:[%s139 + $0xc] sm:$0xf]
        %v6332 = vld [vmem:[#allocation31] sm:$0x1]
        %v6333 = vpack.c.bf16 %v6327, %v6326
        %v6335 = vperm.slane %v6332, 0
        %v6341 = vunpack.c.l.b16 %v6328
        %v6342 = vunpack.c.l.b16 %v6329
        %v6343 = vunpack.c.l.b16 %v6330
        %v6344 = vunpack.c.l.b16 %v6331
        %v6345 = vpack.c.b16 %v6342, %v6341
        %v6346 = vpack.c.b16 %v6344, %v6343
        %v6350 = vsel %vm2536, %v6333, 0
        %6352 = vmatpush.bf16.msra.mxu0 0
        %6353 = vmatpush.bf16.msra.mxu0 0
        %6354 = vmatpush.bf16.msra.mxu0 0
        %6355 = vmatpush.bf16.msra.mxu0 0
        %6356 = vmatpush.bf16.msra.mxu0 0
        %6357 = vmatpush.bf16.msra.mxu0 0
        %6358 = vmatpush.bf16.msra.mxu0 %v6346
        %6359 = vmatpush.bf16.msra.mxu0 %v6345
        %6360 = vmatmul.bf16.gmra.mxu0 %v6350
        %v6361 = vpop.f32.mrf.mxu0
        %v6362 = vadd.f32 %v6335, %v6361
        %v6363 = vpop.f32.mrf.mxu0
        %v6364 = vadd.f32 %v6335, %v6363
        %6365 = vdwg.mxu0
        %vm6366 = vcmp.ge.f32.partialorder %v6362, 0.0
        %vm6367 = vcmp.ge.f32.partialorder %v6364, 0.0
        %v6368 = vmul.f32 %v6362, 0.01
        %v6369 = vmul.f32 %v6364, 0.01
        %v6370 = vsel %vm6366, %v6362, %v6368
        %v6371 = vsel %vm6367, %v6364, %v6369
        %v6372 = vxor.u32 %v6370, 2147483648
        %v6373 = vxor.u32 %v6371, 2147483648
        %v6374 = vmul.f32 %v6372, 1.442695
        %v6375 = vpow.pop %v6374
        %v6376 = vmul.f32 %v6373, 1.442695
        %v6377 = vpow.pop %v6376
        %v6378 = vadd.f32 %v6375, 1.0
        %v6379 = vadd.f32 %v6377, 1.0
        %v6380 = vrcp.pop %v6378
        %v6381 = vmul.f32 %v6378, %v6380
        %v6382 = vsub.f32 1.0, %v6381
        %v6383 = vmul.f32 %v6380, %v6382
        %v6384 = vadd.f32 %v6380, %v6383
        %vm6385 = vweird.f32 %v6378
        %vm6386 = vweird.f32 %v6380
        %vm6387 = vmor %vm6385, %vm6386
        %v6388 = vsel %vm6387, %v6380, %v6384
        %v6389 = vand.u32 2147483647, %v6378
        %vm6390 = vcmp.eq.f32.partialorder %v6389, 8.507059e+37
        %v6391 = vand.u32 %v6378, 2147483648
        %v6392 = vor.u32 1.1754944e-38, %v6391
        %v6393 = vsel %vm6390, %v6392, %v6388
        %v6394 = vmul.f32 1.0, %v6393
        %v6395 = vrcp.pop %v6379
        %v6396 = vmul.f32 %v6379, %v6395
        %v6397 = vsub.f32 1.0, %v6396
        %v6398 = vmul.f32 %v6395, %v6397
        %v6399 = vadd.f32 %v6395, %v6398
        %vm6400 = vweird.f32 %v6379
        %vm6401 = vweird.f32 %v6395
        %vm6402 = vmor %vm6400, %vm6401
        %v6403 = vsel %vm6402, %v6395, %v6399
        %v6404 = vand.u32 2147483647, %v6379
        %vm6405 = vcmp.eq.f32.partialorder %v6404, 8.507059e+37
        %v6406 = vand.u32 %v6379, 2147483648
        %v6407 = vor.u32 1.1754944e-38, %v6406
        %v6408 = vsel %vm6405, %v6407, %v6403
        %v6409 = vmul.f32 1.0, %v6408
        %6410 = vst.msk [vmem:[%s2409] sm:$0xff] %vm2536, %v6278
        %6411 = vst.msk [vmem:[%s2409 + $0x8] sm:$0xff] %vm2536, %v6280
        %6412 = vst.msk [vmem:[%s2416] sm:$0xff] %vm2536, %v6282
        %6413 = vst.msk [vmem:[%s2416 + $0x8] sm:$0xff] %vm2536, %v6283
        %6414 = vst.msk [vmem:[%s2423] sm:$0xff] %vm2536, %v6394
        %6415 = vst.msk [vmem:[%s2423 + $0x8] sm:$0xff] %vm2536, %v6409
        %s6416 = sand.u32 %s1666, 1
        %s6417 = scalar_lea.sflag [#allocation4], %s6416
        %s6418 = sand.u32 %s1666, 1
        %s6419 = smul.addr %s6418, 16
        %s6420 = scalar_lea.vmem [#allocation32], %s6419
        %s6421 = sand.u32 %s173, 1
        %s6422 = scalar_lea.sflag [#allocation34], %s6421
        %s6423 = sand.u32 %s1692, 1
        %s6424 = smul.addr %s6423, 16
        %s6425 = scalar_lea.vmem [#allocation33], %s6424
        %s6426 = sand.u32 %s173, 1
        %s6427 = scalar_lea.sflag [#allocation34], %s6426
        %s6428 = sand.u32 %s1718, 1
        %s6429 = smul.addr %s6428, 16
        %s6430 = scalar_lea.vmem [#allocation35], %s6429
        // Predicated region
        $region377: #{decoder_forward.1} parent=299 // pred_check
          %p6431 = pneg %p1676
        $region378: #{decoder_forward.1} parent=299 // pred_check_branch
          %6433 = sbr.rel (%p6431) target = $region380
        $region379: #{decoder_forward.1} parent=299 // pred_region
          %6435 = vsyncadd %s6417, 0
          %s6436 = smul.addr %s173, 2
          %s6437 = smul.addr %s6436, 8
          %s6438 = scalar_lea.hbm %s141, %s6437
          %s6439 = sshll.u32 %s6420, 4
          %s6440 = int_to_ptr.vmem [resolvable:$true] %s6439
          %s6441 = sshll.u32 %s6438, 4
          %s6442 = int_to_ptr.hbm [resolvable:$true] %s6441
          %6447 = dma.vmem_to_hbm [thread:$0]  %s6440, 256, %s6442, %s6417, 128, 128, 8
        $region380: #{decoder_forward.1} parent=299 // pred_fallthru
          _
        // Predicated region
        $region381: #{decoder_forward.1} parent=299 // pred_check
          %p6448 = pneg %p1702
        $region382: #{decoder_forward.1} parent=299 // pred_check_branch
          %6450 = sbr.rel (%p6448) target = $region384
        $region383: #{decoder_forward.1} parent=299 // pred_region
          %6452 = vsyncadd %s6422, 0
          %s6453 = smul.addr %s173, 2
          %s6454 = smul.addr %s6453, 8
          %s6455 = scalar_lea.hbm %s143, %s6454
          %s6456 = sshll.u32 %s6425, 4
          %s6457 = int_to_ptr.vmem [resolvable:$true] %s6456
          %s6458 = sshll.u32 %s6455, 4
          %s6459 = int_to_ptr.hbm [resolvable:$true] %s6458
          %6464 = dma.vmem_to_hbm [thread:$0]  %s6457, 256, %s6459, %s6422, 128, 128, 8
        $region384: #{decoder_forward.1} parent=299 // pred_fallthru
          _
        // Predicated region
        $region385: #{decoder_forward.1} parent=299 // pred_check
          %p6465 = pneg %p1728
        $region386: #{decoder_forward.1} parent=299 // pred_check_branch
          %6467 = sbr.rel (%p6465) target = $region388
        $region387: #{decoder_forward.1} parent=299 // pred_region
          %6469 = vsyncadd %s6427, 0
          %s6470 = smul.addr %s173, 2
          %s6471 = smul.addr %s6470, 8
          %s6472 = scalar_lea.hbm %s145, %s6471
          %s6473 = sshll.u32 %s6430, 4
          %s6474 = int_to_ptr.vmem [resolvable:$true] %s6473
          %s6475 = sshll.u32 %s6472, 4
          %s6476 = int_to_ptr.hbm [resolvable:$true] %s6475
          %6481 = dma.vmem_to_hbm [thread:$0]  %s6474, 256, %s6476, %s6427, 128, 128, 8
        $region388: #{decoder_forward.1} parent=299 // pred_fallthru
          _
      $region300: #{decoder_forward.1} parent=5 // pred_fallthru
        _
      %p6482 = scmp.le.s32.totalorder 2, %s168
      // Predicated region
      $region389: #{decoder_forward.1} parent=5 // pred_check
        %p6483 = pneg %p6482
      $region390: #{decoder_forward.1} parent=5 // pred_check_branch
        %6485 = sbr.rel (%p6483) target = $region392
      $region391: #{decoder_forward.1} parent=5 // pred_region
        %s6486 = ssub.s32 %s168, 2
        // Predicated region
        $region393: #{decoder_forward.1} parent=391 // pred_check
          %p6487 = pneg %p1682
        $region394: #{decoder_forward.1} parent=391 // pred_check_branch
          %6489 = sbr.rel (%p6487) target = $region396
        $region395: #{decoder_forward.1} parent=391 // pred_region
          %s6490 = sand.u32 %s1667, 1
          %s6491 = scalar_lea.sflag [#allocation4], %s6490
          %s6492 = sand.u32 %s1667, 1
          %s6493 = smul.addr %s6492, 16
          %s6494 = scalar_lea.vmem [#allocation32], %s6493
          %6496 = dma.done %s6491, 256
        $region396: #{decoder_forward.1} parent=391 // pred_fallthru
          _
        // Predicated region
        $region397: #{decoder_forward.1} parent=391 // pred_check
          %p6497 = pneg %p1708
        $region398: #{decoder_forward.1} parent=391 // pred_check_branch
          %6499 = sbr.rel (%p6497) target = $region400
        $region399: #{decoder_forward.1} parent=391 // pred_region
          %s6500 = sand.u32 %s174, 1
          %s6501 = scalar_lea.sflag [#allocation34], %s6500
          %s6502 = sand.u32 %s1693, 1
          %s6503 = smul.addr %s6502, 16
          %s6504 = scalar_lea.vmem [#allocation33], %s6503
          %6506 = dma.done %s6501, 256
        $region400: #{decoder_forward.1} parent=391 // pred_fallthru
          _
        // Predicated region
        $region401: #{decoder_forward.1} parent=391 // pred_check
          %p6507 = pneg %p1734
        $region402: #{decoder_forward.1} parent=391 // pred_check_branch
          %6509 = sbr.rel (%p6507) target = $region404
        $region403: #{decoder_forward.1} parent=391 // pred_region
          %s6510 = sand.u32 %s174, 1
          %s6511 = scalar_lea.sflag [#allocation34], %s6510
          %s6512 = sand.u32 %s1719, 1
          %s6513 = smul.addr %s6512, 16
          %s6514 = scalar_lea.vmem [#allocation35], %s6513
          %6516 = dma.done %s6511, 256
        $region404: #{decoder_forward.1} parent=391 // pred_fallthru
          _
      $region392: #{decoder_forward.1} parent=5 // pred_fallthru
        _
    $region6: #{decoder_forward.1} parent=1 // loop_footer
      %s172 = sadd.s32 1, %s168
    $region7: #{decoder_forward.1} parent=1 // loop_footer_branch
      %167 = sbr.rel target = $region3
    $region8: #{decoder_forward.1} parent=1 // loop_exit
      _
    %6517 = vsyncpa [#allocation3], 1
    %s6518 = scalar_lea.sflag [#allocation3], 1
    %6519 = vsyncpa %s6518, 1
    %6520 = vsyncpa [#allocation6], 1
    %6521 = vsyncpa [#allocation9], 1
    %6522 = vsyncpa [#allocation12], 1
    %6523 = vsyncpa [#allocation15], 1
    %6524 = vsyncpa [#allocation18], 1
    %6525 = vsyncpa [#allocation21], 1
    %6526 = vsyncpa [#allocation24], 1
    %6527 = vsyncpa [#allocation27], 1
    %6528 = vsyncpa [#allocation30], 1
    %6529 = vsyncpa [#allocation4], 1
    %s6530 = scalar_lea.sflag [#allocation4], 1
    %6531 = vsyncpa %s6530, 1
    %6532 = vsyncpa [#allocation34], 1
    %s6533 = scalar_lea.sflag [#allocation34], 1
    %6534 = vsyncpa %s6533, 1

</llo_original>
